<compile_context>
chip_gen: v5e
topology: v5e:2x2
jax: 0.10.0
libtpu: 0.0.40
codegen_flags: <defaults>
</compile_context>

<pallas_src>
import functools

import jax
import jax.numpy as jnp
from jax.experimental import pallas as pl
from jax.experimental.pallas import tpu as pltpu


def _layer_norm(x, gamma, beta, eps=1e-5):
    # PyTorch LayerNorm: biased variance over last dim, eps inside sqrt.
    mu = jnp.mean(x, axis=-1, keepdims=True)
    var = jnp.mean((x - mu) ** 2, axis=-1, keepdims=True)
    return (x - mu) * jax.lax.rsqrt(var + eps) * gamma + beta


def _encoder_layer_kernel(
    # inputs
    x_q_ref, x_kv_ref, mask_ref,
    wq_ref, bq_ref, wk_ref, bk_ref, wv_ref, bv_ref, wo_ref, bo_ref,
    w1_ref, b1_ref, w2_ref, b2_ref,
    g1_ref, be1_ref, g2_ref, be2_ref,
    # outputs
    o_ref,
    # scratch
    q_sc, m_sc, l_sc, acc_sc,
    *, num_heads, d_k, compute_dtype, approx_recip,
):
    f32 = jnp.float32
    cd = compute_dtype
    H = num_heads
    kv_idx = pl.program_id(2)
    n_kv = pl.num_programs(2)

    x_q = x_q_ref[0]                                  # (tq, D) f32 (residual path)

    # ---- first KV block of this (batch, q-tile): init accumulators, cache Q --
    @pl.when(kv_idx == 0)
    def _init():
        m_sc[...] = jnp.full_like(m_sc, -jnp.inf)
        l_sc[...] = jnp.zeros_like(l_sc)
        acc_sc[...] = jnp.zeros_like(acc_sc)
        xq_b = jnp.broadcast_to(x_q.astype(cd)[None], (H,) + x_q.shape)
        q = jnp.einsum("hsd,hdk->hsk", xq_b, wq_ref[...],
                       preferred_element_type=f32) + bq_ref[...]
        q_sc[...] = q.astype(cd)                      # (H, tq, dk)

    # ---- K / V projections for this KV block (head-major, no lane slicing) ---
    x_kv = x_kv_ref[0].astype(cd)                     # (tkv, D)
    xkv_b = jnp.broadcast_to(x_kv[None], (H,) + x_kv.shape)
    k = (jnp.einsum("hsd,hdk->hsk", xkv_b, wk_ref[...],
                    preferred_element_type=f32) + bk_ref[...]).astype(cd)
    v = (jnp.einsum("hsd,hdk->hsk", xkv_b, wv_ref[...],
                    preferred_element_type=f32) + bv_ref[...]).astype(cd)

    # ---- scores + online softmax (flash-style); softmax math stays f32 -------
    s = jnp.einsum("hqd,hkd->hqk", q_sc[...], k,
                   preferred_element_type=f32) * (1.0 / (d_k ** 0.5))
    mask2d = mask_ref[0].astype(f32)                  # (tq, tkv); 0 => masked
    s = jnp.where(mask2d[None, :, :] == 0, -1e9, s)

    m_prev = m_sc[...]                                # (H, tq, 1)
    m_new = jnp.maximum(m_prev, jnp.max(s, axis=-1, keepdims=True))
    alpha = jnp.exp(m_prev - m_new)
    p = jnp.exp(s - m_new)
    l_sc[...] = alpha * l_sc[...] + jnp.sum(p, axis=-1, keepdims=True)
    acc_sc[...] = alpha * acc_sc[...] + jnp.einsum(
        "hqk,hkd->hqd", p.astype(cd), v, preferred_element_type=f32)
    m_sc[...] = m_new

    # ---- last KV block: output proj, residual + LN1, FFN, residual + LN2 -----
    @pl.when(kv_idx == n_kv - 1)
    def _finalize():
        inv_l = pl.reciprocal(l_sc[...], approx=approx_recip)   # EUP slot
        out_h = (acc_sc[...] * inv_l).astype(cd)                # (H, tq, dk)
        proj = jnp.einsum("hqd,hdo->hqo", out_h, wo_ref[...],
                          preferred_element_type=f32)           # (H, tq, D)
        attn_out = jnp.sum(proj, axis=0) + bo_ref[...]          # (tq, D)

        x1 = _layer_norm(x_q + attn_out, g1_ref[...], be1_ref[...])

        h1 = jnp.maximum(
            jnp.dot(x1.astype(cd), w1_ref[...],
                    preferred_element_type=f32) + b1_ref[...], 0.0)
        ff = jnp.dot(h1.astype(cd), w2_ref[...],
                     preferred_element_type=f32) + b2_ref[...]

        o_ref[0] = _layer_norm(x1 + ff, g2_ref[...], be2_ref[...]).astype(o_ref.dtype)


def encoder_layer(x, mask, params, num_heads, *, compute_dtype=jnp.float32,
                  tile_q=None, tile_kv=None):
    """x: (B, S, D) f32, mask: (B, S, S) (nonzero = keep). Returns (B, S, D) f32."""
    B, S, D = x.shape
    H = num_heads
    assert D % H == 0
    d_k = D // H
    d_ff = params["w1"].shape[1]
    f32 = jnp.float32
    cd = compute_dtype

    # Sequence tiling; KV blocks are the innermost (reduction) grid axis.
    if tile_q is None:
        tile_q = S if S <= 128 else 128
    if tile_kv is None:
        tile_kv = S if S <= 128 else 128
    assert S % tile_q == 0 and S % tile_kv == 0
    # TPU tiling rule: a block's last dim must be a multiple of 128 or the full dim.
    assert tile_kv == S or tile_kv % 128 == 0, "tile_kv must be 128-aligned or full"
    n_q, n_kv = S // tile_q, S // tile_kv

    # ---- wrapper-side parameter repacking (plain XLA, done once) -------------
    # Head-split weights so the kernel never lane-slices or concatenates heads.
    wq = params["wq"].reshape(D, H, d_k).transpose(1, 0, 2).astype(cd)   # (H,D,dk)
    wk = params["wk"].reshape(D, H, d_k).transpose(1, 0, 2).astype(cd)
    wv = params["wv"].reshape(D, H, d_k).transpose(1, 0, 2).astype(cd)
    wo = params["wo"].reshape(H, d_k, D).astype(cd)                      # (H,dk,D)
    bq = params["bq"].reshape(H, 1, d_k).astype(f32)
    bk = params["bk"].reshape(H, 1, d_k).astype(f32)
    bv = params["bv"].reshape(H, 1, d_k).astype(f32)
    bo = params["bo"].astype(f32)                                        # (1, D)
    w1 = params["w1"].astype(cd)
    b1 = params["b1"].astype(f32)
    w2 = params["w2"].astype(cd)
    b2 = params["b2"].astype(f32)
    g1, be1 = params["gamma1"].astype(f32), params["beta1"].astype(f32)
    g2, be2 = params["gamma2"].astype(f32), params["beta2"].astype(f32)

    x = x.astype(f32)
    mask_i8 = (mask != 0).astype(jnp.int8)     # 4x less mask DMA than f32

    kernel = functools.partial(
        _encoder_layer_kernel, num_heads=H, d_k=d_k,
        compute_dtype=cd, approx_recip=(cd == jnp.bfloat16))

    def build(single_buffer_weights):
        if single_buffer_weights:
            def w_spec(shape):
                return pl.BlockSpec(shape, lambda b, qi, ki: (0,) * len(shape),
                                    pipeline_mode=pl.Buffered(1))
        else:
            def w_spec(shape):
                return pl.BlockSpec(shape, lambda b, qi, ki: (0,) * len(shape))

        in_specs = [
            pl.BlockSpec((1, tile_q, D), lambda b, qi, ki: (b, qi, 0)),        # x (q rows)
            pl.BlockSpec((1, tile_kv, D), lambda b, qi, ki: (b, ki, 0)),       # x (kv rows)
            pl.BlockSpec((1, tile_q, tile_kv), lambda b, qi, ki: (b, qi, ki)), # mask
            w_spec((H, D, d_k)), w_spec((H, 1, d_k)),    # wq, bq
            w_spec((H, D, d_k)), w_spec((H, 1, d_k)),    # wk, bk
            w_spec((H, D, d_k)), w_spec((H, 1, d_k)),    # wv, bv
            w_spec((H, d_k, D)), w_spec((1, D)),         # wo, bo
            w_spec((D, d_ff)), w_spec((1, d_ff)),        # w1, b1
            w_spec((d_ff, D)), w_spec((1, D)),           # w2, b2
            w_spec((1, D)), w_spec((1, D)),              # gamma1, beta1
            w_spec((1, D)), w_spec((1, D)),              # gamma2, beta2
        ]
        out_specs = pl.BlockSpec((1, tile_q, D), lambda b, qi, ki: (b, qi, 0))
        scratch = [
            pltpu.VMEM((H, tile_q, d_k), cd),    # cached Q for the current q-tile
            pltpu.VMEM((H, tile_q, 1), f32),     # running max
            pltpu.VMEM((H, tile_q, 1), f32),     # running softmax denom
            pltpu.VMEM((H, tile_q, d_k), f32),   # attention output accumulator
        ]

        weight_bytes = sum(int(a.size) * a.dtype.itemsize
                           for a in (wq, wk, wv, wo, w1, w2))
        cost = pl.CostEstimate(
            flops=int(B * (8 * S * D * D + 4 * H * S * S * d_k + 4 * S * D * d_ff)),
            transcendentals=int(B * H * S * S + 2 * B * S),
            bytes_accessed=int(2 * B * S * D * 4 + B * S * S + B * S * D * 4
                               + weight_bytes),
        )

        return pl.pallas_call(
            kernel,
            out_shape=jax.ShapeDtypeStruct((B, S, D), jnp.float32),
            grid_spec=pltpu.PrefetchScalarGridSpec(
                num_scalar_prefetch=0,
                grid=(B, n_q, n_kv),
                in_specs=in_specs,
                out_specs=out_specs,
                scratch_shapes=scratch,
            ),
            compiler_params=pltpu.CompilerParams(
                dimension_semantics=("parallel", "parallel", "arbitrary")),
            cost_estimate=cost,
        )

    args = (x, x, mask_i8,
            wq, bq, wk, bk, wv, bv, wo, bo,
            w1, b1, w2, b2, g1, be1, g2, be2)

    try:
        return build(True)(*args)
    except Exception:
        # pl.Buffered(1) single-buffering not accepted by this jax version;
        # fall back to default double-buffered weight specs.
        return build(False)(*args)


# ------------------------ pure-JAX reference (for checking) ------------------
def ref_encoder_layer(x, mask, p, num_heads):
    B, S, D = x.shape
    d_k = D // num_heads

    def ln(y, g, b, eps=1e-5):
        mu = jnp.mean(y, axis=-1, keepdims=True)
        var = jnp.mean((y - mu) ** 2, axis=-1, keepdims=True)
        return (y - mu) / jnp.sqrt(var + eps) * g + b

    q = x @ p["wq"] + p["bq"]
    k = x @ p["wk"] + p["bk"]
    v = x @ p["wv"] + p["bv"]
    q = q.reshape(B, S, num_heads, d_k).transpose(0, 2, 1, 3)
    k = k.reshape(B, S, num_heads, d_k).transpose(0, 2, 1, 3)
    v = v.reshape(B, S, num_heads, d_k).transpose(0, 2, 1, 3)
    scores = jnp.einsum("bhqd,bhkd->bhqk", q, k) / (d_k ** 0.5)
    scores = jnp.where(mask[:, None, :, :] == 0, -1e9, scores)
    attn = jax.nn.softmax(scores, axis=-1)
    out = jnp.einsum("bhqk,bhkd->bhqd", attn, v).transpose(0, 2, 1, 3).reshape(B, S, D)
    attn_out = out @ p["wo"] + p["bo"]
    x1 = ln(x + attn_out, p["gamma1"], p["beta1"])
    ff = jnp.maximum(x1 @ p["w1"] + p["b1"], 0.0) @ p["w2"] + p["b2"]
    return ln(x1 + ff, p["gamma2"], p["beta2"])


def init_params(key, d_model, d_ff):
    ks = jax.random.split(key, 12)

    def linear(kw, kb, fan_in, fan_out):
        bound = 1.0 / (fan_in ** 0.5)
        w = jax.random.uniform(kw, (fan_in, fan_out), jnp.float32, -bound, bound)
        b = jax.random.uniform(kb, (1, fan_out), jnp.float32, -bound, bound)
        return w, b

    wq, bq = linear(ks[0], ks[1], d_model, d_model)
    wk, bk = linear(ks[2], ks[3], d_model, d_model)
    wv, bv = linear(ks[4], ks[5], d_model, d_model)
    wo, bo = linear(ks[6], ks[7], d_model, d_model)
    w1, b1 = linear(ks[8], ks[9], d_model, d_ff)
    w2, b2 = linear(ks[10], ks[11], d_ff, d_model)
    return dict(
        wq=wq, bq=bq, wk=wk, bk=bk, wv=wv, bv=bv, wo=wo, bo=bo,
        w1=w1, b1=b1, w2=w2, b2=b2,
        gamma1=jnp.ones((1, d_model), jnp.float32),
        beta1=jnp.zeros((1, d_model), jnp.float32),
        gamma2=jnp.ones((1, d_model), jnp.float32),
        beta2=jnp.zeros((1, d_model), jnp.float32),
    )


def _run_case(name, key, B, S, D, H, d_ff, compute_dtype, tol,
              tile_q=None, tile_kv=None):
    kx, km, kp = jax.random.split(key, 3)
    x = jax.random.normal(kx, (B, S, D), jnp.float32)
    # mask: 1 = keep, 0 = masked out; broadcast over heads inside the kernel.
    mask = (jax.random.uniform(km, (B, S, S)) > 0.2).astype(jnp.float32)
    params = init_params(kp, D, d_ff)

    out = encoder_layer(x, mask, params, H, compute_dtype=compute_dtype,
                        tile_q=tile_q, tile_kv=tile_kv)
    out = jax.block_until_ready(out)

    ref = ref_encoder_layer(x, mask, params, H)
    err = float(jnp.max(jnp.abs(out - ref)))
    assert out.shape == (B, S, D), name
    assert err < tol, f"{name}: max abs err {err} >= {tol}"
    return err


if __name__ == "__main__":
    key = jax.random.PRNGKey(0)
    k1, k2, k3 = jax.random.split(key, 3)

    # Tiny config (matches the original toy shapes): one tile per batch,
    # full-f32 compute, tight numerical check.
    _run_case("tiny_f32", k1, B=2, S=8, D=32, H=4, d_ff=2048,
              compute_dtype=jnp.float32, tol=2e-4)

    # Tiled config: exercises the flash-style online softmax across multiple
    # q- and kv-tiles (grid = (2, 2, 2)).  Full-f32 compute, tight check.
    _run_case("tiled_f32", k2, B=2, S=256, D=128, H=4, d_ff=2048,
              compute_dtype=jnp.float32, tol=5e-4, tile_q=128, tile_kv=128)

    # Same tiled config with bf16 MXU operands / f32 accumulation (perf mode);
    # softmax + LayerNorm stay f32, so only matmul rounding differs -> loose check.
    _run_case("tiled_bf16", k3, B=2, S=256, D=128, H=4, d_ff=2048,
              compute_dtype=jnp.bfloat16, tol=2e-1, tile_q=128, tile_kv=128)

    print("KERNEL_OK")
</pallas_src>

<mosaic_0001>
module attributes {stable_mosaic.version = 11 : i64} {
  func.func @_encoder_layer_kernel(%arg0: i32, %arg1: i32, %arg2: i32, %arg3: memref<1x8x32xf32, #tpu.memory_space<vmem>>, %arg4: memref<1x8x32xf32, #tpu.memory_space<vmem>>, %arg5: memref<1x8x8xi8, #tpu.memory_space<vmem>>, %arg6: memref<4x32x8xf32, #tpu.memory_space<vmem>>, %arg7: memref<4x1x8xf32, #tpu.memory_space<vmem>>, %arg8: memref<4x32x8xf32, #tpu.memory_space<vmem>>, %arg9: memref<4x1x8xf32, #tpu.memory_space<vmem>>, %arg10: memref<4x32x8xf32, #tpu.memory_space<vmem>>, %arg11: memref<4x1x8xf32, #tpu.memory_space<vmem>>, %arg12: memref<4x8x32xf32, #tpu.memory_space<vmem>>, %arg13: memref<1x32xf32, #tpu.memory_space<vmem>>, %arg14: memref<32x2048xf32, #tpu.memory_space<vmem>>, %arg15: memref<1x2048xf32, #tpu.memory_space<vmem>>, %arg16: memref<2048x32xf32, #tpu.memory_space<vmem>>, %arg17: memref<1x32xf32, #tpu.memory_space<vmem>>, %arg18: memref<1x32xf32, #tpu.memory_space<vmem>>, %arg19: memref<1x32xf32, #tpu.memory_space<vmem>>, %arg20: memref<1x32xf32, #tpu.memory_space<vmem>>, %arg21: memref<1x32xf32, #tpu.memory_space<vmem>>, %arg22: memref<1x8x32xf32, #tpu.memory_space<vmem>>, %arg23: memref<4x8x8xf32, #tpu.memory_space<vmem>>, %arg24: memref<4x8x1xf32, #tpu.memory_space<vmem>>, %arg25: memref<4x8x1xf32, #tpu.memory_space<vmem>>, %arg26: memref<4x8x8xf32, #tpu.memory_space<vmem>>) attributes {dimension_semantics = [#tpu.dimension_semantics<parallel>, #tpu.dimension_semantics<parallel>, #tpu.dimension_semantics<arbitrary>], iteration_bounds = array<i64: 2, 1, 1>, scalar_prefetch = 0 : i64, scratch_operands = 4 : i64, tpu.core_type = #tpu.core_type<tc>, window_params = [{transform_indices = @transform_0, window_bounds = array<i64: 1, 8, 32>}, {transform_indices = @transform_1, window_bounds = array<i64: 1, 8, 32>}, {transform_indices = @transform_2, window_bounds = array<i64: 1, 8, 8>}, {pipeline_mode = #tpu.pipeline_mode<synchronous>, transform_indices = @transform_3, window_bounds = array<i64: 4, 32, 8>}, {pipeline_mode = #tpu.pipeline_mode<synchronous>, transform_indices = @transform_4, window_bounds = array<i64: 4, 1, 8>}, {pipeline_mode = #tpu.pipeline_mode<synchronous>, transform_indices = @transform_5, window_bounds = array<i64: 4, 32, 8>}, {pipeline_mode = #tpu.pipeline_mode<synchronous>, transform_indices = @transform_6, window_bounds = array<i64: 4, 1, 8>}, {pipeline_mode = #tpu.pipeline_mode<synchronous>, transform_indices = @transform_7, window_bounds = array<i64: 4, 32, 8>}, {pipeline_mode = #tpu.pipeline_mode<synchronous>, transform_indices = @transform_8, window_bounds = array<i64: 4, 1, 8>}, {pipeline_mode = #tpu.pipeline_mode<synchronous>, transform_indices = @transform_9, window_bounds = array<i64: 4, 8, 32>}, {pipeline_mode = #tpu.pipeline_mode<synchronous>, transform_indices = @transform_10, window_bounds = array<i64: 1, 32>}, {pipeline_mode = #tpu.pipeline_mode<synchronous>, transform_indices = @transform_11, window_bounds = array<i64: 32, 2048>}, {pipeline_mode = #tpu.pipeline_mode<synchronous>, transform_indices = @transform_12, window_bounds = array<i64: 1, 2048>}, {pipeline_mode = #tpu.pipeline_mode<synchronous>, transform_indices = @transform_13, window_bounds = array<i64: 2048, 32>}, {pipeline_mode = #tpu.pipeline_mode<synchronous>, transform_indices = @transform_14, window_bounds = array<i64: 1, 32>}, {pipeline_mode = #tpu.pipeline_mode<synchronous>, transform_indices = @transform_15, window_bounds = array<i64: 1, 32>}, {pipeline_mode = #tpu.pipeline_mode<synchronous>, transform_indices = @transform_16, window_bounds = array<i64: 1, 32>}, {pipeline_mode = #tpu.pipeline_mode<synchronous>, transform_indices = @transform_17, window_bounds = array<i64: 1, 32>}, {pipeline_mode = #tpu.pipeline_mode<synchronous>, transform_indices = @transform_18, window_bounds = array<i64: 1, 32>}, {transform_indices = @transform_19, window_bounds = array<i64: 1, 8, 32>}]} {
    %c0 = arith.constant 0 : index
    %c0_0 = arith.constant 0 : index
    %c0_1 = arith.constant 0 : index
    %0 = vector.load %arg3[%c0, %c0_0, %c0_1] : memref<1x8x32xf32, #tpu.memory_space<vmem>>, vector<1x8x32xf32>
    %1 = vector.shape_cast %0 : vector<1x8x32xf32> to vector<8x32xf32>
    %c0_i32 = arith.constant 0 : i32
    %2 = arith.cmpi eq, %arg2, %c0_i32 : i32
    %3 = arith.extui %2 : i1 to i32
    %c0_i32_2 = arith.constant 0 : i32
    %4 = arith.cmpi ne, %3, %c0_i32_2 : i32
    scf.if %4 {
      %cst_52 = arith.constant 0xFF800000 : f32
      %59 = vector.broadcast %cst_52 : f32 to vector<4x8x1xf32>
      %c0_53 = arith.constant 0 : index
      %c0_54 = arith.constant 0 : index
      %c0_55 = arith.constant 0 : index
      %60 = vector.load %arg24[%c0_53, %c0_54, %c0_55] : memref<4x8x1xf32, #tpu.memory_space<vmem>>, vector<4x8x1xf32>
      tpu.vector_store %arg24[%c0_53, %c0_54, %c0_55], %59 {strides = array<i32>} : memref<4x8x1xf32, #tpu.memory_space<vmem>>, vector<4x8x1xf32>,
      %cst_56 = arith.constant 0.000000e+00 : f32
      %61 = vector.broadcast %cst_56 : f32 to vector<4x8x1xf32>
      %c0_57 = arith.constant 0 : index
      %c0_58 = arith.constant 0 : index
      %c0_59 = arith.constant 0 : index
      %62 = vector.load %arg25[%c0_57, %c0_58, %c0_59] : memref<4x8x1xf32, #tpu.memory_space<vmem>>, vector<4x8x1xf32>
      tpu.vector_store %arg25[%c0_57, %c0_58, %c0_59], %61 {strides = array<i32>} : memref<4x8x1xf32, #tpu.memory_space<vmem>>, vector<4x8x1xf32>,
      %cst_60 = arith.constant 0.000000e+00 : f32
      %63 = vector.broadcast %cst_60 : f32 to vector<4x8x8xf32>
      %c0_61 = arith.constant 0 : index
      %c0_62 = arith.constant 0 : index
      %c0_63 = arith.constant 0 : index
      %64 = vector.load %arg26[%c0_61, %c0_62, %c0_63] : memref<4x8x8xf32, #tpu.memory_space<vmem>>, vector<4x8x8xf32>
      tpu.vector_store %arg26[%c0_61, %c0_62, %c0_63], %63 {strides = array<i32>} : memref<4x8x8xf32, #tpu.memory_space<vmem>>, vector<4x8x8xf32>,
      %65 = vector.shape_cast %1 : vector<8x32xf32> to vector<1x8x32xf32>
      %66 = vector.shape_cast %65 : vector<1x8x32xf32> to vector<1x8x32xf32>
      %67 = vector.broadcast %66 : vector<1x8x32xf32> to vector<4x8x32xf32>
      %c0_64 = arith.constant 0 : index
      %c0_65 = arith.constant 0 : index
      %c0_66 = arith.constant 0 : index
      %68 = vector.load %arg6[%c0_64, %c0_65, %c0_66] : memref<4x32x8xf32, #tpu.memory_space<vmem>>, vector<4x32x8xf32>
      "tpu.trace_start"() <{level = 10 : i32, message = "hsd,hdk->hsk"}> : () -> ()
      %cst_67 = arith.constant dense<0.000000e+00> : vector<4x8x8xf32>
      %69 = tpu.matmul %67, %68, %cst_67 {dimension_numbers = #tpu.dot_dimension_numbers<[2], [1], [1], [2], [0, 0, 0, 1, 1, 2], [0], [0]>} : vector<4x8x32xf32>, vector<4x32x8xf32>, vector<4x8x8xf32> -> vector<4x8x8xf32>
      "tpu.trace_stop"() : () -> ()
      %c0_68 = arith.constant 0 : index
      %c0_69 = arith.constant 0 : index
      %c0_70 = arith.constant 0 : index
      %70 = vector.load %arg7[%c0_68, %c0_69, %c0_70] : memref<4x1x8xf32, #tpu.memory_space<vmem>>, vector<4x1x8xf32>
      %71 = vector.broadcast %70 : vector<4x1x8xf32> to vector<4x8x8xf32>
      %72 = arith.addf %69, %71 : vector<4x8x8xf32>
      %c0_71 = arith.constant 0 : index
      %c0_72 = arith.constant 0 : index
      %c0_73 = arith.constant 0 : index
      %73 = vector.load %arg23[%c0_71, %c0_72, %c0_73] : memref<4x8x8xf32, #tpu.memory_space<vmem>>, vector<4x8x8xf32>
      tpu.vector_store %arg23[%c0_71, %c0_72, %c0_73], %72 {strides = array<i32>} : memref<4x8x8xf32, #tpu.memory_space<vmem>>, vector<4x8x8xf32>,
    } else {
    }
    %c0_3 = arith.constant 0 : index
    %c0_4 = arith.constant 0 : index
    %c0_5 = arith.constant 0 : index
    %5 = vector.load %arg4[%c0_3, %c0_4, %c0_5] : memref<1x8x32xf32, #tpu.memory_space<vmem>>, vector<1x8x32xf32>
    %6 = vector.shape_cast %5 : vector<1x8x32xf32> to vector<8x32xf32>
    %7 = vector.shape_cast %6 : vector<8x32xf32> to vector<1x8x32xf32>
    %8 = vector.shape_cast %7 : vector<1x8x32xf32> to vector<1x8x32xf32>
    %9 = vector.broadcast %8 : vector<1x8x32xf32> to vector<4x8x32xf32>
    %c0_6 = arith.constant 0 : index
    %c0_7 = arith.constant 0 : index
    %c0_8 = arith.constant 0 : index
    %10 = vector.load %arg8[%c0_6, %c0_7, %c0_8] : memref<4x32x8xf32, #tpu.memory_space<vmem>>, vector<4x32x8xf32>
    "tpu.trace_start"() <{level = 10 : i32, message = "hsd,hdk->hsk"}> : () -> ()
    %cst = arith.constant dense<0.000000e+00> : vector<4x8x8xf32>
    %11 = tpu.matmul %9, %10, %cst {dimension_numbers = #tpu.dot_dimension_numbers<[2], [1], [1], [2], [0, 0, 0, 1, 1, 2], [0], [0]>} : vector<4x8x32xf32>, vector<4x32x8xf32>, vector<4x8x8xf32> -> vector<4x8x8xf32>
    "tpu.trace_stop"() : () -> ()
    %c0_9 = arith.constant 0 : index
    %c0_10 = arith.constant 0 : index
    %c0_11 = arith.constant 0 : index
    %12 = vector.load %arg9[%c0_9, %c0_10, %c0_11] : memref<4x1x8xf32, #tpu.memory_space<vmem>>, vector<4x1x8xf32>
    %13 = vector.broadcast %12 : vector<4x1x8xf32> to vector<4x8x8xf32>
    %14 = arith.addf %11, %13 : vector<4x8x8xf32>
    %c0_12 = arith.constant 0 : index
    %c0_13 = arith.constant 0 : index
    %c0_14 = arith.constant 0 : index
    %15 = vector.load %arg10[%c0_12, %c0_13, %c0_14] : memref<4x32x8xf32, #tpu.memory_space<vmem>>, vector<4x32x8xf32>
    "tpu.trace_start"() <{level = 10 : i32, message = "hsd,hdk->hsk"}> : () -> ()
    %cst_15 = arith.constant dense<0.000000e+00> : vector<4x8x8xf32>
    %16 = tpu.matmul %9, %15, %cst_15 {dimension_numbers = #tpu.dot_dimension_numbers<[2], [1], [1], [2], [0, 0, 0, 1, 1, 2], [0], [0]>} : vector<4x8x32xf32>, vector<4x32x8xf32>, vector<4x8x8xf32> -> vector<4x8x8xf32>
    "tpu.trace_stop"() : () -> ()
    %c0_16 = arith.constant 0 : index
    %c0_17 = arith.constant 0 : index
    %c0_18 = arith.constant 0 : index
    %17 = vector.load %arg11[%c0_16, %c0_17, %c0_18] : memref<4x1x8xf32, #tpu.memory_space<vmem>>, vector<4x1x8xf32>
    %18 = vector.broadcast %17 : vector<4x1x8xf32> to vector<4x8x8xf32>
    %19 = arith.addf %16, %18 : vector<4x8x8xf32>
    %c0_19 = arith.constant 0 : index
    %c0_20 = arith.constant 0 : index
    %c0_21 = arith.constant 0 : index
    %20 = vector.load %arg23[%c0_19, %c0_20, %c0_21] : memref<4x8x8xf32, #tpu.memory_space<vmem>>, vector<4x8x8xf32>
    "tpu.trace_start"() <{level = 10 : i32, message = "hqd,hkd->hqk"}> : () -> ()
    %cst_22 = arith.constant dense<0.000000e+00> : vector<4x8x8xf32>
    %21 = tpu.matmul %20, %14, %cst_22 {dimension_numbers = #tpu.dot_dimension_numbers<[2], [2], [1], [1], [0, 0, 0, 1, 1, 1], [0], [0]>} : vector<4x8x8xf32>, vector<4x8x8xf32>, vector<4x8x8xf32> -> vector<4x8x8xf32>
    "tpu.trace_stop"() : () -> ()
    %cst_23 = arith.constant 0.353553385 : f32
    %22 = vector.broadcast %cst_23 : f32 to vector<4x8x8xf32>
    %23 = arith.mulf %21, %22 : vector<4x8x8xf32>
    %c0_24 = arith.constant 0 : index
    %c0_25 = arith.constant 0 : index
    %c0_26 = arith.constant 0 : index
    %24 = vector.load %arg5[%c0_24, %c0_25, %c0_26] : memref<1x8x8xi8, #tpu.memory_space<vmem>>, vector<1x8x8xi8>
    %25 = vector.shape_cast %24 : vector<1x8x8xi8> to vector<8x8xi8>
    %26 = arith.sitofp %25 : vector<8x8xi8> to vector<8x8xf32>
    %27 = vector.shape_cast %26 : vector<8x8xf32> to vector<1x8x8xf32>
    %cst_27 = arith.constant 0.000000e+00 : f32
    %28 = vector.broadcast %cst_27 : f32 to vector<1x8x8xf32>
    %29 = arith.cmpf oeq, %27, %28 : vector<1x8x8xf32>
    %cst_28 = arith.constant -1.000000e+09 : f32
    %30 = vector.shape_cast %29 : vector<1x8x8xi1> to vector<1x8x8xi1>
    %31 = vector.broadcast %30 : vector<1x8x8xi1> to vector<4x8x8xi1>
    %32 = vector.broadcast %cst_28 : f32 to vector<4x8x8xf32>
    %33 = arith.select %31, %32, %23 : vector<4x8x8xi1>, vector<4x8x8xf32>
    %c0_29 = arith.constant 0 : index
    %c0_30 = arith.constant 0 : index
    %c0_31 = arith.constant 0 : index
    %34 = vector.load %arg24[%c0_29, %c0_30, %c0_31] : memref<4x8x1xf32, #tpu.memory_space<vmem>>, vector<4x8x1xf32>
    %cst_32 = arith.constant dense<0xFF800000> : vector<4x8xf32>
    %35 = vector.multi_reduction <maximumf>, %33, %cst_32 [2] : vector<4x8x8xf32> to vector<4x8xf32>
    %36 = vector.shape_cast %35 : vector<4x8xf32> to vector<4x8x1xf32>
    %37 = arith.maximumf %34, %36 : vector<4x8x1xf32>
    %38 = arith.subf %34, %37 : vector<4x8x1xf32>
    %39 = math.exp %38 : vector<4x8x1xf32>
    %40 = vector.broadcast %37 : vector<4x8x1xf32> to vector<4x8x8xf32>
    %41 = arith.subf %33, %40 : vector<4x8x8xf32>
    %42 = math.exp %41 : vector<4x8x8xf32>
    %c0_33 = arith.constant 0 : index
    %c0_34 = arith.constant 0 : index
    %c0_35 = arith.constant 0 : index
    %43 = vector.load %arg25[%c0_33, %c0_34, %c0_35] : memref<4x8x1xf32, #tpu.memory_space<vmem>>, vector<4x8x1xf32>
    %44 = arith.mulf %39, %43 : vector<4x8x1xf32>
    %cst_36 = arith.constant dense<0.000000e+00> : vector<4x8xf32>
    %45 = vector.multi_reduction <add>, %42, %cst_36 [2] : vector<4x8x8xf32> to vector<4x8xf32>
    %46 = vector.shape_cast %45 : vector<4x8xf32> to vector<4x8x1xf32>
    %47 = arith.addf %44, %46 : vector<4x8x1xf32>
    %c0_37 = arith.constant 0 : index
    %c0_38 = arith.constant 0 : index
    %c0_39 = arith.constant 0 : index
    %48 = vector.load %arg25[%c0_37, %c0_38, %c0_39] : memref<4x8x1xf32, #tpu.memory_space<vmem>>, vector<4x8x1xf32>
    tpu.vector_store %arg25[%c0_37, %c0_38, %c0_39], %47 {strides = array<i32>} : memref<4x8x1xf32, #tpu.memory_space<vmem>>, vector<4x8x1xf32>,
    %c0_40 = arith.constant 0 : index
    %c0_41 = arith.constant 0 : index
    %c0_42 = arith.constant 0 : index
    %49 = vector.load %arg26[%c0_40, %c0_41, %c0_42] : memref<4x8x8xf32, #tpu.memory_space<vmem>>, vector<4x8x8xf32>
    %50 = vector.broadcast %39 : vector<4x8x1xf32> to vector<4x8x8xf32>
    %51 = arith.mulf %50, %49 : vector<4x8x8xf32>
    "tpu.trace_start"() <{level = 10 : i32, message = "hqk,hkd->hqd"}> : () -> ()
    %cst_43 = arith.constant dense<0.000000e+00> : vector<4x8x8xf32>
    %52 = tpu.matmul %42, %19, %cst_43 {dimension_numbers = #tpu.dot_dimension_numbers<[2], [1], [1], [2], [0, 0, 0, 1, 1, 2], [0], [0]>} : vector<4x8x8xf32>, vector<4x8x8xf32>, vector<4x8x8xf32> -> vector<4x8x8xf32>
    "tpu.trace_stop"() : () -> ()
    %53 = arith.addf %51, %52 : vector<4x8x8xf32>
    %c0_44 = arith.constant 0 : index
    %c0_45 = arith.constant 0 : index
    %c0_46 = arith.constant 0 : index
    %54 = vector.load %arg26[%c0_44, %c0_45, %c0_46] : memref<4x8x8xf32, #tpu.memory_space<vmem>>, vector<4x8x8xf32>
    tpu.vector_store %arg26[%c0_44, %c0_45, %c0_46], %53 {strides = array<i32>} : memref<4x8x8xf32, #tpu.memory_space<vmem>>, vector<4x8x8xf32>,
    %c0_47 = arith.constant 0 : index
    %c0_48 = arith.constant 0 : index
    %c0_49 = arith.constant 0 : index
    %55 = vector.load %arg24[%c0_47, %c0_48, %c0_49] : memref<4x8x1xf32, #tpu.memory_space<vmem>>, vector<4x8x1xf32>
    tpu.vector_store %arg24[%c0_47, %c0_48, %c0_49], %37 {strides = array<i32>} : memref<4x8x1xf32, #tpu.memory_space<vmem>>, vector<4x8x1xf32>,
    %c0_i32_50 = arith.constant 0 : i32
    %56 = arith.cmpi eq, %arg2, %c0_i32_50 : i32
    %57 = arith.extui %56 : i1 to i32
    %c0_i32_51 = arith.constant 0 : i32
    %58 = arith.cmpi ne, %57, %c0_i32_51 : i32
    scf.if %58 {
      %c0_52 = arith.constant 0 : index
      %c0_53 = arith.constant 0 : index
      %c0_54 = arith.constant 0 : index
      %59 = vector.load %arg25[%c0_52, %c0_53, %c0_54] : memref<4x8x1xf32, #tpu.memory_space<vmem>>, vector<4x8x1xf32>
      %60 = tpu.reciprocal %59 : vector<4x8x1xf32> -> vector<4x8x1xf32>
      %c0_55 = arith.constant 0 : index
      %c0_56 = arith.constant 0 : index
      %c0_57 = arith.constant 0 : index
      %61 = vector.load %arg26[%c0_55, %c0_56, %c0_57] : memref<4x8x8xf32, #tpu.memory_space<vmem>>, vector<4x8x8xf32>
      %62 = vector.broadcast %60 : vector<4x8x1xf32> to vector<4x8x8xf32>
      %63 = arith.mulf %61, %62 : vector<4x8x8xf32>
      %c0_58 = arith.constant 0 : index
      %c0_59 = arith.constant 0 : index
      %c0_60 = arith.constant 0 : index
      %64 = vector.load %arg12[%c0_58, %c0_59, %c0_60] : memref<4x8x32xf32, #tpu.memory_space<vmem>>, vector<4x8x32xf32>
      "tpu.trace_start"() <{level = 10 : i32, message = "hqd,hdo->hqo"}> : () -> ()
      %cst_61 = arith.constant dense<0.000000e+00> : vector<4x8x32xf32>
      %65 = tpu.matmul %63, %64, %cst_61 {dimension_numbers = #tpu.dot_dimension_numbers<[2], [1], [1], [2], [0, 0, 0, 1, 1, 2], [0], [0]>} : vector<4x8x8xf32>, vector<4x8x32xf32>, vector<4x8x32xf32> -> vector<4x8x32xf32>
      "tpu.trace_stop"() : () -> ()
      %cst_62 = arith.constant dense<0.000000e+00> : vector<8x32xf32>
      %66 = vector.multi_reduction <add>, %65, %cst_62 [0] : vector<4x8x32xf32> to vector<8x32xf32>
      %c0_63 = arith.constant 0 : index
      %c0_64 = arith.constant 0 : index
      %67 = vector.load %arg13[%c0_63, %c0_64] : memref<1x32xf32, #tpu.memory_space<vmem>>, vector<1x32xf32>
      %68 = vector.broadcast %67 : vector<1x32xf32> to vector<8x32xf32>
      %69 = arith.addf %66, %68 : vector<8x32xf32>
      %70 = arith.addf %1, %69 : vector<8x32xf32>
      %c0_65 = arith.constant 0 : index
      %c0_66 = arith.constant 0 : index
      %71 = vector.load %arg18[%c0_65, %c0_66] : memref<1x32xf32, #tpu.memory_space<vmem>>, vector<1x32xf32>
      %c0_67 = arith.constant 0 : index
      %c0_68 = arith.constant 0 : index
      %72 = vector.load %arg19[%c0_67, %c0_68] : memref<1x32xf32, #tpu.memory_space<vmem>>, vector<1x32xf32>
      %cst_69 = arith.constant dense<0.000000e+00> : vector<8xf32>
      %73 = vector.multi_reduction <add>, %70, %cst_69 [1] : vector<8x32xf32> to vector<8xf32>
      %74 = vector.shape_cast %73 : vector<8xf32> to vector<8x1xf32>
      %cst_70 = arith.constant 3.200000e+01 : f32
      %75 = vector.broadcast %cst_70 : f32 to vector<8x1xf32>
      %76 = arith.divf %74, %75 : vector<8x1xf32>
      %77 = vector.broadcast %76 : vector<8x1xf32> to vector<8x32xf32>
      %78 = arith.subf %70, %77 : vector<8x32xf32>
      %79 = arith.mulf %78, %78 : vector<8x32xf32>
      %cst_71 = arith.constant dense<0.000000e+00> : vector<8xf32>
      %80 = vector.multi_reduction <add>, %79, %cst_71 [1] : vector<8x32xf32> to vector<8xf32>
      %81 = vector.shape_cast %80 : vector<8xf32> to vector<8x1xf32>
      %cst_72 = arith.constant 3.200000e+01 : f32
      %82 = vector.broadcast %cst_72 : f32 to vector<8x1xf32>
      %83 = arith.divf %81, %82 : vector<8x1xf32>
      %84 = vector.broadcast %76 : vector<8x1xf32> to vector<8x32xf32>
      %85 = arith.subf %70, %84 : vector<8x32xf32>
      %cst_73 = arith.constant 9.99999974E-6 : f32
      %86 = vector.broadcast %cst_73 : f32 to vector<8x1xf32>
      %87 = arith.addf %83, %86 : vector<8x1xf32>
      %88 = math.rsqrt %87 : vector<8x1xf32>
      %89 = vector.broadcast %88 : vector<8x1xf32> to vector<8x32xf32>
      %90 = arith.mulf %85, %89 : vector<8x32xf32>
      %91 = vector.broadcast %71 : vector<1x32xf32> to vector<8x32xf32>
      %92 = arith.mulf %90, %91 : vector<8x32xf32>
      %93 = vector.broadcast %72 : vector<1x32xf32> to vector<8x32xf32>
      %94 = arith.addf %92, %93 : vector<8x32xf32>
      %c0_74 = arith.constant 0 : index
      %c0_75 = arith.constant 0 : index
      %95 = vector.load %arg14[%c0_74, %c0_75] : memref<32x2048xf32, #tpu.memory_space<vmem>>, vector<32x2048xf32>
      %cst_76 = arith.constant dense<0.000000e+00> : vector<8x2048xf32>
      %96 = tpu.matmul %94, %95, %cst_76 {dimension_numbers = #tpu.dot_dimension_numbers<[1], [0], [0], [1], [0, 0, 1, 1], [], []>} : vector<8x32xf32>, vector<32x2048xf32>, vector<8x2048xf32> -> vector<8x2048xf32>
      %c0_77 = arith.constant 0 : index
      %c0_78 = arith.constant 0 : index
      %97 = vector.load %arg15[%c0_77, %c0_78] : memref<1x2048xf32, #tpu.memory_space<vmem>>, vector<1x2048xf32>
      %98 = vector.broadcast %97 : vector<1x2048xf32> to vector<8x2048xf32>
      %99 = arith.addf %96, %98 : vector<8x2048xf32>
      %cst_79 = arith.constant 0.000000e+00 : f32
      %100 = vector.broadcast %cst_79 : f32 to vector<8x2048xf32>
      %101 = arith.maximumf %99, %100 : vector<8x2048xf32>
      %c0_80 = arith.constant 0 : index
      %c0_81 = arith.constant 0 : index
      %102 = vector.load %arg16[%c0_80, %c0_81] : memref<2048x32xf32, #tpu.memory_space<vmem>>, vector<2048x32xf32>
      %cst_82 = arith.constant dense<0.000000e+00> : vector<8x32xf32>
      %103 = tpu.matmul %101, %102, %cst_82 {dimension_numbers = #tpu.dot_dimension_numbers<[1], [0], [0], [1], [0, 0, 1, 1], [], []>} : vector<8x2048xf32>, vector<2048x32xf32>, vector<8x32xf32> -> vector<8x32xf32>
      %c0_83 = arith.constant 0 : index
      %c0_84 = arith.constant 0 : index
      %104 = vector.load %arg17[%c0_83, %c0_84] : memref<1x32xf32, #tpu.memory_space<vmem>>, vector<1x32xf32>
      %105 = vector.broadcast %104 : vector<1x32xf32> to vector<8x32xf32>
      %106 = arith.addf %103, %105 : vector<8x32xf32>
      %107 = arith.addf %94, %106 : vector<8x32xf32>
      %c0_85 = arith.constant 0 : index
      %c0_86 = arith.constant 0 : index
      %108 = vector.load %arg20[%c0_85, %c0_86] : memref<1x32xf32, #tpu.memory_space<vmem>>, vector<1x32xf32>
      %c0_87 = arith.constant 0 : index
      %c0_88 = arith.constant 0 : index
      %109 = vector.load %arg21[%c0_87, %c0_88] : memref<1x32xf32, #tpu.memory_space<vmem>>, vector<1x32xf32>
      %cst_89 = arith.constant dense<0.000000e+00> : vector<8xf32>
      %110 = vector.multi_reduction <add>, %107, %cst_89 [1] : vector<8x32xf32> to vector<8xf32>
      %111 = vector.shape_cast %110 : vector<8xf32> to vector<8x1xf32>
      %cst_90 = arith.constant 3.200000e+01 : f32
      %112 = vector.broadcast %cst_90 : f32 to vector<8x1xf32>
      %113 = arith.divf %111, %112 : vector<8x1xf32>
      %114 = vector.broadcast %113 : vector<8x1xf32> to vector<8x32xf32>
      %115 = arith.subf %107, %114 : vector<8x32xf32>
      %116 = arith.mulf %115, %115 : vector<8x32xf32>
      %cst_91 = arith.constant dense<0.000000e+00> : vector<8xf32>
      %117 = vector.multi_reduction <add>, %116, %cst_91 [1] : vector<8x32xf32> to vector<8xf32>
      %118 = vector.shape_cast %117 : vector<8xf32> to vector<8x1xf32>
      %cst_92 = arith.constant 3.200000e+01 : f32
      %119 = vector.broadcast %cst_92 : f32 to vector<8x1xf32>
      %120 = arith.divf %118, %119 : vector<8x1xf32>
      %121 = vector.broadcast %113 : vector<8x1xf32> to vector<8x32xf32>
      %122 = arith.subf %107, %121 : vector<8x32xf32>
      %cst_93 = arith.constant 9.99999974E-6 : f32
      %123 = vector.broadcast %cst_93 : f32 to vector<8x1xf32>
      %124 = arith.addf %120, %123 : vector<8x1xf32>
      %125 = math.rsqrt %124 : vector<8x1xf32>
      %126 = vector.broadcast %125 : vector<8x1xf32> to vector<8x32xf32>
      %127 = arith.mulf %122, %126 : vector<8x32xf32>
      %128 = vector.broadcast %108 : vector<1x32xf32> to vector<8x32xf32>
      %129 = arith.mulf %127, %128 : vector<8x32xf32>
      %130 = vector.broadcast %109 : vector<1x32xf32> to vector<8x32xf32>
      %131 = arith.addf %129, %130 : vector<8x32xf32>
      %c0_94 = arith.constant 0 : index
      %c0_95 = arith.constant 0 : index
      %c0_96 = arith.constant 0 : index
      %132 = vector.load %arg22[%c0_94, %c0_95, %c0_96] : memref<1x8x32xf32, #tpu.memory_space<vmem>>, vector<1x8x32xf32>
      %133 = vector.shape_cast %132 : vector<1x8x32xf32> to vector<8x32xf32>
      %134 = vector.shape_cast %131 : vector<8x32xf32> to vector<1x8x32xf32>
      tpu.vector_store %arg22[%c0_94, %c0_95, %c0_96], %134 {strides = array<i32>} : memref<1x8x32xf32, #tpu.memory_space<vmem>>, vector<1x8x32xf32>,
    } else {
    }
    return
  }
  func.func @transform_0(%arg0: i32, %arg1: i32, %arg2: i32) -> (i32, i32, i32) {
    %c0_i32 = arith.constant 0 : i32
    %c0_i32_0 = arith.constant 0 : i32
    return %arg0, %arg1, %c0_i32 : i32, i32, i32
  }
  func.func @transform_1(%arg0: i32, %arg1: i32, %arg2: i32) -> (i32, i32, i32) {
    %c0_i32 = arith.constant 0 : i32
    %c0_i32_0 = arith.constant 0 : i32
    return %arg0, %arg2, %c0_i32 : i32, i32, i32
  }
  func.func @transform_2(%arg0: i32, %arg1: i32, %arg2: i32) -> (i32, i32, i32) {
    %c0_i32 = arith.constant 0 : i32
    return %arg0, %arg1, %arg2 : i32, i32, i32
  }
  func.func @transform_3(%arg0: i32, %arg1: i32, %arg2: i32) -> (i32, i32, i32) {
    %c0_i32 = arith.constant 0 : i32
    %c0_i32_0 = arith.constant 0 : i32
    %c0_i32_1 = arith.constant 0 : i32
    %c0_i32_2 = arith.constant 0 : i32
    return %c0_i32, %c0_i32_0, %c0_i32_1 : i32, i32, i32
  }
  func.func @transform_4(%arg0: i32, %arg1: i32, %arg2: i32) -> (i32, i32, i32) {
    %c0_i32 = arith.constant 0 : i32
    %c0_i32_0 = arith.constant 0 : i32
    %c0_i32_1 = arith.constant 0 : i32
    %c0_i32_2 = arith.constant 0 : i32
    return %c0_i32, %c0_i32_0, %c0_i32_1 : i32, i32, i32
  }
  func.func @transform_5(%arg0: i32, %arg1: i32, %arg2: i32) -> (i32, i32, i32) {
    %c0_i32 = arith.constant 0 : i32
    %c0_i32_0 = arith.constant 0 : i32
    %c0_i32_1 = arith.constant 0 : i32
    %c0_i32_2 = arith.constant 0 : i32
    return %c0_i32, %c0_i32_0, %c0_i32_1 : i32, i32, i32
  }
  func.func @transform_6(%arg0: i32, %arg1: i32, %arg2: i32) -> (i32, i32, i32) {
    %c0_i32 = arith.constant 0 : i32
    %c0_i32_0 = arith.constant 0 : i32
    %c0_i32_1 = arith.constant 0 : i32
    %c0_i32_2 = arith.constant 0 : i32
    return %c0_i32, %c0_i32_0, %c0_i32_1 : i32, i32, i32
  }
  func.func @transform_7(%arg0: i32, %arg1: i32, %arg2: i32) -> (i32, i32, i32) {
    %c0_i32 = arith.constant 0 : i32
    %c0_i32_0 = arith.constant 0 : i32
    %c0_i32_1 = arith.constant 0 : i32
    %c0_i32_2 = arith.constant 0 : i32
    return %c0_i32, %c0_i32_0, %c0_i32_1 : i32, i32, i32
  }
  func.func @transform_8(%arg0: i32, %arg1: i32, %arg2: i32) -> (i32, i32, i32) {
    %c0_i32 = arith.constant 0 : i32
    %c0_i32_0 = arith.constant 0 : i32
    %c0_i32_1 = arith.constant 0 : i32
    %c0_i32_2 = arith.constant 0 : i32
    return %c0_i32, %c0_i32_0, %c0_i32_1 : i32, i32, i32
  }
  func.func @transform_9(%arg0: i32, %arg1: i32, %arg2: i32) -> (i32, i32, i32) {
    %c0_i32 = arith.constant 0 : i32
    %c0_i32_0 = arith.constant 0 : i32
    %c0_i32_1 = arith.constant 0 : i32
    %c0_i32_2 = arith.constant 0 : i32
    return %c0_i32, %c0_i32_0, %c0_i32_1 : i32, i32, i32
  }
  func.func @transform_10(%arg0: i32, %arg1: i32, %arg2: i32) -> (i32, i32) {
    %c0_i32 = arith.constant 0 : i32
    %c0_i32_0 = arith.constant 0 : i32
    %c0_i32_1 = arith.constant 0 : i32
    return %c0_i32, %c0_i32_0 : i32, i32
  }
  func.func @transform_11(%arg0: i32, %arg1: i32, %arg2: i32) -> (i32, i32) {
    %c0_i32 = arith.constant 0 : i32
    %c0_i32_0 = arith.constant 0 : i32
    %c0_i32_1 = arith.constant 0 : i32
    return %c0_i32, %c0_i32_0 : i32, i32
  }
  func.func @transform_12(%arg0: i32, %arg1: i32, %arg2: i32) -> (i32, i32) {
    %c0_i32 = arith.constant 0 : i32
    %c0_i32_0 = arith.constant 0 : i32
    %c0_i32_1 = arith.constant 0 : i32
    return %c0_i32, %c0_i32_0 : i32, i32
  }
  func.func @transform_13(%arg0: i32, %arg1: i32, %arg2: i32) -> (i32, i32) {
    %c0_i32 = arith.constant 0 : i32
    %c0_i32_0 = arith.constant 0 : i32
    %c0_i32_1 = arith.constant 0 : i32
    return %c0_i32, %c0_i32_0 : i32, i32
  }
  func.func @transform_14(%arg0: i32, %arg1: i32, %arg2: i32) -> (i32, i32) {
    %c0_i32 = arith.constant 0 : i32
    %c0_i32_0 = arith.constant 0 : i32
    %c0_i32_1 = arith.constant 0 : i32
    return %c0_i32, %c0_i32_0 : i32, i32
  }
  func.func @transform_15(%arg0: i32, %arg1: i32, %arg2: i32) -> (i32, i32) {
    %c0_i32 = arith.constant 0 : i32
    %c0_i32_0 = arith.constant 0 : i32
    %c0_i32_1 = arith.constant 0 : i32
    return %c0_i32, %c0_i32_0 : i32, i32
  }
  func.func @transform_16(%arg0: i32, %arg1: i32, %arg2: i32) -> (i32, i32) {
    %c0_i32 = arith.constant 0 : i32
    %c0_i32_0 = arith.constant 0 : i32
    %c0_i32_1 = arith.constant 0 : i32
    return %c0_i32, %c0_i32_0 : i32, i32
  }
  func.func @transform_17(%arg0: i32, %arg1: i32, %arg2: i32) -> (i32, i32) {
    %c0_i32 = arith.constant 0 : i32
    %c0_i32_0 = arith.constant 0 : i32
    %c0_i32_1 = arith.constant 0 : i32
    return %c0_i32, %c0_i32_0 : i32, i32
  }
  func.func @transform_18(%arg0: i32, %arg1: i32, %arg2: i32) -> (i32, i32) {
    %c0_i32 = arith.constant 0 : i32
    %c0_i32_0 = arith.constant 0 : i32
    %c0_i32_1 = arith.constant 0 : i32
    return %c0_i32, %c0_i32_0 : i32, i32
  }
  func.func @transform_19(%arg0: i32, %arg1: i32, %arg2: i32) -> (i32, i32, i32) {
    %c0_i32 = arith.constant 0 : i32
    %c0_i32_0 = arith.constant 0 : i32
    return %arg0, %arg1, %c0_i32 : i32, i32, i32
  }
}

module attributes {stable_mosaic.version = 11 : i64} {
  func.func @_encoder_layer_kernel(%arg0: i32, %arg1: i32, %arg2: i32, %arg3: memref<1x8x32xf32, #tpu.memory_space<vmem>>, %arg4: memref<1x8x32xf32, #tpu.memory_space<vmem>>, %arg5: memref<1x8x8xi8, #tpu.memory_space<vmem>>, %arg6: memref<4x32x8xf32, #tpu.memory_space<vmem>>, %arg7: memref<4x1x8xf32, #tpu.memory_space<vmem>>, %arg8: memref<4x32x8xf32, #tpu.memory_space<vmem>>, %arg9: memref<4x1x8xf32, #tpu.memory_space<vmem>>, %arg10: memref<4x32x8xf32, #tpu.memory_space<vmem>>, %arg11: memref<4x1x8xf32, #tpu.memory_space<vmem>>, %arg12: memref<4x8x32xf32, #tpu.memory_space<vmem>>, %arg13: memref<1x32xf32, #tpu.memory_space<vmem>>, %arg14: memref<32x2048xf32, #tpu.memory_space<vmem>>, %arg15: memref<1x2048xf32, #tpu.memory_space<vmem>>, %arg16: memref<2048x32xf32, #tpu.memory_space<vmem>>, %arg17: memref<1x32xf32, #tpu.memory_space<vmem>>, %arg18: memref<1x32xf32, #tpu.memory_space<vmem>>, %arg19: memref<1x32xf32, #tpu.memory_space<vmem>>, %arg20: memref<1x32xf32, #tpu.memory_space<vmem>>, %arg21: memref<1x32xf32, #tpu.memory_space<vmem>>, %arg22: memref<1x8x32xf32, #tpu.memory_space<vmem>>, %arg23: memref<4x8x8xf32, #tpu.memory_space<vmem>>, %arg24: memref<4x8x1xf32, #tpu.memory_space<vmem>>, %arg25: memref<4x8x1xf32, #tpu.memory_space<vmem>>, %arg26: memref<4x8x8xf32, #tpu.memory_space<vmem>>) attributes {dimension_semantics = [#tpu.dimension_semantics<parallel>, #tpu.dimension_semantics<parallel>, #tpu.dimension_semantics<arbitrary>], iteration_bounds = array<i64: 2, 1, 1>, scalar_prefetch = 0 : i64, scratch_operands = 4 : i64, tpu.core_type = #tpu.core_type<tc>, window_params = [{transform_indices = @transform_0, window_bounds = array<i64: 1, 8, 32>}, {transform_indices = @transform_1, window_bounds = array<i64: 1, 8, 32>}, {transform_indices = @transform_2, window_bounds = array<i64: 1, 8, 8>}, {pipeline_mode = #tpu.pipeline_mode<synchronous>, transform_indices = @transform_3, window_bounds = array<i64: 4, 32, 8>}, {pipeline_mode = #tpu.pipeline_mode<synchronous>, transform_indices = @transform_4, window_bounds = array<i64: 4, 1, 8>}, {pipeline_mode = #tpu.pipeline_mode<synchronous>, transform_indices = @transform_5, window_bounds = array<i64: 4, 32, 8>}, {pipeline_mode = #tpu.pipeline_mode<synchronous>, transform_indices = @transform_6, window_bounds = array<i64: 4, 1, 8>}, {pipeline_mode = #tpu.pipeline_mode<synchronous>, transform_indices = @transform_7, window_bounds = array<i64: 4, 32, 8>}, {pipeline_mode = #tpu.pipeline_mode<synchronous>, transform_indices = @transform_8, window_bounds = array<i64: 4, 1, 8>}, {pipeline_mode = #tpu.pipeline_mode<synchronous>, transform_indices = @transform_9, window_bounds = array<i64: 4, 8, 32>}, {pipeline_mode = #tpu.pipeline_mode<synchronous>, transform_indices = @transform_10, window_bounds = array<i64: 1, 32>}, {pipeline_mode = #tpu.pipeline_mode<synchronous>, transform_indices = @transform_11, window_bounds = array<i64: 32, 2048>}, {pipeline_mode = #tpu.pipeline_mode<synchronous>, transform_indices = @transform_12, window_bounds = array<i64: 1, 2048>}, {pipeline_mode = #tpu.pipeline_mode<synchronous>, transform_indices = @transform_13, window_bounds = array<i64: 2048, 32>}, {pipeline_mode = #tpu.pipeline_mode<synchronous>, transform_indices = @transform_14, window_bounds = array<i64: 1, 32>}, {pipeline_mode = #tpu.pipeline_mode<synchronous>, transform_indices = @transform_15, window_bounds = array<i64: 1, 32>}, {pipeline_mode = #tpu.pipeline_mode<synchronous>, transform_indices = @transform_16, window_bounds = array<i64: 1, 32>}, {pipeline_mode = #tpu.pipeline_mode<synchronous>, transform_indices = @transform_17, window_bounds = array<i64: 1, 32>}, {pipeline_mode = #tpu.pipeline_mode<synchronous>, transform_indices = @transform_18, window_bounds = array<i64: 1, 32>}, {transform_indices = @transform_19, window_bounds = array<i64: 1, 8, 32>}]} {
    %c0 = arith.constant 0 : index
    %c0_0 = arith.constant 0 : index
    %c0_1 = arith.constant 0 : index
    %0 = vector.load %arg3[%c0, %c0_0, %c0_1] : memref<1x8x32xf32, #tpu.memory_space<vmem>>, vector<1x8x32xf32>
    %1 = vector.shape_cast %0 : vector<1x8x32xf32> to vector<8x32xf32>
    %c0_i32 = arith.constant 0 : i32
    %2 = arith.cmpi eq, %arg2, %c0_i32 : i32
    %3 = arith.extui %2 : i1 to i32
    %c0_i32_2 = arith.constant 0 : i32
    %4 = arith.cmpi ne, %3, %c0_i32_2 : i32
    scf.if %4 {
      %cst_52 = arith.constant 0xFF800000 : f32
      %59 = vector.broadcast %cst_52 : f32 to vector<4x8x1xf32>
      %c0_53 = arith.constant 0 : index
      %c0_54 = arith.constant 0 : index
      %c0_55 = arith.constant 0 : index
      %60 = vector.load %arg24[%c0_53, %c0_54, %c0_55] : memref<4x8x1xf32, #tpu.memory_space<vmem>>, vector<4x8x1xf32>
      tpu.vector_store %arg24[%c0_53, %c0_54, %c0_55], %59 {strides = array<i32>} : memref<4x8x1xf32, #tpu.memory_space<vmem>>, vector<4x8x1xf32>,
      %cst_56 = arith.constant 0.000000e+00 : f32
      %61 = vector.broadcast %cst_56 : f32 to vector<4x8x1xf32>
      %c0_57 = arith.constant 0 : index
      %c0_58 = arith.constant 0 : index
      %c0_59 = arith.constant 0 : index
      %62 = vector.load %arg25[%c0_57, %c0_58, %c0_59] : memref<4x8x1xf32, #tpu.memory_space<vmem>>, vector<4x8x1xf32>
      tpu.vector_store %arg25[%c0_57, %c0_58, %c0_59], %61 {strides = array<i32>} : memref<4x8x1xf32, #tpu.memory_space<vmem>>, vector<4x8x1xf32>,
      %cst_60 = arith.constant 0.000000e+00 : f32
      %63 = vector.broadcast %cst_60 : f32 to vector<4x8x8xf32>
      %c0_61 = arith.constant 0 : index
      %c0_62 = arith.constant 0 : index
      %c0_63 = arith.constant 0 : index
      %64 = vector.load %arg26[%c0_61, %c0_62, %c0_63] : memref<4x8x8xf32, #tpu.memory_space<vmem>>, vector<4x8x8xf32>
      tpu.vector_store %arg26[%c0_61, %c0_62, %c0_63], %63 {strides = array<i32>} : memref<4x8x8xf32, #tpu.memory_space<vmem>>, vector<4x8x8xf32>,
      %65 = vector.shape_cast %1 : vector<8x32xf32> to vector<1x8x32xf32>
      %66 = vector.shape_cast %65 : vector<1x8x32xf32> to vector<1x8x32xf32>
      %67 = vector.broadcast %66 : vector<1x8x32xf32> to vector<4x8x32xf32>
      %c0_64 = arith.constant 0 : index
      %c0_65 = arith.constant 0 : index
      %c0_66 = arith.constant 0 : index
      %68 = vector.load %arg6[%c0_64, %c0_65, %c0_66] : memref<4x32x8xf32, #tpu.memory_space<vmem>>, vector<4x32x8xf32>
      "tpu.trace_start"() <{level = 10 : i32, message = "hsd,hdk->hsk"}> : () -> ()
      %cst_67 = arith.constant dense<0.000000e+00> : vector<4x8x8xf32>
      %69 = tpu.matmul %67, %68, %cst_67 {dimension_numbers = #tpu.dot_dimension_numbers<[2], [1], [1], [2], [0, 0, 0, 1, 1, 2], [0], [0]>} : vector<4x8x32xf32>, vector<4x32x8xf32>, vector<4x8x8xf32> -> vector<4x8x8xf32>
      "tpu.trace_stop"() : () -> ()
      %c0_68 = arith.constant 0 : index
      %c0_69 = arith.constant 0 : index
      %c0_70 = arith.constant 0 : index
      %70 = vector.load %arg7[%c0_68, %c0_69, %c0_70] : memref<4x1x8xf32, #tpu.memory_space<vmem>>, vector<4x1x8xf32>
      %71 = vector.broadcast %70 : vector<4x1x8xf32> to vector<4x8x8xf32>
      %72 = arith.addf %69, %71 : vector<4x8x8xf32>
      %c0_71 = arith.constant 0 : index
      %c0_72 = arith.constant 0 : index
      %c0_73 = arith.constant 0 : index
      %73 = vector.load %arg23[%c0_71, %c0_72, %c0_73] : memref<4x8x8xf32, #tpu.memory_space<vmem>>, vector<4x8x8xf32>
      tpu.vector_store %arg23[%c0_71, %c0_72, %c0_73], %72 {strides = array<i32>} : memref<4x8x8xf32, #tpu.memory_space<vmem>>, vector<4x8x8xf32>,
    } else {
    }
    %c0_3 = arith.constant 0 : index
    %c0_4 = arith.constant 0 : index
    %c0_5 = arith.constant 0 : index
    %5 = vector.load %arg4[%c0_3, %c0_4, %c0_5] : memref<1x8x32xf32, #tpu.memory_space<vmem>>, vector<1x8x32xf32>
    %6 = vector.shape_cast %5 : vector<1x8x32xf32> to vector<8x32xf32>
    %7 = vector.shape_cast %6 : vector<8x32xf32> to vector<1x8x32xf32>
    %8 = vector.shape_cast %7 : vector<1x8x32xf32> to vector<1x8x32xf32>
    %9 = vector.broadcast %8 : vector<1x8x32xf32> to vector<4x8x32xf32>
    %c0_6 = arith.constant 0 : index
    %c0_7 = arith.constant 0 : index
    %c0_8 = arith.constant 0 : index
    %10 = vector.load %arg8[%c0_6, %c0_7, %c0_8] : memref<4x32x8xf32, #tpu.memory_space<vmem>>, vector<4x32x8xf32>
    "tpu.trace_start"() <{level = 10 : i32, message = "hsd,hdk->hsk"}> : () -> ()
    %cst = arith.constant dense<0.000000e+00> : vector<4x8x8xf32>
    %11 = tpu.matmul %9, %10, %cst {dimension_numbers = #tpu.dot_dimension_numbers<[2], [1], [1], [2], [0, 0, 0, 1, 1, 2], [0], [0]>} : vector<4x8x32xf32>, vector<4x32x8xf32>, vector<4x8x8xf32> -> vector<4x8x8xf32>
    "tpu.trace_stop"() : () -> ()
    %c0_9 = arith.constant 0 : index
    %c0_10 = arith.constant 0 : index
    %c0_11 = arith.constant 0 : index
    %12 = vector.load %arg9[%c0_9, %c0_10, %c0_11] : memref<4x1x8xf32, #tpu.memory_space<vmem>>, vector<4x1x8xf32>
    %13 = vector.broadcast %12 : vector<4x1x8xf32> to vector<4x8x8xf32>
    %14 = arith.addf %11, %13 : vector<4x8x8xf32>
    %c0_12 = arith.constant 0 : index
    %c0_13 = arith.constant 0 : index
    %c0_14 = arith.constant 0 : index
    %15 = vector.load %arg10[%c0_12, %c0_13, %c0_14] : memref<4x32x8xf32, #tpu.memory_space<vmem>>, vector<4x32x8xf32>
    "tpu.trace_start"() <{level = 10 : i32, message = "hsd,hdk->hsk"}> : () -> ()
    %cst_15 = arith.constant dense<0.000000e+00> : vector<4x8x8xf32>
    %16 = tpu.matmul %9, %15, %cst_15 {dimension_numbers = #tpu.dot_dimension_numbers<[2], [1], [1], [2], [0, 0, 0, 1, 1, 2], [0], [0]>} : vector<4x8x32xf32>, vector<4x32x8xf32>, vector<4x8x8xf32> -> vector<4x8x8xf32>
    "tpu.trace_stop"() : () -> ()
    %c0_16 = arith.constant 0 : index
    %c0_17 = arith.constant 0 : index
    %c0_18 = arith.constant 0 : index
    %17 = vector.load %arg11[%c0_16, %c0_17, %c0_18] : memref<4x1x8xf32, #tpu.memory_space<vmem>>, vector<4x1x8xf32>
    %18 = vector.broadcast %17 : vector<4x1x8xf32> to vector<4x8x8xf32>
    %19 = arith.addf %16, %18 : vector<4x8x8xf32>
    %c0_19 = arith.constant 0 : index
    %c0_20 = arith.constant 0 : index
    %c0_21 = arith.constant 0 : index
    %20 = vector.load %arg23[%c0_19, %c0_20, %c0_21] : memref<4x8x8xf32, #tpu.memory_space<vmem>>, vector<4x8x8xf32>
    "tpu.trace_start"() <{level = 10 : i32, message = "hqd,hkd->hqk"}> : () -> ()
    %cst_22 = arith.constant dense<0.000000e+00> : vector<4x8x8xf32>
    %21 = tpu.matmul %20, %14, %cst_22 {dimension_numbers = #tpu.dot_dimension_numbers<[2], [2], [1], [1], [0, 0, 0, 1, 1, 1], [0], [0]>} : vector<4x8x8xf32>, vector<4x8x8xf32>, vector<4x8x8xf32> -> vector<4x8x8xf32>
    "tpu.trace_stop"() : () -> ()
    %cst_23 = arith.constant 0.353553385 : f32
    %22 = vector.broadcast %cst_23 : f32 to vector<4x8x8xf32>
    %23 = arith.mulf %21, %22 : vector<4x8x8xf32>
    %c0_24 = arith.constant 0 : index
    %c0_25 = arith.constant 0 : index
    %c0_26 = arith.constant 0 : index
    %24 = vector.load %arg5[%c0_24, %c0_25, %c0_26] : memref<1x8x8xi8, #tpu.memory_space<vmem>>, vector<1x8x8xi8>
    %25 = vector.shape_cast %24 : vector<1x8x8xi8> to vector<8x8xi8>
    %26 = arith.sitofp %25 : vector<8x8xi8> to vector<8x8xf32>
    %27 = vector.shape_cast %26 : vector<8x8xf32> to vector<1x8x8xf32>
    %cst_27 = arith.constant 0.000000e+00 : f32
    %28 = vector.broadcast %cst_27 : f32 to vector<1x8x8xf32>
    %29 = arith.cmpf oeq, %27, %28 : vector<1x8x8xf32>
    %cst_28 = arith.constant -1.000000e+09 : f32
    %30 = vector.shape_cast %29 : vector<1x8x8xi1> to vector<1x8x8xi1>
    %31 = vector.broadcast %30 : vector<1x8x8xi1> to vector<4x8x8xi1>
    %32 = vector.broadcast %cst_28 : f32 to vector<4x8x8xf32>
    %33 = arith.select %31, %32, %23 : vector<4x8x8xi1>, vector<4x8x8xf32>
    %c0_29 = arith.constant 0 : index
    %c0_30 = arith.constant 0 : index
    %c0_31 = arith.constant 0 : index
    %34 = vector.load %arg24[%c0_29, %c0_30, %c0_31] : memref<4x8x1xf32, #tpu.memory_space<vmem>>, vector<4x8x1xf32>
    %cst_32 = arith.constant dense<0xFF800000> : vector<4x8xf32>
    %35 = vector.multi_reduction <maximumf>, %33, %cst_32 [2] : vector<4x8x8xf32> to vector<4x8xf32>
    %36 = vector.shape_cast %35 : vector<4x8xf32> to vector<4x8x1xf32>
    %37 = arith.maximumf %34, %36 : vector<4x8x1xf32>
    %38 = arith.subf %34, %37 : vector<4x8x1xf32>
    %39 = math.exp %38 : vector<4x8x1xf32>
    %40 = vector.broadcast %37 : vector<4x8x1xf32> to vector<4x8x8xf32>
    %41 = arith.subf %33, %40 : vector<4x8x8xf32>
    %42 = math.exp %41 : vector<4x8x8xf32>
    %c0_33 = arith.constant 0 : index
    %c0_34 = arith.constant 0 : index
    %c0_35 = arith.constant 0 : index
    %43 = vector.load %arg25[%c0_33, %c0_34, %c0_35] : memref<4x8x1xf32, #tpu.memory_space<vmem>>, vector<4x8x1xf32>
    %44 = arith.mulf %39, %43 : vector<4x8x1xf32>
    %cst_36 = arith.constant dense<0.000000e+00> : vector<4x8xf32>
    %45 = vector.multi_reduction <add>, %42, %cst_36 [2] : vector<4x8x8xf32> to vector<4x8xf32>
    %46 = vector.shape_cast %45 : vector<4x8xf32> to vector<4x8x1xf32>
    %47 = arith.addf %44, %46 : vector<4x8x1xf32>
    %c0_37 = arith.constant 0 : index
    %c0_38 = arith.constant 0 : index
    %c0_39 = arith.constant 0 : index
    %48 = vector.load %arg25[%c0_37, %c0_38, %c0_39] : memref<4x8x1xf32, #tpu.memory_space<vmem>>, vector<4x8x1xf32>
    tpu.vector_store %arg25[%c0_37, %c0_38, %c0_39], %47 {strides = array<i32>} : memref<4x8x1xf32, #tpu.memory_space<vmem>>, vector<4x8x1xf32>,
    %c0_40 = arith.constant 0 : index
    %c0_41 = arith.constant 0 : index
    %c0_42 = arith.constant 0 : index
    %49 = vector.load %arg26[%c0_40, %c0_41, %c0_42] : memref<4x8x8xf32, #tpu.memory_space<vmem>>, vector<4x8x8xf32>
    %50 = vector.broadcast %39 : vector<4x8x1xf32> to vector<4x8x8xf32>
    %51 = arith.mulf %50, %49 : vector<4x8x8xf32>
    "tpu.trace_start"() <{level = 10 : i32, message = "hqk,hkd->hqd"}> : () -> ()
    %cst_43 = arith.constant dense<0.000000e+00> : vector<4x8x8xf32>
    %52 = tpu.matmul %42, %19, %cst_43 {dimension_numbers = #tpu.dot_dimension_numbers<[2], [1], [1], [2], [0, 0, 0, 1, 1, 2], [0], [0]>} : vector<4x8x8xf32>, vector<4x8x8xf32>, vector<4x8x8xf32> -> vector<4x8x8xf32>
    "tpu.trace_stop"() : () -> ()
    %53 = arith.addf %51, %52 : vector<4x8x8xf32>
    %c0_44 = arith.constant 0 : index
    %c0_45 = arith.constant 0 : index
    %c0_46 = arith.constant 0 : index
    %54 = vector.load %arg26[%c0_44, %c0_45, %c0_46] : memref<4x8x8xf32, #tpu.memory_space<vmem>>, vector<4x8x8xf32>
    tpu.vector_store %arg26[%c0_44, %c0_45, %c0_46], %53 {strides = array<i32>} : memref<4x8x8xf32, #tpu.memory_space<vmem>>, vector<4x8x8xf32>,
    %c0_47 = arith.constant 0 : index
    %c0_48 = arith.constant 0 : index
    %c0_49 = arith.constant 0 : index
    %55 = vector.load %arg24[%c0_47, %c0_48, %c0_49] : memref<4x8x1xf32, #tpu.memory_space<vmem>>, vector<4x8x1xf32>
    tpu.vector_store %arg24[%c0_47, %c0_48, %c0_49], %37 {strides = array<i32>} : memref<4x8x1xf32, #tpu.memory_space<vmem>>, vector<4x8x1xf32>,
    %c0_i32_50 = arith.constant 0 : i32
    %56 = arith.cmpi eq, %arg2, %c0_i32_50 : i32
    %57 = arith.extui %56 : i1 to i32
    %c0_i32_51 = arith.constant 0 : i32
    %58 = arith.cmpi ne, %57, %c0_i32_51 : i32
    scf.if %58 {
      %c0_52 = arith.constant 0 : index
      %c0_53 = arith.constant 0 : index
      %c0_54 = arith.constant 0 : index
      %59 = vector.load %arg25[%c0_52, %c0_53, %c0_54] : memref<4x8x1xf32, #tpu.memory_space<vmem>>, vector<4x8x1xf32>
      %60 = tpu.reciprocal %59 : vector<4x8x1xf32> -> vector<4x8x1xf32>
      %c0_55 = arith.constant 0 : index
      %c0_56 = arith.constant 0 : index
      %c0_57 = arith.constant 0 : index
      %61 = vector.load %arg26[%c0_55, %c0_56, %c0_57] : memref<4x8x8xf32, #tpu.memory_space<vmem>>, vector<4x8x8xf32>
      %62 = vector.broadcast %60 : vector<4x8x1xf32> to vector<4x8x8xf32>
      %63 = arith.mulf %61, %62 : vector<4x8x8xf32>
      %c0_58 = arith.constant 0 : index
      %c0_59 = arith.constant 0 : index
      %c0_60 = arith.constant 0 : index
      %64 = vector.load %arg12[%c0_58, %c0_59, %c0_60] : memref<4x8x32xf32, #tpu.memory_space<vmem>>, vector<4x8x32xf32>
      "tpu.trace_start"() <{level = 10 : i32, message = "hqd,hdo->hqo"}> : () -> ()
      %cst_61 = arith.constant dense<0.000000e+00> : vector<4x8x32xf32>
      %65 = tpu.matmul %63, %64, %cst_61 {dimension_numbers = #tpu.dot_dimension_numbers<[2], [1], [1], [2], [0, 0, 0, 1, 1, 2], [0], [0]>} : vector<4x8x8xf32>, vector<4x8x32xf32>, vector<4x8x32xf32> -> vector<4x8x32xf32>
      "tpu.trace_stop"() : () -> ()
      %cst_62 = arith.constant dense<0.000000e+00> : vector<8x32xf32>
      %66 = vector.multi_reduction <add>, %65, %cst_62 [0] : vector<4x8x32xf32> to vector<8x32xf32>
      %c0_63 = arith.constant 0 : index
      %c0_64 = arith.constant 0 : index
      %67 = vector.load %arg13[%c0_63, %c0_64] : memref<1x32xf32, #tpu.memory_space<vmem>>, vector<1x32xf32>
      %68 = vector.broadcast %67 : vector<1x32xf32> to vector<8x32xf32>
      %69 = arith.addf %66, %68 : vector<8x32xf32>
      %70 = arith.addf %1, %69 : vector<8x32xf32>
      %c0_65 = arith.constant 0 : index
      %c0_66 = arith.constant 0 : index
      %71 = vector.load %arg18[%c0_65, %c0_66] : memref<1x32xf32, #tpu.memory_space<vmem>>, vector<1x32xf32>
      %c0_67 = arith.constant 0 : index
      %c0_68 = arith.constant 0 : index
      %72 = vector.load %arg19[%c0_67, %c0_68] : memref<1x32xf32, #tpu.memory_space<vmem>>, vector<1x32xf32>
      %cst_69 = arith.constant dense<0.000000e+00> : vector<8xf32>
      %73 = vector.multi_reduction <add>, %70, %cst_69 [1] : vector<8x32xf32> to vector<8xf32>
      %74 = vector.shape_cast %73 : vector<8xf32> to vector<8x1xf32>
      %cst_70 = arith.constant 3.200000e+01 : f32
      %75 = vector.broadcast %cst_70 : f32 to vector<8x1xf32>
      %76 = arith.divf %74, %75 : vector<8x1xf32>
      %77 = vector.broadcast %76 : vector<8x1xf32> to vector<8x32xf32>
      %78 = arith.subf %70, %77 : vector<8x32xf32>
      %79 = arith.mulf %78, %78 : vector<8x32xf32>
      %cst_71 = arith.constant dense<0.000000e+00> : vector<8xf32>
      %80 = vector.multi_reduction <add>, %79, %cst_71 [1] : vector<8x32xf32> to vector<8xf32>
      %81 = vector.shape_cast %80 : vector<8xf32> to vector<8x1xf32>
      %cst_72 = arith.constant 3.200000e+01 : f32
      %82 = vector.broadcast %cst_72 : f32 to vector<8x1xf32>
      %83 = arith.divf %81, %82 : vector<8x1xf32>
      %84 = vector.broadcast %76 : vector<8x1xf32> to vector<8x32xf32>
      %85 = arith.subf %70, %84 : vector<8x32xf32>
      %cst_73 = arith.constant 9.99999974E-6 : f32
      %86 = vector.broadcast %cst_73 : f32 to vector<8x1xf32>
      %87 = arith.addf %83, %86 : vector<8x1xf32>
      %88 = math.rsqrt %87 : vector<8x1xf32>
      %89 = vector.broadcast %88 : vector<8x1xf32> to vector<8x32xf32>
      %90 = arith.mulf %85, %89 : vector<8x32xf32>
      %91 = vector.broadcast %71 : vector<1x32xf32> to vector<8x32xf32>
      %92 = arith.mulf %90, %91 : vector<8x32xf32>
      %93 = vector.broadcast %72 : vector<1x32xf32> to vector<8x32xf32>
      %94 = arith.addf %92, %93 : vector<8x32xf32>
      %c0_74 = arith.constant 0 : index
      %c0_75 = arith.constant 0 : index
      %95 = vector.load %arg14[%c0_74, %c0_75] : memref<32x2048xf32, #tpu.memory_space<vmem>>, vector<32x2048xf32>
      %cst_76 = arith.constant dense<0.000000e+00> : vector<8x2048xf32>
      %96 = tpu.matmul %94, %95, %cst_76 {dimension_numbers = #tpu.dot_dimension_numbers<[1], [0], [0], [1], [0, 0, 1, 1], [], []>} : vector<8x32xf32>, vector<32x2048xf32>, vector<8x2048xf32> -> vector<8x2048xf32>
      %c0_77 = arith.constant 0 : index
      %c0_78 = arith.constant 0 : index
      %97 = vector.load %arg15[%c0_77, %c0_78] : memref<1x2048xf32, #tpu.memory_space<vmem>>, vector<1x2048xf32>
      %98 = vector.broadcast %97 : vector<1x2048xf32> to vector<8x2048xf32>
      %99 = arith.addf %96, %98 : vector<8x2048xf32>
      %cst_79 = arith.constant 0.000000e+00 : f32
      %100 = vector.broadcast %cst_79 : f32 to vector<8x2048xf32>
      %101 = arith.maximumf %99, %100 : vector<8x2048xf32>
      %c0_80 = arith.constant 0 : index
      %c0_81 = arith.constant 0 : index
      %102 = vector.load %arg16[%c0_80, %c0_81] : memref<2048x32xf32, #tpu.memory_space<vmem>>, vector<2048x32xf32>
      %cst_82 = arith.constant dense<0.000000e+00> : vector<8x32xf32>
      %103 = tpu.matmul %101, %102, %cst_82 {dimension_numbers = #tpu.dot_dimension_numbers<[1], [0], [0], [1], [0, 0, 1, 1], [], []>} : vector<8x2048xf32>, vector<2048x32xf32>, vector<8x32xf32> -> vector<8x32xf32>
      %c0_83 = arith.constant 0 : index
      %c0_84 = arith.constant 0 : index
      %104 = vector.load %arg17[%c0_83, %c0_84] : memref<1x32xf32, #tpu.memory_space<vmem>>, vector<1x32xf32>
      %105 = vector.broadcast %104 : vector<1x32xf32> to vector<8x32xf32>
      %106 = arith.addf %103, %105 : vector<8x32xf32>
      %107 = arith.addf %94, %106 : vector<8x32xf32>
      %c0_85 = arith.constant 0 : index
      %c0_86 = arith.constant 0 : index
      %108 = vector.load %arg20[%c0_85, %c0_86] : memref<1x32xf32, #tpu.memory_space<vmem>>, vector<1x32xf32>
      %c0_87 = arith.constant 0 : index
      %c0_88 = arith.constant 0 : index
      %109 = vector.load %arg21[%c0_87, %c0_88] : memref<1x32xf32, #tpu.memory_space<vmem>>, vector<1x32xf32>
      %cst_89 = arith.constant dense<0.000000e+00> : vector<8xf32>
      %110 = vector.multi_reduction <add>, %107, %cst_89 [1] : vector<8x32xf32> to vector<8xf32>
      %111 = vector.shape_cast %110 : vector<8xf32> to vector<8x1xf32>
      %cst_90 = arith.constant 3.200000e+01 : f32
      %112 = vector.broadcast %cst_90 : f32 to vector<8x1xf32>
      %113 = arith.divf %111, %112 : vector<8x1xf32>
      %114 = vector.broadcast %113 : vector<8x1xf32> to vector<8x32xf32>
      %115 = arith.subf %107, %114 : vector<8x32xf32>
      %116 = arith.mulf %115, %115 : vector<8x32xf32>
      %cst_91 = arith.constant dense<0.000000e+00> : vector<8xf32>
      %117 = vector.multi_reduction <add>, %116, %cst_91 [1] : vector<8x32xf32> to vector<8xf32>
      %118 = vector.shape_cast %117 : vector<8xf32> to vector<8x1xf32>
      %cst_92 = arith.constant 3.200000e+01 : f32
      %119 = vector.broadcast %cst_92 : f32 to vector<8x1xf32>
      %120 = arith.divf %118, %119 : vector<8x1xf32>
      %121 = vector.broadcast %113 : vector<8x1xf32> to vector<8x32xf32>
      %122 = arith.subf %107, %121 : vector<8x32xf32>
      %cst_93 = arith.constant 9.99999974E-6 : f32
      %123 = vector.broadcast %cst_93 : f32 to vector<8x1xf32>
      %124 = arith.addf %120, %123 : vector<8x1xf32>
      %125 = math.rsqrt %124 : vector<8x1xf32>
      %126 = vector.broadcast %125 : vector<8x1xf32> to vector<8x32xf32>
      %127 = arith.mulf %122, %126 : vector<8x32xf32>
      %128 = vector.broadcast %108 : vector<1x32xf32> to vector<8x32xf32>
      %129 = arith.mulf %127, %128 : vector<8x32xf32>
      %130 = vector.broadcast %109 : vector<1x32xf32> to vector<8x32xf32>
      %131 = arith.addf %129, %130 : vector<8x32xf32>
      %c0_94 = arith.constant 0 : index
      %c0_95 = arith.constant 0 : index
      %c0_96 = arith.constant 0 : index
      %132 = vector.load %arg22[%c0_94, %c0_95, %c0_96] : memref<1x8x32xf32, #tpu.memory_space<vmem>>, vector<1x8x32xf32>
      %133 = vector.shape_cast %132 : vector<1x8x32xf32> to vector<8x32xf32>
      %134 = vector.shape_cast %131 : vector<8x32xf32> to vector<1x8x32xf32>
      tpu.vector_store %arg22[%c0_94, %c0_95, %c0_96], %134 {strides = array<i32>} : memref<1x8x32xf32, #tpu.memory_space<vmem>>, vector<1x8x32xf32>,
    } else {
    }
    return
  }
  func.func @transform_0(%arg0: i32, %arg1: i32, %arg2: i32) -> (i32, i32, i32) {
    %c0_i32 = arith.constant 0 : i32
    %c0_i32_0 = arith.constant 0 : i32
    return %arg0, %arg1, %c0_i32 : i32, i32, i32
  }
  func.func @transform_1(%arg0: i32, %arg1: i32, %arg2: i32) -> (i32, i32, i32) {
    %c0_i32 = arith.constant 0 : i32
    %c0_i32_0 = arith.constant 0 : i32
    return %arg0, %arg2, %c0_i32 : i32, i32, i32
  }
  func.func @transform_2(%arg0: i32, %arg1: i32, %arg2: i32) -> (i32, i32, i32) {
    %c0_i32 = arith.constant 0 : i32
    return %arg0, %arg1, %arg2 : i32, i32, i32
  }
  func.func @transform_3(%arg0: i32, %arg1: i32, %arg2: i32) -> (i32, i32, i32) {
    %c0_i32 = arith.constant 0 : i32
    %c0_i32_0 = arith.constant 0 : i32
    %c0_i32_1 = arith.constant 0 : i32
    %c0_i32_2 = arith.constant 0 : i32
    return %c0_i32, %c0_i32_0, %c0_i32_1 : i32, i32, i32
  }
  func.func @transform_4(%arg0: i32, %arg1: i32, %arg2: i32) -> (i32, i32, i32) {
    %c0_i32 = arith.constant 0 : i32
    %c0_i32_0 = arith.constant 0 : i32
    %c0_i32_1 = arith.constant 0 : i32
    %c0_i32_2 = arith.constant 0 : i32
    return %c0_i32, %c0_i32_0, %c0_i32_1 : i32, i32, i32
  }
  func.func @transform_5(%arg0: i32, %arg1: i32, %arg2: i32) -> (i32, i32, i32) {
    %c0_i32 = arith.constant 0 : i32
    %c0_i32_0 = arith.constant 0 : i32
    %c0_i32_1 = arith.constant 0 : i32
    %c0_i32_2 = arith.constant 0 : i32
    return %c0_i32, %c0_i32_0, %c0_i32_1 : i32, i32, i32
  }
  func.func @transform_6(%arg0: i32, %arg1: i32, %arg2: i32) -> (i32, i32, i32) {
    %c0_i32 = arith.constant 0 : i32
    %c0_i32_0 = arith.constant 0 : i32
    %c0_i32_1 = arith.constant 0 : i32
    %c0_i32_2 = arith.constant 0 : i32
    return %c0_i32, %c0_i32_0, %c0_i32_1 : i32, i32, i32
  }
  func.func @transform_7(%arg0: i32, %arg1: i32, %arg2: i32) -> (i32, i32, i32) {
    %c0_i32 = arith.constant 0 : i32
    %c0_i32_0 = arith.constant 0 : i32
    %c0_i32_1 = arith.constant 0 : i32
    %c0_i32_2 = arith.constant 0 : i32
    return %c0_i32, %c0_i32_0, %c0_i32_1 : i32, i32, i32
  }
  func.func @transform_8(%arg0: i32, %arg1: i32, %arg2: i32) -> (i32, i32, i32) {
    %c0_i32 = arith.constant 0 : i32
    %c0_i32_0 = arith.constant 0 : i32
    %c0_i32_1 = arith.constant 0 : i32
    %c0_i32_2 = arith.constant 0 : i32
    return %c0_i32, %c0_i32_0, %c0_i32_1 : i32, i32, i32
  }
  func.func @transform_9(%arg0: i32, %arg1: i32, %arg2: i32) -> (i32, i32, i32) {
    %c0_i32 = arith.constant 0 : i32
    %c0_i32_0 = arith.constant 0 : i32
    %c0_i32_1 = arith.constant 0 : i32
    %c0_i32_2 = arith.constant 0 : i32
    return %c0_i32, %c0_i32_0, %c0_i32_1 : i32, i32, i32
  }
  func.func @transform_10(%arg0: i32, %arg1: i32, %arg2: i32) -> (i32, i32) {
    %c0_i32 = arith.constant 0 : i32
    %c0_i32_0 = arith.constant 0 : i32
    %c0_i32_1 = arith.constant 0 : i32
    return %c0_i32, %c0_i32_0 : i32, i32
  }
  func.func @transform_11(%arg0: i32, %arg1: i32, %arg2: i32) -> (i32, i32) {
    %c0_i32 = arith.constant 0 : i32
    %c0_i32_0 = arith.constant 0 : i32
    %c0_i32_1 = arith.constant 0 : i32
    return %c0_i32, %c0_i32_0 : i32, i32
  }
  func.func @transform_12(%arg0: i32, %arg1: i32, %arg2: i32) -> (i32, i32) {
    %c0_i32 = arith.constant 0 : i32
    %c0_i32_0 = arith.constant 0 : i32
    %c0_i32_1 = arith.constant 0 : i32
    return %c0_i32, %c0_i32_0 : i32, i32
  }
  func.func @transform_13(%arg0: i32, %arg1: i32, %arg2: i32) -> (i32, i32) {
    %c0_i32 = arith.constant 0 : i32
    %c0_i32_0 = arith.constant 0 : i32
    %c0_i32_1 = arith.constant 0 : i32
    return %c0_i32, %c0_i32_0 : i32, i32
  }
  func.func @transform_14(%arg0: i32, %arg1: i32, %arg2: i32) -> (i32, i32) {
    %c0_i32 = arith.constant 0 : i32
    %c0_i32_0 = arith.constant 0 : i32
    %c0_i32_1 = arith.constant 0 : i32
    return %c0_i32, %c0_i32_0 : i32, i32
  }
  func.func @transform_15(%arg0: i32, %arg1: i32, %arg2: i32) -> (i32, i32) {
    %c0_i32 = arith.constant 0 : i32
    %c0_i32_0 = arith.constant 0 : i32
    %c0_i32_1 = arith.constant 0 : i32
    return %c0_i32, %c0_i32_0 : i32, i32
  }
  func.func @transform_16(%arg0: i32, %arg1: i32, %arg2: i32) -> (i32, i32) {
    %c0_i32 = arith.constant 0 : i32
    %c0_i32_0 = arith.constant 0 : i32
    %c0_i32_1 = arith.constant 0 : i32
    return %c0_i32, %c0_i32_0 : i32, i32
  }
  func.func @transform_17(%arg0: i32, %arg1: i32, %arg2: i32) -> (i32, i32) {
    %c0_i32 = arith.constant 0 : i32
    %c0_i32_0 = arith.constant 0 : i32
    %c0_i32_1 = arith.constant 0 : i32
    return %c0_i32, %c0_i32_0 : i32, i32
  }
  func.func @transform_18(%arg0: i32, %arg1: i32, %arg2: i32) -> (i32, i32) {
    %c0_i32 = arith.constant 0 : i32
    %c0_i32_0 = arith.constant 0 : i32
    %c0_i32_1 = arith.constant 0 : i32
    return %c0_i32, %c0_i32_0 : i32, i32
  }
  func.func @transform_19(%arg0: i32, %arg1: i32, %arg2: i32) -> (i32, i32, i32) {
    %c0_i32 = arith.constant 0 : i32
    %c0_i32_0 = arith.constant 0 : i32
    return %arg0, %arg1, %c0_i32 : i32, i32, i32
  }
}

</mosaic_0001>

<llo_original>
// kernel: tpu_custom_call.1
$region0: #{tpu_custom_call.1}
  #allocation0 [shape = 'u32[]', space=smem, size = 0x4, offset = 0x4, fixed_abs, tag = 'smem constant byte address 0x4 - core index']
  #allocation1 [shape = 'u32[72,128]{1,0:T(1,128)}', space=vmem, size = 0x9000, scoped, tag = 'internal scratch']
  #allocation2 [shape = 'f32[4,8,8]{2,1,0:T(8,128)}', space=vmem, size = 0x4000, scoped, tag = 'scratch operand']
  #allocation3 [shape = 'f32[4,8,1]{2,1,0:T(8,128)}', space=vmem, size = 0x4000, scoped, tag = 'scratch operand']
  #allocation4 [shape = 'f32[4,8,1]{2,1,0:T(8,128)}', space=vmem, size = 0x4000, scoped, tag = 'scratch operand']
  #allocation5 [shape = 'f32[4,8,8]{2,1,0:T(8,128)}', space=vmem, size = 0x4000, scoped, tag = 'scratch operand']
  %s0 = inlined_call_operand.vmem [shape: f32[2,8,32], index: 0, kind: input, shape index: {}]
  %s1 = inlined_call_operand.vmem [shape: f32[2,8,32], index: 1, kind: input, shape index: {}]
  %s2 = inlined_call_operand.vmem [shape: s8[2,8,8], index: 2, kind: input, shape index: {}]
  %s3 = inlined_call_operand.vmem [shape: f32[4,32,8], index: 3, kind: input, shape index: {}]
  %s4 = inlined_call_operand.vmem [shape: f32[4,1,8], index: 4, kind: input, shape index: {}]
  %s5 = inlined_call_operand.vmem [shape: f32[4,32,8], index: 5, kind: input, shape index: {}]
  %s6 = inlined_call_operand.vmem [shape: f32[4,1,8], index: 6, kind: input, shape index: {}]
  %s7 = inlined_call_operand.vmem [shape: f32[4,32,8], index: 7, kind: input, shape index: {}]
  %s8 = inlined_call_operand.vmem [shape: f32[4,1,8], index: 8, kind: input, shape index: {}]
  %s9 = inlined_call_operand.vmem [shape: f32[4,8,32], index: 9, kind: input, shape index: {}]
  %s10 = inlined_call_operand.vmem [shape: f32[1,32], index: 10, kind: input, shape index: {}]
  %s11 = inlined_call_operand.vmem [shape: f32[32,2048], index: 11, kind: input, shape index: {}]
  %s12 = inlined_call_operand.vmem [shape: f32[1,2048], index: 12, kind: input, shape index: {}]
  %s13 = inlined_call_operand.vmem [shape: f32[2048,32], index: 13, kind: input, shape index: {}]
  %s14 = inlined_call_operand.vmem [shape: f32[1,32], index: 14, kind: input, shape index: {}]
  %s15 = inlined_call_operand.vmem [shape: f32[1,32], index: 15, kind: input, shape index: {}]
  %s16 = inlined_call_operand.vmem [shape: f32[1,32], index: 16, kind: input, shape index: {}]
  %s17 = inlined_call_operand.vmem [shape: f32[1,32], index: 17, kind: input, shape index: {}]
  %s18 = inlined_call_operand.vmem [shape: f32[1,32], index: 18, kind: input, shape index: {}]
  %s19 = inlined_call_operand.hbm [shape: f32[2,8,32], index: 19, kind: output, shape index: {}]
  %s20 = sld [smem:[#allocation0]]
  $region117: #{tpu_custom_call.1} parent=0
    _
  %s22 = ssub.s32 1, %s20
  %s23 = scalar_select 0, %s22, %s20
  $region1: #{tpu_custom_call.1} parent=0
    #allocation6 [shape = 'u8[8192]{0}', space=vmem, size = 0x2000, scoped, tag = 'output window, operand 0']
    #allocation7 [shape = 's32[2]{0}', space=sflag, size = 0x8, scoped, tag = 'scoped memory for tpu_custom_call.1']
    %24 = vsyncpa [#allocation7], 0
    %s25 = scalar_lea.sflag [#allocation7], 1
    %26 = vsyncpa %s25, 0
    loop: start=0, step=1, limit=4
    $region2: #{tpu_custom_call.1} parent=1 // loop_pre_header
      _
    $region3: #{tpu_custom_call.1} parent=1 // loop_header
      %s28 = sphi 0, %s32
      %p29 = scmp.ge.s32.totalorder %s28, 4
      %s35 = sphi 0, %s54
      %s36 = sphi 0, %s50
      %s37 = sphi 0, %s46
      %s38 = sphi 0, %s35
      %s39 = sphi 0, %s36
      %s40 = sphi 0, %s37
      %s41 = sphi 0, %s38
      %s42 = sphi 0, %s39
      %s43 = sphi 0, %s40
      %s59 = sphi 0, %s61
      %s62 = sphi 0, %s59
      %s63 = sphi 0, %s62
      %s79 = sphi 0, %s63
      %s87 = sphi 0, %s89
      %s90 = sphi 0, %s87
      %s91 = sphi 0, %s90
      %s107 = sphi 0, %s91
      %s117 = sphi 0, %s119
      %s120 = sphi 0, %s117
      %s121 = sphi 0, %s120
      %s137 = sphi 0, %s121
      %s141 = sphi 0, %s141
      %s143 = sphi 0, %s141
      %s144 = sphi 0, %s143
      %s158 = sphi 0, %s144
      %s162 = sphi 0, %s162
      %s164 = sphi 0, %s162
      %s165 = sphi 0, %s164
      %s179 = sphi 0, %s165
      %s183 = sphi 0, %s183
      %s185 = sphi 0, %s183
      %s186 = sphi 0, %s185
      %s200 = sphi 0, %s186
      %s204 = sphi 0, %s204
      %s206 = sphi 0, %s204
      %s207 = sphi 0, %s206
      %s221 = sphi 0, %s207
      %s225 = sphi 0, %s225
      %s227 = sphi 0, %s225
      %s228 = sphi 0, %s227
      %s242 = sphi 0, %s228
      %s246 = sphi 0, %s246
      %s248 = sphi 0, %s246
      %s249 = sphi 0, %s248
      %s263 = sphi 0, %s249
      %s267 = sphi 0, %s267
      %s269 = sphi 0, %s267
      %s270 = sphi 0, %s269
      %s284 = sphi 0, %s270
      %s288 = sphi 0, %s288
      %s290 = sphi 0, %s288
      %s291 = sphi 0, %s290
      %s305 = sphi 0, %s291
      %s309 = sphi 0, %s309
      %s311 = sphi 0, %s309
      %s312 = sphi 0, %s311
      %s326 = sphi 0, %s312
      %s330 = sphi 0, %s330
      %s332 = sphi 0, %s330
      %s333 = sphi 0, %s332
      %s347 = sphi 0, %s333
      %s351 = sphi 0, %s351
      %s353 = sphi 0, %s351
      %s354 = sphi 0, %s353
      %s368 = sphi 0, %s354
      %s372 = sphi 0, %s372
      %s374 = sphi 0, %s372
      %s375 = sphi 0, %s374
      %s389 = sphi 0, %s375
      %s393 = sphi 0, %s393
      %s395 = sphi 0, %s393
      %s396 = sphi 0, %s395
      %s410 = sphi 0, %s396
      %s414 = sphi 0, %s414
      %s416 = sphi 0, %s414
      %s417 = sphi 0, %s416
      %s431 = sphi 0, %s417
      %s435 = sphi 0, %s435
      %s437 = sphi 0, %s435
      %s438 = sphi 0, %s437
      %s452 = sphi 0, %s438
      %s456 = sphi 0, %s456
      %s458 = sphi 0, %s456
      %s459 = sphi 0, %s458
      %s473 = sphi 0, %s459
      %s481 = sphi 0, %s483
      %s484 = sphi 0, %s481
      %s485 = sphi 0, %s484
      %s501 = sphi 0, %s485
    $region4: #{tpu_custom_call.1} parent=1 // loop_header_branch
      %31 = sbr.rel (%p29) target = $region8
    $region5: #{tpu_custom_call.1} parent=1 // loop_body
      %s33 = ssub.s32 %s28, 1
      %s34 = ssub.s32 %s28, 2
      %s44 = sadd.s32 1, %s37
      %p45 = scmp.ge.s32.totalorder %s44, 1
      %s46 = scalar_select %p45, 0, %s44
      %s47 = sadd.s32 1, %s36
      %s48 = scalar_select %p45, %s47, %s36
      %p49 = scmp.ge.s32.totalorder %s48, 1
      %s50 = scalar_select %p49, 0, %s48
      %s51 = sadd.s32 1, %s35
      %s52 = scalar_select %p49, %s51, %s35
      %p53 = scmp.ge.s32.totalorder %s52, 2
      %s54 = scalar_select %p53, 0, %s52
      %s55 = ssub.s32 %s35, %s54
      %s56 = ssub.s32 %s36, %s50
      %s57 = sor.u32 %s55, %s56
      %p58 = scmp.eq.s32.totalorder %s57, 0
      %s60 = sadd.s32 %s59, 1
      %s61 = scalar_select %p58, %s59, %s60
      %p64 = pneg %p58
      %p65 = scmp.eq.s32.totalorder %s28, 1
      %p66 = por %p64, %p65
      %p67 = scmp.ne.s32.totalorder %s59, %s62
      %p68 = scmp.eq.s32.totalorder %s28, 0
      %p69 = por %p67, %p68
      %p70 = scmp.ne.s32.totalorder %s59, %s62
      %p71 = scmp.eq.s32.totalorder %s33, 1
      %p72 = por %p70, %p71
      %p73 = scmp.ne.s32.totalorder %s62, %s63
      %p74 = scmp.eq.s32.totalorder %s33, 0
      %p75 = por %p73, %p74
      %p76 = scmp.ne.s32.totalorder %s62, %s63
      %p77 = scmp.eq.s32.totalorder %s34, 1
      %p78 = por %p76, %p77
      %p80 = scmp.ne.s32.totalorder %s63, %s79
      %p81 = scmp.eq.s32.totalorder %s34, 0
      %p82 = por %p80, %p81
      %s83 = ssub.s32 %s35, %s54
      %s84 = ssub.s32 %s37, %s46
      %s85 = sor.u32 %s83, %s84
      %p86 = scmp.eq.s32.totalorder %s85, 0
      %s88 = sadd.s32 %s87, 1
      %s89 = scalar_select %p86, %s87, %s88
      %p92 = pneg %p86
      %p93 = scmp.eq.s32.totalorder %s28, 1
      %p94 = por %p92, %p93
      %p95 = scmp.ne.s32.totalorder %s87, %s90
      %p96 = scmp.eq.s32.totalorder %s28, 0
      %p97 = por %p95, %p96
      %p98 = scmp.ne.s32.totalorder %s87, %s90
      %p99 = scmp.eq.s32.totalorder %s33, 1
      %p100 = por %p98, %p99
      %p101 = scmp.ne.s32.totalorder %s90, %s91
      %p102 = scmp.eq.s32.totalorder %s33, 0
      %p103 = por %p101, %p102
      %p104 = scmp.ne.s32.totalorder %s90, %s91
      %p105 = scmp.eq.s32.totalorder %s34, 1
      %p106 = por %p104, %p105
      %p108 = scmp.ne.s32.totalorder %s91, %s107
      %p109 = scmp.eq.s32.totalorder %s34, 0
      %p110 = por %p108, %p109
      %s111 = ssub.s32 %s35, %s54
      %s112 = ssub.s32 %s36, %s50
      %s113 = sor.u32 %s111, %s112
      %s114 = ssub.s32 %s37, %s46
      %s115 = sor.u32 %s113, %s114
      %p116 = scmp.eq.s32.totalorder %s115, 0
      %s118 = sadd.s32 %s117, 1
      %s119 = scalar_select %p116, %s117, %s118
      %p122 = pneg %p116
      %p123 = scmp.eq.s32.totalorder %s28, 1
      %p124 = por %p122, %p123
      %p125 = scmp.ne.s32.totalorder %s117, %s120
      %p126 = scmp.eq.s32.totalorder %s28, 0
      %p127 = por %p125, %p126
      %p128 = scmp.ne.s32.totalorder %s117, %s120
      %p129 = scmp.eq.s32.totalorder %s33, 1
      %p130 = por %p128, %p129
      %p131 = scmp.ne.s32.totalorder %s120, %s121
      %p132 = scmp.eq.s32.totalorder %s33, 0
      %p133 = por %p131, %p132
      %p134 = scmp.ne.s32.totalorder %s120, %s121
      %p135 = scmp.eq.s32.totalorder %s34, 1
      %p136 = por %p134, %p135
      %p138 = scmp.ne.s32.totalorder %s121, %s137
      %p139 = scmp.eq.s32.totalorder %s34, 0
      %p140 = por %p138, %p139
      %s142 = sadd.s32 %s141, 1
      %p145 = scmp.eq.s32.totalorder %s28, 1
      %p146 = scmp.ne.s32.totalorder %s141, %s143
      %p147 = scmp.eq.s32.totalorder %s28, 0
      %p148 = por %p146, %p147
      %p149 = scmp.ne.s32.totalorder %s141, %s143
      %p150 = scmp.eq.s32.totalorder %s33, 1
      %p151 = por %p149, %p150
      %p152 = scmp.ne.s32.totalorder %s143, %s144
      %p153 = scmp.eq.s32.totalorder %s33, 0
      %p154 = por %p152, %p153
      %p155 = scmp.ne.s32.totalorder %s143, %s144
      %p156 = scmp.eq.s32.totalorder %s34, 1
      %p157 = por %p155, %p156
      %p159 = scmp.ne.s32.totalorder %s144, %s158
      %p160 = scmp.eq.s32.totalorder %s34, 0
      %p161 = por %p159, %p160
      %s163 = sadd.s32 %s162, 1
      %p166 = scmp.eq.s32.totalorder %s28, 1
      %p167 = scmp.ne.s32.totalorder %s162, %s164
      %p168 = scmp.eq.s32.totalorder %s28, 0
      %p169 = por %p167, %p168
      %p170 = scmp.ne.s32.totalorder %s162, %s164
      %p171 = scmp.eq.s32.totalorder %s33, 1
      %p172 = por %p170, %p171
      %p173 = scmp.ne.s32.totalorder %s164, %s165
      %p174 = scmp.eq.s32.totalorder %s33, 0
      %p175 = por %p173, %p174
      %p176 = scmp.ne.s32.totalorder %s164, %s165
      %p177 = scmp.eq.s32.totalorder %s34, 1
      %p178 = por %p176, %p177
      %p180 = scmp.ne.s32.totalorder %s165, %s179
      %p181 = scmp.eq.s32.totalorder %s34, 0
      %p182 = por %p180, %p181
      %s184 = sadd.s32 %s183, 1
      %p187 = scmp.eq.s32.totalorder %s28, 1
      %p188 = scmp.ne.s32.totalorder %s183, %s185
      %p189 = scmp.eq.s32.totalorder %s28, 0
      %p190 = por %p188, %p189
      %p191 = scmp.ne.s32.totalorder %s183, %s185
      %p192 = scmp.eq.s32.totalorder %s33, 1
      %p193 = por %p191, %p192
      %p194 = scmp.ne.s32.totalorder %s185, %s186
      %p195 = scmp.eq.s32.totalorder %s33, 0
      %p196 = por %p194, %p195
      %p197 = scmp.ne.s32.totalorder %s185, %s186
      %p198 = scmp.eq.s32.totalorder %s34, 1
      %p199 = por %p197, %p198
      %p201 = scmp.ne.s32.totalorder %s186, %s200
      %p202 = scmp.eq.s32.totalorder %s34, 0
      %p203 = por %p201, %p202
      %s205 = sadd.s32 %s204, 1
      %p208 = scmp.eq.s32.totalorder %s28, 1
      %p209 = scmp.ne.s32.totalorder %s204, %s206
      %p210 = scmp.eq.s32.totalorder %s28, 0
      %p211 = por %p209, %p210
      %p212 = scmp.ne.s32.totalorder %s204, %s206
      %p213 = scmp.eq.s32.totalorder %s33, 1
      %p214 = por %p212, %p213
      %p215 = scmp.ne.s32.totalorder %s206, %s207
      %p216 = scmp.eq.s32.totalorder %s33, 0
      %p217 = por %p215, %p216
      %p218 = scmp.ne.s32.totalorder %s206, %s207
      %p219 = scmp.eq.s32.totalorder %s34, 1
      %p220 = por %p218, %p219
      %p222 = scmp.ne.s32.totalorder %s207, %s221
      %p223 = scmp.eq.s32.totalorder %s34, 0
      %p224 = por %p222, %p223
      %s226 = sadd.s32 %s225, 1
      %p229 = scmp.eq.s32.totalorder %s28, 1
      %p230 = scmp.ne.s32.totalorder %s225, %s227
      %p231 = scmp.eq.s32.totalorder %s28, 0
      %p232 = por %p230, %p231
      %p233 = scmp.ne.s32.totalorder %s225, %s227
      %p234 = scmp.eq.s32.totalorder %s33, 1
      %p235 = por %p233, %p234
      %p236 = scmp.ne.s32.totalorder %s227, %s228
      %p237 = scmp.eq.s32.totalorder %s33, 0
      %p238 = por %p236, %p237
      %p239 = scmp.ne.s32.totalorder %s227, %s228
      %p240 = scmp.eq.s32.totalorder %s34, 1
      %p241 = por %p239, %p240
      %p243 = scmp.ne.s32.totalorder %s228, %s242
      %p244 = scmp.eq.s32.totalorder %s34, 0
      %p245 = por %p243, %p244
      %s247 = sadd.s32 %s246, 1
      %p250 = scmp.eq.s32.totalorder %s28, 1
      %p251 = scmp.ne.s32.totalorder %s246, %s248
      %p252 = scmp.eq.s32.totalorder %s28, 0
      %p253 = por %p251, %p252
      %p254 = scmp.ne.s32.totalorder %s246, %s248
      %p255 = scmp.eq.s32.totalorder %s33, 1
      %p256 = por %p254, %p255
      %p257 = scmp.ne.s32.totalorder %s248, %s249
      %p258 = scmp.eq.s32.totalorder %s33, 0
      %p259 = por %p257, %p258
      %p260 = scmp.ne.s32.totalorder %s248, %s249
      %p261 = scmp.eq.s32.totalorder %s34, 1
      %p262 = por %p260, %p261
      %p264 = scmp.ne.s32.totalorder %s249, %s263
      %p265 = scmp.eq.s32.totalorder %s34, 0
      %p266 = por %p264, %p265
      %s268 = sadd.s32 %s267, 1
      %p271 = scmp.eq.s32.totalorder %s28, 1
      %p272 = scmp.ne.s32.totalorder %s267, %s269
      %p273 = scmp.eq.s32.totalorder %s28, 0
      %p274 = por %p272, %p273
      %p275 = scmp.ne.s32.totalorder %s267, %s269
      %p276 = scmp.eq.s32.totalorder %s33, 1
      %p277 = por %p275, %p276
      %p278 = scmp.ne.s32.totalorder %s269, %s270
      %p279 = scmp.eq.s32.totalorder %s33, 0
      %p280 = por %p278, %p279
      %p281 = scmp.ne.s32.totalorder %s269, %s270
      %p282 = scmp.eq.s32.totalorder %s34, 1
      %p283 = por %p281, %p282
      %p285 = scmp.ne.s32.totalorder %s270, %s284
      %p286 = scmp.eq.s32.totalorder %s34, 0
      %p287 = por %p285, %p286
      %s289 = sadd.s32 %s288, 1
      %p292 = scmp.eq.s32.totalorder %s28, 1
      %p293 = scmp.ne.s32.totalorder %s288, %s290
      %p294 = scmp.eq.s32.totalorder %s28, 0
      %p295 = por %p293, %p294
      %p296 = scmp.ne.s32.totalorder %s288, %s290
      %p297 = scmp.eq.s32.totalorder %s33, 1
      %p298 = por %p296, %p297
      %p299 = scmp.ne.s32.totalorder %s290, %s291
      %p300 = scmp.eq.s32.totalorder %s33, 0
      %p301 = por %p299, %p300
      %p302 = scmp.ne.s32.totalorder %s290, %s291
      %p303 = scmp.eq.s32.totalorder %s34, 1
      %p304 = por %p302, %p303
      %p306 = scmp.ne.s32.totalorder %s291, %s305
      %p307 = scmp.eq.s32.totalorder %s34, 0
      %p308 = por %p306, %p307
      %s310 = sadd.s32 %s309, 1
      %p313 = scmp.eq.s32.totalorder %s28, 1
      %p314 = scmp.ne.s32.totalorder %s309, %s311
      %p315 = scmp.eq.s32.totalorder %s28, 0
      %p316 = por %p314, %p315
      %p317 = scmp.ne.s32.totalorder %s309, %s311
      %p318 = scmp.eq.s32.totalorder %s33, 1
      %p319 = por %p317, %p318
      %p320 = scmp.ne.s32.totalorder %s311, %s312
      %p321 = scmp.eq.s32.totalorder %s33, 0
      %p322 = por %p320, %p321
      %p323 = scmp.ne.s32.totalorder %s311, %s312
      %p324 = scmp.eq.s32.totalorder %s34, 1
      %p325 = por %p323, %p324
      %p327 = scmp.ne.s32.totalorder %s312, %s326
      %p328 = scmp.eq.s32.totalorder %s34, 0
      %p329 = por %p327, %p328
      %s331 = sadd.s32 %s330, 1
      %p334 = scmp.eq.s32.totalorder %s28, 1
      %p335 = scmp.ne.s32.totalorder %s330, %s332
      %p336 = scmp.eq.s32.totalorder %s28, 0
      %p337 = por %p335, %p336
      %p338 = scmp.ne.s32.totalorder %s330, %s332
      %p339 = scmp.eq.s32.totalorder %s33, 1
      %p340 = por %p338, %p339
      %p341 = scmp.ne.s32.totalorder %s332, %s333
      %p342 = scmp.eq.s32.totalorder %s33, 0
      %p343 = por %p341, %p342
      %p344 = scmp.ne.s32.totalorder %s332, %s333
      %p345 = scmp.eq.s32.totalorder %s34, 1
      %p346 = por %p344, %p345
      %p348 = scmp.ne.s32.totalorder %s333, %s347
      %p349 = scmp.eq.s32.totalorder %s34, 0
      %p350 = por %p348, %p349
      %s352 = sadd.s32 %s351, 1
      %p355 = scmp.eq.s32.totalorder %s28, 1
      %p356 = scmp.ne.s32.totalorder %s351, %s353
      %p357 = scmp.eq.s32.totalorder %s28, 0
      %p358 = por %p356, %p357
      %p359 = scmp.ne.s32.totalorder %s351, %s353
      %p360 = scmp.eq.s32.totalorder %s33, 1
      %p361 = por %p359, %p360
      %p362 = scmp.ne.s32.totalorder %s353, %s354
      %p363 = scmp.eq.s32.totalorder %s33, 0
      %p364 = por %p362, %p363
      %p365 = scmp.ne.s32.totalorder %s353, %s354
      %p366 = scmp.eq.s32.totalorder %s34, 1
      %p367 = por %p365, %p366
      %p369 = scmp.ne.s32.totalorder %s354, %s368
      %p370 = scmp.eq.s32.totalorder %s34, 0
      %p371 = por %p369, %p370
      %s373 = sadd.s32 %s372, 1
      %p376 = scmp.eq.s32.totalorder %s28, 1
      %p377 = scmp.ne.s32.totalorder %s372, %s374
      %p378 = scmp.eq.s32.totalorder %s28, 0
      %p379 = por %p377, %p378
      %p380 = scmp.ne.s32.totalorder %s372, %s374
      %p381 = scmp.eq.s32.totalorder %s33, 1
      %p382 = por %p380, %p381
      %p383 = scmp.ne.s32.totalorder %s374, %s375
      %p384 = scmp.eq.s32.totalorder %s33, 0
      %p385 = por %p383, %p384
      %p386 = scmp.ne.s32.totalorder %s374, %s375
      %p387 = scmp.eq.s32.totalorder %s34, 1
      %p388 = por %p386, %p387
      %p390 = scmp.ne.s32.totalorder %s375, %s389
      %p391 = scmp.eq.s32.totalorder %s34, 0
      %p392 = por %p390, %p391
      %s394 = sadd.s32 %s393, 1
      %p397 = scmp.eq.s32.totalorder %s28, 1
      %p398 = scmp.ne.s32.totalorder %s393, %s395
      %p399 = scmp.eq.s32.totalorder %s28, 0
      %p400 = por %p398, %p399
      %p401 = scmp.ne.s32.totalorder %s393, %s395
      %p402 = scmp.eq.s32.totalorder %s33, 1
      %p403 = por %p401, %p402
      %p404 = scmp.ne.s32.totalorder %s395, %s396
      %p405 = scmp.eq.s32.totalorder %s33, 0
      %p406 = por %p404, %p405
      %p407 = scmp.ne.s32.totalorder %s395, %s396
      %p408 = scmp.eq.s32.totalorder %s34, 1
      %p409 = por %p407, %p408
      %p411 = scmp.ne.s32.totalorder %s396, %s410
      %p412 = scmp.eq.s32.totalorder %s34, 0
      %p413 = por %p411, %p412
      %s415 = sadd.s32 %s414, 1
      %p418 = scmp.eq.s32.totalorder %s28, 1
      %p419 = scmp.ne.s32.totalorder %s414, %s416
      %p420 = scmp.eq.s32.totalorder %s28, 0
      %p421 = por %p419, %p420
      %p422 = scmp.ne.s32.totalorder %s414, %s416
      %p423 = scmp.eq.s32.totalorder %s33, 1
      %p424 = por %p422, %p423
      %p425 = scmp.ne.s32.totalorder %s416, %s417
      %p426 = scmp.eq.s32.totalorder %s33, 0
      %p427 = por %p425, %p426
      %p428 = scmp.ne.s32.totalorder %s416, %s417
      %p429 = scmp.eq.s32.totalorder %s34, 1
      %p430 = por %p428, %p429
      %p432 = scmp.ne.s32.totalorder %s417, %s431
      %p433 = scmp.eq.s32.totalorder %s34, 0
      %p434 = por %p432, %p433
      %s436 = sadd.s32 %s435, 1
      %p439 = scmp.eq.s32.totalorder %s28, 1
      %p440 = scmp.ne.s32.totalorder %s435, %s437
      %p441 = scmp.eq.s32.totalorder %s28, 0
      %p442 = por %p440, %p441
      %p443 = scmp.ne.s32.totalorder %s435, %s437
      %p444 = scmp.eq.s32.totalorder %s33, 1
      %p445 = por %p443, %p444
      %p446 = scmp.ne.s32.totalorder %s437, %s438
      %p447 = scmp.eq.s32.totalorder %s33, 0
      %p448 = por %p446, %p447
      %p449 = scmp.ne.s32.totalorder %s437, %s438
      %p450 = scmp.eq.s32.totalorder %s34, 1
      %p451 = por %p449, %p450
      %p453 = scmp.ne.s32.totalorder %s438, %s452
      %p454 = scmp.eq.s32.totalorder %s34, 0
      %p455 = por %p453, %p454
      %s457 = sadd.s32 %s456, 1
      %p460 = scmp.eq.s32.totalorder %s28, 1
      %p461 = scmp.ne.s32.totalorder %s456, %s458
      %p462 = scmp.eq.s32.totalorder %s28, 0
      %p463 = por %p461, %p462
      %p464 = scmp.ne.s32.totalorder %s456, %s458
      %p465 = scmp.eq.s32.totalorder %s33, 1
      %p466 = por %p464, %p465
      %p467 = scmp.ne.s32.totalorder %s458, %s459
      %p468 = scmp.eq.s32.totalorder %s33, 0
      %p469 = por %p467, %p468
      %p470 = scmp.ne.s32.totalorder %s458, %s459
      %p471 = scmp.eq.s32.totalorder %s34, 1
      %p472 = por %p470, %p471
      %p474 = scmp.ne.s32.totalorder %s459, %s473
      %p475 = scmp.eq.s32.totalorder %s34, 0
      %p476 = por %p474, %p475
      %s477 = ssub.s32 %s35, %s54
      %s478 = ssub.s32 %s36, %s50
      %s479 = sor.u32 %s477, %s478
      %p480 = scmp.eq.s32.totalorder %s479, 0
      %s482 = sadd.s32 %s481, 1
      %s483 = scalar_select %p480, %s481, %s482
      %p486 = pneg %p480
      %p487 = scmp.eq.s32.totalorder %s28, 1
      %p488 = por %p486, %p487
      %p489 = scmp.ne.s32.totalorder %s481, %s484
      %p490 = scmp.eq.s32.totalorder %s28, 0
      %p491 = por %p489, %p490
      %p492 = scmp.ne.s32.totalorder %s481, %s484
      %p493 = scmp.eq.s32.totalorder %s33, 1
      %p494 = por %p492, %p493
      %p495 = scmp.ne.s32.totalorder %s484, %s485
      %p496 = scmp.eq.s32.totalorder %s33, 0
      %p497 = por %p495, %p496
      %p498 = scmp.ne.s32.totalorder %s484, %s485
      %p499 = scmp.eq.s32.totalorder %s34, 1
      %p500 = por %p498, %p499
      %p502 = scmp.ne.s32.totalorder %s485, %s501
      %p503 = scmp.eq.s32.totalorder %s34, 0
      %p504 = por %p502, %p503
      %p505 = scmp.le.s32.totalorder 1, %s28
      %p506 = scmp.lt.s32.totalorder %s28, 3
      %p507 = pnand %p505, %p506
      %p508 = pneg %p507
      // Predicated region
      $region9: #{tpu_custom_call.1} parent=5 // pred_check
        _
      $region10: #{tpu_custom_call.1} parent=5 // pred_check_branch
        %510 = sbr.rel (%p507) target = $region12
      $region11: #{tpu_custom_call.1} parent=5 // pred_region
        %s511 = ssub.s32 %s28, 1
        // Predicated region
        $region13: #{tpu_custom_call.1} parent=11 // pred_check
          %p512 = pneg %p154
        $region14: #{tpu_custom_call.1} parent=11 // pred_check_branch
          %514 = sbr.rel (%p512) target = $region16
        $region15: #{tpu_custom_call.1} parent=11 // pred_region
          _
        $region16: #{tpu_custom_call.1} parent=11 // pred_fallthru
          _
        // Predicated region
        $region17: #{tpu_custom_call.1} parent=11 // pred_check
          %p515 = pneg %p175
        $region18: #{tpu_custom_call.1} parent=11 // pred_check_branch
          %517 = sbr.rel (%p515) target = $region20
        $region19: #{tpu_custom_call.1} parent=11 // pred_region
          _
        $region20: #{tpu_custom_call.1} parent=11 // pred_fallthru
          _
        // Predicated region
        $region21: #{tpu_custom_call.1} parent=11 // pred_check
          %p518 = pneg %p196
        $region22: #{tpu_custom_call.1} parent=11 // pred_check_branch
          %520 = sbr.rel (%p518) target = $region24
        $region23: #{tpu_custom_call.1} parent=11 // pred_region
          _
        $region24: #{tpu_custom_call.1} parent=11 // pred_fallthru
          _
        // Predicated region
        $region25: #{tpu_custom_call.1} parent=11 // pred_check
          %p521 = pneg %p217
        $region26: #{tpu_custom_call.1} parent=11 // pred_check_branch
          %523 = sbr.rel (%p521) target = $region28
        $region27: #{tpu_custom_call.1} parent=11 // pred_region
          _
        $region28: #{tpu_custom_call.1} parent=11 // pred_fallthru
          _
        // Predicated region
        $region29: #{tpu_custom_call.1} parent=11 // pred_check
          %p524 = pneg %p238
        $region30: #{tpu_custom_call.1} parent=11 // pred_check_branch
          %526 = sbr.rel (%p524) target = $region32
        $region31: #{tpu_custom_call.1} parent=11 // pred_region
          _
        $region32: #{tpu_custom_call.1} parent=11 // pred_fallthru
          _
        // Predicated region
        $region33: #{tpu_custom_call.1} parent=11 // pred_check
          %p527 = pneg %p259
        $region34: #{tpu_custom_call.1} parent=11 // pred_check_branch
          %529 = sbr.rel (%p527) target = $region36
        $region35: #{tpu_custom_call.1} parent=11 // pred_region
          _
        $region36: #{tpu_custom_call.1} parent=11 // pred_fallthru
          _
        // Predicated region
        $region37: #{tpu_custom_call.1} parent=11 // pred_check
          %p530 = pneg %p280
        $region38: #{tpu_custom_call.1} parent=11 // pred_check_branch
          %532 = sbr.rel (%p530) target = $region40
        $region39: #{tpu_custom_call.1} parent=11 // pred_region
          _
        $region40: #{tpu_custom_call.1} parent=11 // pred_fallthru
          _
        // Predicated region
        $region41: #{tpu_custom_call.1} parent=11 // pred_check
          %p533 = pneg %p301
        $region42: #{tpu_custom_call.1} parent=11 // pred_check_branch
          %535 = sbr.rel (%p533) target = $region44
        $region43: #{tpu_custom_call.1} parent=11 // pred_region
          _
        $region44: #{tpu_custom_call.1} parent=11 // pred_fallthru
          _
        // Predicated region
        $region45: #{tpu_custom_call.1} parent=11 // pred_check
          %p536 = pneg %p322
        $region46: #{tpu_custom_call.1} parent=11 // pred_check_branch
          %538 = sbr.rel (%p536) target = $region48
        $region47: #{tpu_custom_call.1} parent=11 // pred_region
          _
        $region48: #{tpu_custom_call.1} parent=11 // pred_fallthru
          _
        // Predicated region
        $region49: #{tpu_custom_call.1} parent=11 // pred_check
          %p539 = pneg %p343
        $region50: #{tpu_custom_call.1} parent=11 // pred_check_branch
          %541 = sbr.rel (%p539) target = $region52
        $region51: #{tpu_custom_call.1} parent=11 // pred_region
          _
        $region52: #{tpu_custom_call.1} parent=11 // pred_fallthru
          _
        // Predicated region
        $region53: #{tpu_custom_call.1} parent=11 // pred_check
          %p542 = pneg %p364
        $region54: #{tpu_custom_call.1} parent=11 // pred_check_branch
          %544 = sbr.rel (%p542) target = $region56
        $region55: #{tpu_custom_call.1} parent=11 // pred_region
          _
        $region56: #{tpu_custom_call.1} parent=11 // pred_fallthru
          _
        // Predicated region
        $region57: #{tpu_custom_call.1} parent=11 // pred_check
          %p545 = pneg %p385
        $region58: #{tpu_custom_call.1} parent=11 // pred_check_branch
          %547 = sbr.rel (%p545) target = $region60
        $region59: #{tpu_custom_call.1} parent=11 // pred_region
          _
        $region60: #{tpu_custom_call.1} parent=11 // pred_fallthru
          _
        // Predicated region
        $region61: #{tpu_custom_call.1} parent=11 // pred_check
          %p548 = pneg %p406
        $region62: #{tpu_custom_call.1} parent=11 // pred_check_branch
          %550 = sbr.rel (%p548) target = $region64
        $region63: #{tpu_custom_call.1} parent=11 // pred_region
          _
        $region64: #{tpu_custom_call.1} parent=11 // pred_fallthru
          _
        // Predicated region
        $region65: #{tpu_custom_call.1} parent=11 // pred_check
          %p551 = pneg %p427
        $region66: #{tpu_custom_call.1} parent=11 // pred_check_branch
          %553 = sbr.rel (%p551) target = $region68
        $region67: #{tpu_custom_call.1} parent=11 // pred_region
          _
        $region68: #{tpu_custom_call.1} parent=11 // pred_fallthru
          _
        // Predicated region
        $region69: #{tpu_custom_call.1} parent=11 // pred_check
          %p554 = pneg %p448
        $region70: #{tpu_custom_call.1} parent=11 // pred_check_branch
          %556 = sbr.rel (%p554) target = $region72
        $region71: #{tpu_custom_call.1} parent=11 // pred_region
          _
        $region72: #{tpu_custom_call.1} parent=11 // pred_fallthru
          _
        // Predicated region
        $region73: #{tpu_custom_call.1} parent=11 // pred_check
          %p557 = pneg %p469
        $region74: #{tpu_custom_call.1} parent=11 // pred_check_branch
          %559 = sbr.rel (%p557) target = $region76
        $region75: #{tpu_custom_call.1} parent=11 // pred_region
          _
        $region76: #{tpu_custom_call.1} parent=11 // pred_fallthru
          _
      $region12: #{tpu_custom_call.1} parent=5 // pred_fallthru
        _
      %p560 = scmp.lt.s32.totalorder %s28, 2
      // Predicated region
      $region77: #{tpu_custom_call.1} parent=5 // pred_check
        %p561 = pneg %p560
      $region78: #{tpu_custom_call.1} parent=5 // pred_check_branch
        %563 = sbr.rel (%p561) target = $region80
      $region79: #{tpu_custom_call.1} parent=5 // pred_region
        // Predicated region
        $region81: #{tpu_custom_call.1} parent=79 // pred_check
          %p564 = pneg %p69
        $region82: #{tpu_custom_call.1} parent=79 // pred_check_branch
          %566 = sbr.rel (%p564) target = $region84
        $region83: #{tpu_custom_call.1} parent=79 // pred_region
          %p567 = scmp.lt.s32.totalorder %s35, 1
          %s568 = scalar_select %p567, %s35, 1
          %p569 = scmp.lt.s32.totalorder %s36, 0
          %s570 = scalar_select %p569, %s36, 0
          %s571 = sadd.s32 %s570, %s568
          %s572 = smul.addr %s571, 8
          %s573 = scalar_lea.vmem %s0, %s572
        $region84: #{tpu_custom_call.1} parent=79 // pred_fallthru
          _
        // Predicated region
        $region85: #{tpu_custom_call.1} parent=79 // pred_check
          %p574 = pneg %p97
        $region86: #{tpu_custom_call.1} parent=79 // pred_check_branch
          %576 = sbr.rel (%p574) target = $region88
        $region87: #{tpu_custom_call.1} parent=79 // pred_region
          %p577 = scmp.lt.s32.totalorder %s35, 1
          %s578 = scalar_select %p577, %s35, 1
          %p579 = scmp.lt.s32.totalorder %s37, 0
          %s580 = scalar_select %p579, %s37, 0
          %s581 = sadd.s32 %s580, %s578
          %s582 = smul.addr %s581, 8
          %s583 = scalar_lea.vmem %s1, %s582
        $region88: #{tpu_custom_call.1} parent=79 // pred_fallthru
          _
        // Predicated region
        $region89: #{tpu_custom_call.1} parent=79 // pred_check
          %p584 = pneg %p127
        $region90: #{tpu_custom_call.1} parent=79 // pred_check_branch
          %586 = sbr.rel (%p584) target = $region92
        $region91: #{tpu_custom_call.1} parent=79 // pred_region
          %p587 = scmp.lt.s32.totalorder %s35, 1
          %s588 = scalar_select %p587, %s35, 1
          %p589 = scmp.lt.s32.totalorder %s36, 0
          %s590 = scalar_select %p589, %s36, 0
          %p591 = scmp.lt.s32.totalorder %s37, 0
          %s592 = scalar_select %p591, %s37, 0
          %s593 = sadd.s32 %s592, %s590
          %s594 = sadd.s32 %s593, %s588
          %s595 = smul.addr %s594, 2
          %s596 = scalar_lea.vmem %s2, %s595
        $region92: #{tpu_custom_call.1} parent=79 // pred_fallthru
          _
      $region80: #{tpu_custom_call.1} parent=5 // pred_fallthru
        _
      %p597 = scmp.le.s32.totalorder 1, %s28
      %p598 = scmp.lt.s32.totalorder %s28, 3
      %p599 = pnand %p597, %p598
      %p600 = pneg %p599
      // Predicated region
      $region93: #{tpu_custom_call.1} parent=5 // pred_check
        _
      $region94: #{tpu_custom_call.1} parent=5 // pred_check_branch
        %602 = sbr.rel (%p599) target = $region96
      $region95: #{tpu_custom_call.1} parent=5 // pred_region
        %s603 = ssub.s32 %s28, 1
        %p604 = scmp.lt.s32.totalorder %s38, 1
        %s605 = scalar_select %p604, %s38, 1
        %p606 = scmp.lt.s32.totalorder %s39, 0
        %s607 = scalar_select %p606, %s39, 0
        %s608 = sadd.s32 %s607, %s605
        %s609 = smul.addr %s608, 8
        %s610 = scalar_lea.vmem %s0, %s609
        %p611 = pneg %p75
        %p612 = pneg %p72
        %p613 = scmp.lt.s32.totalorder %s38, 1
        %s614 = scalar_select %p613, %s38, 1
        %p615 = scmp.lt.s32.totalorder %s40, 0
        %s616 = scalar_select %p615, %s40, 0
        %s617 = sadd.s32 %s616, %s614
        %s618 = smul.addr %s617, 8
        %s619 = scalar_lea.vmem %s1, %s618
        %p620 = pneg %p103
        %p621 = pneg %p100
        %p622 = scmp.lt.s32.totalorder %s38, 1
        %s623 = scalar_select %p622, %s38, 1
        %p624 = scmp.lt.s32.totalorder %s39, 0
        %s625 = scalar_select %p624, %s39, 0
        %p626 = scmp.lt.s32.totalorder %s40, 0
        %s627 = scalar_select %p626, %s40, 0
        %s628 = sadd.s32 %s627, %s625
        %s629 = sadd.s32 %s628, %s623
        %s630 = smul.addr %s629, 2
        %s631 = scalar_lea.vmem %s2, %s630
        %p632 = pneg %p133
        %p633 = pneg %p130
        %p634 = pneg %p154
        %p635 = pneg %p151
        %p636 = pneg %p175
        %p637 = pneg %p172
        %p638 = pneg %p196
        %p639 = pneg %p193
        %p640 = pneg %p217
        %p641 = pneg %p214
        %p642 = pneg %p238
        %p643 = pneg %p235
        %p644 = pneg %p259
        %p645 = pneg %p256
        %p646 = pneg %p280
        %p647 = pneg %p277
        %p648 = pneg %p301
        %p649 = pneg %p298
        %p650 = pneg %p322
        %p651 = pneg %p319
        %p652 = pneg %p343
        %p653 = pneg %p340
        %p654 = pneg %p364
        %p655 = pneg %p361
        %p656 = pneg %p385
        %p657 = pneg %p382
        %p658 = pneg %p406
        %p659 = pneg %p403
        %p660 = pneg %p427
        %p661 = pneg %p424
        %p662 = pneg %p448
        %p663 = pneg %p445
        %p664 = pneg %p469
        %p665 = pneg %p466
        %p666 = pneg %p497
        %p667 = pneg %p494
        %s668 = sand.u32 %s484, 1
        %s669 = scalar_lea.sflag [#allocation7], %s668
        %s670 = sand.u32 %s484, 1
        %s671 = smul.addr %s670, 8
        %s672 = scalar_lea.vmem [#allocation6], %s671
        %p673 = scmp.lt.s32.totalorder %s38, 1
        %s674 = scalar_select %p673, %s38, 1
        %p675 = scmp.lt.s32.totalorder %s39, 0
        %s676 = scalar_select %p675, %s39, 0
        %s677 = sadd.s32 %s676, %s674
        %s678 = smul.addr %s677, 8
        %s679 = scalar_lea.vmem %s0, %s678
        %p680 = scmp.lt.s32.totalorder %s38, 1
        %s681 = scalar_select %p680, %s38, 1
        %p682 = scmp.lt.s32.totalorder %s40, 0
        %s683 = scalar_select %p682, %s40, 0
        %s684 = sadd.s32 %s683, %s681
        %s685 = smul.addr %s684, 8
        %s686 = scalar_lea.vmem %s1, %s685
        %p687 = scmp.lt.s32.totalorder %s38, 1
        %s688 = scalar_select %p687, %s38, 1
        %p689 = scmp.lt.s32.totalorder %s39, 0
        %s690 = scalar_select %p689, %s39, 0
        %p691 = scmp.lt.s32.totalorder %s40, 0
        %s692 = scalar_select %p691, %s40, 0
        %s693 = sadd.s32 %s692, %s690
        %s694 = sadd.s32 %s693, %s688
        %s695 = smul.addr %s694, 2
        %s696 = scalar_lea.vmem %s2, %s695
        %v697 = vld [vmem:[%s679] sm:$0xff]
        %p698 = scmp.eq.s32.totalorder %s40, 0
        // Predicated region
        $region97: #{tpu_custom_call.1} parent=95 // pred_check
          %p699 = pneg %p698
        $region98: #{tpu_custom_call.1} parent=95 // pred_check_branch
          %701 = sbr.rel (%p699) target = $region100
        $region99: #{tpu_custom_call.1} parent=95 // pred_region
          %vm702 = vcmask 7168
          %703 = vst.msk [vmem:[#allocation3] sm:$0xff] %vm702, -inf
          %704 = vst.msk [vmem:[#allocation3 + $0x8] sm:$0xff] %vm702, -inf
          %705 = vst.msk [vmem:[#allocation3 + $0x10] sm:$0xff] %vm702, -inf
          %706 = vst.msk [vmem:[#allocation3 + $0x18] sm:$0xff] %vm702, -inf
          %707 = vst.msk [vmem:[#allocation4] sm:$0xff] %vm702, 0.0
          %708 = vst.msk [vmem:[#allocation4 + $0x8] sm:$0xff] %vm702, 0.0
          %709 = vst.msk [vmem:[#allocation4 + $0x10] sm:$0xff] %vm702, 0.0
          %710 = vst.msk [vmem:[#allocation4 + $0x18] sm:$0xff] %vm702, 0.0
          %vm711 = vcmask 64512
          %712 = vst.msk [vmem:[#allocation5] sm:$0xff] %vm711, 0.0
          %713 = vst.msk [vmem:[#allocation5 + $0x8] sm:$0xff] %vm711, 0.0
          %714 = vst.msk [vmem:[#allocation5 + $0x10] sm:$0xff] %vm711, 0.0
          %715 = vst.msk [vmem:[#allocation5 + $0x18] sm:$0xff] %vm711, 0.0
          %v716 = vld [vmem:[%s3] sm:$0xff]
          %v717 = vld [vmem:[%s3 + $0x8] sm:$0xff]
          %v718 = vld [vmem:[%s3 + $0x10] sm:$0xff]
          %v719 = vld [vmem:[%s3 + $0x18] sm:$0xff]
          %v720 = vld [vmem:[%s3 + $0x20] sm:$0xff]
          %v721 = vld [vmem:[%s3 + $0x28] sm:$0xff]
          %v722 = vld [vmem:[%s3 + $0x30] sm:$0xff]
          %v723 = vld [vmem:[%s3 + $0x38] sm:$0xff]
          %v724 = vld [vmem:[%s3 + $0x40] sm:$0xff]
          %v725 = vld [vmem:[%s3 + $0x48] sm:$0xff]
          %v726 = vld [vmem:[%s3 + $0x50] sm:$0xff]
          %v727 = vld [vmem:[%s3 + $0x58] sm:$0xff]
          %v728 = vld [vmem:[%s3 + $0x60] sm:$0xff]
          %v729 = vld [vmem:[%s3 + $0x68] sm:$0xff]
          %v730 = vld [vmem:[%s3 + $0x70] sm:$0xff]
          %v731 = vld [vmem:[%s3 + $0x78] sm:$0xff]
          %v732 = vld [vmem:[%s4] sm:$0x1]
          %v733 = vld [vmem:[%s4 + $0x1] sm:$0x1]
          %v734 = vld [vmem:[%s4 + $0x2] sm:$0x1]
          %v735 = vld [vmem:[%s4 + $0x3] sm:$0x1]
          %v740 = vperm.slane %v732, 0
          %v741 = vperm.slane %v733, 0
          %v742 = vperm.slane %v734, 0
          %v743 = vperm.slane %v735, 0
          %vm748 = vcmask 261120
          %v750 = vsel %vm748, %v697, 0
          %752 = vmatpush.msra.mxu0 0.0
          %753 = vmatpush.msra.mxu0 0.0
          %754 = vmatpush.msra.mxu0 0.0
          %755 = vmatpush.msra.mxu0 0.0
          %756 = vmatpush.msra.mxu0 0.0
          %757 = vmatpush.msra.mxu0 0.0
          %758 = vmatpush.msra.mxu0 0.0
          %759 = vmatpush.msra.mxu0 0.0
          %760 = vmatpush.msra.mxu0 0.0
          %761 = vmatpush.msra.mxu0 0.0
          %762 = vmatpush.msra.mxu0 0.0
          %763 = vmatpush.msra.mxu0 0.0
          %764 = vmatpush.msra.mxu0 %v719
          %765 = vmatpush.msra.mxu0 %v718
          %766 = vmatpush.msra.mxu0 %v717
          %767 = vmatpush.msra.mxu0 %v716
          %768 = vmatmul.f32.gmra.mxu0 %v750
          %v769 = vpop.f32.mrf.mxu0
          %v770 = vadd.f32 %v740, %v769
          %771 = vdwg.mxu0
          %772 = vmatpush.msra.mxu0 0.0
          %773 = vmatpush.msra.mxu0 0.0
          %774 = vmatpush.msra.mxu0 0.0
          %775 = vmatpush.msra.mxu0 0.0
          %776 = vmatpush.msra.mxu0 0.0
          %777 = vmatpush.msra.mxu0 0.0
          %778 = vmatpush.msra.mxu0 0.0
          %779 = vmatpush.msra.mxu0 0.0
          %780 = vmatpush.msra.mxu0 0.0
          %781 = vmatpush.msra.mxu0 0.0
          %782 = vmatpush.msra.mxu0 0.0
          %783 = vmatpush.msra.mxu0 0.0
          %784 = vmatpush.msra.mxu0 %v723
          %785 = vmatpush.msra.mxu0 %v722
          %786 = vmatpush.msra.mxu0 %v721
          %787 = vmatpush.msra.mxu0 %v720
          %788 = vmatmul.f32.gmra.mxu0 %v750
          %v789 = vpop.f32.mrf.mxu0
          %v790 = vadd.f32 %v741, %v789
          %791 = vdwg.mxu0
          %792 = vmatpush.msra.mxu0 0.0
          %793 = vmatpush.msra.mxu0 0.0
          %794 = vmatpush.msra.mxu0 0.0
          %795 = vmatpush.msra.mxu0 0.0
          %796 = vmatpush.msra.mxu0 0.0
          %797 = vmatpush.msra.mxu0 0.0
          %798 = vmatpush.msra.mxu0 0.0
          %799 = vmatpush.msra.mxu0 0.0
          %800 = vmatpush.msra.mxu0 0.0
          %801 = vmatpush.msra.mxu0 0.0
          %802 = vmatpush.msra.mxu0 0.0
          %803 = vmatpush.msra.mxu0 0.0
          %804 = vmatpush.msra.mxu0 %v727
          %805 = vmatpush.msra.mxu0 %v726
          %806 = vmatpush.msra.mxu0 %v725
          %807 = vmatpush.msra.mxu0 %v724
          %808 = vmatmul.f32.gmra.mxu0 %v750
          %v809 = vpop.f32.mrf.mxu0
          %v810 = vadd.f32 %v742, %v809
          %811 = vdwg.mxu0
          %812 = vmatpush.msra.mxu0 0.0
          %813 = vmatpush.msra.mxu0 0.0
          %814 = vmatpush.msra.mxu0 0.0
          %815 = vmatpush.msra.mxu0 0.0
          %816 = vmatpush.msra.mxu0 0.0
          %817 = vmatpush.msra.mxu0 0.0
          %818 = vmatpush.msra.mxu0 0.0
          %819 = vmatpush.msra.mxu0 0.0
          %820 = vmatpush.msra.mxu0 0.0
          %821 = vmatpush.msra.mxu0 0.0
          %822 = vmatpush.msra.mxu0 0.0
          %823 = vmatpush.msra.mxu0 0.0
          %824 = vmatpush.msra.mxu0 %v731
          %825 = vmatpush.msra.mxu0 %v730
          %826 = vmatpush.msra.mxu0 %v729
          %827 = vmatpush.msra.mxu0 %v728
          %828 = vmatmul.f32.gmra.mxu0 %v750
          %v829 = vpop.f32.mrf.mxu0
          %v830 = vadd.f32 %v743, %v829
          %831 = vdwg.mxu0
          %832 = vst.msk [vmem:[#allocation2] sm:$0xff] %vm711, %v770
          %833 = vst.msk [vmem:[#allocation2 + $0x8] sm:$0xff] %vm711, %v790
          %834 = vst.msk [vmem:[#allocation2 + $0x10] sm:$0xff] %vm711, %v810
          %835 = vst.msk [vmem:[#allocation2 + $0x18] sm:$0xff] %vm711, %v830
        $region100: #{tpu_custom_call.1} parent=95 // pred_fallthru
          _
        %v836 = vld [vmem:[%s686] sm:$0xff]
        %v837 = vld [vmem:[%s5] sm:$0xff]
        %v838 = vld [vmem:[%s5 + $0x8] sm:$0xff]
        %v839 = vld [vmem:[%s5 + $0x10] sm:$0xff]
        %v840 = vld [vmem:[%s5 + $0x18] sm:$0xff]
        %v841 = vld [vmem:[%s5 + $0x20] sm:$0xff]
        %v842 = vld [vmem:[%s5 + $0x28] sm:$0xff]
        %v843 = vld [vmem:[%s5 + $0x30] sm:$0xff]
        %v844 = vld [vmem:[%s5 + $0x38] sm:$0xff]
        %v845 = vld [vmem:[%s5 + $0x40] sm:$0xff]
        %v846 = vld [vmem:[%s5 + $0x48] sm:$0xff]
        %v847 = vld [vmem:[%s5 + $0x50] sm:$0xff]
        %v848 = vld [vmem:[%s5 + $0x58] sm:$0xff]
        %v849 = vld [vmem:[%s5 + $0x60] sm:$0xff]
        %v850 = vld [vmem:[%s5 + $0x68] sm:$0xff]
        %v851 = vld [vmem:[%s5 + $0x70] sm:$0xff]
        %v852 = vld [vmem:[%s5 + $0x78] sm:$0xff]
        %v853 = vld [vmem:[%s6] sm:$0x1]
        %v854 = vld [vmem:[%s6 + $0x1] sm:$0x1]
        %v855 = vld [vmem:[%s6 + $0x2] sm:$0x1]
        %v856 = vld [vmem:[%s6 + $0x3] sm:$0x1]
        %v861 = vperm.slane %v853, 0
        %v862 = vperm.slane %v854, 0
        %v863 = vperm.slane %v855, 0
        %v864 = vperm.slane %v856, 0
        %vm869 = vcmask 261120
        %v871 = vsel %vm869, %v836, 0
        %873 = vmatpush.msra.mxu0 0.0
        %874 = vmatpush.msra.mxu0 0.0
        %875 = vmatpush.msra.mxu0 0.0
        %876 = vmatpush.msra.mxu0 0.0
        %877 = vmatpush.msra.mxu0 0.0
        %878 = vmatpush.msra.mxu0 0.0
        %879 = vmatpush.msra.mxu0 0.0
        %880 = vmatpush.msra.mxu0 0.0
        %881 = vmatpush.msra.mxu0 0.0
        %882 = vmatpush.msra.mxu0 0.0
        %883 = vmatpush.msra.mxu0 0.0
        %884 = vmatpush.msra.mxu0 0.0
        %885 = vmatpush.msra.mxu0 %v840
        %886 = vmatpush.msra.mxu0 %v839
        %887 = vmatpush.msra.mxu0 %v838
        %888 = vmatpush.msra.mxu0 %v837
        %889 = vmatmul.f32.gmra.mxu0 %v871
        %v890 = vpop.f32.mrf.mxu0
        %v891 = vadd.f32 %v861, %v890
        %892 = vdwg.mxu0
        %893 = vmatpush.msra.mxu0 0.0
        %894 = vmatpush.msra.mxu0 0.0
        %895 = vmatpush.msra.mxu0 0.0
        %896 = vmatpush.msra.mxu0 0.0
        %897 = vmatpush.msra.mxu0 0.0
        %898 = vmatpush.msra.mxu0 0.0
        %899 = vmatpush.msra.mxu0 0.0
        %900 = vmatpush.msra.mxu0 0.0
        %901 = vmatpush.msra.mxu0 0.0
        %902 = vmatpush.msra.mxu0 0.0
        %903 = vmatpush.msra.mxu0 0.0
        %904 = vmatpush.msra.mxu0 0.0
        %905 = vmatpush.msra.mxu0 %v844
        %906 = vmatpush.msra.mxu0 %v843
        %907 = vmatpush.msra.mxu0 %v842
        %908 = vmatpush.msra.mxu0 %v841
        %909 = vmatmul.f32.gmra.mxu0 %v871
        %v910 = vpop.f32.mrf.mxu0
        %v911 = vadd.f32 %v862, %v910
        %912 = vdwg.mxu0
        %913 = vmatpush.msra.mxu0 0.0
        %914 = vmatpush.msra.mxu0 0.0
        %915 = vmatpush.msra.mxu0 0.0
        %916 = vmatpush.msra.mxu0 0.0
        %917 = vmatpush.msra.mxu0 0.0
        %918 = vmatpush.msra.mxu0 0.0
        %919 = vmatpush.msra.mxu0 0.0
        %920 = vmatpush.msra.mxu0 0.0
        %921 = vmatpush.msra.mxu0 0.0
        %922 = vmatpush.msra.mxu0 0.0
        %923 = vmatpush.msra.mxu0 0.0
        %924 = vmatpush.msra.mxu0 0.0
        %925 = vmatpush.msra.mxu0 %v848
        %926 = vmatpush.msra.mxu0 %v847
        %927 = vmatpush.msra.mxu0 %v846
        %928 = vmatpush.msra.mxu0 %v845
        %929 = vmatmul.f32.gmra.mxu0 %v871
        %v930 = vpop.f32.mrf.mxu0
        %v931 = vadd.f32 %v863, %v930
        %932 = vdwg.mxu0
        %933 = vmatpush.msra.mxu0 0.0
        %934 = vmatpush.msra.mxu0 0.0
        %935 = vmatpush.msra.mxu0 0.0
        %936 = vmatpush.msra.mxu0 0.0
        %937 = vmatpush.msra.mxu0 0.0
        %938 = vmatpush.msra.mxu0 0.0
        %939 = vmatpush.msra.mxu0 0.0
        %940 = vmatpush.msra.mxu0 0.0
        %941 = vmatpush.msra.mxu0 0.0
        %942 = vmatpush.msra.mxu0 0.0
        %943 = vmatpush.msra.mxu0 0.0
        %944 = vmatpush.msra.mxu0 0.0
        %945 = vmatpush.msra.mxu0 %v852
        %946 = vmatpush.msra.mxu0 %v851
        %947 = vmatpush.msra.mxu0 %v850
        %948 = vmatpush.msra.mxu0 %v849
        %949 = vmatmul.f32.gmra.mxu0 %v871
        %v950 = vpop.f32.mrf.mxu0
        %v951 = vadd.f32 %v864, %v950
        %952 = vdwg.mxu0
        %v953 = vld [vmem:[%s7] sm:$0xff]
        %v954 = vld [vmem:[%s7 + $0x8] sm:$0xff]
        %v955 = vld [vmem:[%s7 + $0x10] sm:$0xff]
        %v956 = vld [vmem:[%s7 + $0x18] sm:$0xff]
        %v957 = vld [vmem:[%s7 + $0x20] sm:$0xff]
        %v958 = vld [vmem:[%s7 + $0x28] sm:$0xff]
        %v959 = vld [vmem:[%s7 + $0x30] sm:$0xff]
        %v960 = vld [vmem:[%s7 + $0x38] sm:$0xff]
        %v961 = vld [vmem:[%s7 + $0x40] sm:$0xff]
        %v962 = vld [vmem:[%s7 + $0x48] sm:$0xff]
        %v963 = vld [vmem:[%s7 + $0x50] sm:$0xff]
        %v964 = vld [vmem:[%s7 + $0x58] sm:$0xff]
        %v965 = vld [vmem:[%s7 + $0x60] sm:$0xff]
        %v966 = vld [vmem:[%s7 + $0x68] sm:$0xff]
        %v967 = vld [vmem:[%s7 + $0x70] sm:$0xff]
        %v968 = vld [vmem:[%s7 + $0x78] sm:$0xff]
        %v969 = vld [vmem:[%s8] sm:$0x1]
        %v970 = vld [vmem:[%s8 + $0x1] sm:$0x1]
        %v971 = vld [vmem:[%s8 + $0x2] sm:$0x1]
        %v972 = vld [vmem:[%s8 + $0x3] sm:$0x1]
        %v977 = vperm.slane %v969, 0
        %v978 = vperm.slane %v970, 0
        %v979 = vperm.slane %v971, 0
        %v980 = vperm.slane %v972, 0
        %985 = vmatpush.msra.mxu0 0.0
        %986 = vmatpush.msra.mxu0 0.0
        %987 = vmatpush.msra.mxu0 0.0
        %988 = vmatpush.msra.mxu0 0.0
        %989 = vmatpush.msra.mxu0 0.0
        %990 = vmatpush.msra.mxu0 0.0
        %991 = vmatpush.msra.mxu0 0.0
        %992 = vmatpush.msra.mxu0 0.0
        %993 = vmatpush.msra.mxu0 0.0
        %994 = vmatpush.msra.mxu0 0.0
        %995 = vmatpush.msra.mxu0 0.0
        %996 = vmatpush.msra.mxu0 0.0
        %997 = vmatpush.msra.mxu0 %v956
        %998 = vmatpush.msra.mxu0 %v955
        %999 = vmatpush.msra.mxu0 %v954
        %1000 = vmatpush.msra.mxu0 %v953
        %1001 = vmatmul.f32.gmra.mxu0 %v871
        %v1002 = vpop.f32.mrf.mxu0
        %v1003 = vadd.f32 %v977, %v1002
        %1004 = vdwg.mxu0
        %1005 = vmatpush.msra.mxu0 0.0
        %1006 = vmatpush.msra.mxu0 0.0
        %1007 = vmatpush.msra.mxu0 0.0
        %1008 = vmatpush.msra.mxu0 0.0
        %1009 = vmatpush.msra.mxu0 0.0
        %1010 = vmatpush.msra.mxu0 0.0
        %1011 = vmatpush.msra.mxu0 0.0
        %1012 = vmatpush.msra.mxu0 0.0
        %1013 = vmatpush.msra.mxu0 0.0
        %1014 = vmatpush.msra.mxu0 0.0
        %1015 = vmatpush.msra.mxu0 0.0
        %1016 = vmatpush.msra.mxu0 0.0
        %1017 = vmatpush.msra.mxu0 %v960
        %1018 = vmatpush.msra.mxu0 %v959
        %1019 = vmatpush.msra.mxu0 %v958
        %1020 = vmatpush.msra.mxu0 %v957
        %1021 = vmatmul.f32.gmra.mxu0 %v871
        %v1022 = vpop.f32.mrf.mxu0
        %v1023 = vadd.f32 %v978, %v1022
        %1024 = vdwg.mxu0
        %1025 = vmatpush.msra.mxu0 0.0
        %1026 = vmatpush.msra.mxu0 0.0
        %1027 = vmatpush.msra.mxu0 0.0
        %1028 = vmatpush.msra.mxu0 0.0
        %1029 = vmatpush.msra.mxu0 0.0
        %1030 = vmatpush.msra.mxu0 0.0
        %1031 = vmatpush.msra.mxu0 0.0
        %1032 = vmatpush.msra.mxu0 0.0
        %1033 = vmatpush.msra.mxu0 0.0
        %1034 = vmatpush.msra.mxu0 0.0
        %1035 = vmatpush.msra.mxu0 0.0
        %1036 = vmatpush.msra.mxu0 0.0
        %1037 = vmatpush.msra.mxu0 %v964
        %1038 = vmatpush.msra.mxu0 %v963
        %1039 = vmatpush.msra.mxu0 %v962
        %1040 = vmatpush.msra.mxu0 %v961
        %1041 = vmatmul.f32.gmra.mxu0 %v871
        %v1042 = vpop.f32.mrf.mxu0
        %v1043 = vadd.f32 %v979, %v1042
        %1044 = vdwg.mxu0
        %1045 = vmatpush.msra.mxu0 0.0
        %1046 = vmatpush.msra.mxu0 0.0
        %1047 = vmatpush.msra.mxu0 0.0
        %1048 = vmatpush.msra.mxu0 0.0
        %1049 = vmatpush.msra.mxu0 0.0
        %1050 = vmatpush.msra.mxu0 0.0
        %1051 = vmatpush.msra.mxu0 0.0
        %1052 = vmatpush.msra.mxu0 0.0
        %1053 = vmatpush.msra.mxu0 0.0
        %1054 = vmatpush.msra.mxu0 0.0
        %1055 = vmatpush.msra.mxu0 0.0
        %1056 = vmatpush.msra.mxu0 0.0
        %1057 = vmatpush.msra.mxu0 %v968
        %1058 = vmatpush.msra.mxu0 %v967
        %1059 = vmatpush.msra.mxu0 %v966
        %1060 = vmatpush.msra.mxu0 %v965
        %1061 = vmatmul.f32.gmra.mxu0 %v871
        %v1062 = vpop.f32.mrf.mxu0
        %v1063 = vadd.f32 %v980, %v1062
        %1064 = vdwg.mxu0
        %v1065 = vld [vmem:[#allocation2] sm:$0xff]
        %v1066 = vld [vmem:[#allocation2 + $0x8] sm:$0xff]
        %v1067 = vld [vmem:[#allocation2 + $0x10] sm:$0xff]
        %v1068 = vld [vmem:[#allocation2 + $0x18] sm:$0xff]
        %vm1069 = vcmask 64512
        %v1071 = vsel %vm1069, %v1065, 0
        %v1074 = vsel %vm1069, %v891, 0
        %1076 = vmatpush.xpose.msra.mxu0 0.0
        %1077 = vmatpush.xpose.msra.mxu0 0.0
        %1078 = vmatpush.xpose.msra.mxu0 0.0
        %1079 = vmatpush.xpose.msra.mxu0 0.0
        %1080 = vmatpush.xpose.msra.mxu0 0.0
        %1081 = vmatpush.xpose.msra.mxu0 0.0
        %1082 = vmatpush.xpose.msra.mxu0 0.0
        %1083 = vmatpush.xpose.msra.mxu0 0.0
        %1084 = vmatpush.xpose.msra.mxu0 0.0
        %1085 = vmatpush.xpose.msra.mxu0 0.0
        %1086 = vmatpush.xpose.msra.mxu0 0.0
        %1087 = vmatpush.xpose.msra.mxu0 0.0
        %1088 = vmatpush.xpose.msra.mxu0 0.0
        %1089 = vmatpush.xpose.msra.mxu0 0.0
        %1090 = vmatpush.xpose.msra.mxu0 0.0
        %1091 = vmatpush.xpose.msra.mxu0 %v1074
        %1092 = vmatmul.f32.gmra.mxu0 %v1071
        %v1093 = vpop.f32.mrf.mxu0
        %v1094 = vadd.f32 0.0, %v1093
        %1095 = vdwg.mxu0
        %v1097 = vsel %vm1069, %v1066, 0
        %v1100 = vsel %vm1069, %v911, 0
        %1102 = vmatpush.xpose.msra.mxu0 0.0
        %1103 = vmatpush.xpose.msra.mxu0 0.0
        %1104 = vmatpush.xpose.msra.mxu0 0.0
        %1105 = vmatpush.xpose.msra.mxu0 0.0
        %1106 = vmatpush.xpose.msra.mxu0 0.0
        %1107 = vmatpush.xpose.msra.mxu0 0.0
        %1108 = vmatpush.xpose.msra.mxu0 0.0
        %1109 = vmatpush.xpose.msra.mxu0 0.0
        %1110 = vmatpush.xpose.msra.mxu0 0.0
        %1111 = vmatpush.xpose.msra.mxu0 0.0
        %1112 = vmatpush.xpose.msra.mxu0 0.0
        %1113 = vmatpush.xpose.msra.mxu0 0.0
        %1114 = vmatpush.xpose.msra.mxu0 0.0
        %1115 = vmatpush.xpose.msra.mxu0 0.0
        %1116 = vmatpush.xpose.msra.mxu0 0.0
        %1117 = vmatpush.xpose.msra.mxu0 %v1100
        %1118 = vmatmul.f32.gmra.mxu0 %v1097
        %v1119 = vpop.f32.mrf.mxu0
        %v1120 = vadd.f32 0.0, %v1119
        %1121 = vdwg.mxu0
        %v1123 = vsel %vm1069, %v1067, 0
        %v1126 = vsel %vm1069, %v931, 0
        %1128 = vmatpush.xpose.msra.mxu0 0.0
        %1129 = vmatpush.xpose.msra.mxu0 0.0
        %1130 = vmatpush.xpose.msra.mxu0 0.0
        %1131 = vmatpush.xpose.msra.mxu0 0.0
        %1132 = vmatpush.xpose.msra.mxu0 0.0
        %1133 = vmatpush.xpose.msra.mxu0 0.0
        %1134 = vmatpush.xpose.msra.mxu0 0.0
        %1135 = vmatpush.xpose.msra.mxu0 0.0
        %1136 = vmatpush.xpose.msra.mxu0 0.0
        %1137 = vmatpush.xpose.msra.mxu0 0.0
        %1138 = vmatpush.xpose.msra.mxu0 0.0
        %1139 = vmatpush.xpose.msra.mxu0 0.0
        %1140 = vmatpush.xpose.msra.mxu0 0.0
        %1141 = vmatpush.xpose.msra.mxu0 0.0
        %1142 = vmatpush.xpose.msra.mxu0 0.0
        %1143 = vmatpush.xpose.msra.mxu0 %v1126
        %1144 = vmatmul.f32.gmra.mxu0 %v1123
        %v1145 = vpop.f32.mrf.mxu0
        %v1146 = vadd.f32 0.0, %v1145
        %1147 = vdwg.mxu0
        %v1149 = vsel %vm1069, %v1068, 0
        %v1152 = vsel %vm1069, %v951, 0
        %1154 = vmatpush.xpose.msra.mxu0 0.0
        %1155 = vmatpush.xpose.msra.mxu0 0.0
        %1156 = vmatpush.xpose.msra.mxu0 0.0
        %1157 = vmatpush.xpose.msra.mxu0 0.0
        %1158 = vmatpush.xpose.msra.mxu0 0.0
        %1159 = vmatpush.xpose.msra.mxu0 0.0
        %1160 = vmatpush.xpose.msra.mxu0 0.0
        %1161 = vmatpush.xpose.msra.mxu0 0.0
        %1162 = vmatpush.xpose.msra.mxu0 0.0
        %1163 = vmatpush.xpose.msra.mxu0 0.0
        %1164 = vmatpush.xpose.msra.mxu0 0.0
        %1165 = vmatpush.xpose.msra.mxu0 0.0
        %1166 = vmatpush.xpose.msra.mxu0 0.0
        %1167 = vmatpush.xpose.msra.mxu0 0.0
        %1168 = vmatpush.xpose.msra.mxu0 0.0
        %1169 = vmatpush.xpose.msra.mxu0 %v1152
        %1170 = vmatmul.f32.gmra.mxu0 %v1149
        %v1171 = vpop.f32.mrf.mxu0
        %v1172 = vadd.f32 0.0, %v1171
        %1173 = vdwg.mxu0
        %v1174 = vmul.f32 %v1094, 0.35355338
        %v1175 = vmul.f32 %v1120, 0.35355338
        %v1176 = vmul.f32 %v1146, 0.35355338
        %v1177 = vmul.f32 %v1172, 0.35355338
        %v1178 = vld [vmem:[%s696] sm:$0x3]
        %v1179 = vunpack.c.0.s8 %v1178
        %v1180 = vcvt.s32.f32 %v1179
        %vm1181 = vcmp.eq.f32.partialorder %v1180, 0.0
        %v1182 = vsel %vm1181, 1, 0
        %vm1183 = vcmp.eq.s32.totalorder %v1182, 1
        %v1184 = vsel %vm1183, -1e+09, %v1174
        %v1185 = vsel %vm1183, -1e+09, %v1175
        %v1186 = vsel %vm1183, -1e+09, %v1176
        %v1187 = vsel %vm1183, -1e+09, %v1177
        %v1188 = vld [vmem:[#allocation3] sm:$0xff]
        %v1189 = vld [vmem:[#allocation3 + $0x8] sm:$0xff]
        %v1190 = vld [vmem:[#allocation3 + $0x10] sm:$0xff]
        %v1191 = vld [vmem:[#allocation3 + $0x18] sm:$0xff]
        %v1192 = vsel %vm1069, %v1184, -inf
        %1193 = vmax.xlane.f32.xlu0 %v1192
        %v1194 = vpop.xlane.xlu0 %1193
        %v1195 = vsel %vm1069, %v1185, -inf
        %1196 = vmax.xlane.f32.xlu0 %v1195
        %v1197 = vpop.xlane.xlu0 %1196
        %v1198 = vsel %vm1069, %v1186, -inf
        %1199 = vmax.xlane.f32.xlu0 %v1198
        %v1200 = vpop.xlane.xlu0 %1199
        %v1201 = vsel %vm1069, %v1187, -inf
        %1202 = vmax.xlane.f32.xlu0 %v1201
        %v1203 = vpop.xlane.xlu0 %1202
        %v1204 = vmax.f32 %v1188, %v1194
        %v1205 = vmax.f32 %v1189, %v1197
        %v1206 = vmax.f32 %v1190, %v1200
        %v1207 = vmax.f32 %v1191, %v1203
        %v1208 = vsub.f32 %v1188, %v1204
        %v1209 = vsub.f32 %v1189, %v1205
        %v1210 = vsub.f32 %v1190, %v1206
        %v1211 = vsub.f32 %v1191, %v1207
        %v1212 = vmul.f32 %v1208, 1.442695
        %v1213 = vpow.pop %v1212
        %v1214 = vmul.f32 %v1209, 1.442695
        %v1215 = vpow.pop %v1214
        %v1216 = vmul.f32 %v1210, 1.442695
        %v1217 = vpow.pop %v1216
        %v1218 = vmul.f32 %v1211, 1.442695
        %v1219 = vpow.pop %v1218
        %1221 = vset.pattern.permute.xlu0 0
        %1222 = vperm.xlu0 %1221, %v1204
        %v1223 = vpop.permute.xlu0 %1222
        %1226 = vset.pattern.permute.xlu0 0
        %1227 = vperm.xlu0 %1226, %v1205
        %v1228 = vpop.permute.xlu0 %1227
        %1231 = vset.pattern.permute.xlu0 0
        %1232 = vperm.xlu0 %1231, %v1206
        %v1233 = vpop.permute.xlu0 %1232
        %1236 = vset.pattern.permute.xlu0 0
        %1237 = vperm.xlu0 %1236, %v1207
        %v1238 = vpop.permute.xlu0 %1237
        %v1240 = vsub.f32 %v1184, %v1223
        %v1241 = vsub.f32 %v1185, %v1228
        %v1242 = vsub.f32 %v1186, %v1233
        %v1243 = vsub.f32 %v1187, %v1238
        %v1244 = vmul.f32 %v1240, 1.442695
        %v1245 = vpow.pop %v1244
        %v1246 = vmul.f32 %v1241, 1.442695
        %v1247 = vpow.pop %v1246
        %v1248 = vmul.f32 %v1242, 1.442695
        %v1249 = vpow.pop %v1248
        %v1250 = vmul.f32 %v1243, 1.442695
        %v1251 = vpow.pop %v1250
        %v1252 = vld [vmem:[#allocation4] sm:$0xff]
        %v1253 = vld [vmem:[#allocation4 + $0x8] sm:$0xff]
        %v1254 = vld [vmem:[#allocation4 + $0x10] sm:$0xff]
        %v1255 = vld [vmem:[#allocation4 + $0x18] sm:$0xff]
        %v1256 = vmul.f32 %v1213, %v1252
        %v1257 = vmul.f32 %v1215, %v1253
        %v1258 = vmul.f32 %v1217, %v1254
        %v1259 = vmul.f32 %v1219, %v1255
        %v1260 = vsel %vm1069, %v1245, 0.0
        %1261 = vadd.xlane.f32.xlu0 %v1260
        %v1262 = vpop.xlane.xlu0 %1261
        %v1263 = vsel %vm1069, %v1247, 0.0
        %1264 = vadd.xlane.f32.xlu0 %v1263
        %v1265 = vpop.xlane.xlu0 %1264
        %v1266 = vsel %vm1069, %v1249, 0.0
        %1267 = vadd.xlane.f32.xlu0 %v1266
        %v1268 = vpop.xlane.xlu0 %1267
        %v1269 = vsel %vm1069, %v1251, 0.0
        %1270 = vadd.xlane.f32.xlu0 %v1269
        %v1271 = vpop.xlane.xlu0 %1270
        %v1272 = vadd.f32 %v1256, %v1262
        %v1273 = vadd.f32 %v1257, %v1265
        %v1274 = vadd.f32 %v1258, %v1268
        %v1275 = vadd.f32 %v1259, %v1271
        %vm1276 = vcmask 7168
        %1277 = vst.msk [vmem:[#allocation4] sm:$0xff] %vm1276, %v1272
        %1278 = vst.msk [vmem:[#allocation4 + $0x8] sm:$0xff] %vm1276, %v1273
        %1279 = vst.msk [vmem:[#allocation4 + $0x10] sm:$0xff] %vm1276, %v1274
        %1280 = vst.msk [vmem:[#allocation4 + $0x18] sm:$0xff] %vm1276, %v1275
        %v1281 = vld [vmem:[#allocation5] sm:$0xff]
        %v1282 = vld [vmem:[#allocation5 + $0x8] sm:$0xff]
        %v1283 = vld [vmem:[#allocation5 + $0x10] sm:$0xff]
        %v1284 = vld [vmem:[#allocation5 + $0x18] sm:$0xff]
        %1286 = vset.pattern.permute.xlu0 0
        %1287 = vperm.xlu0 %1286, %v1213
        %v1288 = vpop.permute.xlu0 %1287
        %1291 = vset.pattern.permute.xlu0 0
        %1292 = vperm.xlu0 %1291, %v1215
        %v1293 = vpop.permute.xlu0 %1292
        %1296 = vset.pattern.permute.xlu0 0
        %1297 = vperm.xlu0 %1296, %v1217
        %v1298 = vpop.permute.xlu0 %1297
        %1301 = vset.pattern.permute.xlu0 0
        %1302 = vperm.xlu0 %1301, %v1219
        %v1303 = vpop.permute.xlu0 %1302
        %v1305 = vmul.f32 %v1288, %v1281
        %v1306 = vmul.f32 %v1293, %v1282
        %v1307 = vmul.f32 %v1298, %v1283
        %v1308 = vmul.f32 %v1303, %v1284
        %v1310 = vsel %vm1069, %v1245, 0
        %1312 = vmatpush.msra.mxu0 0.0
        %1313 = vmatpush.msra.mxu0 0.0
        %1314 = vmatpush.msra.mxu0 0.0
        %1315 = vmatpush.msra.mxu0 0.0
        %1316 = vmatpush.msra.mxu0 0.0
        %1317 = vmatpush.msra.mxu0 0.0
        %1318 = vmatpush.msra.mxu0 0.0
        %1319 = vmatpush.msra.mxu0 0.0
        %1320 = vmatpush.msra.mxu0 0.0
        %1321 = vmatpush.msra.mxu0 0.0
        %1322 = vmatpush.msra.mxu0 0.0
        %1323 = vmatpush.msra.mxu0 0.0
        %1324 = vmatpush.msra.mxu0 0.0
        %1325 = vmatpush.msra.mxu0 0.0
        %1326 = vmatpush.msra.mxu0 0.0
        %1327 = vmatpush.msra.mxu0 %v1003
        %1328 = vmatmul.f32.gmra.mxu0 %v1310
        %v1329 = vpop.f32.mrf.mxu0
        %v1330 = vadd.f32 0.0, %v1329
        %1331 = vdwg.mxu0
        %v1333 = vsel %vm1069, %v1247, 0
        %1335 = vmatpush.msra.mxu0 0.0
        %1336 = vmatpush.msra.mxu0 0.0
        %1337 = vmatpush.msra.mxu0 0.0
        %1338 = vmatpush.msra.mxu0 0.0
        %1339 = vmatpush.msra.mxu0 0.0
        %1340 = vmatpush.msra.mxu0 0.0
        %1341 = vmatpush.msra.mxu0 0.0
        %1342 = vmatpush.msra.mxu0 0.0
        %1343 = vmatpush.msra.mxu0 0.0
        %1344 = vmatpush.msra.mxu0 0.0
        %1345 = vmatpush.msra.mxu0 0.0
        %1346 = vmatpush.msra.mxu0 0.0
        %1347 = vmatpush.msra.mxu0 0.0
        %1348 = vmatpush.msra.mxu0 0.0
        %1349 = vmatpush.msra.mxu0 0.0
        %1350 = vmatpush.msra.mxu0 %v1023
        %1351 = vmatmul.f32.gmra.mxu0 %v1333
        %v1352 = vpop.f32.mrf.mxu0
        %v1353 = vadd.f32 0.0, %v1352
        %1354 = vdwg.mxu0
        %v1356 = vsel %vm1069, %v1249, 0
        %1358 = vmatpush.msra.mxu0 0.0
        %1359 = vmatpush.msra.mxu0 0.0
        %1360 = vmatpush.msra.mxu0 0.0
        %1361 = vmatpush.msra.mxu0 0.0
        %1362 = vmatpush.msra.mxu0 0.0
        %1363 = vmatpush.msra.mxu0 0.0
        %1364 = vmatpush.msra.mxu0 0.0
        %1365 = vmatpush.msra.mxu0 0.0
        %1366 = vmatpush.msra.mxu0 0.0
        %1367 = vmatpush.msra.mxu0 0.0
        %1368 = vmatpush.msra.mxu0 0.0
        %1369 = vmatpush.msra.mxu0 0.0
        %1370 = vmatpush.msra.mxu0 0.0
        %1371 = vmatpush.msra.mxu0 0.0
        %1372 = vmatpush.msra.mxu0 0.0
        %1373 = vmatpush.msra.mxu0 %v1043
        %1374 = vmatmul.f32.gmra.mxu0 %v1356
        %v1375 = vpop.f32.mrf.mxu0
        %v1376 = vadd.f32 0.0, %v1375
        %1377 = vdwg.mxu0
        %v1379 = vsel %vm1069, %v1251, 0
        %1381 = vmatpush.msra.mxu0 0.0
        %1382 = vmatpush.msra.mxu0 0.0
        %1383 = vmatpush.msra.mxu0 0.0
        %1384 = vmatpush.msra.mxu0 0.0
        %1385 = vmatpush.msra.mxu0 0.0
        %1386 = vmatpush.msra.mxu0 0.0
        %1387 = vmatpush.msra.mxu0 0.0
        %1388 = vmatpush.msra.mxu0 0.0
        %1389 = vmatpush.msra.mxu0 0.0
        %1390 = vmatpush.msra.mxu0 0.0
        %1391 = vmatpush.msra.mxu0 0.0
        %1392 = vmatpush.msra.mxu0 0.0
        %1393 = vmatpush.msra.mxu0 0.0
        %1394 = vmatpush.msra.mxu0 0.0
        %1395 = vmatpush.msra.mxu0 0.0
        %1396 = vmatpush.msra.mxu0 %v1063
        %1397 = vmatmul.f32.gmra.mxu0 %v1379
        %v1398 = vpop.f32.mrf.mxu0
        %v1399 = vadd.f32 0.0, %v1398
        %1400 = vdwg.mxu0
        %v1401 = vadd.f32 %v1305, %v1330
        %v1402 = vadd.f32 %v1306, %v1353
        %v1403 = vadd.f32 %v1307, %v1376
        %v1404 = vadd.f32 %v1308, %v1399
        %1405 = vst.msk [vmem:[#allocation5] sm:$0xff] %vm1069, %v1401
        %1406 = vst.msk [vmem:[#allocation5 + $0x8] sm:$0xff] %vm1069, %v1402
        %1407 = vst.msk [vmem:[#allocation5 + $0x10] sm:$0xff] %vm1069, %v1403
        %1408 = vst.msk [vmem:[#allocation5 + $0x18] sm:$0xff] %vm1069, %v1404
        %1409 = vst.msk [vmem:[#allocation3] sm:$0xff] %vm1276, %v1204
        %1410 = vst.msk [vmem:[#allocation3 + $0x8] sm:$0xff] %vm1276, %v1205
        %1411 = vst.msk [vmem:[#allocation3 + $0x10] sm:$0xff] %vm1276, %v1206
        %1412 = vst.msk [vmem:[#allocation3 + $0x18] sm:$0xff] %vm1276, %v1207
        // Predicated region
        $region101: #{tpu_custom_call.1} parent=95 // pred_check
          %p1413 = pneg %p698
        $region102: #{tpu_custom_call.1} parent=95 // pred_check_branch
          %1415 = sbr.rel (%p1413) target = $region104
        $region103: #{tpu_custom_call.1} parent=95 // pred_region
          %v1416 = vld [vmem:[#allocation4] sm:$0xff]
          %v1417 = vld [vmem:[#allocation4 + $0x8] sm:$0xff]
          %v1418 = vld [vmem:[#allocation4 + $0x10] sm:$0xff]
          %v1419 = vld [vmem:[#allocation4 + $0x18] sm:$0xff]
          %v1420 = vrcp.pop %v1416
          %v1421 = vmul.f32 %v1416, %v1420
          %v1422 = vsub.f32 1.0, %v1421
          %v1423 = vmul.f32 %v1420, %v1422
          %v1424 = vadd.f32 %v1420, %v1423
          %vm1425 = vweird.f32 %v1416
          %vm1426 = vweird.f32 %v1420
          %vm1427 = vmor %vm1425, %vm1426
          %v1428 = vsel %vm1427, %v1420, %v1424
          %v1429 = vand.u32 2147483647, %v1416
          %vm1430 = vcmp.eq.f32.partialorder %v1429, 8.507059e+37
          %v1431 = vand.u32 %v1416, 2147483648
          %v1432 = vor.u32 1.1754944e-38, %v1431
          %v1433 = vsel %vm1430, %v1432, %v1428
          %v1434 = vrcp.pop %v1417
          %v1435 = vmul.f32 %v1417, %v1434
          %v1436 = vsub.f32 1.0, %v1435
          %v1437 = vmul.f32 %v1434, %v1436
          %v1438 = vadd.f32 %v1434, %v1437
          %vm1439 = vweird.f32 %v1417
          %vm1440 = vweird.f32 %v1434
          %vm1441 = vmor %vm1439, %vm1440
          %v1442 = vsel %vm1441, %v1434, %v1438
          %v1443 = vand.u32 2147483647, %v1417
          %vm1444 = vcmp.eq.f32.partialorder %v1443, 8.507059e+37
          %v1445 = vand.u32 %v1417, 2147483648
          %v1446 = vor.u32 1.1754944e-38, %v1445
          %v1447 = vsel %vm1444, %v1446, %v1442
          %v1448 = vrcp.pop %v1418
          %v1449 = vmul.f32 %v1418, %v1448
          %v1450 = vsub.f32 1.0, %v1449
          %v1451 = vmul.f32 %v1448, %v1450
          %v1452 = vadd.f32 %v1448, %v1451
          %vm1453 = vweird.f32 %v1418
          %vm1454 = vweird.f32 %v1448
          %vm1455 = vmor %vm1453, %vm1454
          %v1456 = vsel %vm1455, %v1448, %v1452
          %v1457 = vand.u32 2147483647, %v1418
          %vm1458 = vcmp.eq.f32.partialorder %v1457, 8.507059e+37
          %v1459 = vand.u32 %v1418, 2147483648
          %v1460 = vor.u32 1.1754944e-38, %v1459
          %v1461 = vsel %vm1458, %v1460, %v1456
          %v1462 = vrcp.pop %v1419
          %v1463 = vmul.f32 %v1419, %v1462
          %v1464 = vsub.f32 1.0, %v1463
          %v1465 = vmul.f32 %v1462, %v1464
          %v1466 = vadd.f32 %v1462, %v1465
          %vm1467 = vweird.f32 %v1419
          %vm1468 = vweird.f32 %v1462
          %vm1469 = vmor %vm1467, %vm1468
          %v1470 = vsel %vm1469, %v1462, %v1466
          %v1471 = vand.u32 2147483647, %v1419
          %vm1472 = vcmp.eq.f32.partialorder %v1471, 8.507059e+37
          %v1473 = vand.u32 %v1419, 2147483648
          %v1474 = vor.u32 1.1754944e-38, %v1473
          %v1475 = vsel %vm1472, %v1474, %v1470
          %v1476 = vld [vmem:[#allocation5] sm:$0xff]
          %v1477 = vld [vmem:[#allocation5 + $0x8] sm:$0xff]
          %v1478 = vld [vmem:[#allocation5 + $0x10] sm:$0xff]
          %v1479 = vld [vmem:[#allocation5 + $0x18] sm:$0xff]
          %1481 = vset.pattern.permute.xlu0 0
          %1482 = vperm.xlu0 %1481, %v1433
          %v1483 = vpop.permute.xlu0 %1482
          %1486 = vset.pattern.permute.xlu0 0
          %1487 = vperm.xlu0 %1486, %v1447
          %v1488 = vpop.permute.xlu0 %1487
          %1491 = vset.pattern.permute.xlu0 0
          %1492 = vperm.xlu0 %1491, %v1461
          %v1493 = vpop.permute.xlu0 %1492
          %1496 = vset.pattern.permute.xlu0 0
          %1497 = vperm.xlu0 %1496, %v1475
          %v1498 = vpop.permute.xlu0 %1497
          %v1500 = vmul.f32 %v1476, %v1483
          %v1501 = vmul.f32 %v1477, %v1488
          %v1502 = vmul.f32 %v1478, %v1493
          %v1503 = vmul.f32 %v1479, %v1498
          %v1504 = vld [vmem:[%s9] sm:$0xff]
          %v1505 = vld [vmem:[%s9 + $0x8] sm:$0xff]
          %v1506 = vld [vmem:[%s9 + $0x10] sm:$0xff]
          %v1507 = vld [vmem:[%s9 + $0x18] sm:$0xff]
          %v1509 = vsel %vm1069, %v1500, 0
          %1511 = vmatpush.msra.mxu0 0.0
          %1512 = vmatpush.msra.mxu0 0.0
          %1513 = vmatpush.msra.mxu0 0.0
          %1514 = vmatpush.msra.mxu0 0.0
          %1515 = vmatpush.msra.mxu0 0.0
          %1516 = vmatpush.msra.mxu0 0.0
          %1517 = vmatpush.msra.mxu0 0.0
          %1518 = vmatpush.msra.mxu0 0.0
          %1519 = vmatpush.msra.mxu0 0.0
          %1520 = vmatpush.msra.mxu0 0.0
          %1521 = vmatpush.msra.mxu0 0.0
          %1522 = vmatpush.msra.mxu0 0.0
          %1523 = vmatpush.msra.mxu0 0.0
          %1524 = vmatpush.msra.mxu0 0.0
          %1525 = vmatpush.msra.mxu0 0.0
          %1526 = vmatpush.msra.mxu0 %v1504
          %1527 = vmatmul.f32.gmra.mxu0 %v1509
          %v1528 = vpop.f32.mrf.mxu0
          %v1529 = vadd.f32 0.0, %v1528
          %1530 = vdwg.mxu0
          %v1532 = vsel %vm1069, %v1501, 0
          %1534 = vmatpush.msra.mxu0 0.0
          %1535 = vmatpush.msra.mxu0 0.0
          %1536 = vmatpush.msra.mxu0 0.0
          %1537 = vmatpush.msra.mxu0 0.0
          %1538 = vmatpush.msra.mxu0 0.0
          %1539 = vmatpush.msra.mxu0 0.0
          %1540 = vmatpush.msra.mxu0 0.0
          %1541 = vmatpush.msra.mxu0 0.0
          %1542 = vmatpush.msra.mxu0 0.0
          %1543 = vmatpush.msra.mxu0 0.0
          %1544 = vmatpush.msra.mxu0 0.0
          %1545 = vmatpush.msra.mxu0 0.0
          %1546 = vmatpush.msra.mxu0 0.0
          %1547 = vmatpush.msra.mxu0 0.0
          %1548 = vmatpush.msra.mxu0 0.0
          %1549 = vmatpush.msra.mxu0 %v1505
          %1550 = vmatmul.f32.gmra.mxu0 %v1532
          %v1551 = vpop.f32.mrf.mxu0
          %v1552 = vadd.f32 0.0, %v1551
          %1553 = vdwg.mxu0
          %v1555 = vsel %vm1069, %v1502, 0
          %1557 = vmatpush.msra.mxu0 0.0
          %1558 = vmatpush.msra.mxu0 0.0
          %1559 = vmatpush.msra.mxu0 0.0
          %1560 = vmatpush.msra.mxu0 0.0
          %1561 = vmatpush.msra.mxu0 0.0
          %1562 = vmatpush.msra.mxu0 0.0
          %1563 = vmatpush.msra.mxu0 0.0
          %1564 = vmatpush.msra.mxu0 0.0
          %1565 = vmatpush.msra.mxu0 0.0
          %1566 = vmatpush.msra.mxu0 0.0
          %1567 = vmatpush.msra.mxu0 0.0
          %1568 = vmatpush.msra.mxu0 0.0
          %1569 = vmatpush.msra.mxu0 0.0
          %1570 = vmatpush.msra.mxu0 0.0
          %1571 = vmatpush.msra.mxu0 0.0
          %1572 = vmatpush.msra.mxu0 %v1506
          %1573 = vmatmul.f32.gmra.mxu0 %v1555
          %v1574 = vpop.f32.mrf.mxu0
          %v1575 = vadd.f32 0.0, %v1574
          %1576 = vdwg.mxu0
          %v1578 = vsel %vm1069, %v1503, 0
          %1580 = vmatpush.msra.mxu0 0.0
          %1581 = vmatpush.msra.mxu0 0.0
          %1582 = vmatpush.msra.mxu0 0.0
          %1583 = vmatpush.msra.mxu0 0.0
          %1584 = vmatpush.msra.mxu0 0.0
          %1585 = vmatpush.msra.mxu0 0.0
          %1586 = vmatpush.msra.mxu0 0.0
          %1587 = vmatpush.msra.mxu0 0.0
          %1588 = vmatpush.msra.mxu0 0.0
          %1589 = vmatpush.msra.mxu0 0.0
          %1590 = vmatpush.msra.mxu0 0.0
          %1591 = vmatpush.msra.mxu0 0.0
          %1592 = vmatpush.msra.mxu0 0.0
          %1593 = vmatpush.msra.mxu0 0.0
          %1594 = vmatpush.msra.mxu0 0.0
          %1595 = vmatpush.msra.mxu0 %v1507
          %1596 = vmatmul.f32.gmra.mxu0 %v1578
          %v1597 = vpop.f32.mrf.mxu0
          %v1598 = vadd.f32 0.0, %v1597
          %1599 = vdwg.mxu0
          %v1600 = vsel %vm869, %v1529, 0.0
          %v1601 = vsel %vm869, %v1552, 0.0
          %v1602 = vadd.f32 %v1600, %v1601
          %v1603 = vsel %vm869, %v1575, 0.0
          %v1604 = vadd.f32 %v1602, %v1603
          %v1605 = vsel %vm869, %v1598, 0.0
          %v1606 = vadd.f32 %v1604, %v1605
          %v1607 = vld [vmem:[%s10] sm:$0x1]
          %v1609 = vperm.slane %v1607, 0
          %v1611 = vadd.f32 %v1606, %v1609
          %v1612 = vadd.f32 %v697, %v1611
          %v1613 = vld [vmem:[%s15] sm:$0x1]
          %v1614 = vld [vmem:[%s16] sm:$0x1]
          %v1615 = vsel %vm869, %v1612, 0.0
          %1616 = vadd.xlane.f32.xlu0 %v1615
          %v1617 = vpop.xlane.xlu0 %1616
          %v1618 = vrcp.pop 32.0
          %v1619 = vmul.f32 32.0, %v1618
          %v1620 = vsub.f32 1.0, %v1619
          %v1621 = vmul.f32 %v1618, %v1620
          %v1622 = vadd.f32 %v1618, %v1621
          %vm1623 = vweird.f32 %v1618
          %v1624 = vsel %vm1623, %v1618, %v1622
          %v1625 = vmul.f32 %v1617, %v1624
          %v1626 = vsub.f32 %v1612, %v1625
          %v1627 = vmul.f32 %v1626, %v1626
          %v1628 = vsel %vm869, %v1627, 0.0
          %1629 = vadd.xlane.f32.xlu0 %v1628
          %v1630 = vpop.xlane.xlu0 %1629
          %v1631 = vmul.f32 %v1630, %v1624
          %v1632 = vadd.f32 %v1631, 1e-05
          %v1633 = vrsqrt.pop %v1632
          %v1634 = vmul.f32 %v1633, %v1632
          %v1635 = vmul.f32 %v1634, %v1633
          %v1636 = vmul.f32 0.5, %v1635
          %v1637 = vsub.f32 1.5, %v1636
          %v1638 = vmul.f32 %v1633, %v1637
          %vm1639 = vweird.f32 %v1632
          %vm1640 = vweird.f32 %v1633
          %vm1641 = vmor %vm1639, %vm1640
          %v1642 = vsel %vm1641, %v1633, %v1638
          %v1643 = vmul.f32 %v1626, %v1642
          %v1645 = vperm.slane %v1613, 0
          %v1647 = vmul.f32 %v1643, %v1645
          %v1649 = vperm.slane %v1614, 0
          %v1651 = vadd.f32 %v1647, %v1649
          %v1652 = vld [vmem:[%s11] sm:$0xff]
          %v1653 = vld [vmem:[%s11 + $0x8] sm:$0xff]
          %v1654 = vld [vmem:[%s11 + $0x10] sm:$0xff]
          %v1655 = vld [vmem:[%s11 + $0x18] sm:$0xff]
          %v1656 = vld [vmem:[%s11 + $0x20] sm:$0xff]
          %v1657 = vld [vmem:[%s11 + $0x28] sm:$0xff]
          %v1658 = vld [vmem:[%s11 + $0x30] sm:$0xff]
          %v1659 = vld [vmem:[%s11 + $0x38] sm:$0xff]
          %v1660 = vld [vmem:[%s11 + $0x40] sm:$0xff]
          %v1661 = vld [vmem:[%s11 + $0x48] sm:$0xff]
          %v1662 = vld [vmem:[%s11 + $0x50] sm:$0xff]
          %v1663 = vld [vmem:[%s11 + $0x58] sm:$0xff]
          %v1664 = vld [vmem:[%s11 + $0x60] sm:$0xff]
          %v1665 = vld [vmem:[%s11 + $0x68] sm:$0xff]
          %v1666 = vld [vmem:[%s11 + $0x70] sm:$0xff]
          %v1667 = vld [vmem:[%s11 + $0x78] sm:$0xff]
          %v1668 = vld [vmem:[%s11 + $0x80] sm:$0xff]
          %v1669 = vld [vmem:[%s11 + $0x88] sm:$0xff]
          %v1670 = vld [vmem:[%s11 + $0x90] sm:$0xff]
          %v1671 = vld [vmem:[%s11 + $0x98] sm:$0xff]
          %v1672 = vld [vmem:[%s11 + $0xa0] sm:$0xff]
          %v1673 = vld [vmem:[%s11 + $0xa8] sm:$0xff]
          %v1674 = vld [vmem:[%s11 + $0xb0] sm:$0xff]
          %v1675 = vld [vmem:[%s11 + $0xb8] sm:$0xff]
          %v1676 = vld [vmem:[%s11 + $0xc0] sm:$0xff]
          %v1677 = vld [vmem:[%s11 + $0xc8] sm:$0xff]
          %v1678 = vld [vmem:[%s11 + $0xd0] sm:$0xff]
          %v1679 = vld [vmem:[%s11 + $0xd8] sm:$0xff]
          %v1680 = vld [vmem:[%s11 + $0xe0] sm:$0xff]
          %v1681 = vld [vmem:[%s11 + $0xe8] sm:$0xff]
          %v1682 = vld [vmem:[%s11 + $0xf0] sm:$0xff]
          %v1683 = vld [vmem:[%s11 + $0xf8] sm:$0xff]
          %v1684 = vld [vmem:[%s11 + $0x100] sm:$0xff]
          %v1685 = vld [vmem:[%s11 + $0x108] sm:$0xff]
          %v1686 = vld [vmem:[%s11 + $0x110] sm:$0xff]
          %v1687 = vld [vmem:[%s11 + $0x118] sm:$0xff]
          %v1688 = vld [vmem:[%s11 + $0x120] sm:$0xff]
          %v1689 = vld [vmem:[%s11 + $0x128] sm:$0xff]
          %v1690 = vld [vmem:[%s11 + $0x130] sm:$0xff]
          %v1691 = vld [vmem:[%s11 + $0x138] sm:$0xff]
          %v1692 = vld [vmem:[%s11 + $0x140] sm:$0xff]
          %v1693 = vld [vmem:[%s11 + $0x148] sm:$0xff]
          %v1694 = vld [vmem:[%s11 + $0x150] sm:$0xff]
          %v1695 = vld [vmem:[%s11 + $0x158] sm:$0xff]
          %v1696 = vld [vmem:[%s11 + $0x160] sm:$0xff]
          %v1697 = vld [vmem:[%s11 + $0x168] sm:$0xff]
          %v1698 = vld [vmem:[%s11 + $0x170] sm:$0xff]
          %v1699 = vld [vmem:[%s11 + $0x178] sm:$0xff]
          %v1700 = vld [vmem:[%s11 + $0x180] sm:$0xff]
          %v1701 = vld [vmem:[%s11 + $0x188] sm:$0xff]
          %v1702 = vld [vmem:[%s11 + $0x190] sm:$0xff]
          %v1703 = vld [vmem:[%s11 + $0x198] sm:$0xff]
          %v1704 = vld [vmem:[%s11 + $0x1a0] sm:$0xff]
          %v1705 = vld [vmem:[%s11 + $0x1a8] sm:$0xff]
          %v1706 = vld [vmem:[%s11 + $0x1b0] sm:$0xff]
          %v1707 = vld [vmem:[%s11 + $0x1b8] sm:$0xff]
          %v1708 = vld [vmem:[%s11 + $0x1c0] sm:$0xff]
          %v1709 = vld [vmem:[%s11 + $0x1c8] sm:$0xff]
          %v1710 = vld [vmem:[%s11 + $0x1d0] sm:$0xff]
          %v1711 = vld [vmem:[%s11 + $0x1d8] sm:$0xff]
          %v1712 = vld [vmem:[%s11 + $0x1e0] sm:$0xff]
          %v1713 = vld [vmem:[%s11 + $0x1e8] sm:$0xff]
          %v1714 = vld [vmem:[%s11 + $0x1f0] sm:$0xff]
          %v1715 = vld [vmem:[%s11 + $0x1f8] sm:$0xff]
          %v1716 = vld [vmem:[%s12] sm:$0xff]
          %v1717 = vld [vmem:[%s12 + $0x8] sm:$0xff]
          %v1720 = vperm.slane %v1716, 0
          %v1721 = vperm.slane %v1716, 1
          %v1722 = vperm.slane %v1716, 2
          %v1723 = vperm.slane %v1716, 3
          %v1724 = vperm.slane %v1716, 4
          %v1725 = vperm.slane %v1716, 5
          %v1726 = vperm.slane %v1716, 6
          %v1727 = vperm.slane %v1716, 7
          %v1728 = vperm.slane %v1717, 0
          %v1729 = vperm.slane %v1717, 1
          %v1730 = vperm.slane %v1717, 2
          %v1731 = vperm.slane %v1717, 3
          %v1732 = vperm.slane %v1717, 4
          %v1733 = vperm.slane %v1717, 5
          %v1734 = vperm.slane %v1717, 6
          %v1735 = vperm.slane %v1717, 7
          %v1753 = vsel %vm869, %v1651, 0
          %1755 = vmatpush.msra.mxu0 0.0
          %1756 = vmatpush.msra.mxu0 0.0
          %1757 = vmatpush.msra.mxu0 0.0
          %1758 = vmatpush.msra.mxu0 0.0
          %1759 = vmatpush.msra.mxu0 0.0
          %1760 = vmatpush.msra.mxu0 0.0
          %1761 = vmatpush.msra.mxu0 0.0
          %1762 = vmatpush.msra.mxu0 0.0
          %1763 = vmatpush.msra.mxu0 0.0
          %1764 = vmatpush.msra.mxu0 0.0
          %1765 = vmatpush.msra.mxu0 0.0
          %1766 = vmatpush.msra.mxu0 0.0
          %1767 = vmatpush.msra.mxu0 %v1700
          %1768 = vmatpush.msra.mxu0 %v1684
          %1769 = vmatpush.msra.mxu0 %v1668
          %1770 = vmatpush.msra.mxu0 %v1652
          %1771 = vmatmul.f32.gmra.mxu0 %v1753
          %v1772 = vpop.f32.mrf.mxu0
          %v1773 = vadd.f32 %v1720, %v1772
          %1774 = vdwg.mxu0
          %1775 = vmatpush.msra.mxu0 0.0
          %1776 = vmatpush.msra.mxu0 0.0
          %1777 = vmatpush.msra.mxu0 0.0
          %1778 = vmatpush.msra.mxu0 0.0
          %1779 = vmatpush.msra.mxu0 0.0
          %1780 = vmatpush.msra.mxu0 0.0
          %1781 = vmatpush.msra.mxu0 0.0
          %1782 = vmatpush.msra.mxu0 0.0
          %1783 = vmatpush.msra.mxu0 0.0
          %1784 = vmatpush.msra.mxu0 0.0
          %1785 = vmatpush.msra.mxu0 0.0
          %1786 = vmatpush.msra.mxu0 0.0
          %1787 = vmatpush.msra.mxu0 %v1701
          %1788 = vmatpush.msra.mxu0 %v1685
          %1789 = vmatpush.msra.mxu0 %v1669
          %1790 = vmatpush.msra.mxu0 %v1653
          %1791 = vmatmul.f32.gmra.mxu0 %v1753
          %v1792 = vpop.f32.mrf.mxu0
          %v1793 = vadd.f32 %v1721, %v1792
          %1794 = vdwg.mxu0
          %1795 = vmatpush.msra.mxu0 0.0
          %1796 = vmatpush.msra.mxu0 0.0
          %1797 = vmatpush.msra.mxu0 0.0
          %1798 = vmatpush.msra.mxu0 0.0
          %1799 = vmatpush.msra.mxu0 0.0
          %1800 = vmatpush.msra.mxu0 0.0
          %1801 = vmatpush.msra.mxu0 0.0
          %1802 = vmatpush.msra.mxu0 0.0
          %1803 = vmatpush.msra.mxu0 0.0
          %1804 = vmatpush.msra.mxu0 0.0
          %1805 = vmatpush.msra.mxu0 0.0
          %1806 = vmatpush.msra.mxu0 0.0
          %1807 = vmatpush.msra.mxu0 %v1702
          %1808 = vmatpush.msra.mxu0 %v1686
          %1809 = vmatpush.msra.mxu0 %v1670
          %1810 = vmatpush.msra.mxu0 %v1654
          %1811 = vmatmul.f32.gmra.mxu0 %v1753
          %v1812 = vpop.f32.mrf.mxu0
          %v1813 = vadd.f32 %v1722, %v1812
          %1814 = vdwg.mxu0
          %1815 = vmatpush.msra.mxu0 0.0
          %1816 = vmatpush.msra.mxu0 0.0
          %1817 = vmatpush.msra.mxu0 0.0
          %1818 = vmatpush.msra.mxu0 0.0
          %1819 = vmatpush.msra.mxu0 0.0
          %1820 = vmatpush.msra.mxu0 0.0
          %1821 = vmatpush.msra.mxu0 0.0
          %1822 = vmatpush.msra.mxu0 0.0
          %1823 = vmatpush.msra.mxu0 0.0
          %1824 = vmatpush.msra.mxu0 0.0
          %1825 = vmatpush.msra.mxu0 0.0
          %1826 = vmatpush.msra.mxu0 0.0
          %1827 = vmatpush.msra.mxu0 %v1703
          %1828 = vmatpush.msra.mxu0 %v1687
          %1829 = vmatpush.msra.mxu0 %v1671
          %1830 = vmatpush.msra.mxu0 %v1655
          %1831 = vmatmul.f32.gmra.mxu0 %v1753
          %v1832 = vpop.f32.mrf.mxu0
          %v1833 = vadd.f32 %v1723, %v1832
          %1834 = vdwg.mxu0
          %1835 = vmatpush.msra.mxu0 0.0
          %1836 = vmatpush.msra.mxu0 0.0
          %1837 = vmatpush.msra.mxu0 0.0
          %1838 = vmatpush.msra.mxu0 0.0
          %1839 = vmatpush.msra.mxu0 0.0
          %1840 = vmatpush.msra.mxu0 0.0
          %1841 = vmatpush.msra.mxu0 0.0
          %1842 = vmatpush.msra.mxu0 0.0
          %1843 = vmatpush.msra.mxu0 0.0
          %1844 = vmatpush.msra.mxu0 0.0
          %1845 = vmatpush.msra.mxu0 0.0
          %1846 = vmatpush.msra.mxu0 0.0
          %1847 = vmatpush.msra.mxu0 %v1704
          %1848 = vmatpush.msra.mxu0 %v1688
          %1849 = vmatpush.msra.mxu0 %v1672
          %1850 = vmatpush.msra.mxu0 %v1656
          %1851 = vmatmul.f32.gmra.mxu0 %v1753
          %v1852 = vpop.f32.mrf.mxu0
          %v1853 = vadd.f32 %v1724, %v1852
          %1854 = vdwg.mxu0
          %1855 = vmatpush.msra.mxu0 0.0
          %1856 = vmatpush.msra.mxu0 0.0
          %1857 = vmatpush.msra.mxu0 0.0
          %1858 = vmatpush.msra.mxu0 0.0
          %1859 = vmatpush.msra.mxu0 0.0
          %1860 = vmatpush.msra.mxu0 0.0
          %1861 = vmatpush.msra.mxu0 0.0
          %1862 = vmatpush.msra.mxu0 0.0
          %1863 = vmatpush.msra.mxu0 0.0
          %1864 = vmatpush.msra.mxu0 0.0
          %1865 = vmatpush.msra.mxu0 0.0
          %1866 = vmatpush.msra.mxu0 0.0
          %1867 = vmatpush.msra.mxu0 %v1705
          %1868 = vmatpush.msra.mxu0 %v1689
          %1869 = vmatpush.msra.mxu0 %v1673
          %1870 = vmatpush.msra.mxu0 %v1657
          %1871 = vmatmul.f32.gmra.mxu0 %v1753
          %v1872 = vpop.f32.mrf.mxu0
          %v1873 = vadd.f32 %v1725, %v1872
          %1874 = vdwg.mxu0
          %1875 = vmatpush.msra.mxu0 0.0
          %1876 = vmatpush.msra.mxu0 0.0
          %1877 = vmatpush.msra.mxu0 0.0
          %1878 = vmatpush.msra.mxu0 0.0
          %1879 = vmatpush.msra.mxu0 0.0
          %1880 = vmatpush.msra.mxu0 0.0
          %1881 = vmatpush.msra.mxu0 0.0
          %1882 = vmatpush.msra.mxu0 0.0
          %1883 = vmatpush.msra.mxu0 0.0
          %1884 = vmatpush.msra.mxu0 0.0
          %1885 = vmatpush.msra.mxu0 0.0
          %1886 = vmatpush.msra.mxu0 0.0
          %1887 = vmatpush.msra.mxu0 %v1706
          %1888 = vmatpush.msra.mxu0 %v1690
          %1889 = vmatpush.msra.mxu0 %v1674
          %1890 = vmatpush.msra.mxu0 %v1658
          %1891 = vmatmul.f32.gmra.mxu0 %v1753
          %v1892 = vpop.f32.mrf.mxu0
          %v1893 = vadd.f32 %v1726, %v1892
          %1894 = vdwg.mxu0
          %1895 = vmatpush.msra.mxu0 0.0
          %1896 = vmatpush.msra.mxu0 0.0
          %1897 = vmatpush.msra.mxu0 0.0
          %1898 = vmatpush.msra.mxu0 0.0
          %1899 = vmatpush.msra.mxu0 0.0
          %1900 = vmatpush.msra.mxu0 0.0
          %1901 = vmatpush.msra.mxu0 0.0
          %1902 = vmatpush.msra.mxu0 0.0
          %1903 = vmatpush.msra.mxu0 0.0
          %1904 = vmatpush.msra.mxu0 0.0
          %1905 = vmatpush.msra.mxu0 0.0
          %1906 = vmatpush.msra.mxu0 0.0
          %1907 = vmatpush.msra.mxu0 %v1707
          %1908 = vmatpush.msra.mxu0 %v1691
          %1909 = vmatpush.msra.mxu0 %v1675
          %1910 = vmatpush.msra.mxu0 %v1659
          %1911 = vmatmul.f32.gmra.mxu0 %v1753
          %v1912 = vpop.f32.mrf.mxu0
          %v1913 = vadd.f32 %v1727, %v1912
          %1914 = vdwg.mxu0
          %1915 = vmatpush.msra.mxu0 0.0
          %1916 = vmatpush.msra.mxu0 0.0
          %1917 = vmatpush.msra.mxu0 0.0
          %1918 = vmatpush.msra.mxu0 0.0
          %1919 = vmatpush.msra.mxu0 0.0
          %1920 = vmatpush.msra.mxu0 0.0
          %1921 = vmatpush.msra.mxu0 0.0
          %1922 = vmatpush.msra.mxu0 0.0
          %1923 = vmatpush.msra.mxu0 0.0
          %1924 = vmatpush.msra.mxu0 0.0
          %1925 = vmatpush.msra.mxu0 0.0
          %1926 = vmatpush.msra.mxu0 0.0
          %1927 = vmatpush.msra.mxu0 %v1708
          %1928 = vmatpush.msra.mxu0 %v1692
          %1929 = vmatpush.msra.mxu0 %v1676
          %1930 = vmatpush.msra.mxu0 %v1660
          %1931 = vmatmul.f32.gmra.mxu0 %v1753
          %v1932 = vpop.f32.mrf.mxu0
          %v1933 = vadd.f32 %v1728, %v1932
          %1934 = vdwg.mxu0
          %1935 = vmatpush.msra.mxu0 0.0
          %1936 = vmatpush.msra.mxu0 0.0
          %1937 = vmatpush.msra.mxu0 0.0
          %1938 = vmatpush.msra.mxu0 0.0
          %1939 = vmatpush.msra.mxu0 0.0
          %1940 = vmatpush.msra.mxu0 0.0
          %1941 = vmatpush.msra.mxu0 0.0
          %1942 = vmatpush.msra.mxu0 0.0
          %1943 = vmatpush.msra.mxu0 0.0
          %1944 = vmatpush.msra.mxu0 0.0
          %1945 = vmatpush.msra.mxu0 0.0
          %1946 = vmatpush.msra.mxu0 0.0
          %1947 = vmatpush.msra.mxu0 %v1709
          %1948 = vmatpush.msra.mxu0 %v1693
          %1949 = vmatpush.msra.mxu0 %v1677
          %1950 = vmatpush.msra.mxu0 %v1661
          %1951 = vmatmul.f32.gmra.mxu0 %v1753
          %v1952 = vpop.f32.mrf.mxu0
          %v1953 = vadd.f32 %v1729, %v1952
          %1954 = vdwg.mxu0
          %1955 = vmatpush.msra.mxu0 0.0
          %1956 = vmatpush.msra.mxu0 0.0
          %1957 = vmatpush.msra.mxu0 0.0
          %1958 = vmatpush.msra.mxu0 0.0
          %1959 = vmatpush.msra.mxu0 0.0
          %1960 = vmatpush.msra.mxu0 0.0
          %1961 = vmatpush.msra.mxu0 0.0
          %1962 = vmatpush.msra.mxu0 0.0
          %1963 = vmatpush.msra.mxu0 0.0
          %1964 = vmatpush.msra.mxu0 0.0
          %1965 = vmatpush.msra.mxu0 0.0
          %1966 = vmatpush.msra.mxu0 0.0
          %1967 = vmatpush.msra.mxu0 %v1710
          %1968 = vmatpush.msra.mxu0 %v1694
          %1969 = vmatpush.msra.mxu0 %v1678
          %1970 = vmatpush.msra.mxu0 %v1662
          %1971 = vmatmul.f32.gmra.mxu0 %v1753
          %v1972 = vpop.f32.mrf.mxu0
          %v1973 = vadd.f32 %v1730, %v1972
          %1974 = vdwg.mxu0
          %1975 = vmatpush.msra.mxu0 0.0
          %1976 = vmatpush.msra.mxu0 0.0
          %1977 = vmatpush.msra.mxu0 0.0
          %1978 = vmatpush.msra.mxu0 0.0
          %1979 = vmatpush.msra.mxu0 0.0
          %1980 = vmatpush.msra.mxu0 0.0
          %1981 = vmatpush.msra.mxu0 0.0
          %1982 = vmatpush.msra.mxu0 0.0
          %1983 = vmatpush.msra.mxu0 0.0
          %1984 = vmatpush.msra.mxu0 0.0
          %1985 = vmatpush.msra.mxu0 0.0
          %1986 = vmatpush.msra.mxu0 0.0
          %1987 = vmatpush.msra.mxu0 %v1711
          %1988 = vmatpush.msra.mxu0 %v1695
          %1989 = vmatpush.msra.mxu0 %v1679
          %1990 = vmatpush.msra.mxu0 %v1663
          %1991 = vmatmul.f32.gmra.mxu0 %v1753
          %v1992 = vpop.f32.mrf.mxu0
          %v1993 = vadd.f32 %v1731, %v1992
          %1994 = vdwg.mxu0
          %1995 = vmatpush.msra.mxu0 0.0
          %1996 = vmatpush.msra.mxu0 0.0
          %1997 = vmatpush.msra.mxu0 0.0
          %1998 = vmatpush.msra.mxu0 0.0
          %1999 = vmatpush.msra.mxu0 0.0
          %2000 = vmatpush.msra.mxu0 0.0
          %2001 = vmatpush.msra.mxu0 0.0
          %2002 = vmatpush.msra.mxu0 0.0
          %2003 = vmatpush.msra.mxu0 0.0
          %2004 = vmatpush.msra.mxu0 0.0
          %2005 = vmatpush.msra.mxu0 0.0
          %2006 = vmatpush.msra.mxu0 0.0
          %2007 = vmatpush.msra.mxu0 %v1712
          %2008 = vmatpush.msra.mxu0 %v1696
          %2009 = vmatpush.msra.mxu0 %v1680
          %2010 = vmatpush.msra.mxu0 %v1664
          %2011 = vmatmul.f32.gmra.mxu0 %v1753
          %v2012 = vpop.f32.mrf.mxu0
          %v2013 = vadd.f32 %v1732, %v2012
          %2014 = vdwg.mxu0
          %2015 = vmatpush.msra.mxu0 0.0
          %2016 = vmatpush.msra.mxu0 0.0
          %2017 = vmatpush.msra.mxu0 0.0
          %2018 = vmatpush.msra.mxu0 0.0
          %2019 = vmatpush.msra.mxu0 0.0
          %2020 = vmatpush.msra.mxu0 0.0
          %2021 = vmatpush.msra.mxu0 0.0
          %2022 = vmatpush.msra.mxu0 0.0
          %2023 = vmatpush.msra.mxu0 0.0
          %2024 = vmatpush.msra.mxu0 0.0
          %2025 = vmatpush.msra.mxu0 0.0
          %2026 = vmatpush.msra.mxu0 0.0
          %2027 = vmatpush.msra.mxu0 %v1713
          %2028 = vmatpush.msra.mxu0 %v1697
          %2029 = vmatpush.msra.mxu0 %v1681
          %2030 = vmatpush.msra.mxu0 %v1665
          %2031 = vmatmul.f32.gmra.mxu0 %v1753
          %v2032 = vpop.f32.mrf.mxu0
          %v2033 = vadd.f32 %v1733, %v2032
          %2034 = vdwg.mxu0
          %2035 = vmatpush.msra.mxu0 0.0
          %2036 = vmatpush.msra.mxu0 0.0
          %2037 = vmatpush.msra.mxu0 0.0
          %2038 = vmatpush.msra.mxu0 0.0
          %2039 = vmatpush.msra.mxu0 0.0
          %2040 = vmatpush.msra.mxu0 0.0
          %2041 = vmatpush.msra.mxu0 0.0
          %2042 = vmatpush.msra.mxu0 0.0
          %2043 = vmatpush.msra.mxu0 0.0
          %2044 = vmatpush.msra.mxu0 0.0
          %2045 = vmatpush.msra.mxu0 0.0
          %2046 = vmatpush.msra.mxu0 0.0
          %2047 = vmatpush.msra.mxu0 %v1714
          %2048 = vmatpush.msra.mxu0 %v1698
          %2049 = vmatpush.msra.mxu0 %v1682
          %2050 = vmatpush.msra.mxu0 %v1666
          %2051 = vmatmul.f32.gmra.mxu0 %v1753
          %v2052 = vpop.f32.mrf.mxu0
          %v2053 = vadd.f32 %v1734, %v2052
          %2054 = vdwg.mxu0
          %2055 = vmatpush.msra.mxu0 0.0
          %2056 = vmatpush.msra.mxu0 0.0
          %2057 = vmatpush.msra.mxu0 0.0
          %2058 = vmatpush.msra.mxu0 0.0
          %2059 = vmatpush.msra.mxu0 0.0
          %2060 = vmatpush.msra.mxu0 0.0
          %2061 = vmatpush.msra.mxu0 0.0
          %2062 = vmatpush.msra.mxu0 0.0
          %2063 = vmatpush.msra.mxu0 0.0
          %2064 = vmatpush.msra.mxu0 0.0
          %2065 = vmatpush.msra.mxu0 0.0
          %2066 = vmatpush.msra.mxu0 0.0
          %2067 = vmatpush.msra.mxu0 %v1715
          %2068 = vmatpush.msra.mxu0 %v1699
          %2069 = vmatpush.msra.mxu0 %v1683
          %2070 = vmatpush.msra.mxu0 %v1667
          %2071 = vmatmul.f32.gmra.mxu0 %v1753
          %v2072 = vpop.f32.mrf.mxu0
          %v2073 = vadd.f32 %v1735, %v2072
          %2074 = vdwg.mxu0
          %v2075 = vmax.f32 %v1773, 0.0
          %v2076 = vmax.f32 %v1793, 0.0
          %v2077 = vmax.f32 %v1813, 0.0
          %v2078 = vmax.f32 %v1833, 0.0
          %v2079 = vmax.f32 %v1853, 0.0
          %v2080 = vmax.f32 %v1873, 0.0
          %v2081 = vmax.f32 %v1893, 0.0
          %v2082 = vmax.f32 %v1913, 0.0
          %v2083 = vmax.f32 %v1933, 0.0
          %v2084 = vmax.f32 %v1953, 0.0
          %v2085 = vmax.f32 %v1973, 0.0
          %v2086 = vmax.f32 %v1993, 0.0
          %v2087 = vmax.f32 %v2013, 0.0
          %v2088 = vmax.f32 %v2033, 0.0
          %v2089 = vmax.f32 %v2053, 0.0
          %v2090 = vmax.f32 %v2073, 0.0
          %v2091 = vld [vmem:[%s13] sm:$0xff]
          %v2092 = vld [vmem:[%s13 + $0x8] sm:$0xff]
          %v2093 = vld [vmem:[%s13 + $0x10] sm:$0xff]
          %v2094 = vld [vmem:[%s13 + $0x18] sm:$0xff]
          %v2095 = vld [vmem:[%s13 + $0x20] sm:$0xff]
          %v2096 = vld [vmem:[%s13 + $0x28] sm:$0xff]
          %v2097 = vld [vmem:[%s13 + $0x30] sm:$0xff]
          %v2098 = vld [vmem:[%s13 + $0x38] sm:$0xff]
          %v2099 = vld [vmem:[%s13 + $0x40] sm:$0xff]
          %v2100 = vld [vmem:[%s13 + $0x48] sm:$0xff]
          %v2101 = vld [vmem:[%s13 + $0x50] sm:$0xff]
          %v2102 = vld [vmem:[%s13 + $0x58] sm:$0xff]
          %v2103 = vld [vmem:[%s13 + $0x60] sm:$0xff]
          %v2104 = vld [vmem:[%s13 + $0x68] sm:$0xff]
          %v2105 = vld [vmem:[%s13 + $0x70] sm:$0xff]
          %v2106 = vld [vmem:[%s13 + $0x78] sm:$0xff]
          %v2107 = vld [vmem:[%s13 + $0x80] sm:$0xff]
          %v2108 = vld [vmem:[%s13 + $0x88] sm:$0xff]
          %v2109 = vld [vmem:[%s13 + $0x90] sm:$0xff]
          %v2110 = vld [vmem:[%s13 + $0x98] sm:$0xff]
          %v2111 = vld [vmem:[%s13 + $0xa0] sm:$0xff]
          %v2112 = vld [vmem:[%s13 + $0xa8] sm:$0xff]
          %v2113 = vld [vmem:[%s13 + $0xb0] sm:$0xff]
          %v2114 = vld [vmem:[%s13 + $0xb8] sm:$0xff]
          %v2115 = vld [vmem:[%s13 + $0xc0] sm:$0xff]
          %v2116 = vld [vmem:[%s13 + $0xc8] sm:$0xff]
          %v2117 = vld [vmem:[%s13 + $0xd0] sm:$0xff]
          %v2118 = vld [vmem:[%s13 + $0xd8] sm:$0xff]
          %v2119 = vld [vmem:[%s13 + $0xe0] sm:$0xff]
          %v2120 = vld [vmem:[%s13 + $0xe8] sm:$0xff]
          %v2121 = vld [vmem:[%s13 + $0xf0] sm:$0xff]
          %v2122 = vld [vmem:[%s13 + $0xf8] sm:$0xff]
          %v2123 = vld [vmem:[%s13 + $0x100] sm:$0xff]
          %v2124 = vld [vmem:[%s13 + $0x108] sm:$0xff]
          %v2125 = vld [vmem:[%s13 + $0x110] sm:$0xff]
          %v2126 = vld [vmem:[%s13 + $0x118] sm:$0xff]
          %v2127 = vld [vmem:[%s13 + $0x120] sm:$0xff]
          %v2128 = vld [vmem:[%s13 + $0x128] sm:$0xff]
          %v2129 = vld [vmem:[%s13 + $0x130] sm:$0xff]
          %v2130 = vld [vmem:[%s13 + $0x138] sm:$0xff]
          %v2131 = vld [vmem:[%s13 + $0x140] sm:$0xff]
          %v2132 = vld [vmem:[%s13 + $0x148] sm:$0xff]
          %v2133 = vld [vmem:[%s13 + $0x150] sm:$0xff]
          %v2134 = vld [vmem:[%s13 + $0x158] sm:$0xff]
          %v2135 = vld [vmem:[%s13 + $0x160] sm:$0xff]
          %v2136 = vld [vmem:[%s13 + $0x168] sm:$0xff]
          %v2137 = vld [vmem:[%s13 + $0x170] sm:$0xff]
          %v2138 = vld [vmem:[%s13 + $0x178] sm:$0xff]
          %v2139 = vld [vmem:[%s13 + $0x180] sm:$0xff]
          %v2140 = vld [vmem:[%s13 + $0x188] sm:$0xff]
          %v2141 = vld [vmem:[%s13 + $0x190] sm:$0xff]
          %v2142 = vld [vmem:[%s13 + $0x198] sm:$0xff]
          %v2143 = vld [vmem:[%s13 + $0x1a0] sm:$0xff]
          %v2144 = vld [vmem:[%s13 + $0x1a8] sm:$0xff]
          %v2145 = vld [vmem:[%s13 + $0x1b0] sm:$0xff]
          %v2146 = vld [vmem:[%s13 + $0x1b8] sm:$0xff]
          %v2147 = vld [vmem:[%s13 + $0x1c0] sm:$0xff]
          %v2148 = vld [vmem:[%s13 + $0x1c8] sm:$0xff]
          %v2149 = vld [vmem:[%s13 + $0x1d0] sm:$0xff]
          %v2150 = vld [vmem:[%s13 + $0x1d8] sm:$0xff]
          %v2151 = vld [vmem:[%s13 + $0x1e0] sm:$0xff]
          %v2152 = vld [vmem:[%s13 + $0x1e8] sm:$0xff]
          %v2153 = vld [vmem:[%s13 + $0x1f0] sm:$0xff]
          %v2154 = vld [vmem:[%s13 + $0x1f8] sm:$0xff]
          %v2155 = vld [vmem:[%s13 + $0x200] sm:$0xff]
          %v2156 = vld [vmem:[%s13 + $0x208] sm:$0xff]
          %v2157 = vld [vmem:[%s13 + $0x210] sm:$0xff]
          %v2158 = vld [vmem:[%s13 + $0x218] sm:$0xff]
          %v2159 = vld [vmem:[%s13 + $0x220] sm:$0xff]
          %v2160 = vld [vmem:[%s13 + $0x228] sm:$0xff]
          %v2161 = vld [vmem:[%s13 + $0x230] sm:$0xff]
          %v2162 = vld [vmem:[%s13 + $0x238] sm:$0xff]
          %v2163 = vld [vmem:[%s13 + $0x240] sm:$0xff]
          %v2164 = vld [vmem:[%s13 + $0x248] sm:$0xff]
          %v2165 = vld [vmem:[%s13 + $0x250] sm:$0xff]
          %v2166 = vld [vmem:[%s13 + $0x258] sm:$0xff]
          %v2167 = vld [vmem:[%s13 + $0x260] sm:$0xff]
          %v2168 = vld [vmem:[%s13 + $0x268] sm:$0xff]
          %v2169 = vld [vmem:[%s13 + $0x270] sm:$0xff]
          %v2170 = vld [vmem:[%s13 + $0x278] sm:$0xff]
          %v2171 = vld [vmem:[%s13 + $0x280] sm:$0xff]
          %v2172 = vld [vmem:[%s13 + $0x288] sm:$0xff]
          %v2173 = vld [vmem:[%s13 + $0x290] sm:$0xff]
          %v2174 = vld [vmem:[%s13 + $0x298] sm:$0xff]
          %v2175 = vld [vmem:[%s13 + $0x2a0] sm:$0xff]
          %v2176 = vld [vmem:[%s13 + $0x2a8] sm:$0xff]
          %v2177 = vld [vmem:[%s13 + $0x2b0] sm:$0xff]
          %v2178 = vld [vmem:[%s13 + $0x2b8] sm:$0xff]
          %v2179 = vld [vmem:[%s13 + $0x2c0] sm:$0xff]
          %v2180 = vld [vmem:[%s13 + $0x2c8] sm:$0xff]
          %v2181 = vld [vmem:[%s13 + $0x2d0] sm:$0xff]
          %v2182 = vld [vmem:[%s13 + $0x2d8] sm:$0xff]
          %v2183 = vld [vmem:[%s13 + $0x2e0] sm:$0xff]
          %v2184 = vld [vmem:[%s13 + $0x2e8] sm:$0xff]
          %v2185 = vld [vmem:[%s13 + $0x2f0] sm:$0xff]
          %v2186 = vld [vmem:[%s13 + $0x2f8] sm:$0xff]
          %v2187 = vld [vmem:[%s13 + $0x300] sm:$0xff]
          %v2188 = vld [vmem:[%s13 + $0x308] sm:$0xff]
          %v2189 = vld [vmem:[%s13 + $0x310] sm:$0xff]
          %v2190 = vld [vmem:[%s13 + $0x318] sm:$0xff]
          %v2191 = vld [vmem:[%s13 + $0x320] sm:$0xff]
          %v2192 = vld [vmem:[%s13 + $0x328] sm:$0xff]
          %v2193 = vld [vmem:[%s13 + $0x330] sm:$0xff]
          %v2194 = vld [vmem:[%s13 + $0x338] sm:$0xff]
          %v2195 = vld [vmem:[%s13 + $0x340] sm:$0xff]
          %v2196 = vld [vmem:[%s13 + $0x348] sm:$0xff]
          %v2197 = vld [vmem:[%s13 + $0x350] sm:$0xff]
          %v2198 = vld [vmem:[%s13 + $0x358] sm:$0xff]
          %v2199 = vld [vmem:[%s13 + $0x360] sm:$0xff]
          %v2200 = vld [vmem:[%s13 + $0x368] sm:$0xff]
          %v2201 = vld [vmem:[%s13 + $0x370] sm:$0xff]
          %v2202 = vld [vmem:[%s13 + $0x378] sm:$0xff]
          %v2203 = vld [vmem:[%s13 + $0x380] sm:$0xff]
          %v2204 = vld [vmem:[%s13 + $0x388] sm:$0xff]
          %v2205 = vld [vmem:[%s13 + $0x390] sm:$0xff]
          %v2206 = vld [vmem:[%s13 + $0x398] sm:$0xff]
          %v2207 = vld [vmem:[%s13 + $0x3a0] sm:$0xff]
          %v2208 = vld [vmem:[%s13 + $0x3a8] sm:$0xff]
          %v2209 = vld [vmem:[%s13 + $0x3b0] sm:$0xff]
          %v2210 = vld [vmem:[%s13 + $0x3b8] sm:$0xff]
          %v2211 = vld [vmem:[%s13 + $0x3c0] sm:$0xff]
          %v2212 = vld [vmem:[%s13 + $0x3c8] sm:$0xff]
          %v2213 = vld [vmem:[%s13 + $0x3d0] sm:$0xff]
          %v2214 = vld [vmem:[%s13 + $0x3d8] sm:$0xff]
          %v2215 = vld [vmem:[%s13 + $0x3e0] sm:$0xff]
          %v2216 = vld [vmem:[%s13 + $0x3e8] sm:$0xff]
          %v2217 = vld [vmem:[%s13 + $0x3f0] sm:$0xff]
          %v2218 = vld [vmem:[%s13 + $0x3f8] sm:$0xff]
          %v2219 = vld [vmem:[%s13 + $0x400] sm:$0xff]
          %v2220 = vld [vmem:[%s13 + $0x408] sm:$0xff]
          %v2221 = vld [vmem:[%s13 + $0x410] sm:$0xff]
          %v2222 = vld [vmem:[%s13 + $0x418] sm:$0xff]
          %v2223 = vld [vmem:[%s13 + $0x420] sm:$0xff]
          %v2224 = vld [vmem:[%s13 + $0x428] sm:$0xff]
          %v2225 = vld [vmem:[%s13 + $0x430] sm:$0xff]
          %v2226 = vld [vmem:[%s13 + $0x438] sm:$0xff]
          %v2227 = vld [vmem:[%s13 + $0x440] sm:$0xff]
          %v2228 = vld [vmem:[%s13 + $0x448] sm:$0xff]
          %v2229 = vld [vmem:[%s13 + $0x450] sm:$0xff]
          %v2230 = vld [vmem:[%s13 + $0x458] sm:$0xff]
          %v2231 = vld [vmem:[%s13 + $0x460] sm:$0xff]
          %v2232 = vld [vmem:[%s13 + $0x468] sm:$0xff]
          %v2233 = vld [vmem:[%s13 + $0x470] sm:$0xff]
          %v2234 = vld [vmem:[%s13 + $0x478] sm:$0xff]
          %v2235 = vld [vmem:[%s13 + $0x480] sm:$0xff]
          %v2236 = vld [vmem:[%s13 + $0x488] sm:$0xff]
          %v2237 = vld [vmem:[%s13 + $0x490] sm:$0xff]
          %v2238 = vld [vmem:[%s13 + $0x498] sm:$0xff]
          %v2239 = vld [vmem:[%s13 + $0x4a0] sm:$0xff]
          %v2240 = vld [vmem:[%s13 + $0x4a8] sm:$0xff]
          %v2241 = vld [vmem:[%s13 + $0x4b0] sm:$0xff]
          %v2242 = vld [vmem:[%s13 + $0x4b8] sm:$0xff]
          %v2243 = vld [vmem:[%s13 + $0x4c0] sm:$0xff]
          %v2244 = vld [vmem:[%s13 + $0x4c8] sm:$0xff]
          %v2245 = vld [vmem:[%s13 + $0x4d0] sm:$0xff]
          %v2246 = vld [vmem:[%s13 + $0x4d8] sm:$0xff]
          %v2247 = vld [vmem:[%s13 + $0x4e0] sm:$0xff]
          %v2248 = vld [vmem:[%s13 + $0x4e8] sm:$0xff]
          %v2249 = vld [vmem:[%s13 + $0x4f0] sm:$0xff]
          %v2250 = vld [vmem:[%s13 + $0x4f8] sm:$0xff]
          %v2251 = vld [vmem:[%s13 + $0x500] sm:$0xff]
          %v2252 = vld [vmem:[%s13 + $0x508] sm:$0xff]
          %v2253 = vld [vmem:[%s13 + $0x510] sm:$0xff]
          %v2254 = vld [vmem:[%s13 + $0x518] sm:$0xff]
          %v2255 = vld [vmem:[%s13 + $0x520] sm:$0xff]
          %v2256 = vld [vmem:[%s13 + $0x528] sm:$0xff]
          %v2257 = vld [vmem:[%s13 + $0x530] sm:$0xff]
          %v2258 = vld [vmem:[%s13 + $0x538] sm:$0xff]
          %v2259 = vld [vmem:[%s13 + $0x540] sm:$0xff]
          %v2260 = vld [vmem:[%s13 + $0x548] sm:$0xff]
          %v2261 = vld [vmem:[%s13 + $0x550] sm:$0xff]
          %v2262 = vld [vmem:[%s13 + $0x558] sm:$0xff]
          %v2263 = vld [vmem:[%s13 + $0x560] sm:$0xff]
          %v2264 = vld [vmem:[%s13 + $0x568] sm:$0xff]
          %v2265 = vld [vmem:[%s13 + $0x570] sm:$0xff]
          %v2266 = vld [vmem:[%s13 + $0x578] sm:$0xff]
          %v2267 = vld [vmem:[%s13 + $0x580] sm:$0xff]
          %v2268 = vld [vmem:[%s13 + $0x588] sm:$0xff]
          %v2269 = vld [vmem:[%s13 + $0x590] sm:$0xff]
          %v2270 = vld [vmem:[%s13 + $0x598] sm:$0xff]
          %v2271 = vld [vmem:[%s13 + $0x5a0] sm:$0xff]
          %v2272 = vld [vmem:[%s13 + $0x5a8] sm:$0xff]
          %v2273 = vld [vmem:[%s13 + $0x5b0] sm:$0xff]
          %v2274 = vld [vmem:[%s13 + $0x5b8] sm:$0xff]
          %v2275 = vld [vmem:[%s13 + $0x5c0] sm:$0xff]
          %v2276 = vld [vmem:[%s13 + $0x5c8] sm:$0xff]
          %v2277 = vld [vmem:[%s13 + $0x5d0] sm:$0xff]
          %v2278 = vld [vmem:[%s13 + $0x5d8] sm:$0xff]
          %v2279 = vld [vmem:[%s13 + $0x5e0] sm:$0xff]
          %v2280 = vld [vmem:[%s13 + $0x5e8] sm:$0xff]
          %v2281 = vld [vmem:[%s13 + $0x5f0] sm:$0xff]
          %v2282 = vld [vmem:[%s13 + $0x5f8] sm:$0xff]
          %v2283 = vld [vmem:[%s13 + $0x600] sm:$0xff]
          %v2284 = vld [vmem:[%s13 + $0x608] sm:$0xff]
          %v2285 = vld [vmem:[%s13 + $0x610] sm:$0xff]
          %v2286 = vld [vmem:[%s13 + $0x618] sm:$0xff]
          %v2287 = vld [vmem:[%s13 + $0x620] sm:$0xff]
          %v2288 = vld [vmem:[%s13 + $0x628] sm:$0xff]
          %v2289 = vld [vmem:[%s13 + $0x630] sm:$0xff]
          %v2290 = vld [vmem:[%s13 + $0x638] sm:$0xff]
          %v2291 = vld [vmem:[%s13 + $0x640] sm:$0xff]
          %v2292 = vld [vmem:[%s13 + $0x648] sm:$0xff]
          %v2293 = vld [vmem:[%s13 + $0x650] sm:$0xff]
          %v2294 = vld [vmem:[%s13 + $0x658] sm:$0xff]
          %v2295 = vld [vmem:[%s13 + $0x660] sm:$0xff]
          %v2296 = vld [vmem:[%s13 + $0x668] sm:$0xff]
          %v2297 = vld [vmem:[%s13 + $0x670] sm:$0xff]
          %v2298 = vld [vmem:[%s13 + $0x678] sm:$0xff]
          %v2299 = vld [vmem:[%s13 + $0x680] sm:$0xff]
          %v2300 = vld [vmem:[%s13 + $0x688] sm:$0xff]
          %v2301 = vld [vmem:[%s13 + $0x690] sm:$0xff]
          %v2302 = vld [vmem:[%s13 + $0x698] sm:$0xff]
          %v2303 = vld [vmem:[%s13 + $0x6a0] sm:$0xff]
          %v2304 = vld [vmem:[%s13 + $0x6a8] sm:$0xff]
          %v2305 = vld [vmem:[%s13 + $0x6b0] sm:$0xff]
          %v2306 = vld [vmem:[%s13 + $0x6b8] sm:$0xff]
          %v2307 = vld [vmem:[%s13 + $0x6c0] sm:$0xff]
          %v2308 = vld [vmem:[%s13 + $0x6c8] sm:$0xff]
          %v2309 = vld [vmem:[%s13 + $0x6d0] sm:$0xff]
          %v2310 = vld [vmem:[%s13 + $0x6d8] sm:$0xff]
          %v2311 = vld [vmem:[%s13 + $0x6e0] sm:$0xff]
          %v2312 = vld [vmem:[%s13 + $0x6e8] sm:$0xff]
          %v2313 = vld [vmem:[%s13 + $0x6f0] sm:$0xff]
          %v2314 = vld [vmem:[%s13 + $0x6f8] sm:$0xff]
          %v2315 = vld [vmem:[%s13 + $0x700] sm:$0xff]
          %v2316 = vld [vmem:[%s13 + $0x708] sm:$0xff]
          %v2317 = vld [vmem:[%s13 + $0x710] sm:$0xff]
          %v2318 = vld [vmem:[%s13 + $0x718] sm:$0xff]
          %v2319 = vld [vmem:[%s13 + $0x720] sm:$0xff]
          %v2320 = vld [vmem:[%s13 + $0x728] sm:$0xff]
          %v2321 = vld [vmem:[%s13 + $0x730] sm:$0xff]
          %v2322 = vld [vmem:[%s13 + $0x738] sm:$0xff]
          %v2323 = vld [vmem:[%s13 + $0x740] sm:$0xff]
          %v2324 = vld [vmem:[%s13 + $0x748] sm:$0xff]
          %v2325 = vld [vmem:[%s13 + $0x750] sm:$0xff]
          %v2326 = vld [vmem:[%s13 + $0x758] sm:$0xff]
          %v2327 = vld [vmem:[%s13 + $0x760] sm:$0xff]
          %v2328 = vld [vmem:[%s13 + $0x768] sm:$0xff]
          %v2329 = vld [vmem:[%s13 + $0x770] sm:$0xff]
          %v2330 = vld [vmem:[%s13 + $0x778] sm:$0xff]
          %v2331 = vld [vmem:[%s13 + $0x780] sm:$0xff]
          %v2332 = vld [vmem:[%s13 + $0x788] sm:$0xff]
          %v2333 = vld [vmem:[%s13 + $0x790] sm:$0xff]
          %v2334 = vld [vmem:[%s13 + $0x798] sm:$0xff]
          %v2335 = vld [vmem:[%s13 + $0x7a0] sm:$0xff]
          %v2336 = vld [vmem:[%s13 + $0x7a8] sm:$0xff]
          %v2337 = vld [vmem:[%s13 + $0x7b0] sm:$0xff]
          %v2338 = vld [vmem:[%s13 + $0x7b8] sm:$0xff]
          %v2339 = vld [vmem:[%s13 + $0x7c0] sm:$0xff]
          %v2340 = vld [vmem:[%s13 + $0x7c8] sm:$0xff]
          %v2341 = vld [vmem:[%s13 + $0x7d0] sm:$0xff]
          %v2342 = vld [vmem:[%s13 + $0x7d8] sm:$0xff]
          %v2343 = vld [vmem:[%s13 + $0x7e0] sm:$0xff]
          %v2344 = vld [vmem:[%s13 + $0x7e8] sm:$0xff]
          %v2345 = vld [vmem:[%s13 + $0x7f0] sm:$0xff]
          %v2346 = vld [vmem:[%s13 + $0x7f8] sm:$0xff]
          %v2347 = vld [vmem:[%s14] sm:$0x1]
          %v2349 = vperm.slane %v2347, 0
          %2351 = vmatpush.msra.mxu0 %v2106
          %2352 = vmatpush.msra.mxu0 %v2105
          %2353 = vmatpush.msra.mxu0 %v2104
          %2354 = vmatpush.msra.mxu0 %v2103
          %2355 = vmatpush.msra.mxu0 %v2102
          %2356 = vmatpush.msra.mxu0 %v2101
          %2357 = vmatpush.msra.mxu0 %v2100
          %2358 = vmatpush.msra.mxu0 %v2099
          %2359 = vmatpush.msra.mxu0 %v2098
          %2360 = vmatpush.msra.mxu0 %v2097
          %2361 = vmatpush.msra.mxu0 %v2096
          %2362 = vmatpush.msra.mxu0 %v2095
          %2363 = vmatpush.msra.mxu0 %v2094
          %2364 = vmatpush.msra.mxu0 %v2093
          %2365 = vmatpush.msra.mxu0 %v2092
          %2366 = vmatpush.msra.mxu0 %v2091
          %2367 = vmatmul.f32.gmra.mxu0 %v2075
          %v2368 = vpop.f32.mrf.mxu0
          %v2369 = vadd.f32 %v2349, %v2368
          %2370 = vdwg.mxu0
          %2371 = vmatpush.msra.mxu0 %v2122
          %2372 = vmatpush.msra.mxu0 %v2121
          %2373 = vmatpush.msra.mxu0 %v2120
          %2374 = vmatpush.msra.mxu0 %v2119
          %2375 = vmatpush.msra.mxu0 %v2118
          %2376 = vmatpush.msra.mxu0 %v2117
          %2377 = vmatpush.msra.mxu0 %v2116
          %2378 = vmatpush.msra.mxu0 %v2115
          %2379 = vmatpush.msra.mxu0 %v2114
          %2380 = vmatpush.msra.mxu0 %v2113
          %2381 = vmatpush.msra.mxu0 %v2112
          %2382 = vmatpush.msra.mxu0 %v2111
          %2383 = vmatpush.msra.mxu0 %v2110
          %2384 = vmatpush.msra.mxu0 %v2109
          %2385 = vmatpush.msra.mxu0 %v2108
          %2386 = vmatpush.msra.mxu0 %v2107
          %2387 = vmatmul.f32.gmra.mxu0 %v2076
          %v2388 = vpop.f32.mrf.mxu0
          %v2389 = vadd.f32 %v2369, %v2388
          %2390 = vdwg.mxu0
          %2391 = vmatpush.msra.mxu0 %v2138
          %2392 = vmatpush.msra.mxu0 %v2137
          %2393 = vmatpush.msra.mxu0 %v2136
          %2394 = vmatpush.msra.mxu0 %v2135
          %2395 = vmatpush.msra.mxu0 %v2134
          %2396 = vmatpush.msra.mxu0 %v2133
          %2397 = vmatpush.msra.mxu0 %v2132
          %2398 = vmatpush.msra.mxu0 %v2131
          %2399 = vmatpush.msra.mxu0 %v2130
          %2400 = vmatpush.msra.mxu0 %v2129
          %2401 = vmatpush.msra.mxu0 %v2128
          %2402 = vmatpush.msra.mxu0 %v2127
          %2403 = vmatpush.msra.mxu0 %v2126
          %2404 = vmatpush.msra.mxu0 %v2125
          %2405 = vmatpush.msra.mxu0 %v2124
          %2406 = vmatpush.msra.mxu0 %v2123
          %2407 = vmatmul.f32.gmra.mxu0 %v2077
          %v2408 = vpop.f32.mrf.mxu0
          %v2409 = vadd.f32 %v2389, %v2408
          %2410 = vdwg.mxu0
          %2411 = vmatpush.msra.mxu0 %v2154
          %2412 = vmatpush.msra.mxu0 %v2153
          %2413 = vmatpush.msra.mxu0 %v2152
          %2414 = vmatpush.msra.mxu0 %v2151
          %2415 = vmatpush.msra.mxu0 %v2150
          %2416 = vmatpush.msra.mxu0 %v2149
          %2417 = vmatpush.msra.mxu0 %v2148
          %2418 = vmatpush.msra.mxu0 %v2147
          %2419 = vmatpush.msra.mxu0 %v2146
          %2420 = vmatpush.msra.mxu0 %v2145
          %2421 = vmatpush.msra.mxu0 %v2144
          %2422 = vmatpush.msra.mxu0 %v2143
          %2423 = vmatpush.msra.mxu0 %v2142
          %2424 = vmatpush.msra.mxu0 %v2141
          %2425 = vmatpush.msra.mxu0 %v2140
          %2426 = vmatpush.msra.mxu0 %v2139
          %2427 = vmatmul.f32.gmra.mxu0 %v2078
          %v2428 = vpop.f32.mrf.mxu0
          %v2429 = vadd.f32 %v2409, %v2428
          %2430 = vdwg.mxu0
          %2431 = vmatpush.msra.mxu0 %v2170
          %2432 = vmatpush.msra.mxu0 %v2169
          %2433 = vmatpush.msra.mxu0 %v2168
          %2434 = vmatpush.msra.mxu0 %v2167
          %2435 = vmatpush.msra.mxu0 %v2166
          %2436 = vmatpush.msra.mxu0 %v2165
          %2437 = vmatpush.msra.mxu0 %v2164
          %2438 = vmatpush.msra.mxu0 %v2163
          %2439 = vmatpush.msra.mxu0 %v2162
          %2440 = vmatpush.msra.mxu0 %v2161
          %2441 = vmatpush.msra.mxu0 %v2160
          %2442 = vmatpush.msra.mxu0 %v2159
          %2443 = vmatpush.msra.mxu0 %v2158
          %2444 = vmatpush.msra.mxu0 %v2157
          %2445 = vmatpush.msra.mxu0 %v2156
          %2446 = vmatpush.msra.mxu0 %v2155
          %2447 = vmatmul.f32.gmra.mxu0 %v2079
          %v2448 = vpop.f32.mrf.mxu0
          %v2449 = vadd.f32 %v2429, %v2448
          %2450 = vdwg.mxu0
          %2451 = vmatpush.msra.mxu0 %v2186
          %2452 = vmatpush.msra.mxu0 %v2185
          %2453 = vmatpush.msra.mxu0 %v2184
          %2454 = vmatpush.msra.mxu0 %v2183
          %2455 = vmatpush.msra.mxu0 %v2182
          %2456 = vmatpush.msra.mxu0 %v2181
          %2457 = vmatpush.msra.mxu0 %v2180
          %2458 = vmatpush.msra.mxu0 %v2179
          %2459 = vmatpush.msra.mxu0 %v2178
          %2460 = vmatpush.msra.mxu0 %v2177
          %2461 = vmatpush.msra.mxu0 %v2176
          %2462 = vmatpush.msra.mxu0 %v2175
          %2463 = vmatpush.msra.mxu0 %v2174
          %2464 = vmatpush.msra.mxu0 %v2173
          %2465 = vmatpush.msra.mxu0 %v2172
          %2466 = vmatpush.msra.mxu0 %v2171
          %2467 = vmatmul.f32.gmra.mxu0 %v2080
          %v2468 = vpop.f32.mrf.mxu0
          %v2469 = vadd.f32 %v2449, %v2468
          %2470 = vdwg.mxu0
          %2471 = vmatpush.msra.mxu0 %v2202
          %2472 = vmatpush.msra.mxu0 %v2201
          %2473 = vmatpush.msra.mxu0 %v2200
          %2474 = vmatpush.msra.mxu0 %v2199
          %2475 = vmatpush.msra.mxu0 %v2198
          %2476 = vmatpush.msra.mxu0 %v2197
          %2477 = vmatpush.msra.mxu0 %v2196
          %2478 = vmatpush.msra.mxu0 %v2195
          %2479 = vmatpush.msra.mxu0 %v2194
          %2480 = vmatpush.msra.mxu0 %v2193
          %2481 = vmatpush.msra.mxu0 %v2192
          %2482 = vmatpush.msra.mxu0 %v2191
          %2483 = vmatpush.msra.mxu0 %v2190
          %2484 = vmatpush.msra.mxu0 %v2189
          %2485 = vmatpush.msra.mxu0 %v2188
          %2486 = vmatpush.msra.mxu0 %v2187
          %2487 = vmatmul.f32.gmra.mxu0 %v2081
          %v2488 = vpop.f32.mrf.mxu0
          %v2489 = vadd.f32 %v2469, %v2488
          %2490 = vdwg.mxu0
          %2491 = vmatpush.msra.mxu0 %v2218
          %2492 = vmatpush.msra.mxu0 %v2217
          %2493 = vmatpush.msra.mxu0 %v2216
          %2494 = vmatpush.msra.mxu0 %v2215
          %2495 = vmatpush.msra.mxu0 %v2214
          %2496 = vmatpush.msra.mxu0 %v2213
          %2497 = vmatpush.msra.mxu0 %v2212
          %2498 = vmatpush.msra.mxu0 %v2211
          %2499 = vmatpush.msra.mxu0 %v2210
          %2500 = vmatpush.msra.mxu0 %v2209
          %2501 = vmatpush.msra.mxu0 %v2208
          %2502 = vmatpush.msra.mxu0 %v2207
          %2503 = vmatpush.msra.mxu0 %v2206
          %2504 = vmatpush.msra.mxu0 %v2205
          %2505 = vmatpush.msra.mxu0 %v2204
          %2506 = vmatpush.msra.mxu0 %v2203
          %2507 = vmatmul.f32.gmra.mxu0 %v2082
          %v2508 = vpop.f32.mrf.mxu0
          %v2509 = vadd.f32 %v2489, %v2508
          %2510 = vdwg.mxu0
          %2511 = vmatpush.msra.mxu0 %v2234
          %2512 = vmatpush.msra.mxu0 %v2233
          %2513 = vmatpush.msra.mxu0 %v2232
          %2514 = vmatpush.msra.mxu0 %v2231
          %2515 = vmatpush.msra.mxu0 %v2230
          %2516 = vmatpush.msra.mxu0 %v2229
          %2517 = vmatpush.msra.mxu0 %v2228
          %2518 = vmatpush.msra.mxu0 %v2227
          %2519 = vmatpush.msra.mxu0 %v2226
          %2520 = vmatpush.msra.mxu0 %v2225
          %2521 = vmatpush.msra.mxu0 %v2224
          %2522 = vmatpush.msra.mxu0 %v2223
          %2523 = vmatpush.msra.mxu0 %v2222
          %2524 = vmatpush.msra.mxu0 %v2221
          %2525 = vmatpush.msra.mxu0 %v2220
          %2526 = vmatpush.msra.mxu0 %v2219
          %2527 = vmatmul.f32.gmra.mxu0 %v2083
          %v2528 = vpop.f32.mrf.mxu0
          %v2529 = vadd.f32 %v2509, %v2528
          %2530 = vdwg.mxu0
          %2531 = vmatpush.msra.mxu0 %v2250
          %2532 = vmatpush.msra.mxu0 %v2249
          %2533 = vmatpush.msra.mxu0 %v2248
          %2534 = vmatpush.msra.mxu0 %v2247
          %2535 = vmatpush.msra.mxu0 %v2246
          %2536 = vmatpush.msra.mxu0 %v2245
          %2537 = vmatpush.msra.mxu0 %v2244
          %2538 = vmatpush.msra.mxu0 %v2243
          %2539 = vmatpush.msra.mxu0 %v2242
          %2540 = vmatpush.msra.mxu0 %v2241
          %2541 = vmatpush.msra.mxu0 %v2240
          %2542 = vmatpush.msra.mxu0 %v2239
          %2543 = vmatpush.msra.mxu0 %v2238
          %2544 = vmatpush.msra.mxu0 %v2237
          %2545 = vmatpush.msra.mxu0 %v2236
          %2546 = vmatpush.msra.mxu0 %v2235
          %2547 = vmatmul.f32.gmra.mxu0 %v2084
          %v2548 = vpop.f32.mrf.mxu0
          %v2549 = vadd.f32 %v2529, %v2548
          %2550 = vdwg.mxu0
          %2551 = vmatpush.msra.mxu0 %v2266
          %2552 = vmatpush.msra.mxu0 %v2265
          %2553 = vmatpush.msra.mxu0 %v2264
          %2554 = vmatpush.msra.mxu0 %v2263
          %2555 = vmatpush.msra.mxu0 %v2262
          %2556 = vmatpush.msra.mxu0 %v2261
          %2557 = vmatpush.msra.mxu0 %v2260
          %2558 = vmatpush.msra.mxu0 %v2259
          %2559 = vmatpush.msra.mxu0 %v2258
          %2560 = vmatpush.msra.mxu0 %v2257
          %2561 = vmatpush.msra.mxu0 %v2256
          %2562 = vmatpush.msra.mxu0 %v2255
          %2563 = vmatpush.msra.mxu0 %v2254
          %2564 = vmatpush.msra.mxu0 %v2253
          %2565 = vmatpush.msra.mxu0 %v2252
          %2566 = vmatpush.msra.mxu0 %v2251
          %2567 = vmatmul.f32.gmra.mxu0 %v2085
          %v2568 = vpop.f32.mrf.mxu0
          %v2569 = vadd.f32 %v2549, %v2568
          %2570 = vdwg.mxu0
          %2571 = vmatpush.msra.mxu0 %v2282
          %2572 = vmatpush.msra.mxu0 %v2281
          %2573 = vmatpush.msra.mxu0 %v2280
          %2574 = vmatpush.msra.mxu0 %v2279
          %2575 = vmatpush.msra.mxu0 %v2278
          %2576 = vmatpush.msra.mxu0 %v2277
          %2577 = vmatpush.msra.mxu0 %v2276
          %2578 = vmatpush.msra.mxu0 %v2275
          %2579 = vmatpush.msra.mxu0 %v2274
          %2580 = vmatpush.msra.mxu0 %v2273
          %2581 = vmatpush.msra.mxu0 %v2272
          %2582 = vmatpush.msra.mxu0 %v2271
          %2583 = vmatpush.msra.mxu0 %v2270
          %2584 = vmatpush.msra.mxu0 %v2269
          %2585 = vmatpush.msra.mxu0 %v2268
          %2586 = vmatpush.msra.mxu0 %v2267
          %2587 = vmatmul.f32.gmra.mxu0 %v2086
          %v2588 = vpop.f32.mrf.mxu0
          %v2589 = vadd.f32 %v2569, %v2588
          %2590 = vdwg.mxu0
          %2591 = vmatpush.msra.mxu0 %v2298
          %2592 = vmatpush.msra.mxu0 %v2297
          %2593 = vmatpush.msra.mxu0 %v2296
          %2594 = vmatpush.msra.mxu0 %v2295
          %2595 = vmatpush.msra.mxu0 %v2294
          %2596 = vmatpush.msra.mxu0 %v2293
          %2597 = vmatpush.msra.mxu0 %v2292
          %2598 = vmatpush.msra.mxu0 %v2291
          %2599 = vmatpush.msra.mxu0 %v2290
          %2600 = vmatpush.msra.mxu0 %v2289
          %2601 = vmatpush.msra.mxu0 %v2288
          %2602 = vmatpush.msra.mxu0 %v2287
          %2603 = vmatpush.msra.mxu0 %v2286
          %2604 = vmatpush.msra.mxu0 %v2285
          %2605 = vmatpush.msra.mxu0 %v2284
          %2606 = vmatpush.msra.mxu0 %v2283
          %2607 = vmatmul.f32.gmra.mxu0 %v2087
          %v2608 = vpop.f32.mrf.mxu0
          %v2609 = vadd.f32 %v2589, %v2608
          %2610 = vdwg.mxu0
          %2611 = vmatpush.msra.mxu0 %v2314
          %2612 = vmatpush.msra.mxu0 %v2313
          %2613 = vmatpush.msra.mxu0 %v2312
          %2614 = vmatpush.msra.mxu0 %v2311
          %2615 = vmatpush.msra.mxu0 %v2310
          %2616 = vmatpush.msra.mxu0 %v2309
          %2617 = vmatpush.msra.mxu0 %v2308
          %2618 = vmatpush.msra.mxu0 %v2307
          %2619 = vmatpush.msra.mxu0 %v2306
          %2620 = vmatpush.msra.mxu0 %v2305
          %2621 = vmatpush.msra.mxu0 %v2304
          %2622 = vmatpush.msra.mxu0 %v2303
          %2623 = vmatpush.msra.mxu0 %v2302
          %2624 = vmatpush.msra.mxu0 %v2301
          %2625 = vmatpush.msra.mxu0 %v2300
          %2626 = vmatpush.msra.mxu0 %v2299
          %2627 = vmatmul.f32.gmra.mxu0 %v2088
          %v2628 = vpop.f32.mrf.mxu0
          %v2629 = vadd.f32 %v2609, %v2628
          %2630 = vdwg.mxu0
          %2631 = vmatpush.msra.mxu0 %v2330
          %2632 = vmatpush.msra.mxu0 %v2329
          %2633 = vmatpush.msra.mxu0 %v2328
          %2634 = vmatpush.msra.mxu0 %v2327
          %2635 = vmatpush.msra.mxu0 %v2326
          %2636 = vmatpush.msra.mxu0 %v2325
          %2637 = vmatpush.msra.mxu0 %v2324
          %2638 = vmatpush.msra.mxu0 %v2323
          %2639 = vmatpush.msra.mxu0 %v2322
          %2640 = vmatpush.msra.mxu0 %v2321
          %2641 = vmatpush.msra.mxu0 %v2320
          %2642 = vmatpush.msra.mxu0 %v2319
          %2643 = vmatpush.msra.mxu0 %v2318
          %2644 = vmatpush.msra.mxu0 %v2317
          %2645 = vmatpush.msra.mxu0 %v2316
          %2646 = vmatpush.msra.mxu0 %v2315
          %2647 = vmatmul.f32.gmra.mxu0 %v2089
          %v2648 = vpop.f32.mrf.mxu0
          %v2649 = vadd.f32 %v2629, %v2648
          %2650 = vdwg.mxu0
          %2651 = vmatpush.msra.mxu0 %v2346
          %2652 = vmatpush.msra.mxu0 %v2345
          %2653 = vmatpush.msra.mxu0 %v2344
          %2654 = vmatpush.msra.mxu0 %v2343
          %2655 = vmatpush.msra.mxu0 %v2342
          %2656 = vmatpush.msra.mxu0 %v2341
          %2657 = vmatpush.msra.mxu0 %v2340
          %2658 = vmatpush.msra.mxu0 %v2339
          %2659 = vmatpush.msra.mxu0 %v2338
          %2660 = vmatpush.msra.mxu0 %v2337
          %2661 = vmatpush.msra.mxu0 %v2336
          %2662 = vmatpush.msra.mxu0 %v2335
          %2663 = vmatpush.msra.mxu0 %v2334
          %2664 = vmatpush.msra.mxu0 %v2333
          %2665 = vmatpush.msra.mxu0 %v2332
          %2666 = vmatpush.msra.mxu0 %v2331
          %2667 = vmatmul.f32.gmra.mxu0 %v2090
          %v2668 = vpop.f32.mrf.mxu0
          %v2669 = vadd.f32 %v2649, %v2668
          %2670 = vdwg.mxu0
          %v2671 = vadd.f32 %v1651, %v2669
          %v2672 = vld [vmem:[%s17] sm:$0x1]
          %v2673 = vld [vmem:[%s18] sm:$0x1]
          %v2674 = vsel %vm869, %v2671, 0.0
          %2675 = vadd.xlane.f32.xlu0 %v2674
          %v2676 = vpop.xlane.xlu0 %2675
          %v2677 = vmul.f32 %v2676, %v1624
          %v2678 = vsub.f32 %v2671, %v2677
          %v2679 = vmul.f32 %v2678, %v2678
          %v2680 = vsel %vm869, %v2679, 0.0
          %2681 = vadd.xlane.f32.xlu0 %v2680
          %v2682 = vpop.xlane.xlu0 %2681
          %v2683 = vmul.f32 %v2682, %v1624
          %v2684 = vadd.f32 %v2683, 1e-05
          %v2685 = vrsqrt.pop %v2684
          %v2686 = vmul.f32 %v2685, %v2684
          %v2687 = vmul.f32 %v2686, %v2685
          %v2688 = vmul.f32 0.5, %v2687
          %v2689 = vsub.f32 1.5, %v2688
          %v2690 = vmul.f32 %v2685, %v2689
          %vm2691 = vweird.f32 %v2684
          %vm2692 = vweird.f32 %v2685
          %vm2693 = vmor %vm2691, %vm2692
          %v2694 = vsel %vm2693, %v2685, %v2690
          %v2695 = vmul.f32 %v2678, %v2694
          %v2697 = vperm.slane %v2672, 0
          %v2699 = vmul.f32 %v2695, %v2697
          %v2701 = vperm.slane %v2673, 0
          %v2703 = vadd.f32 %v2699, %v2701
          %2704 = vst.msk [vmem:[%s672] sm:$0xff] %vm869, %v2703
        $region104: #{tpu_custom_call.1} parent=95 // pred_fallthru
          _
        %s2705 = sand.u32 %s484, 1
        %s2706 = scalar_lea.sflag [#allocation7], %s2705
        %s2707 = sand.u32 %s484, 1
        %s2708 = smul.addr %s2707, 8
        %s2709 = scalar_lea.vmem [#allocation6], %s2708
        // Predicated region
        $region105: #{tpu_custom_call.1} parent=95 // pred_check
          %p2710 = pneg %p494
        $region106: #{tpu_custom_call.1} parent=95 // pred_check_branch
          %2712 = sbr.rel (%p2710) target = $region108
        $region107: #{tpu_custom_call.1} parent=95 // pred_region
          %2714 = vsyncadd %s2706, 0
          %s2715 = sadd.s32 %s39, %s38
          %s2716 = smul.addr %s2715, 8
          %s2717 = scalar_lea.hbm %s19, %s2716
          %s2719 = sshll.u32 %s2709, 4
          %s2720 = int_to_ptr.vmem [resolvable:$true] %s2719
          %s2721 = sshll.u32 %s2717, 4
          %s2722 = int_to_ptr.hbm [resolvable:$true] %s2721
          %2724 = dma.vmem_to_hbm [thread:$0]  %s2720, 128, %s2722, %s2706
        $region108: #{tpu_custom_call.1} parent=95 // pred_fallthru
          _
      $region96: #{tpu_custom_call.1} parent=5 // pred_fallthru
        _
      %p2725 = scmp.le.s32.totalorder 2, %s28
      // Predicated region
      $region109: #{tpu_custom_call.1} parent=5 // pred_check
        %p2726 = pneg %p2725
      $region110: #{tpu_custom_call.1} parent=5 // pred_check_branch
        %2728 = sbr.rel (%p2726) target = $region112
      $region111: #{tpu_custom_call.1} parent=5 // pred_region
        %s2729 = ssub.s32 %s28, 2
        // Predicated region
        $region113: #{tpu_custom_call.1} parent=111 // pred_check
          %p2730 = pneg %p500
        $region114: #{tpu_custom_call.1} parent=111 // pred_check_branch
          %2732 = sbr.rel (%p2730) target = $region116
        $region115: #{tpu_custom_call.1} parent=111 // pred_region
          %s2733 = sand.u32 %s485, 1
          %s2734 = scalar_lea.sflag [#allocation7], %s2733
          %s2735 = sand.u32 %s485, 1
          %s2736 = smul.addr %s2735, 8
          %s2737 = scalar_lea.vmem [#allocation6], %s2736
          %2739 = dma.done %s2734, 128
        $region116: #{tpu_custom_call.1} parent=111 // pred_fallthru
          _
      $region112: #{tpu_custom_call.1} parent=5 // pred_fallthru
        _
    $region6: #{tpu_custom_call.1} parent=1 // loop_footer
      %s32 = sadd.s32 1, %s28
    $region7: #{tpu_custom_call.1} parent=1 // loop_footer_branch
      %27 = sbr.rel target = $region3
    $region8: #{tpu_custom_call.1} parent=1 // loop_exit
      _
    %2740 = vsyncpa [#allocation7], 1
    %s2741 = scalar_lea.sflag [#allocation7], 1
    %2742 = vsyncpa %s2741, 1

// kernel: tpu_custom_call.1
$region0: #{tpu_custom_call.1}
  #allocation0 [shape = 'u32[]', space=smem, size = 0x4, offset = 0x4, fixed_abs, tag = 'smem constant byte address 0x4 - core index']
  #allocation1 [shape = 'u32[72,128]{1,0:T(1,128)}', space=vmem, size = 0x9000, scoped, tag = 'internal scratch']
  #allocation2 [shape = 'f32[4,8,8]{2,1,0:T(8,128)}', space=vmem, size = 0x4000, scoped, tag = 'scratch operand']
  #allocation3 [shape = 'f32[4,8,1]{2,1,0:T(8,128)}', space=vmem, size = 0x4000, scoped, tag = 'scratch operand']
  #allocation4 [shape = 'f32[4,8,1]{2,1,0:T(8,128)}', space=vmem, size = 0x4000, scoped, tag = 'scratch operand']
  #allocation5 [shape = 'f32[4,8,8]{2,1,0:T(8,128)}', space=vmem, size = 0x4000, scoped, tag = 'scratch operand']
  %s0 = inlined_call_operand.vmem [shape: f32[2,8,32], index: 0, kind: input, shape index: {}]
  %s1 = inlined_call_operand.vmem [shape: f32[2,8,32], index: 1, kind: input, shape index: {}]
  %s2 = inlined_call_operand.vmem [shape: s8[2,8,8], index: 2, kind: input, shape index: {}]
  %s3 = inlined_call_operand.vmem [shape: f32[4,32,8], index: 3, kind: input, shape index: {}]
  %s4 = inlined_call_operand.vmem [shape: f32[4,1,8], index: 4, kind: input, shape index: {}]
  %s5 = inlined_call_operand.vmem [shape: f32[4,32,8], index: 5, kind: input, shape index: {}]
  %s6 = inlined_call_operand.vmem [shape: f32[4,1,8], index: 6, kind: input, shape index: {}]
  %s7 = inlined_call_operand.vmem [shape: f32[4,32,8], index: 7, kind: input, shape index: {}]
  %s8 = inlined_call_operand.vmem [shape: f32[4,1,8], index: 8, kind: input, shape index: {}]
  %s9 = inlined_call_operand.vmem [shape: f32[4,8,32], index: 9, kind: input, shape index: {}]
  %s10 = inlined_call_operand.vmem [shape: f32[1,32], index: 10, kind: input, shape index: {}]
  %s11 = inlined_call_operand.vmem [shape: f32[32,2048], index: 11, kind: input, shape index: {}]
  %s12 = inlined_call_operand.vmem [shape: f32[1,2048], index: 12, kind: input, shape index: {}]
  %s13 = inlined_call_operand.vmem [shape: f32[2048,32], index: 13, kind: input, shape index: {}]
  %s14 = inlined_call_operand.vmem [shape: f32[1,32], index: 14, kind: input, shape index: {}]
  %s15 = inlined_call_operand.vmem [shape: f32[1,32], index: 15, kind: input, shape index: {}]
  %s16 = inlined_call_operand.vmem [shape: f32[1,32], index: 16, kind: input, shape index: {}]
  %s17 = inlined_call_operand.vmem [shape: f32[1,32], index: 17, kind: input, shape index: {}]
  %s18 = inlined_call_operand.vmem [shape: f32[1,32], index: 18, kind: input, shape index: {}]
  %s19 = inlined_call_operand.hbm [shape: f32[2,8,32], index: 19, kind: output, shape index: {}]
  %s20 = sld [smem:[#allocation0]]
  $region117: #{tpu_custom_call.1} parent=0
    _
  %s22 = ssub.s32 1, %s20
  %s23 = scalar_select 0, %s22, %s20
  $region1: #{tpu_custom_call.1} parent=0
    #allocation6 [shape = 'u8[8192]{0}', space=vmem, size = 0x2000, scoped, tag = 'output window, operand 0']
    #allocation7 [shape = 's32[2]{0}', space=sflag, size = 0x8, scoped, tag = 'scoped memory for tpu_custom_call.1']
    %24 = vsyncpa [#allocation7], 0
    %s25 = scalar_lea.sflag [#allocation7], 1
    %26 = vsyncpa %s25, 0
    loop: start=0, step=1, limit=4
    $region2: #{tpu_custom_call.1} parent=1 // loop_pre_header
      _
    $region3: #{tpu_custom_call.1} parent=1 // loop_header
      %s28 = sphi 0, %s32
      %p29 = scmp.ge.s32.totalorder %s28, 4
      %s35 = sphi 0, %s54
      %s36 = sphi 0, %s50
      %s37 = sphi 0, %s46
      %s38 = sphi 0, %s35
      %s39 = sphi 0, %s36
      %s40 = sphi 0, %s37
      %s41 = sphi 0, %s38
      %s42 = sphi 0, %s39
      %s43 = sphi 0, %s40
      %s59 = sphi 0, %s61
      %s62 = sphi 0, %s59
      %s63 = sphi 0, %s62
      %s79 = sphi 0, %s63
      %s87 = sphi 0, %s89
      %s90 = sphi 0, %s87
      %s91 = sphi 0, %s90
      %s107 = sphi 0, %s91
      %s117 = sphi 0, %s119
      %s120 = sphi 0, %s117
      %s121 = sphi 0, %s120
      %s137 = sphi 0, %s121
      %s141 = sphi 0, %s141
      %s143 = sphi 0, %s141
      %s144 = sphi 0, %s143
      %s158 = sphi 0, %s144
      %s162 = sphi 0, %s162
      %s164 = sphi 0, %s162
      %s165 = sphi 0, %s164
      %s179 = sphi 0, %s165
      %s183 = sphi 0, %s183
      %s185 = sphi 0, %s183
      %s186 = sphi 0, %s185
      %s200 = sphi 0, %s186
      %s204 = sphi 0, %s204
      %s206 = sphi 0, %s204
      %s207 = sphi 0, %s206
      %s221 = sphi 0, %s207
      %s225 = sphi 0, %s225
      %s227 = sphi 0, %s225
      %s228 = sphi 0, %s227
      %s242 = sphi 0, %s228
      %s246 = sphi 0, %s246
      %s248 = sphi 0, %s246
      %s249 = sphi 0, %s248
      %s263 = sphi 0, %s249
      %s267 = sphi 0, %s267
      %s269 = sphi 0, %s267
      %s270 = sphi 0, %s269
      %s284 = sphi 0, %s270
      %s288 = sphi 0, %s288
      %s290 = sphi 0, %s288
      %s291 = sphi 0, %s290
      %s305 = sphi 0, %s291
      %s309 = sphi 0, %s309
      %s311 = sphi 0, %s309
      %s312 = sphi 0, %s311
      %s326 = sphi 0, %s312
      %s330 = sphi 0, %s330
      %s332 = sphi 0, %s330
      %s333 = sphi 0, %s332
      %s347 = sphi 0, %s333
      %s351 = sphi 0, %s351
      %s353 = sphi 0, %s351
      %s354 = sphi 0, %s353
      %s368 = sphi 0, %s354
      %s372 = sphi 0, %s372
      %s374 = sphi 0, %s372
      %s375 = sphi 0, %s374
      %s389 = sphi 0, %s375
      %s393 = sphi 0, %s393
      %s395 = sphi 0, %s393
      %s396 = sphi 0, %s395
      %s410 = sphi 0, %s396
      %s414 = sphi 0, %s414
      %s416 = sphi 0, %s414
      %s417 = sphi 0, %s416
      %s431 = sphi 0, %s417
      %s435 = sphi 0, %s435
      %s437 = sphi 0, %s435
      %s438 = sphi 0, %s437
      %s452 = sphi 0, %s438
      %s456 = sphi 0, %s456
      %s458 = sphi 0, %s456
      %s459 = sphi 0, %s458
      %s473 = sphi 0, %s459
      %s481 = sphi 0, %s483
      %s484 = sphi 0, %s481
      %s485 = sphi 0, %s484
      %s501 = sphi 0, %s485
    $region4: #{tpu_custom_call.1} parent=1 // loop_header_branch
      %31 = sbr.rel (%p29) target = $region8
    $region5: #{tpu_custom_call.1} parent=1 // loop_body
      %s33 = ssub.s32 %s28, 1
      %s34 = ssub.s32 %s28, 2
      %s44 = sadd.s32 1, %s37
      %p45 = scmp.ge.s32.totalorder %s44, 1
      %s46 = scalar_select %p45, 0, %s44
      %s47 = sadd.s32 1, %s36
      %s48 = scalar_select %p45, %s47, %s36
      %p49 = scmp.ge.s32.totalorder %s48, 1
      %s50 = scalar_select %p49, 0, %s48
      %s51 = sadd.s32 1, %s35
      %s52 = scalar_select %p49, %s51, %s35
      %p53 = scmp.ge.s32.totalorder %s52, 2
      %s54 = scalar_select %p53, 0, %s52
      %s55 = ssub.s32 %s35, %s54
      %s56 = ssub.s32 %s36, %s50
      %s57 = sor.u32 %s55, %s56
      %p58 = scmp.eq.s32.totalorder %s57, 0
      %s60 = sadd.s32 %s59, 1
      %s61 = scalar_select %p58, %s59, %s60
      %p64 = pneg %p58
      %p65 = scmp.eq.s32.totalorder %s28, 1
      %p66 = por %p64, %p65
      %p67 = scmp.ne.s32.totalorder %s59, %s62
      %p68 = scmp.eq.s32.totalorder %s28, 0
      %p69 = por %p67, %p68
      %p70 = scmp.ne.s32.totalorder %s59, %s62
      %p71 = scmp.eq.s32.totalorder %s33, 1
      %p72 = por %p70, %p71
      %p73 = scmp.ne.s32.totalorder %s62, %s63
      %p74 = scmp.eq.s32.totalorder %s33, 0
      %p75 = por %p73, %p74
      %p76 = scmp.ne.s32.totalorder %s62, %s63
      %p77 = scmp.eq.s32.totalorder %s34, 1
      %p78 = por %p76, %p77
      %p80 = scmp.ne.s32.totalorder %s63, %s79
      %p81 = scmp.eq.s32.totalorder %s34, 0
      %p82 = por %p80, %p81
      %s83 = ssub.s32 %s35, %s54
      %s84 = ssub.s32 %s37, %s46
      %s85 = sor.u32 %s83, %s84
      %p86 = scmp.eq.s32.totalorder %s85, 0
      %s88 = sadd.s32 %s87, 1
      %s89 = scalar_select %p86, %s87, %s88
      %p92 = pneg %p86
      %p93 = scmp.eq.s32.totalorder %s28, 1
      %p94 = por %p92, %p93
      %p95 = scmp.ne.s32.totalorder %s87, %s90
      %p96 = scmp.eq.s32.totalorder %s28, 0
      %p97 = por %p95, %p96
      %p98 = scmp.ne.s32.totalorder %s87, %s90
      %p99 = scmp.eq.s32.totalorder %s33, 1
      %p100 = por %p98, %p99
      %p101 = scmp.ne.s32.totalorder %s90, %s91
      %p102 = scmp.eq.s32.totalorder %s33, 0
      %p103 = por %p101, %p102
      %p104 = scmp.ne.s32.totalorder %s90, %s91
      %p105 = scmp.eq.s32.totalorder %s34, 1
      %p106 = por %p104, %p105
      %p108 = scmp.ne.s32.totalorder %s91, %s107
      %p109 = scmp.eq.s32.totalorder %s34, 0
      %p110 = por %p108, %p109
      %s111 = ssub.s32 %s35, %s54
      %s112 = ssub.s32 %s36, %s50
      %s113 = sor.u32 %s111, %s112
      %s114 = ssub.s32 %s37, %s46
      %s115 = sor.u32 %s113, %s114
      %p116 = scmp.eq.s32.totalorder %s115, 0
      %s118 = sadd.s32 %s117, 1
      %s119 = scalar_select %p116, %s117, %s118
      %p122 = pneg %p116
      %p123 = scmp.eq.s32.totalorder %s28, 1
      %p124 = por %p122, %p123
      %p125 = scmp.ne.s32.totalorder %s117, %s120
      %p126 = scmp.eq.s32.totalorder %s28, 0
      %p127 = por %p125, %p126
      %p128 = scmp.ne.s32.totalorder %s117, %s120
      %p129 = scmp.eq.s32.totalorder %s33, 1
      %p130 = por %p128, %p129
      %p131 = scmp.ne.s32.totalorder %s120, %s121
      %p132 = scmp.eq.s32.totalorder %s33, 0
      %p133 = por %p131, %p132
      %p134 = scmp.ne.s32.totalorder %s120, %s121
      %p135 = scmp.eq.s32.totalorder %s34, 1
      %p136 = por %p134, %p135
      %p138 = scmp.ne.s32.totalorder %s121, %s137
      %p139 = scmp.eq.s32.totalorder %s34, 0
      %p140 = por %p138, %p139
      %s142 = sadd.s32 %s141, 1
      %p145 = scmp.eq.s32.totalorder %s28, 1
      %p146 = scmp.ne.s32.totalorder %s141, %s143
      %p147 = scmp.eq.s32.totalorder %s28, 0
      %p148 = por %p146, %p147
      %p149 = scmp.ne.s32.totalorder %s141, %s143
      %p150 = scmp.eq.s32.totalorder %s33, 1
      %p151 = por %p149, %p150
      %p152 = scmp.ne.s32.totalorder %s143, %s144
      %p153 = scmp.eq.s32.totalorder %s33, 0
      %p154 = por %p152, %p153
      %p155 = scmp.ne.s32.totalorder %s143, %s144
      %p156 = scmp.eq.s32.totalorder %s34, 1
      %p157 = por %p155, %p156
      %p159 = scmp.ne.s32.totalorder %s144, %s158
      %p160 = scmp.eq.s32.totalorder %s34, 0
      %p161 = por %p159, %p160
      %s163 = sadd.s32 %s162, 1
      %p166 = scmp.eq.s32.totalorder %s28, 1
      %p167 = scmp.ne.s32.totalorder %s162, %s164
      %p168 = scmp.eq.s32.totalorder %s28, 0
      %p169 = por %p167, %p168
      %p170 = scmp.ne.s32.totalorder %s162, %s164
      %p171 = scmp.eq.s32.totalorder %s33, 1
      %p172 = por %p170, %p171
      %p173 = scmp.ne.s32.totalorder %s164, %s165
      %p174 = scmp.eq.s32.totalorder %s33, 0
      %p175 = por %p173, %p174
      %p176 = scmp.ne.s32.totalorder %s164, %s165
      %p177 = scmp.eq.s32.totalorder %s34, 1
      %p178 = por %p176, %p177
      %p180 = scmp.ne.s32.totalorder %s165, %s179
      %p181 = scmp.eq.s32.totalorder %s34, 0
      %p182 = por %p180, %p181
      %s184 = sadd.s32 %s183, 1
      %p187 = scmp.eq.s32.totalorder %s28, 1
      %p188 = scmp.ne.s32.totalorder %s183, %s185
      %p189 = scmp.eq.s32.totalorder %s28, 0
      %p190 = por %p188, %p189
      %p191 = scmp.ne.s32.totalorder %s183, %s185
      %p192 = scmp.eq.s32.totalorder %s33, 1
      %p193 = por %p191, %p192
      %p194 = scmp.ne.s32.totalorder %s185, %s186
      %p195 = scmp.eq.s32.totalorder %s33, 0
      %p196 = por %p194, %p195
      %p197 = scmp.ne.s32.totalorder %s185, %s186
      %p198 = scmp.eq.s32.totalorder %s34, 1
      %p199 = por %p197, %p198
      %p201 = scmp.ne.s32.totalorder %s186, %s200
      %p202 = scmp.eq.s32.totalorder %s34, 0
      %p203 = por %p201, %p202
      %s205 = sadd.s32 %s204, 1
      %p208 = scmp.eq.s32.totalorder %s28, 1
      %p209 = scmp.ne.s32.totalorder %s204, %s206
      %p210 = scmp.eq.s32.totalorder %s28, 0
      %p211 = por %p209, %p210
      %p212 = scmp.ne.s32.totalorder %s204, %s206
      %p213 = scmp.eq.s32.totalorder %s33, 1
      %p214 = por %p212, %p213
      %p215 = scmp.ne.s32.totalorder %s206, %s207
      %p216 = scmp.eq.s32.totalorder %s33, 0
      %p217 = por %p215, %p216
      %p218 = scmp.ne.s32.totalorder %s206, %s207
      %p219 = scmp.eq.s32.totalorder %s34, 1
      %p220 = por %p218, %p219
      %p222 = scmp.ne.s32.totalorder %s207, %s221
      %p223 = scmp.eq.s32.totalorder %s34, 0
      %p224 = por %p222, %p223
      %s226 = sadd.s32 %s225, 1
      %p229 = scmp.eq.s32.totalorder %s28, 1
      %p230 = scmp.ne.s32.totalorder %s225, %s227
      %p231 = scmp.eq.s32.totalorder %s28, 0
      %p232 = por %p230, %p231
      %p233 = scmp.ne.s32.totalorder %s225, %s227
      %p234 = scmp.eq.s32.totalorder %s33, 1
      %p235 = por %p233, %p234
      %p236 = scmp.ne.s32.totalorder %s227, %s228
      %p237 = scmp.eq.s32.totalorder %s33, 0
      %p238 = por %p236, %p237
      %p239 = scmp.ne.s32.totalorder %s227, %s228
      %p240 = scmp.eq.s32.totalorder %s34, 1
      %p241 = por %p239, %p240
      %p243 = scmp.ne.s32.totalorder %s228, %s242
      %p244 = scmp.eq.s32.totalorder %s34, 0
      %p245 = por %p243, %p244
      %s247 = sadd.s32 %s246, 1
      %p250 = scmp.eq.s32.totalorder %s28, 1
      %p251 = scmp.ne.s32.totalorder %s246, %s248
      %p252 = scmp.eq.s32.totalorder %s28, 0
      %p253 = por %p251, %p252
      %p254 = scmp.ne.s32.totalorder %s246, %s248
      %p255 = scmp.eq.s32.totalorder %s33, 1
      %p256 = por %p254, %p255
      %p257 = scmp.ne.s32.totalorder %s248, %s249
      %p258 = scmp.eq.s32.totalorder %s33, 0
      %p259 = por %p257, %p258
      %p260 = scmp.ne.s32.totalorder %s248, %s249
      %p261 = scmp.eq.s32.totalorder %s34, 1
      %p262 = por %p260, %p261
      %p264 = scmp.ne.s32.totalorder %s249, %s263
      %p265 = scmp.eq.s32.totalorder %s34, 0
      %p266 = por %p264, %p265
      %s268 = sadd.s32 %s267, 1
      %p271 = scmp.eq.s32.totalorder %s28, 1
      %p272 = scmp.ne.s32.totalorder %s267, %s269
      %p273 = scmp.eq.s32.totalorder %s28, 0
      %p274 = por %p272, %p273
      %p275 = scmp.ne.s32.totalorder %s267, %s269
      %p276 = scmp.eq.s32.totalorder %s33, 1
      %p277 = por %p275, %p276
      %p278 = scmp.ne.s32.totalorder %s269, %s270
      %p279 = scmp.eq.s32.totalorder %s33, 0
      %p280 = por %p278, %p279
      %p281 = scmp.ne.s32.totalorder %s269, %s270
      %p282 = scmp.eq.s32.totalorder %s34, 1
      %p283 = por %p281, %p282
      %p285 = scmp.ne.s32.totalorder %s270, %s284
      %p286 = scmp.eq.s32.totalorder %s34, 0
      %p287 = por %p285, %p286
      %s289 = sadd.s32 %s288, 1
      %p292 = scmp.eq.s32.totalorder %s28, 1
      %p293 = scmp.ne.s32.totalorder %s288, %s290
      %p294 = scmp.eq.s32.totalorder %s28, 0
      %p295 = por %p293, %p294
      %p296 = scmp.ne.s32.totalorder %s288, %s290
      %p297 = scmp.eq.s32.totalorder %s33, 1
      %p298 = por %p296, %p297
      %p299 = scmp.ne.s32.totalorder %s290, %s291
      %p300 = scmp.eq.s32.totalorder %s33, 0
      %p301 = por %p299, %p300
      %p302 = scmp.ne.s32.totalorder %s290, %s291
      %p303 = scmp.eq.s32.totalorder %s34, 1
      %p304 = por %p302, %p303
      %p306 = scmp.ne.s32.totalorder %s291, %s305
      %p307 = scmp.eq.s32.totalorder %s34, 0
      %p308 = por %p306, %p307
      %s310 = sadd.s32 %s309, 1
      %p313 = scmp.eq.s32.totalorder %s28, 1
      %p314 = scmp.ne.s32.totalorder %s309, %s311
      %p315 = scmp.eq.s32.totalorder %s28, 0
      %p316 = por %p314, %p315
      %p317 = scmp.ne.s32.totalorder %s309, %s311
      %p318 = scmp.eq.s32.totalorder %s33, 1
      %p319 = por %p317, %p318
      %p320 = scmp.ne.s32.totalorder %s311, %s312
      %p321 = scmp.eq.s32.totalorder %s33, 0
      %p322 = por %p320, %p321
      %p323 = scmp.ne.s32.totalorder %s311, %s312
      %p324 = scmp.eq.s32.totalorder %s34, 1
      %p325 = por %p323, %p324
      %p327 = scmp.ne.s32.totalorder %s312, %s326
      %p328 = scmp.eq.s32.totalorder %s34, 0
      %p329 = por %p327, %p328
      %s331 = sadd.s32 %s330, 1
      %p334 = scmp.eq.s32.totalorder %s28, 1
      %p335 = scmp.ne.s32.totalorder %s330, %s332
      %p336 = scmp.eq.s32.totalorder %s28, 0
      %p337 = por %p335, %p336
      %p338 = scmp.ne.s32.totalorder %s330, %s332
      %p339 = scmp.eq.s32.totalorder %s33, 1
      %p340 = por %p338, %p339
      %p341 = scmp.ne.s32.totalorder %s332, %s333
      %p342 = scmp.eq.s32.totalorder %s33, 0
      %p343 = por %p341, %p342
      %p344 = scmp.ne.s32.totalorder %s332, %s333
      %p345 = scmp.eq.s32.totalorder %s34, 1
      %p346 = por %p344, %p345
      %p348 = scmp.ne.s32.totalorder %s333, %s347
      %p349 = scmp.eq.s32.totalorder %s34, 0
      %p350 = por %p348, %p349
      %s352 = sadd.s32 %s351, 1
      %p355 = scmp.eq.s32.totalorder %s28, 1
      %p356 = scmp.ne.s32.totalorder %s351, %s353
      %p357 = scmp.eq.s32.totalorder %s28, 0
      %p358 = por %p356, %p357
      %p359 = scmp.ne.s32.totalorder %s351, %s353
      %p360 = scmp.eq.s32.totalorder %s33, 1
      %p361 = por %p359, %p360
      %p362 = scmp.ne.s32.totalorder %s353, %s354
      %p363 = scmp.eq.s32.totalorder %s33, 0
      %p364 = por %p362, %p363
      %p365 = scmp.ne.s32.totalorder %s353, %s354
      %p366 = scmp.eq.s32.totalorder %s34, 1
      %p367 = por %p365, %p366
      %p369 = scmp.ne.s32.totalorder %s354, %s368
      %p370 = scmp.eq.s32.totalorder %s34, 0
      %p371 = por %p369, %p370
      %s373 = sadd.s32 %s372, 1
      %p376 = scmp.eq.s32.totalorder %s28, 1
      %p377 = scmp.ne.s32.totalorder %s372, %s374
      %p378 = scmp.eq.s32.totalorder %s28, 0
      %p379 = por %p377, %p378
      %p380 = scmp.ne.s32.totalorder %s372, %s374
      %p381 = scmp.eq.s32.totalorder %s33, 1
      %p382 = por %p380, %p381
      %p383 = scmp.ne.s32.totalorder %s374, %s375
      %p384 = scmp.eq.s32.totalorder %s33, 0
      %p385 = por %p383, %p384
      %p386 = scmp.ne.s32.totalorder %s374, %s375
      %p387 = scmp.eq.s32.totalorder %s34, 1
      %p388 = por %p386, %p387
      %p390 = scmp.ne.s32.totalorder %s375, %s389
      %p391 = scmp.eq.s32.totalorder %s34, 0
      %p392 = por %p390, %p391
      %s394 = sadd.s32 %s393, 1
      %p397 = scmp.eq.s32.totalorder %s28, 1
      %p398 = scmp.ne.s32.totalorder %s393, %s395
      %p399 = scmp.eq.s32.totalorder %s28, 0
      %p400 = por %p398, %p399
      %p401 = scmp.ne.s32.totalorder %s393, %s395
      %p402 = scmp.eq.s32.totalorder %s33, 1
      %p403 = por %p401, %p402
      %p404 = scmp.ne.s32.totalorder %s395, %s396
      %p405 = scmp.eq.s32.totalorder %s33, 0
      %p406 = por %p404, %p405
      %p407 = scmp.ne.s32.totalorder %s395, %s396
      %p408 = scmp.eq.s32.totalorder %s34, 1
      %p409 = por %p407, %p408
      %p411 = scmp.ne.s32.totalorder %s396, %s410
      %p412 = scmp.eq.s32.totalorder %s34, 0
      %p413 = por %p411, %p412
      %s415 = sadd.s32 %s414, 1
      %p418 = scmp.eq.s32.totalorder %s28, 1
      %p419 = scmp.ne.s32.totalorder %s414, %s416
      %p420 = scmp.eq.s32.totalorder %s28, 0
      %p421 = por %p419, %p420
      %p422 = scmp.ne.s32.totalorder %s414, %s416
      %p423 = scmp.eq.s32.totalorder %s33, 1
      %p424 = por %p422, %p423
      %p425 = scmp.ne.s32.totalorder %s416, %s417
      %p426 = scmp.eq.s32.totalorder %s33, 0
      %p427 = por %p425, %p426
      %p428 = scmp.ne.s32.totalorder %s416, %s417
      %p429 = scmp.eq.s32.totalorder %s34, 1
      %p430 = por %p428, %p429
      %p432 = scmp.ne.s32.totalorder %s417, %s431
      %p433 = scmp.eq.s32.totalorder %s34, 0
      %p434 = por %p432, %p433
      %s436 = sadd.s32 %s435, 1
      %p439 = scmp.eq.s32.totalorder %s28, 1
      %p440 = scmp.ne.s32.totalorder %s435, %s437
      %p441 = scmp.eq.s32.totalorder %s28, 0
      %p442 = por %p440, %p441
      %p443 = scmp.ne.s32.totalorder %s435, %s437
      %p444 = scmp.eq.s32.totalorder %s33, 1
      %p445 = por %p443, %p444
      %p446 = scmp.ne.s32.totalorder %s437, %s438
      %p447 = scmp.eq.s32.totalorder %s33, 0
      %p448 = por %p446, %p447
      %p449 = scmp.ne.s32.totalorder %s437, %s438
      %p450 = scmp.eq.s32.totalorder %s34, 1
      %p451 = por %p449, %p450
      %p453 = scmp.ne.s32.totalorder %s438, %s452
      %p454 = scmp.eq.s32.totalorder %s34, 0
      %p455 = por %p453, %p454
      %s457 = sadd.s32 %s456, 1
      %p460 = scmp.eq.s32.totalorder %s28, 1
      %p461 = scmp.ne.s32.totalorder %s456, %s458
      %p462 = scmp.eq.s32.totalorder %s28, 0
      %p463 = por %p461, %p462
      %p464 = scmp.ne.s32.totalorder %s456, %s458
      %p465 = scmp.eq.s32.totalorder %s33, 1
      %p466 = por %p464, %p465
      %p467 = scmp.ne.s32.totalorder %s458, %s459
      %p468 = scmp.eq.s32.totalorder %s33, 0
      %p469 = por %p467, %p468
      %p470 = scmp.ne.s32.totalorder %s458, %s459
      %p471 = scmp.eq.s32.totalorder %s34, 1
      %p472 = por %p470, %p471
      %p474 = scmp.ne.s32.totalorder %s459, %s473
      %p475 = scmp.eq.s32.totalorder %s34, 0
      %p476 = por %p474, %p475
      %s477 = ssub.s32 %s35, %s54
      %s478 = ssub.s32 %s36, %s50
      %s479 = sor.u32 %s477, %s478
      %p480 = scmp.eq.s32.totalorder %s479, 0
      %s482 = sadd.s32 %s481, 1
      %s483 = scalar_select %p480, %s481, %s482
      %p486 = pneg %p480
      %p487 = scmp.eq.s32.totalorder %s28, 1
      %p488 = por %p486, %p487
      %p489 = scmp.ne.s32.totalorder %s481, %s484
      %p490 = scmp.eq.s32.totalorder %s28, 0
      %p491 = por %p489, %p490
      %p492 = scmp.ne.s32.totalorder %s481, %s484
      %p493 = scmp.eq.s32.totalorder %s33, 1
      %p494 = por %p492, %p493
      %p495 = scmp.ne.s32.totalorder %s484, %s485
      %p496 = scmp.eq.s32.totalorder %s33, 0
      %p497 = por %p495, %p496
      %p498 = scmp.ne.s32.totalorder %s484, %s485
      %p499 = scmp.eq.s32.totalorder %s34, 1
      %p500 = por %p498, %p499
      %p502 = scmp.ne.s32.totalorder %s485, %s501
      %p503 = scmp.eq.s32.totalorder %s34, 0
      %p504 = por %p502, %p503
      %p505 = scmp.le.s32.totalorder 1, %s28
      %p506 = scmp.lt.s32.totalorder %s28, 3
      %p507 = pnand %p505, %p506
      %p508 = pneg %p507
      // Predicated region
      $region9: #{tpu_custom_call.1} parent=5 // pred_check
        _
      $region10: #{tpu_custom_call.1} parent=5 // pred_check_branch
        %510 = sbr.rel (%p507) target = $region12
      $region11: #{tpu_custom_call.1} parent=5 // pred_region
        %s511 = ssub.s32 %s28, 1
        // Predicated region
        $region13: #{tpu_custom_call.1} parent=11 // pred_check
          %p512 = pneg %p154
        $region14: #{tpu_custom_call.1} parent=11 // pred_check_branch
          %514 = sbr.rel (%p512) target = $region16
        $region15: #{tpu_custom_call.1} parent=11 // pred_region
          _
        $region16: #{tpu_custom_call.1} parent=11 // pred_fallthru
          _
        // Predicated region
        $region17: #{tpu_custom_call.1} parent=11 // pred_check
          %p515 = pneg %p175
        $region18: #{tpu_custom_call.1} parent=11 // pred_check_branch
          %517 = sbr.rel (%p515) target = $region20
        $region19: #{tpu_custom_call.1} parent=11 // pred_region
          _
        $region20: #{tpu_custom_call.1} parent=11 // pred_fallthru
          _
        // Predicated region
        $region21: #{tpu_custom_call.1} parent=11 // pred_check
          %p518 = pneg %p196
        $region22: #{tpu_custom_call.1} parent=11 // pred_check_branch
          %520 = sbr.rel (%p518) target = $region24
        $region23: #{tpu_custom_call.1} parent=11 // pred_region
          _
        $region24: #{tpu_custom_call.1} parent=11 // pred_fallthru
          _
        // Predicated region
        $region25: #{tpu_custom_call.1} parent=11 // pred_check
          %p521 = pneg %p217
        $region26: #{tpu_custom_call.1} parent=11 // pred_check_branch
          %523 = sbr.rel (%p521) target = $region28
        $region27: #{tpu_custom_call.1} parent=11 // pred_region
          _
        $region28: #{tpu_custom_call.1} parent=11 // pred_fallthru
          _
        // Predicated region
        $region29: #{tpu_custom_call.1} parent=11 // pred_check
          %p524 = pneg %p238
        $region30: #{tpu_custom_call.1} parent=11 // pred_check_branch
          %526 = sbr.rel (%p524) target = $region32
        $region31: #{tpu_custom_call.1} parent=11 // pred_region
          _
        $region32: #{tpu_custom_call.1} parent=11 // pred_fallthru
          _
        // Predicated region
        $region33: #{tpu_custom_call.1} parent=11 // pred_check
          %p527 = pneg %p259
        $region34: #{tpu_custom_call.1} parent=11 // pred_check_branch
          %529 = sbr.rel (%p527) target = $region36
        $region35: #{tpu_custom_call.1} parent=11 // pred_region
          _
        $region36: #{tpu_custom_call.1} parent=11 // pred_fallthru
          _
        // Predicated region
        $region37: #{tpu_custom_call.1} parent=11 // pred_check
          %p530 = pneg %p280
        $region38: #{tpu_custom_call.1} parent=11 // pred_check_branch
          %532 = sbr.rel (%p530) target = $region40
        $region39: #{tpu_custom_call.1} parent=11 // pred_region
          _
        $region40: #{tpu_custom_call.1} parent=11 // pred_fallthru
          _
        // Predicated region
        $region41: #{tpu_custom_call.1} parent=11 // pred_check
          %p533 = pneg %p301
        $region42: #{tpu_custom_call.1} parent=11 // pred_check_branch
          %535 = sbr.rel (%p533) target = $region44
        $region43: #{tpu_custom_call.1} parent=11 // pred_region
          _
        $region44: #{tpu_custom_call.1} parent=11 // pred_fallthru
          _
        // Predicated region
        $region45: #{tpu_custom_call.1} parent=11 // pred_check
          %p536 = pneg %p322
        $region46: #{tpu_custom_call.1} parent=11 // pred_check_branch
          %538 = sbr.rel (%p536) target = $region48
        $region47: #{tpu_custom_call.1} parent=11 // pred_region
          _
        $region48: #{tpu_custom_call.1} parent=11 // pred_fallthru
          _
        // Predicated region
        $region49: #{tpu_custom_call.1} parent=11 // pred_check
          %p539 = pneg %p343
        $region50: #{tpu_custom_call.1} parent=11 // pred_check_branch
          %541 = sbr.rel (%p539) target = $region52
        $region51: #{tpu_custom_call.1} parent=11 // pred_region
          _
        $region52: #{tpu_custom_call.1} parent=11 // pred_fallthru
          _
        // Predicated region
        $region53: #{tpu_custom_call.1} parent=11 // pred_check
          %p542 = pneg %p364
        $region54: #{tpu_custom_call.1} parent=11 // pred_check_branch
          %544 = sbr.rel (%p542) target = $region56
        $region55: #{tpu_custom_call.1} parent=11 // pred_region
          _
        $region56: #{tpu_custom_call.1} parent=11 // pred_fallthru
          _
        // Predicated region
        $region57: #{tpu_custom_call.1} parent=11 // pred_check
          %p545 = pneg %p385
        $region58: #{tpu_custom_call.1} parent=11 // pred_check_branch
          %547 = sbr.rel (%p545) target = $region60
        $region59: #{tpu_custom_call.1} parent=11 // pred_region
          _
        $region60: #{tpu_custom_call.1} parent=11 // pred_fallthru
          _
        // Predicated region
        $region61: #{tpu_custom_call.1} parent=11 // pred_check
          %p548 = pneg %p406
        $region62: #{tpu_custom_call.1} parent=11 // pred_check_branch
          %550 = sbr.rel (%p548) target = $region64
        $region63: #{tpu_custom_call.1} parent=11 // pred_region
          _
        $region64: #{tpu_custom_call.1} parent=11 // pred_fallthru
          _
        // Predicated region
        $region65: #{tpu_custom_call.1} parent=11 // pred_check
          %p551 = pneg %p427
        $region66: #{tpu_custom_call.1} parent=11 // pred_check_branch
          %553 = sbr.rel (%p551) target = $region68
        $region67: #{tpu_custom_call.1} parent=11 // pred_region
          _
        $region68: #{tpu_custom_call.1} parent=11 // pred_fallthru
          _
        // Predicated region
        $region69: #{tpu_custom_call.1} parent=11 // pred_check
          %p554 = pneg %p448
        $region70: #{tpu_custom_call.1} parent=11 // pred_check_branch
          %556 = sbr.rel (%p554) target = $region72
        $region71: #{tpu_custom_call.1} parent=11 // pred_region
          _
        $region72: #{tpu_custom_call.1} parent=11 // pred_fallthru
          _
        // Predicated region
        $region73: #{tpu_custom_call.1} parent=11 // pred_check
          %p557 = pneg %p469
        $region74: #{tpu_custom_call.1} parent=11 // pred_check_branch
          %559 = sbr.rel (%p557) target = $region76
        $region75: #{tpu_custom_call.1} parent=11 // pred_region
          _
        $region76: #{tpu_custom_call.1} parent=11 // pred_fallthru
          _
      $region12: #{tpu_custom_call.1} parent=5 // pred_fallthru
        _
      %p560 = scmp.lt.s32.totalorder %s28, 2
      // Predicated region
      $region77: #{tpu_custom_call.1} parent=5 // pred_check
        %p561 = pneg %p560
      $region78: #{tpu_custom_call.1} parent=5 // pred_check_branch
        %563 = sbr.rel (%p561) target = $region80
      $region79: #{tpu_custom_call.1} parent=5 // pred_region
        // Predicated region
        $region81: #{tpu_custom_call.1} parent=79 // pred_check
          %p564 = pneg %p69
        $region82: #{tpu_custom_call.1} parent=79 // pred_check_branch
          %566 = sbr.rel (%p564) target = $region84
        $region83: #{tpu_custom_call.1} parent=79 // pred_region
          %p567 = scmp.lt.s32.totalorder %s35, 1
          %s568 = scalar_select %p567, %s35, 1
          %p569 = scmp.lt.s32.totalorder %s36, 0
          %s570 = scalar_select %p569, %s36, 0
          %s571 = sadd.s32 %s570, %s568
          %s572 = smul.addr %s571, 8
          %s573 = scalar_lea.vmem %s0, %s572
        $region84: #{tpu_custom_call.1} parent=79 // pred_fallthru
          _
        // Predicated region
        $region85: #{tpu_custom_call.1} parent=79 // pred_check
          %p574 = pneg %p97
        $region86: #{tpu_custom_call.1} parent=79 // pred_check_branch
          %576 = sbr.rel (%p574) target = $region88
        $region87: #{tpu_custom_call.1} parent=79 // pred_region
          %p577 = scmp.lt.s32.totalorder %s35, 1
          %s578 = scalar_select %p577, %s35, 1
          %p579 = scmp.lt.s32.totalorder %s37, 0
          %s580 = scalar_select %p579, %s37, 0
          %s581 = sadd.s32 %s580, %s578
          %s582 = smul.addr %s581, 8
          %s583 = scalar_lea.vmem %s1, %s582
        $region88: #{tpu_custom_call.1} parent=79 // pred_fallthru
          _
        // Predicated region
        $region89: #{tpu_custom_call.1} parent=79 // pred_check
          %p584 = pneg %p127
        $region90: #{tpu_custom_call.1} parent=79 // pred_check_branch
          %586 = sbr.rel (%p584) target = $region92
        $region91: #{tpu_custom_call.1} parent=79 // pred_region
          %p587 = scmp.lt.s32.totalorder %s35, 1
          %s588 = scalar_select %p587, %s35, 1
          %p589 = scmp.lt.s32.totalorder %s36, 0
          %s590 = scalar_select %p589, %s36, 0
          %p591 = scmp.lt.s32.totalorder %s37, 0
          %s592 = scalar_select %p591, %s37, 0
          %s593 = sadd.s32 %s592, %s590
          %s594 = sadd.s32 %s593, %s588
          %s595 = smul.addr %s594, 2
          %s596 = scalar_lea.vmem %s2, %s595
        $region92: #{tpu_custom_call.1} parent=79 // pred_fallthru
          _
      $region80: #{tpu_custom_call.1} parent=5 // pred_fallthru
        _
      %p597 = scmp.le.s32.totalorder 1, %s28
      %p598 = scmp.lt.s32.totalorder %s28, 3
      %p599 = pnand %p597, %p598
      %p600 = pneg %p599
      // Predicated region
      $region93: #{tpu_custom_call.1} parent=5 // pred_check
        _
      $region94: #{tpu_custom_call.1} parent=5 // pred_check_branch
        %602 = sbr.rel (%p599) target = $region96
      $region95: #{tpu_custom_call.1} parent=5 // pred_region
        %s603 = ssub.s32 %s28, 1
        %p604 = scmp.lt.s32.totalorder %s38, 1
        %s605 = scalar_select %p604, %s38, 1
        %p606 = scmp.lt.s32.totalorder %s39, 0
        %s607 = scalar_select %p606, %s39, 0
        %s608 = sadd.s32 %s607, %s605
        %s609 = smul.addr %s608, 8
        %s610 = scalar_lea.vmem %s0, %s609
        %p611 = pneg %p75
        %p612 = pneg %p72
        %p613 = scmp.lt.s32.totalorder %s38, 1
        %s614 = scalar_select %p613, %s38, 1
        %p615 = scmp.lt.s32.totalorder %s40, 0
        %s616 = scalar_select %p615, %s40, 0
        %s617 = sadd.s32 %s616, %s614
        %s618 = smul.addr %s617, 8
        %s619 = scalar_lea.vmem %s1, %s618
        %p620 = pneg %p103
        %p621 = pneg %p100
        %p622 = scmp.lt.s32.totalorder %s38, 1
        %s623 = scalar_select %p622, %s38, 1
        %p624 = scmp.lt.s32.totalorder %s39, 0
        %s625 = scalar_select %p624, %s39, 0
        %p626 = scmp.lt.s32.totalorder %s40, 0
        %s627 = scalar_select %p626, %s40, 0
        %s628 = sadd.s32 %s627, %s625
        %s629 = sadd.s32 %s628, %s623
        %s630 = smul.addr %s629, 2
        %s631 = scalar_lea.vmem %s2, %s630
        %p632 = pneg %p133
        %p633 = pneg %p130
        %p634 = pneg %p154
        %p635 = pneg %p151
        %p636 = pneg %p175
        %p637 = pneg %p172
        %p638 = pneg %p196
        %p639 = pneg %p193
        %p640 = pneg %p217
        %p641 = pneg %p214
        %p642 = pneg %p238
        %p643 = pneg %p235
        %p644 = pneg %p259
        %p645 = pneg %p256
        %p646 = pneg %p280
        %p647 = pneg %p277
        %p648 = pneg %p301
        %p649 = pneg %p298
        %p650 = pneg %p322
        %p651 = pneg %p319
        %p652 = pneg %p343
        %p653 = pneg %p340
        %p654 = pneg %p364
        %p655 = pneg %p361
        %p656 = pneg %p385
        %p657 = pneg %p382
        %p658 = pneg %p406
        %p659 = pneg %p403
        %p660 = pneg %p427
        %p661 = pneg %p424
        %p662 = pneg %p448
        %p663 = pneg %p445
        %p664 = pneg %p469
        %p665 = pneg %p466
        %p666 = pneg %p497
        %p667 = pneg %p494
        %s668 = sand.u32 %s484, 1
        %s669 = scalar_lea.sflag [#allocation7], %s668
        %s670 = sand.u32 %s484, 1
        %s671 = smul.addr %s670, 8
        %s672 = scalar_lea.vmem [#allocation6], %s671
        %p673 = scmp.lt.s32.totalorder %s38, 1
        %s674 = scalar_select %p673, %s38, 1
        %p675 = scmp.lt.s32.totalorder %s39, 0
        %s676 = scalar_select %p675, %s39, 0
        %s677 = sadd.s32 %s676, %s674
        %s678 = smul.addr %s677, 8
        %s679 = scalar_lea.vmem %s0, %s678
        %p680 = scmp.lt.s32.totalorder %s38, 1
        %s681 = scalar_select %p680, %s38, 1
        %p682 = scmp.lt.s32.totalorder %s40, 0
        %s683 = scalar_select %p682, %s40, 0
        %s684 = sadd.s32 %s683, %s681
        %s685 = smul.addr %s684, 8
        %s686 = scalar_lea.vmem %s1, %s685
        %p687 = scmp.lt.s32.totalorder %s38, 1
        %s688 = scalar_select %p687, %s38, 1
        %p689 = scmp.lt.s32.totalorder %s39, 0
        %s690 = scalar_select %p689, %s39, 0
        %p691 = scmp.lt.s32.totalorder %s40, 0
        %s692 = scalar_select %p691, %s40, 0
        %s693 = sadd.s32 %s692, %s690
        %s694 = sadd.s32 %s693, %s688
        %s695 = smul.addr %s694, 2
        %s696 = scalar_lea.vmem %s2, %s695
        %v697 = vld [vmem:[%s679] sm:$0xff]
        %p698 = scmp.eq.s32.totalorder %s40, 0
        // Predicated region
        $region97: #{tpu_custom_call.1} parent=95 // pred_check
          %p699 = pneg %p698
        $region98: #{tpu_custom_call.1} parent=95 // pred_check_branch
          %701 = sbr.rel (%p699) target = $region100
        $region99: #{tpu_custom_call.1} parent=95 // pred_region
          %vm702 = vcmask 7168
          %703 = vst.msk [vmem:[#allocation3] sm:$0xff] %vm702, -inf
          %704 = vst.msk [vmem:[#allocation3 + $0x8] sm:$0xff] %vm702, -inf
          %705 = vst.msk [vmem:[#allocation3 + $0x10] sm:$0xff] %vm702, -inf
          %706 = vst.msk [vmem:[#allocation3 + $0x18] sm:$0xff] %vm702, -inf
          %707 = vst.msk [vmem:[#allocation4] sm:$0xff] %vm702, 0.0
          %708 = vst.msk [vmem:[#allocation4 + $0x8] sm:$0xff] %vm702, 0.0
          %709 = vst.msk [vmem:[#allocation4 + $0x10] sm:$0xff] %vm702, 0.0
          %710 = vst.msk [vmem:[#allocation4 + $0x18] sm:$0xff] %vm702, 0.0
          %vm711 = vcmask 64512
          %712 = vst.msk [vmem:[#allocation5] sm:$0xff] %vm711, 0.0
          %713 = vst.msk [vmem:[#allocation5 + $0x8] sm:$0xff] %vm711, 0.0
          %714 = vst.msk [vmem:[#allocation5 + $0x10] sm:$0xff] %vm711, 0.0
          %715 = vst.msk [vmem:[#allocation5 + $0x18] sm:$0xff] %vm711, 0.0
          %v716 = vld [vmem:[%s3] sm:$0xff]
          %v717 = vld [vmem:[%s3 + $0x8] sm:$0xff]
          %v718 = vld [vmem:[%s3 + $0x10] sm:$0xff]
          %v719 = vld [vmem:[%s3 + $0x18] sm:$0xff]
          %v720 = vld [vmem:[%s3 + $0x20] sm:$0xff]
          %v721 = vld [vmem:[%s3 + $0x28] sm:$0xff]
          %v722 = vld [vmem:[%s3 + $0x30] sm:$0xff]
          %v723 = vld [vmem:[%s3 + $0x38] sm:$0xff]
          %v724 = vld [vmem:[%s3 + $0x40] sm:$0xff]
          %v725 = vld [vmem:[%s3 + $0x48] sm:$0xff]
          %v726 = vld [vmem:[%s3 + $0x50] sm:$0xff]
          %v727 = vld [vmem:[%s3 + $0x58] sm:$0xff]
          %v728 = vld [vmem:[%s3 + $0x60] sm:$0xff]
          %v729 = vld [vmem:[%s3 + $0x68] sm:$0xff]
          %v730 = vld [vmem:[%s3 + $0x70] sm:$0xff]
          %v731 = vld [vmem:[%s3 + $0x78] sm:$0xff]
          %v732 = vld [vmem:[%s4] sm:$0x1]
          %v733 = vld [vmem:[%s4 + $0x1] sm:$0x1]
          %v734 = vld [vmem:[%s4 + $0x2] sm:$0x1]
          %v735 = vld [vmem:[%s4 + $0x3] sm:$0x1]
          %v740 = vperm.slane %v732, 0
          %v741 = vperm.slane %v733, 0
          %v742 = vperm.slane %v734, 0
          %v743 = vperm.slane %v735, 0
          %vm748 = vcmask 261120
          %v750 = vsel %vm748, %v697, 0
          %752 = vmatpush.msra.mxu0 0.0
          %753 = vmatpush.msra.mxu0 0.0
          %754 = vmatpush.msra.mxu0 0.0
          %755 = vmatpush.msra.mxu0 0.0
          %756 = vmatpush.msra.mxu0 0.0
          %757 = vmatpush.msra.mxu0 0.0
          %758 = vmatpush.msra.mxu0 0.0
          %759 = vmatpush.msra.mxu0 0.0
          %760 = vmatpush.msra.mxu0 0.0
          %761 = vmatpush.msra.mxu0 0.0
          %762 = vmatpush.msra.mxu0 0.0
          %763 = vmatpush.msra.mxu0 0.0
          %764 = vmatpush.msra.mxu0 %v719
          %765 = vmatpush.msra.mxu0 %v718
          %766 = vmatpush.msra.mxu0 %v717
          %767 = vmatpush.msra.mxu0 %v716
          %768 = vmatmul.f32.gmra.mxu0 %v750
          %v769 = vpop.f32.mrf.mxu0
          %v770 = vadd.f32 %v740, %v769
          %771 = vdwg.mxu0
          %772 = vmatpush.msra.mxu0 0.0
          %773 = vmatpush.msra.mxu0 0.0
          %774 = vmatpush.msra.mxu0 0.0
          %775 = vmatpush.msra.mxu0 0.0
          %776 = vmatpush.msra.mxu0 0.0
          %777 = vmatpush.msra.mxu0 0.0
          %778 = vmatpush.msra.mxu0 0.0
          %779 = vmatpush.msra.mxu0 0.0
          %780 = vmatpush.msra.mxu0 0.0
          %781 = vmatpush.msra.mxu0 0.0
          %782 = vmatpush.msra.mxu0 0.0
          %783 = vmatpush.msra.mxu0 0.0
          %784 = vmatpush.msra.mxu0 %v723
          %785 = vmatpush.msra.mxu0 %v722
          %786 = vmatpush.msra.mxu0 %v721
          %787 = vmatpush.msra.mxu0 %v720
          %788 = vmatmul.f32.gmra.mxu0 %v750
          %v789 = vpop.f32.mrf.mxu0
          %v790 = vadd.f32 %v741, %v789
          %791 = vdwg.mxu0
          %792 = vmatpush.msra.mxu0 0.0
          %793 = vmatpush.msra.mxu0 0.0
          %794 = vmatpush.msra.mxu0 0.0
          %795 = vmatpush.msra.mxu0 0.0
          %796 = vmatpush.msra.mxu0 0.0
          %797 = vmatpush.msra.mxu0 0.0
          %798 = vmatpush.msra.mxu0 0.0
          %799 = vmatpush.msra.mxu0 0.0
          %800 = vmatpush.msra.mxu0 0.0
          %801 = vmatpush.msra.mxu0 0.0
          %802 = vmatpush.msra.mxu0 0.0
          %803 = vmatpush.msra.mxu0 0.0
          %804 = vmatpush.msra.mxu0 %v727
          %805 = vmatpush.msra.mxu0 %v726
          %806 = vmatpush.msra.mxu0 %v725
          %807 = vmatpush.msra.mxu0 %v724
          %808 = vmatmul.f32.gmra.mxu0 %v750
          %v809 = vpop.f32.mrf.mxu0
          %v810 = vadd.f32 %v742, %v809
          %811 = vdwg.mxu0
          %812 = vmatpush.msra.mxu0 0.0
          %813 = vmatpush.msra.mxu0 0.0
          %814 = vmatpush.msra.mxu0 0.0
          %815 = vmatpush.msra.mxu0 0.0
          %816 = vmatpush.msra.mxu0 0.0
          %817 = vmatpush.msra.mxu0 0.0
          %818 = vmatpush.msra.mxu0 0.0
          %819 = vmatpush.msra.mxu0 0.0
          %820 = vmatpush.msra.mxu0 0.0
          %821 = vmatpush.msra.mxu0 0.0
          %822 = vmatpush.msra.mxu0 0.0
          %823 = vmatpush.msra.mxu0 0.0
          %824 = vmatpush.msra.mxu0 %v731
          %825 = vmatpush.msra.mxu0 %v730
          %826 = vmatpush.msra.mxu0 %v729
          %827 = vmatpush.msra.mxu0 %v728
          %828 = vmatmul.f32.gmra.mxu0 %v750
          %v829 = vpop.f32.mrf.mxu0
          %v830 = vadd.f32 %v743, %v829
          %831 = vdwg.mxu0
          %832 = vst.msk [vmem:[#allocation2] sm:$0xff] %vm711, %v770
          %833 = vst.msk [vmem:[#allocation2 + $0x8] sm:$0xff] %vm711, %v790
          %834 = vst.msk [vmem:[#allocation2 + $0x10] sm:$0xff] %vm711, %v810
          %835 = vst.msk [vmem:[#allocation2 + $0x18] sm:$0xff] %vm711, %v830
        $region100: #{tpu_custom_call.1} parent=95 // pred_fallthru
          _
        %v836 = vld [vmem:[%s686] sm:$0xff]
        %v837 = vld [vmem:[%s5] sm:$0xff]
        %v838 = vld [vmem:[%s5 + $0x8] sm:$0xff]
        %v839 = vld [vmem:[%s5 + $0x10] sm:$0xff]
        %v840 = vld [vmem:[%s5 + $0x18] sm:$0xff]
        %v841 = vld [vmem:[%s5 + $0x20] sm:$0xff]
        %v842 = vld [vmem:[%s5 + $0x28] sm:$0xff]
        %v843 = vld [vmem:[%s5 + $0x30] sm:$0xff]
        %v844 = vld [vmem:[%s5 + $0x38] sm:$0xff]
        %v845 = vld [vmem:[%s5 + $0x40] sm:$0xff]
        %v846 = vld [vmem:[%s5 + $0x48] sm:$0xff]
        %v847 = vld [vmem:[%s5 + $0x50] sm:$0xff]
        %v848 = vld [vmem:[%s5 + $0x58] sm:$0xff]
        %v849 = vld [vmem:[%s5 + $0x60] sm:$0xff]
        %v850 = vld [vmem:[%s5 + $0x68] sm:$0xff]
        %v851 = vld [vmem:[%s5 + $0x70] sm:$0xff]
        %v852 = vld [vmem:[%s5 + $0x78] sm:$0xff]
        %v853 = vld [vmem:[%s6] sm:$0x1]
        %v854 = vld [vmem:[%s6 + $0x1] sm:$0x1]
        %v855 = vld [vmem:[%s6 + $0x2] sm:$0x1]
        %v856 = vld [vmem:[%s6 + $0x3] sm:$0x1]
        %v861 = vperm.slane %v853, 0
        %v862 = vperm.slane %v854, 0
        %v863 = vperm.slane %v855, 0
        %v864 = vperm.slane %v856, 0
        %vm869 = vcmask 261120
        %v871 = vsel %vm869, %v836, 0
        %873 = vmatpush.msra.mxu0 0.0
        %874 = vmatpush.msra.mxu0 0.0
        %875 = vmatpush.msra.mxu0 0.0
        %876 = vmatpush.msra.mxu0 0.0
        %877 = vmatpush.msra.mxu0 0.0
        %878 = vmatpush.msra.mxu0 0.0
        %879 = vmatpush.msra.mxu0 0.0
        %880 = vmatpush.msra.mxu0 0.0
        %881 = vmatpush.msra.mxu0 0.0
        %882 = vmatpush.msra.mxu0 0.0
        %883 = vmatpush.msra.mxu0 0.0
        %884 = vmatpush.msra.mxu0 0.0
        %885 = vmatpush.msra.mxu0 %v840
        %886 = vmatpush.msra.mxu0 %v839
        %887 = vmatpush.msra.mxu0 %v838
        %888 = vmatpush.msra.mxu0 %v837
        %889 = vmatmul.f32.gmra.mxu0 %v871
        %v890 = vpop.f32.mrf.mxu0
        %v891 = vadd.f32 %v861, %v890
        %892 = vdwg.mxu0
        %893 = vmatpush.msra.mxu0 0.0
        %894 = vmatpush.msra.mxu0 0.0
        %895 = vmatpush.msra.mxu0 0.0
        %896 = vmatpush.msra.mxu0 0.0
        %897 = vmatpush.msra.mxu0 0.0
        %898 = vmatpush.msra.mxu0 0.0
        %899 = vmatpush.msra.mxu0 0.0
        %900 = vmatpush.msra.mxu0 0.0
        %901 = vmatpush.msra.mxu0 0.0
        %902 = vmatpush.msra.mxu0 0.0
        %903 = vmatpush.msra.mxu0 0.0
        %904 = vmatpush.msra.mxu0 0.0
        %905 = vmatpush.msra.mxu0 %v844
        %906 = vmatpush.msra.mxu0 %v843
        %907 = vmatpush.msra.mxu0 %v842
        %908 = vmatpush.msra.mxu0 %v841
        %909 = vmatmul.f32.gmra.mxu0 %v871
        %v910 = vpop.f32.mrf.mxu0
        %v911 = vadd.f32 %v862, %v910
        %912 = vdwg.mxu0
        %913 = vmatpush.msra.mxu0 0.0
        %914 = vmatpush.msra.mxu0 0.0
        %915 = vmatpush.msra.mxu0 0.0
        %916 = vmatpush.msra.mxu0 0.0
        %917 = vmatpush.msra.mxu0 0.0
        %918 = vmatpush.msra.mxu0 0.0
        %919 = vmatpush.msra.mxu0 0.0
        %920 = vmatpush.msra.mxu0 0.0
        %921 = vmatpush.msra.mxu0 0.0
        %922 = vmatpush.msra.mxu0 0.0
        %923 = vmatpush.msra.mxu0 0.0
        %924 = vmatpush.msra.mxu0 0.0
        %925 = vmatpush.msra.mxu0 %v848
        %926 = vmatpush.msra.mxu0 %v847
        %927 = vmatpush.msra.mxu0 %v846
        %928 = vmatpush.msra.mxu0 %v845
        %929 = vmatmul.f32.gmra.mxu0 %v871
        %v930 = vpop.f32.mrf.mxu0
        %v931 = vadd.f32 %v863, %v930
        %932 = vdwg.mxu0
        %933 = vmatpush.msra.mxu0 0.0
        %934 = vmatpush.msra.mxu0 0.0
        %935 = vmatpush.msra.mxu0 0.0
        %936 = vmatpush.msra.mxu0 0.0
        %937 = vmatpush.msra.mxu0 0.0
        %938 = vmatpush.msra.mxu0 0.0
        %939 = vmatpush.msra.mxu0 0.0
        %940 = vmatpush.msra.mxu0 0.0
        %941 = vmatpush.msra.mxu0 0.0
        %942 = vmatpush.msra.mxu0 0.0
        %943 = vmatpush.msra.mxu0 0.0
        %944 = vmatpush.msra.mxu0 0.0
        %945 = vmatpush.msra.mxu0 %v852
        %946 = vmatpush.msra.mxu0 %v851
        %947 = vmatpush.msra.mxu0 %v850
        %948 = vmatpush.msra.mxu0 %v849
        %949 = vmatmul.f32.gmra.mxu0 %v871
        %v950 = vpop.f32.mrf.mxu0
        %v951 = vadd.f32 %v864, %v950
        %952 = vdwg.mxu0
        %v953 = vld [vmem:[%s7] sm:$0xff]
        %v954 = vld [vmem:[%s7 + $0x8] sm:$0xff]
        %v955 = vld [vmem:[%s7 + $0x10] sm:$0xff]
        %v956 = vld [vmem:[%s7 + $0x18] sm:$0xff]
        %v957 = vld [vmem:[%s7 + $0x20] sm:$0xff]
        %v958 = vld [vmem:[%s7 + $0x28] sm:$0xff]
        %v959 = vld [vmem:[%s7 + $0x30] sm:$0xff]
        %v960 = vld [vmem:[%s7 + $0x38] sm:$0xff]
        %v961 = vld [vmem:[%s7 + $0x40] sm:$0xff]
        %v962 = vld [vmem:[%s7 + $0x48] sm:$0xff]
        %v963 = vld [vmem:[%s7 + $0x50] sm:$0xff]
        %v964 = vld [vmem:[%s7 + $0x58] sm:$0xff]
        %v965 = vld [vmem:[%s7 + $0x60] sm:$0xff]
        %v966 = vld [vmem:[%s7 + $0x68] sm:$0xff]
        %v967 = vld [vmem:[%s7 + $0x70] sm:$0xff]
        %v968 = vld [vmem:[%s7 + $0x78] sm:$0xff]
        %v969 = vld [vmem:[%s8] sm:$0x1]
        %v970 = vld [vmem:[%s8 + $0x1] sm:$0x1]
        %v971 = vld [vmem:[%s8 + $0x2] sm:$0x1]
        %v972 = vld [vmem:[%s8 + $0x3] sm:$0x1]
        %v977 = vperm.slane %v969, 0
        %v978 = vperm.slane %v970, 0
        %v979 = vperm.slane %v971, 0
        %v980 = vperm.slane %v972, 0
        %985 = vmatpush.msra.mxu0 0.0
        %986 = vmatpush.msra.mxu0 0.0
        %987 = vmatpush.msra.mxu0 0.0
        %988 = vmatpush.msra.mxu0 0.0
        %989 = vmatpush.msra.mxu0 0.0
        %990 = vmatpush.msra.mxu0 0.0
        %991 = vmatpush.msra.mxu0 0.0
        %992 = vmatpush.msra.mxu0 0.0
        %993 = vmatpush.msra.mxu0 0.0
        %994 = vmatpush.msra.mxu0 0.0
        %995 = vmatpush.msra.mxu0 0.0
        %996 = vmatpush.msra.mxu0 0.0
        %997 = vmatpush.msra.mxu0 %v956
        %998 = vmatpush.msra.mxu0 %v955
        %999 = vmatpush.msra.mxu0 %v954
        %1000 = vmatpush.msra.mxu0 %v953
        %1001 = vmatmul.f32.gmra.mxu0 %v871
        %v1002 = vpop.f32.mrf.mxu0
        %v1003 = vadd.f32 %v977, %v1002
        %1004 = vdwg.mxu0
        %1005 = vmatpush.msra.mxu0 0.0
        %1006 = vmatpush.msra.mxu0 0.0
        %1007 = vmatpush.msra.mxu0 0.0
        %1008 = vmatpush.msra.mxu0 0.0
        %1009 = vmatpush.msra.mxu0 0.0
        %1010 = vmatpush.msra.mxu0 0.0
        %1011 = vmatpush.msra.mxu0 0.0
        %1012 = vmatpush.msra.mxu0 0.0
        %1013 = vmatpush.msra.mxu0 0.0
        %1014 = vmatpush.msra.mxu0 0.0
        %1015 = vmatpush.msra.mxu0 0.0
        %1016 = vmatpush.msra.mxu0 0.0
        %1017 = vmatpush.msra.mxu0 %v960
        %1018 = vmatpush.msra.mxu0 %v959
        %1019 = vmatpush.msra.mxu0 %v958
        %1020 = vmatpush.msra.mxu0 %v957
        %1021 = vmatmul.f32.gmra.mxu0 %v871
        %v1022 = vpop.f32.mrf.mxu0
        %v1023 = vadd.f32 %v978, %v1022
        %1024 = vdwg.mxu0
        %1025 = vmatpush.msra.mxu0 0.0
        %1026 = vmatpush.msra.mxu0 0.0
        %1027 = vmatpush.msra.mxu0 0.0
        %1028 = vmatpush.msra.mxu0 0.0
        %1029 = vmatpush.msra.mxu0 0.0
        %1030 = vmatpush.msra.mxu0 0.0
        %1031 = vmatpush.msra.mxu0 0.0
        %1032 = vmatpush.msra.mxu0 0.0
        %1033 = vmatpush.msra.mxu0 0.0
        %1034 = vmatpush.msra.mxu0 0.0
        %1035 = vmatpush.msra.mxu0 0.0
        %1036 = vmatpush.msra.mxu0 0.0
        %1037 = vmatpush.msra.mxu0 %v964
        %1038 = vmatpush.msra.mxu0 %v963
        %1039 = vmatpush.msra.mxu0 %v962
        %1040 = vmatpush.msra.mxu0 %v961
        %1041 = vmatmul.f32.gmra.mxu0 %v871
        %v1042 = vpop.f32.mrf.mxu0
        %v1043 = vadd.f32 %v979, %v1042
        %1044 = vdwg.mxu0
        %1045 = vmatpush.msra.mxu0 0.0
        %1046 = vmatpush.msra.mxu0 0.0
        %1047 = vmatpush.msra.mxu0 0.0
        %1048 = vmatpush.msra.mxu0 0.0
        %1049 = vmatpush.msra.mxu0 0.0
        %1050 = vmatpush.msra.mxu0 0.0
        %1051 = vmatpush.msra.mxu0 0.0
        %1052 = vmatpush.msra.mxu0 0.0
        %1053 = vmatpush.msra.mxu0 0.0
        %1054 = vmatpush.msra.mxu0 0.0
        %1055 = vmatpush.msra.mxu0 0.0
        %1056 = vmatpush.msra.mxu0 0.0
        %1057 = vmatpush.msra.mxu0 %v968
        %1058 = vmatpush.msra.mxu0 %v967
        %1059 = vmatpush.msra.mxu0 %v966
        %1060 = vmatpush.msra.mxu0 %v965
        %1061 = vmatmul.f32.gmra.mxu0 %v871
        %v1062 = vpop.f32.mrf.mxu0
        %v1063 = vadd.f32 %v980, %v1062
        %1064 = vdwg.mxu0
        %v1065 = vld [vmem:[#allocation2] sm:$0xff]
        %v1066 = vld [vmem:[#allocation2 + $0x8] sm:$0xff]
        %v1067 = vld [vmem:[#allocation2 + $0x10] sm:$0xff]
        %v1068 = vld [vmem:[#allocation2 + $0x18] sm:$0xff]
        %vm1069 = vcmask 64512
        %v1071 = vsel %vm1069, %v1065, 0
        %v1074 = vsel %vm1069, %v891, 0
        %1076 = vmatpush.xpose.msra.mxu0 0.0
        %1077 = vmatpush.xpose.msra.mxu0 0.0
        %1078 = vmatpush.xpose.msra.mxu0 0.0
        %1079 = vmatpush.xpose.msra.mxu0 0.0
        %1080 = vmatpush.xpose.msra.mxu0 0.0
        %1081 = vmatpush.xpose.msra.mxu0 0.0
        %1082 = vmatpush.xpose.msra.mxu0 0.0
        %1083 = vmatpush.xpose.msra.mxu0 0.0
        %1084 = vmatpush.xpose.msra.mxu0 0.0
        %1085 = vmatpush.xpose.msra.mxu0 0.0
        %1086 = vmatpush.xpose.msra.mxu0 0.0
        %1087 = vmatpush.xpose.msra.mxu0 0.0
        %1088 = vmatpush.xpose.msra.mxu0 0.0
        %1089 = vmatpush.xpose.msra.mxu0 0.0
        %1090 = vmatpush.xpose.msra.mxu0 0.0
        %1091 = vmatpush.xpose.msra.mxu0 %v1074
        %1092 = vmatmul.f32.gmra.mxu0 %v1071
        %v1093 = vpop.f32.mrf.mxu0
        %v1094 = vadd.f32 0.0, %v1093
        %1095 = vdwg.mxu0
        %v1097 = vsel %vm1069, %v1066, 0
        %v1100 = vsel %vm1069, %v911, 0
        %1102 = vmatpush.xpose.msra.mxu0 0.0
        %1103 = vmatpush.xpose.msra.mxu0 0.0
        %1104 = vmatpush.xpose.msra.mxu0 0.0
        %1105 = vmatpush.xpose.msra.mxu0 0.0
        %1106 = vmatpush.xpose.msra.mxu0 0.0
        %1107 = vmatpush.xpose.msra.mxu0 0.0
        %1108 = vmatpush.xpose.msra.mxu0 0.0
        %1109 = vmatpush.xpose.msra.mxu0 0.0
        %1110 = vmatpush.xpose.msra.mxu0 0.0
        %1111 = vmatpush.xpose.msra.mxu0 0.0
        %1112 = vmatpush.xpose.msra.mxu0 0.0
        %1113 = vmatpush.xpose.msra.mxu0 0.0
        %1114 = vmatpush.xpose.msra.mxu0 0.0
        %1115 = vmatpush.xpose.msra.mxu0 0.0
        %1116 = vmatpush.xpose.msra.mxu0 0.0
        %1117 = vmatpush.xpose.msra.mxu0 %v1100
        %1118 = vmatmul.f32.gmra.mxu0 %v1097
        %v1119 = vpop.f32.mrf.mxu0
        %v1120 = vadd.f32 0.0, %v1119
        %1121 = vdwg.mxu0
        %v1123 = vsel %vm1069, %v1067, 0
        %v1126 = vsel %vm1069, %v931, 0
        %1128 = vmatpush.xpose.msra.mxu0 0.0
        %1129 = vmatpush.xpose.msra.mxu0 0.0
        %1130 = vmatpush.xpose.msra.mxu0 0.0
        %1131 = vmatpush.xpose.msra.mxu0 0.0
        %1132 = vmatpush.xpose.msra.mxu0 0.0
        %1133 = vmatpush.xpose.msra.mxu0 0.0
        %1134 = vmatpush.xpose.msra.mxu0 0.0
        %1135 = vmatpush.xpose.msra.mxu0 0.0
        %1136 = vmatpush.xpose.msra.mxu0 0.0
        %1137 = vmatpush.xpose.msra.mxu0 0.0
        %1138 = vmatpush.xpose.msra.mxu0 0.0
        %1139 = vmatpush.xpose.msra.mxu0 0.0
        %1140 = vmatpush.xpose.msra.mxu0 0.0
        %1141 = vmatpush.xpose.msra.mxu0 0.0
        %1142 = vmatpush.xpose.msra.mxu0 0.0
        %1143 = vmatpush.xpose.msra.mxu0 %v1126
        %1144 = vmatmul.f32.gmra.mxu0 %v1123
        %v1145 = vpop.f32.mrf.mxu0
        %v1146 = vadd.f32 0.0, %v1145
        %1147 = vdwg.mxu0
        %v1149 = vsel %vm1069, %v1068, 0
        %v1152 = vsel %vm1069, %v951, 0
        %1154 = vmatpush.xpose.msra.mxu0 0.0
        %1155 = vmatpush.xpose.msra.mxu0 0.0
        %1156 = vmatpush.xpose.msra.mxu0 0.0
        %1157 = vmatpush.xpose.msra.mxu0 0.0
        %1158 = vmatpush.xpose.msra.mxu0 0.0
        %1159 = vmatpush.xpose.msra.mxu0 0.0
        %1160 = vmatpush.xpose.msra.mxu0 0.0
        %1161 = vmatpush.xpose.msra.mxu0 0.0
        %1162 = vmatpush.xpose.msra.mxu0 0.0
        %1163 = vmatpush.xpose.msra.mxu0 0.0
        %1164 = vmatpush.xpose.msra.mxu0 0.0
        %1165 = vmatpush.xpose.msra.mxu0 0.0
        %1166 = vmatpush.xpose.msra.mxu0 0.0
        %1167 = vmatpush.xpose.msra.mxu0 0.0
        %1168 = vmatpush.xpose.msra.mxu0 0.0
        %1169 = vmatpush.xpose.msra.mxu0 %v1152
        %1170 = vmatmul.f32.gmra.mxu0 %v1149
        %v1171 = vpop.f32.mrf.mxu0
        %v1172 = vadd.f32 0.0, %v1171
        %1173 = vdwg.mxu0
        %v1174 = vmul.f32 %v1094, 0.35355338
        %v1175 = vmul.f32 %v1120, 0.35355338
        %v1176 = vmul.f32 %v1146, 0.35355338
        %v1177 = vmul.f32 %v1172, 0.35355338
        %v1178 = vld [vmem:[%s696] sm:$0x3]
        %v1179 = vunpack.c.0.s8 %v1178
        %v1180 = vcvt.s32.f32 %v1179
        %vm1181 = vcmp.eq.f32.partialorder %v1180, 0.0
        %v1182 = vsel %vm1181, 1, 0
        %vm1183 = vcmp.eq.s32.totalorder %v1182, 1
        %v1184 = vsel %vm1183, -1e+09, %v1174
        %v1185 = vsel %vm1183, -1e+09, %v1175
        %v1186 = vsel %vm1183, -1e+09, %v1176
        %v1187 = vsel %vm1183, -1e+09, %v1177
        %v1188 = vld [vmem:[#allocation3] sm:$0xff]
        %v1189 = vld [vmem:[#allocation3 + $0x8] sm:$0xff]
        %v1190 = vld [vmem:[#allocation3 + $0x10] sm:$0xff]
        %v1191 = vld [vmem:[#allocation3 + $0x18] sm:$0xff]
        %v1192 = vsel %vm1069, %v1184, -inf
        %1193 = vmax.xlane.f32.xlu0 %v1192
        %v1194 = vpop.xlane.xlu0 %1193
        %v1195 = vsel %vm1069, %v1185, -inf
        %1196 = vmax.xlane.f32.xlu0 %v1195
        %v1197 = vpop.xlane.xlu0 %1196
        %v1198 = vsel %vm1069, %v1186, -inf
        %1199 = vmax.xlane.f32.xlu0 %v1198
        %v1200 = vpop.xlane.xlu0 %1199
        %v1201 = vsel %vm1069, %v1187, -inf
        %1202 = vmax.xlane.f32.xlu0 %v1201
        %v1203 = vpop.xlane.xlu0 %1202
        %v1204 = vmax.f32 %v1188, %v1194
        %v1205 = vmax.f32 %v1189, %v1197
        %v1206 = vmax.f32 %v1190, %v1200
        %v1207 = vmax.f32 %v1191, %v1203
        %v1208 = vsub.f32 %v1188, %v1204
        %v1209 = vsub.f32 %v1189, %v1205
        %v1210 = vsub.f32 %v1190, %v1206
        %v1211 = vsub.f32 %v1191, %v1207
        %v1212 = vmul.f32 %v1208, 1.442695
        %v1213 = vpow.pop %v1212
        %v1214 = vmul.f32 %v1209, 1.442695
        %v1215 = vpow.pop %v1214
        %v1216 = vmul.f32 %v1210, 1.442695
        %v1217 = vpow.pop %v1216
        %v1218 = vmul.f32 %v1211, 1.442695
        %v1219 = vpow.pop %v1218
        %1221 = vset.pattern.permute.xlu0 0
        %1222 = vperm.xlu0 %1221, %v1204
        %v1223 = vpop.permute.xlu0 %1222
        %1226 = vset.pattern.permute.xlu0 0
        %1227 = vperm.xlu0 %1226, %v1205
        %v1228 = vpop.permute.xlu0 %1227
        %1231 = vset.pattern.permute.xlu0 0
        %1232 = vperm.xlu0 %1231, %v1206
        %v1233 = vpop.permute.xlu0 %1232
        %1236 = vset.pattern.permute.xlu0 0
        %1237 = vperm.xlu0 %1236, %v1207
        %v1238 = vpop.permute.xlu0 %1237
        %v1240 = vsub.f32 %v1184, %v1223
        %v1241 = vsub.f32 %v1185, %v1228
        %v1242 = vsub.f32 %v1186, %v1233
        %v1243 = vsub.f32 %v1187, %v1238
        %v1244 = vmul.f32 %v1240, 1.442695
        %v1245 = vpow.pop %v1244
        %v1246 = vmul.f32 %v1241, 1.442695
        %v1247 = vpow.pop %v1246
        %v1248 = vmul.f32 %v1242, 1.442695
        %v1249 = vpow.pop %v1248
        %v1250 = vmul.f32 %v1243, 1.442695
        %v1251 = vpow.pop %v1250
        %v1252 = vld [vmem:[#allocation4] sm:$0xff]
        %v1253 = vld [vmem:[#allocation4 + $0x8] sm:$0xff]
        %v1254 = vld [vmem:[#allocation4 + $0x10] sm:$0xff]
        %v1255 = vld [vmem:[#allocation4 + $0x18] sm:$0xff]
        %v1256 = vmul.f32 %v1213, %v1252
        %v1257 = vmul.f32 %v1215, %v1253
        %v1258 = vmul.f32 %v1217, %v1254
        %v1259 = vmul.f32 %v1219, %v1255
        %v1260 = vsel %vm1069, %v1245, 0.0
        %1261 = vadd.xlane.f32.xlu0 %v1260
        %v1262 = vpop.xlane.xlu0 %1261
        %v1263 = vsel %vm1069, %v1247, 0.0
        %1264 = vadd.xlane.f32.xlu0 %v1263
        %v1265 = vpop.xlane.xlu0 %1264
        %v1266 = vsel %vm1069, %v1249, 0.0
        %1267 = vadd.xlane.f32.xlu0 %v1266
        %v1268 = vpop.xlane.xlu0 %1267
        %v1269 = vsel %vm1069, %v1251, 0.0
        %1270 = vadd.xlane.f32.xlu0 %v1269
        %v1271 = vpop.xlane.xlu0 %1270
        %v1272 = vadd.f32 %v1256, %v1262
        %v1273 = vadd.f32 %v1257, %v1265
        %v1274 = vadd.f32 %v1258, %v1268
        %v1275 = vadd.f32 %v1259, %v1271
        %vm1276 = vcmask 7168
        %1277 = vst.msk [vmem:[#allocation4] sm:$0xff] %vm1276, %v1272
        %1278 = vst.msk [vmem:[#allocation4 + $0x8] sm:$0xff] %vm1276, %v1273
        %1279 = vst.msk [vmem:[#allocation4 + $0x10] sm:$0xff] %vm1276, %v1274
        %1280 = vst.msk [vmem:[#allocation4 + $0x18] sm:$0xff] %vm1276, %v1275
        %v1281 = vld [vmem:[#allocation5] sm:$0xff]
        %v1282 = vld [vmem:[#allocation5 + $0x8] sm:$0xff]
        %v1283 = vld [vmem:[#allocation5 + $0x10] sm:$0xff]
        %v1284 = vld [vmem:[#allocation5 + $0x18] sm:$0xff]
        %1286 = vset.pattern.permute.xlu0 0
        %1287 = vperm.xlu0 %1286, %v1213
        %v1288 = vpop.permute.xlu0 %1287
        %1291 = vset.pattern.permute.xlu0 0
        %1292 = vperm.xlu0 %1291, %v1215
        %v1293 = vpop.permute.xlu0 %1292
        %1296 = vset.pattern.permute.xlu0 0
        %1297 = vperm.xlu0 %1296, %v1217
        %v1298 = vpop.permute.xlu0 %1297
        %1301 = vset.pattern.permute.xlu0 0
        %1302 = vperm.xlu0 %1301, %v1219
        %v1303 = vpop.permute.xlu0 %1302
        %v1305 = vmul.f32 %v1288, %v1281
        %v1306 = vmul.f32 %v1293, %v1282
        %v1307 = vmul.f32 %v1298, %v1283
        %v1308 = vmul.f32 %v1303, %v1284
        %v1310 = vsel %vm1069, %v1245, 0
        %1312 = vmatpush.msra.mxu0 0.0
        %1313 = vmatpush.msra.mxu0 0.0
        %1314 = vmatpush.msra.mxu0 0.0
        %1315 = vmatpush.msra.mxu0 0.0
        %1316 = vmatpush.msra.mxu0 0.0
        %1317 = vmatpush.msra.mxu0 0.0
        %1318 = vmatpush.msra.mxu0 0.0
        %1319 = vmatpush.msra.mxu0 0.0
        %1320 = vmatpush.msra.mxu0 0.0
        %1321 = vmatpush.msra.mxu0 0.0
        %1322 = vmatpush.msra.mxu0 0.0
        %1323 = vmatpush.msra.mxu0 0.0
        %1324 = vmatpush.msra.mxu0 0.0
        %1325 = vmatpush.msra.mxu0 0.0
        %1326 = vmatpush.msra.mxu0 0.0
        %1327 = vmatpush.msra.mxu0 %v1003
        %1328 = vmatmul.f32.gmra.mxu0 %v1310
        %v1329 = vpop.f32.mrf.mxu0
        %v1330 = vadd.f32 0.0, %v1329
        %1331 = vdwg.mxu0
        %v1333 = vsel %vm1069, %v1247, 0
        %1335 = vmatpush.msra.mxu0 0.0
        %1336 = vmatpush.msra.mxu0 0.0
        %1337 = vmatpush.msra.mxu0 0.0
        %1338 = vmatpush.msra.mxu0 0.0
        %1339 = vmatpush.msra.mxu0 0.0
        %1340 = vmatpush.msra.mxu0 0.0
        %1341 = vmatpush.msra.mxu0 0.0
        %1342 = vmatpush.msra.mxu0 0.0
        %1343 = vmatpush.msra.mxu0 0.0
        %1344 = vmatpush.msra.mxu0 0.0
        %1345 = vmatpush.msra.mxu0 0.0
        %1346 = vmatpush.msra.mxu0 0.0
        %1347 = vmatpush.msra.mxu0 0.0
        %1348 = vmatpush.msra.mxu0 0.0
        %1349 = vmatpush.msra.mxu0 0.0
        %1350 = vmatpush.msra.mxu0 %v1023
        %1351 = vmatmul.f32.gmra.mxu0 %v1333
        %v1352 = vpop.f32.mrf.mxu0
        %v1353 = vadd.f32 0.0, %v1352
        %1354 = vdwg.mxu0
        %v1356 = vsel %vm1069, %v1249, 0
        %1358 = vmatpush.msra.mxu0 0.0
        %1359 = vmatpush.msra.mxu0 0.0
        %1360 = vmatpush.msra.mxu0 0.0
        %1361 = vmatpush.msra.mxu0 0.0
        %1362 = vmatpush.msra.mxu0 0.0
        %1363 = vmatpush.msra.mxu0 0.0
        %1364 = vmatpush.msra.mxu0 0.0
        %1365 = vmatpush.msra.mxu0 0.0
        %1366 = vmatpush.msra.mxu0 0.0
        %1367 = vmatpush.msra.mxu0 0.0
        %1368 = vmatpush.msra.mxu0 0.0
        %1369 = vmatpush.msra.mxu0 0.0
        %1370 = vmatpush.msra.mxu0 0.0
        %1371 = vmatpush.msra.mxu0 0.0
        %1372 = vmatpush.msra.mxu0 0.0
        %1373 = vmatpush.msra.mxu0 %v1043
        %1374 = vmatmul.f32.gmra.mxu0 %v1356
        %v1375 = vpop.f32.mrf.mxu0
        %v1376 = vadd.f32 0.0, %v1375
        %1377 = vdwg.mxu0
        %v1379 = vsel %vm1069, %v1251, 0
        %1381 = vmatpush.msra.mxu0 0.0
        %1382 = vmatpush.msra.mxu0 0.0
        %1383 = vmatpush.msra.mxu0 0.0
        %1384 = vmatpush.msra.mxu0 0.0
        %1385 = vmatpush.msra.mxu0 0.0
        %1386 = vmatpush.msra.mxu0 0.0
        %1387 = vmatpush.msra.mxu0 0.0
        %1388 = vmatpush.msra.mxu0 0.0
        %1389 = vmatpush.msra.mxu0 0.0
        %1390 = vmatpush.msra.mxu0 0.0
        %1391 = vmatpush.msra.mxu0 0.0
        %1392 = vmatpush.msra.mxu0 0.0
        %1393 = vmatpush.msra.mxu0 0.0
        %1394 = vmatpush.msra.mxu0 0.0
        %1395 = vmatpush.msra.mxu0 0.0
        %1396 = vmatpush.msra.mxu0 %v1063
        %1397 = vmatmul.f32.gmra.mxu0 %v1379
        %v1398 = vpop.f32.mrf.mxu0
        %v1399 = vadd.f32 0.0, %v1398
        %1400 = vdwg.mxu0
        %v1401 = vadd.f32 %v1305, %v1330
        %v1402 = vadd.f32 %v1306, %v1353
        %v1403 = vadd.f32 %v1307, %v1376
        %v1404 = vadd.f32 %v1308, %v1399
        %1405 = vst.msk [vmem:[#allocation5] sm:$0xff] %vm1069, %v1401
        %1406 = vst.msk [vmem:[#allocation5 + $0x8] sm:$0xff] %vm1069, %v1402
        %1407 = vst.msk [vmem:[#allocation5 + $0x10] sm:$0xff] %vm1069, %v1403
        %1408 = vst.msk [vmem:[#allocation5 + $0x18] sm:$0xff] %vm1069, %v1404
        %1409 = vst.msk [vmem:[#allocation3] sm:$0xff] %vm1276, %v1204
        %1410 = vst.msk [vmem:[#allocation3 + $0x8] sm:$0xff] %vm1276, %v1205
        %1411 = vst.msk [vmem:[#allocation3 + $0x10] sm:$0xff] %vm1276, %v1206
        %1412 = vst.msk [vmem:[#allocation3 + $0x18] sm:$0xff] %vm1276, %v1207
        // Predicated region
        $region101: #{tpu_custom_call.1} parent=95 // pred_check
          %p1413 = pneg %p698
        $region102: #{tpu_custom_call.1} parent=95 // pred_check_branch
          %1415 = sbr.rel (%p1413) target = $region104
        $region103: #{tpu_custom_call.1} parent=95 // pred_region
          %v1416 = vld [vmem:[#allocation4] sm:$0xff]
          %v1417 = vld [vmem:[#allocation4 + $0x8] sm:$0xff]
          %v1418 = vld [vmem:[#allocation4 + $0x10] sm:$0xff]
          %v1419 = vld [vmem:[#allocation4 + $0x18] sm:$0xff]
          %v1420 = vrcp.pop %v1416
          %v1421 = vmul.f32 %v1416, %v1420
          %v1422 = vsub.f32 1.0, %v1421
          %v1423 = vmul.f32 %v1420, %v1422
          %v1424 = vadd.f32 %v1420, %v1423
          %vm1425 = vweird.f32 %v1416
          %vm1426 = vweird.f32 %v1420
          %vm1427 = vmor %vm1425, %vm1426
          %v1428 = vsel %vm1427, %v1420, %v1424
          %v1429 = vand.u32 2147483647, %v1416
          %vm1430 = vcmp.eq.f32.partialorder %v1429, 8.507059e+37
          %v1431 = vand.u32 %v1416, 2147483648
          %v1432 = vor.u32 1.1754944e-38, %v1431
          %v1433 = vsel %vm1430, %v1432, %v1428
          %v1434 = vrcp.pop %v1417
          %v1435 = vmul.f32 %v1417, %v1434
          %v1436 = vsub.f32 1.0, %v1435
          %v1437 = vmul.f32 %v1434, %v1436
          %v1438 = vadd.f32 %v1434, %v1437
          %vm1439 = vweird.f32 %v1417
          %vm1440 = vweird.f32 %v1434
          %vm1441 = vmor %vm1439, %vm1440
          %v1442 = vsel %vm1441, %v1434, %v1438
          %v1443 = vand.u32 2147483647, %v1417
          %vm1444 = vcmp.eq.f32.partialorder %v1443, 8.507059e+37
          %v1445 = vand.u32 %v1417, 2147483648
          %v1446 = vor.u32 1.1754944e-38, %v1445
          %v1447 = vsel %vm1444, %v1446, %v1442
          %v1448 = vrcp.pop %v1418
          %v1449 = vmul.f32 %v1418, %v1448
          %v1450 = vsub.f32 1.0, %v1449
          %v1451 = vmul.f32 %v1448, %v1450
          %v1452 = vadd.f32 %v1448, %v1451
          %vm1453 = vweird.f32 %v1418
          %vm1454 = vweird.f32 %v1448
          %vm1455 = vmor %vm1453, %vm1454
          %v1456 = vsel %vm1455, %v1448, %v1452
          %v1457 = vand.u32 2147483647, %v1418
          %vm1458 = vcmp.eq.f32.partialorder %v1457, 8.507059e+37
          %v1459 = vand.u32 %v1418, 2147483648
          %v1460 = vor.u32 1.1754944e-38, %v1459
          %v1461 = vsel %vm1458, %v1460, %v1456
          %v1462 = vrcp.pop %v1419
          %v1463 = vmul.f32 %v1419, %v1462
          %v1464 = vsub.f32 1.0, %v1463
          %v1465 = vmul.f32 %v1462, %v1464
          %v1466 = vadd.f32 %v1462, %v1465
          %vm1467 = vweird.f32 %v1419
          %vm1468 = vweird.f32 %v1462
          %vm1469 = vmor %vm1467, %vm1468
          %v1470 = vsel %vm1469, %v1462, %v1466
          %v1471 = vand.u32 2147483647, %v1419
          %vm1472 = vcmp.eq.f32.partialorder %v1471, 8.507059e+37
          %v1473 = vand.u32 %v1419, 2147483648
          %v1474 = vor.u32 1.1754944e-38, %v1473
          %v1475 = vsel %vm1472, %v1474, %v1470
          %v1476 = vld [vmem:[#allocation5] sm:$0xff]
          %v1477 = vld [vmem:[#allocation5 + $0x8] sm:$0xff]
          %v1478 = vld [vmem:[#allocation5 + $0x10] sm:$0xff]
          %v1479 = vld [vmem:[#allocation5 + $0x18] sm:$0xff]
          %1481 = vset.pattern.permute.xlu0 0
          %1482 = vperm.xlu0 %1481, %v1433
          %v1483 = vpop.permute.xlu0 %1482
          %1486 = vset.pattern.permute.xlu0 0
          %1487 = vperm.xlu0 %1486, %v1447
          %v1488 = vpop.permute.xlu0 %1487
          %1491 = vset.pattern.permute.xlu0 0
          %1492 = vperm.xlu0 %1491, %v1461
          %v1493 = vpop.permute.xlu0 %1492
          %1496 = vset.pattern.permute.xlu0 0
          %1497 = vperm.xlu0 %1496, %v1475
          %v1498 = vpop.permute.xlu0 %1497
          %v1500 = vmul.f32 %v1476, %v1483
          %v1501 = vmul.f32 %v1477, %v1488
          %v1502 = vmul.f32 %v1478, %v1493
          %v1503 = vmul.f32 %v1479, %v1498
          %v1504 = vld [vmem:[%s9] sm:$0xff]
          %v1505 = vld [vmem:[%s9 + $0x8] sm:$0xff]
          %v1506 = vld [vmem:[%s9 + $0x10] sm:$0xff]
          %v1507 = vld [vmem:[%s9 + $0x18] sm:$0xff]
          %v1509 = vsel %vm1069, %v1500, 0
          %1511 = vmatpush.msra.mxu0 0.0
          %1512 = vmatpush.msra.mxu0 0.0
          %1513 = vmatpush.msra.mxu0 0.0
          %1514 = vmatpush.msra.mxu0 0.0
          %1515 = vmatpush.msra.mxu0 0.0
          %1516 = vmatpush.msra.mxu0 0.0
          %1517 = vmatpush.msra.mxu0 0.0
          %1518 = vmatpush.msra.mxu0 0.0
          %1519 = vmatpush.msra.mxu0 0.0
          %1520 = vmatpush.msra.mxu0 0.0
          %1521 = vmatpush.msra.mxu0 0.0
          %1522 = vmatpush.msra.mxu0 0.0
          %1523 = vmatpush.msra.mxu0 0.0
          %1524 = vmatpush.msra.mxu0 0.0
          %1525 = vmatpush.msra.mxu0 0.0
          %1526 = vmatpush.msra.mxu0 %v1504
          %1527 = vmatmul.f32.gmra.mxu0 %v1509
          %v1528 = vpop.f32.mrf.mxu0
          %v1529 = vadd.f32 0.0, %v1528
          %1530 = vdwg.mxu0
          %v1532 = vsel %vm1069, %v1501, 0
          %1534 = vmatpush.msra.mxu0 0.0
          %1535 = vmatpush.msra.mxu0 0.0
          %1536 = vmatpush.msra.mxu0 0.0
          %1537 = vmatpush.msra.mxu0 0.0
          %1538 = vmatpush.msra.mxu0 0.0
          %1539 = vmatpush.msra.mxu0 0.0
          %1540 = vmatpush.msra.mxu0 0.0
          %1541 = vmatpush.msra.mxu0 0.0
          %1542 = vmatpush.msra.mxu0 0.0
          %1543 = vmatpush.msra.mxu0 0.0
          %1544 = vmatpush.msra.mxu0 0.0
          %1545 = vmatpush.msra.mxu0 0.0
          %1546 = vmatpush.msra.mxu0 0.0
          %1547 = vmatpush.msra.mxu0 0.0
          %1548 = vmatpush.msra.mxu0 0.0
          %1549 = vmatpush.msra.mxu0 %v1505
          %1550 = vmatmul.f32.gmra.mxu0 %v1532
          %v1551 = vpop.f32.mrf.mxu0
          %v1552 = vadd.f32 0.0, %v1551
          %1553 = vdwg.mxu0
          %v1555 = vsel %vm1069, %v1502, 0
          %1557 = vmatpush.msra.mxu0 0.0
          %1558 = vmatpush.msra.mxu0 0.0
          %1559 = vmatpush.msra.mxu0 0.0
          %1560 = vmatpush.msra.mxu0 0.0
          %1561 = vmatpush.msra.mxu0 0.0
          %1562 = vmatpush.msra.mxu0 0.0
          %1563 = vmatpush.msra.mxu0 0.0
          %1564 = vmatpush.msra.mxu0 0.0
          %1565 = vmatpush.msra.mxu0 0.0
          %1566 = vmatpush.msra.mxu0 0.0
          %1567 = vmatpush.msra.mxu0 0.0
          %1568 = vmatpush.msra.mxu0 0.0
          %1569 = vmatpush.msra.mxu0 0.0
          %1570 = vmatpush.msra.mxu0 0.0
          %1571 = vmatpush.msra.mxu0 0.0
          %1572 = vmatpush.msra.mxu0 %v1506
          %1573 = vmatmul.f32.gmra.mxu0 %v1555
          %v1574 = vpop.f32.mrf.mxu0
          %v1575 = vadd.f32 0.0, %v1574
          %1576 = vdwg.mxu0
          %v1578 = vsel %vm1069, %v1503, 0
          %1580 = vmatpush.msra.mxu0 0.0
          %1581 = vmatpush.msra.mxu0 0.0
          %1582 = vmatpush.msra.mxu0 0.0
          %1583 = vmatpush.msra.mxu0 0.0
          %1584 = vmatpush.msra.mxu0 0.0
          %1585 = vmatpush.msra.mxu0 0.0
          %1586 = vmatpush.msra.mxu0 0.0
          %1587 = vmatpush.msra.mxu0 0.0
          %1588 = vmatpush.msra.mxu0 0.0
          %1589 = vmatpush.msra.mxu0 0.0
          %1590 = vmatpush.msra.mxu0 0.0
          %1591 = vmatpush.msra.mxu0 0.0
          %1592 = vmatpush.msra.mxu0 0.0
          %1593 = vmatpush.msra.mxu0 0.0
          %1594 = vmatpush.msra.mxu0 0.0
          %1595 = vmatpush.msra.mxu0 %v1507
          %1596 = vmatmul.f32.gmra.mxu0 %v1578
          %v1597 = vpop.f32.mrf.mxu0
          %v1598 = vadd.f32 0.0, %v1597
          %1599 = vdwg.mxu0
          %v1600 = vsel %vm869, %v1529, 0.0
          %v1601 = vsel %vm869, %v1552, 0.0
          %v1602 = vadd.f32 %v1600, %v1601
          %v1603 = vsel %vm869, %v1575, 0.0
          %v1604 = vadd.f32 %v1602, %v1603
          %v1605 = vsel %vm869, %v1598, 0.0
          %v1606 = vadd.f32 %v1604, %v1605
          %v1607 = vld [vmem:[%s10] sm:$0x1]
          %v1609 = vperm.slane %v1607, 0
          %v1611 = vadd.f32 %v1606, %v1609
          %v1612 = vadd.f32 %v697, %v1611
          %v1613 = vld [vmem:[%s15] sm:$0x1]
          %v1614 = vld [vmem:[%s16] sm:$0x1]
          %v1615 = vsel %vm869, %v1612, 0.0
          %1616 = vadd.xlane.f32.xlu0 %v1615
          %v1617 = vpop.xlane.xlu0 %1616
          %v1618 = vrcp.pop 32.0
          %v1619 = vmul.f32 32.0, %v1618
          %v1620 = vsub.f32 1.0, %v1619
          %v1621 = vmul.f32 %v1618, %v1620
          %v1622 = vadd.f32 %v1618, %v1621
          %vm1623 = vweird.f32 %v1618
          %v1624 = vsel %vm1623, %v1618, %v1622
          %v1625 = vmul.f32 %v1617, %v1624
          %v1626 = vsub.f32 %v1612, %v1625
          %v1627 = vmul.f32 %v1626, %v1626
          %v1628 = vsel %vm869, %v1627, 0.0
          %1629 = vadd.xlane.f32.xlu0 %v1628
          %v1630 = vpop.xlane.xlu0 %1629
          %v1631 = vmul.f32 %v1630, %v1624
          %v1632 = vadd.f32 %v1631, 1e-05
          %v1633 = vrsqrt.pop %v1632
          %v1634 = vmul.f32 %v1633, %v1632
          %v1635 = vmul.f32 %v1634, %v1633
          %v1636 = vmul.f32 0.5, %v1635
          %v1637 = vsub.f32 1.5, %v1636
          %v1638 = vmul.f32 %v1633, %v1637
          %vm1639 = vweird.f32 %v1632
          %vm1640 = vweird.f32 %v1633
          %vm1641 = vmor %vm1639, %vm1640
          %v1642 = vsel %vm1641, %v1633, %v1638
          %v1643 = vmul.f32 %v1626, %v1642
          %v1645 = vperm.slane %v1613, 0
          %v1647 = vmul.f32 %v1643, %v1645
          %v1649 = vperm.slane %v1614, 0
          %v1651 = vadd.f32 %v1647, %v1649
          %v1652 = vld [vmem:[%s11] sm:$0xff]
          %v1653 = vld [vmem:[%s11 + $0x8] sm:$0xff]
          %v1654 = vld [vmem:[%s11 + $0x10] sm:$0xff]
          %v1655 = vld [vmem:[%s11 + $0x18] sm:$0xff]
          %v1656 = vld [vmem:[%s11 + $0x20] sm:$0xff]
          %v1657 = vld [vmem:[%s11 + $0x28] sm:$0xff]
          %v1658 = vld [vmem:[%s11 + $0x30] sm:$0xff]
          %v1659 = vld [vmem:[%s11 + $0x38] sm:$0xff]
          %v1660 = vld [vmem:[%s11 + $0x40] sm:$0xff]
          %v1661 = vld [vmem:[%s11 + $0x48] sm:$0xff]
          %v1662 = vld [vmem:[%s11 + $0x50] sm:$0xff]
          %v1663 = vld [vmem:[%s11 + $0x58] sm:$0xff]
          %v1664 = vld [vmem:[%s11 + $0x60] sm:$0xff]
          %v1665 = vld [vmem:[%s11 + $0x68] sm:$0xff]
          %v1666 = vld [vmem:[%s11 + $0x70] sm:$0xff]
          %v1667 = vld [vmem:[%s11 + $0x78] sm:$0xff]
          %v1668 = vld [vmem:[%s11 + $0x80] sm:$0xff]
          %v1669 = vld [vmem:[%s11 + $0x88] sm:$0xff]
          %v1670 = vld [vmem:[%s11 + $0x90] sm:$0xff]
          %v1671 = vld [vmem:[%s11 + $0x98] sm:$0xff]
          %v1672 = vld [vmem:[%s11 + $0xa0] sm:$0xff]
          %v1673 = vld [vmem:[%s11 + $0xa8] sm:$0xff]
          %v1674 = vld [vmem:[%s11 + $0xb0] sm:$0xff]
          %v1675 = vld [vmem:[%s11 + $0xb8] sm:$0xff]
          %v1676 = vld [vmem:[%s11 + $0xc0] sm:$0xff]
          %v1677 = vld [vmem:[%s11 + $0xc8] sm:$0xff]
          %v1678 = vld [vmem:[%s11 + $0xd0] sm:$0xff]
          %v1679 = vld [vmem:[%s11 + $0xd8] sm:$0xff]
          %v1680 = vld [vmem:[%s11 + $0xe0] sm:$0xff]
          %v1681 = vld [vmem:[%s11 + $0xe8] sm:$0xff]
          %v1682 = vld [vmem:[%s11 + $0xf0] sm:$0xff]
          %v1683 = vld [vmem:[%s11 + $0xf8] sm:$0xff]
          %v1684 = vld [vmem:[%s11 + $0x100] sm:$0xff]
          %v1685 = vld [vmem:[%s11 + $0x108] sm:$0xff]
          %v1686 = vld [vmem:[%s11 + $0x110] sm:$0xff]
          %v1687 = vld [vmem:[%s11 + $0x118] sm:$0xff]
          %v1688 = vld [vmem:[%s11 + $0x120] sm:$0xff]
          %v1689 = vld [vmem:[%s11 + $0x128] sm:$0xff]
          %v1690 = vld [vmem:[%s11 + $0x130] sm:$0xff]
          %v1691 = vld [vmem:[%s11 + $0x138] sm:$0xff]
          %v1692 = vld [vmem:[%s11 + $0x140] sm:$0xff]
          %v1693 = vld [vmem:[%s11 + $0x148] sm:$0xff]
          %v1694 = vld [vmem:[%s11 + $0x150] sm:$0xff]
          %v1695 = vld [vmem:[%s11 + $0x158] sm:$0xff]
          %v1696 = vld [vmem:[%s11 + $0x160] sm:$0xff]
          %v1697 = vld [vmem:[%s11 + $0x168] sm:$0xff]
          %v1698 = vld [vmem:[%s11 + $0x170] sm:$0xff]
          %v1699 = vld [vmem:[%s11 + $0x178] sm:$0xff]
          %v1700 = vld [vmem:[%s11 + $0x180] sm:$0xff]
          %v1701 = vld [vmem:[%s11 + $0x188] sm:$0xff]
          %v1702 = vld [vmem:[%s11 + $0x190] sm:$0xff]
          %v1703 = vld [vmem:[%s11 + $0x198] sm:$0xff]
          %v1704 = vld [vmem:[%s11 + $0x1a0] sm:$0xff]
          %v1705 = vld [vmem:[%s11 + $0x1a8] sm:$0xff]
          %v1706 = vld [vmem:[%s11 + $0x1b0] sm:$0xff]
          %v1707 = vld [vmem:[%s11 + $0x1b8] sm:$0xff]
          %v1708 = vld [vmem:[%s11 + $0x1c0] sm:$0xff]
          %v1709 = vld [vmem:[%s11 + $0x1c8] sm:$0xff]
          %v1710 = vld [vmem:[%s11 + $0x1d0] sm:$0xff]
          %v1711 = vld [vmem:[%s11 + $0x1d8] sm:$0xff]
          %v1712 = vld [vmem:[%s11 + $0x1e0] sm:$0xff]
          %v1713 = vld [vmem:[%s11 + $0x1e8] sm:$0xff]
          %v1714 = vld [vmem:[%s11 + $0x1f0] sm:$0xff]
          %v1715 = vld [vmem:[%s11 + $0x1f8] sm:$0xff]
          %v1716 = vld [vmem:[%s12] sm:$0xff]
          %v1717 = vld [vmem:[%s12 + $0x8] sm:$0xff]
          %v1720 = vperm.slane %v1716, 0
          %v1721 = vperm.slane %v1716, 1
          %v1722 = vperm.slane %v1716, 2
          %v1723 = vperm.slane %v1716, 3
          %v1724 = vperm.slane %v1716, 4
          %v1725 = vperm.slane %v1716, 5
          %v1726 = vperm.slane %v1716, 6
          %v1727 = vperm.slane %v1716, 7
          %v1728 = vperm.slane %v1717, 0
          %v1729 = vperm.slane %v1717, 1
          %v1730 = vperm.slane %v1717, 2
          %v1731 = vperm.slane %v1717, 3
          %v1732 = vperm.slane %v1717, 4
          %v1733 = vperm.slane %v1717, 5
          %v1734 = vperm.slane %v1717, 6
          %v1735 = vperm.slane %v1717, 7
          %v1753 = vsel %vm869, %v1651, 0
          %1755 = vmatpush.msra.mxu0 0.0
          %1756 = vmatpush.msra.mxu0 0.0
          %1757 = vmatpush.msra.mxu0 0.0
          %1758 = vmatpush.msra.mxu0 0.0
          %1759 = vmatpush.msra.mxu0 0.0
          %1760 = vmatpush.msra.mxu0 0.0
          %1761 = vmatpush.msra.mxu0 0.0
          %1762 = vmatpush.msra.mxu0 0.0
          %1763 = vmatpush.msra.mxu0 0.0
          %1764 = vmatpush.msra.mxu0 0.0
          %1765 = vmatpush.msra.mxu0 0.0
          %1766 = vmatpush.msra.mxu0 0.0
          %1767 = vmatpush.msra.mxu0 %v1700
          %1768 = vmatpush.msra.mxu0 %v1684
          %1769 = vmatpush.msra.mxu0 %v1668
          %1770 = vmatpush.msra.mxu0 %v1652
          %1771 = vmatmul.f32.gmra.mxu0 %v1753
          %v1772 = vpop.f32.mrf.mxu0
          %v1773 = vadd.f32 %v1720, %v1772
          %1774 = vdwg.mxu0
          %1775 = vmatpush.msra.mxu0 0.0
          %1776 = vmatpush.msra.mxu0 0.0
          %1777 = vmatpush.msra.mxu0 0.0
          %1778 = vmatpush.msra.mxu0 0.0
          %1779 = vmatpush.msra.mxu0 0.0
          %1780 = vmatpush.msra.mxu0 0.0
          %1781 = vmatpush.msra.mxu0 0.0
          %1782 = vmatpush.msra.mxu0 0.0
          %1783 = vmatpush.msra.mxu0 0.0
          %1784 = vmatpush.msra.mxu0 0.0
          %1785 = vmatpush.msra.mxu0 0.0
          %1786 = vmatpush.msra.mxu0 0.0
          %1787 = vmatpush.msra.mxu0 %v1701
          %1788 = vmatpush.msra.mxu0 %v1685
          %1789 = vmatpush.msra.mxu0 %v1669
          %1790 = vmatpush.msra.mxu0 %v1653
          %1791 = vmatmul.f32.gmra.mxu0 %v1753
          %v1792 = vpop.f32.mrf.mxu0
          %v1793 = vadd.f32 %v1721, %v1792
          %1794 = vdwg.mxu0
          %1795 = vmatpush.msra.mxu0 0.0
          %1796 = vmatpush.msra.mxu0 0.0
          %1797 = vmatpush.msra.mxu0 0.0
          %1798 = vmatpush.msra.mxu0 0.0
          %1799 = vmatpush.msra.mxu0 0.0
          %1800 = vmatpush.msra.mxu0 0.0
          %1801 = vmatpush.msra.mxu0 0.0
          %1802 = vmatpush.msra.mxu0 0.0
          %1803 = vmatpush.msra.mxu0 0.0
          %1804 = vmatpush.msra.mxu0 0.0
          %1805 = vmatpush.msra.mxu0 0.0
          %1806 = vmatpush.msra.mxu0 0.0
          %1807 = vmatpush.msra.mxu0 %v1702
          %1808 = vmatpush.msra.mxu0 %v1686
          %1809 = vmatpush.msra.mxu0 %v1670
          %1810 = vmatpush.msra.mxu0 %v1654
          %1811 = vmatmul.f32.gmra.mxu0 %v1753
          %v1812 = vpop.f32.mrf.mxu0
          %v1813 = vadd.f32 %v1722, %v1812
          %1814 = vdwg.mxu0
          %1815 = vmatpush.msra.mxu0 0.0
          %1816 = vmatpush.msra.mxu0 0.0
          %1817 = vmatpush.msra.mxu0 0.0
          %1818 = vmatpush.msra.mxu0 0.0
          %1819 = vmatpush.msra.mxu0 0.0
          %1820 = vmatpush.msra.mxu0 0.0
          %1821 = vmatpush.msra.mxu0 0.0
          %1822 = vmatpush.msra.mxu0 0.0
          %1823 = vmatpush.msra.mxu0 0.0
          %1824 = vmatpush.msra.mxu0 0.0
          %1825 = vmatpush.msra.mxu0 0.0
          %1826 = vmatpush.msra.mxu0 0.0
          %1827 = vmatpush.msra.mxu0 %v1703
          %1828 = vmatpush.msra.mxu0 %v1687
          %1829 = vmatpush.msra.mxu0 %v1671
          %1830 = vmatpush.msra.mxu0 %v1655
          %1831 = vmatmul.f32.gmra.mxu0 %v1753
          %v1832 = vpop.f32.mrf.mxu0
          %v1833 = vadd.f32 %v1723, %v1832
          %1834 = vdwg.mxu0
          %1835 = vmatpush.msra.mxu0 0.0
          %1836 = vmatpush.msra.mxu0 0.0
          %1837 = vmatpush.msra.mxu0 0.0
          %1838 = vmatpush.msra.mxu0 0.0
          %1839 = vmatpush.msra.mxu0 0.0
          %1840 = vmatpush.msra.mxu0 0.0
          %1841 = vmatpush.msra.mxu0 0.0
          %1842 = vmatpush.msra.mxu0 0.0
          %1843 = vmatpush.msra.mxu0 0.0
          %1844 = vmatpush.msra.mxu0 0.0
          %1845 = vmatpush.msra.mxu0 0.0
          %1846 = vmatpush.msra.mxu0 0.0
          %1847 = vmatpush.msra.mxu0 %v1704
          %1848 = vmatpush.msra.mxu0 %v1688
          %1849 = vmatpush.msra.mxu0 %v1672
          %1850 = vmatpush.msra.mxu0 %v1656
          %1851 = vmatmul.f32.gmra.mxu0 %v1753
          %v1852 = vpop.f32.mrf.mxu0
          %v1853 = vadd.f32 %v1724, %v1852
          %1854 = vdwg.mxu0
          %1855 = vmatpush.msra.mxu0 0.0
          %1856 = vmatpush.msra.mxu0 0.0
          %1857 = vmatpush.msra.mxu0 0.0
          %1858 = vmatpush.msra.mxu0 0.0
          %1859 = vmatpush.msra.mxu0 0.0
          %1860 = vmatpush.msra.mxu0 0.0
          %1861 = vmatpush.msra.mxu0 0.0
          %1862 = vmatpush.msra.mxu0 0.0
          %1863 = vmatpush.msra.mxu0 0.0
          %1864 = vmatpush.msra.mxu0 0.0
          %1865 = vmatpush.msra.mxu0 0.0
          %1866 = vmatpush.msra.mxu0 0.0
          %1867 = vmatpush.msra.mxu0 %v1705
          %1868 = vmatpush.msra.mxu0 %v1689
          %1869 = vmatpush.msra.mxu0 %v1673
          %1870 = vmatpush.msra.mxu0 %v1657
          %1871 = vmatmul.f32.gmra.mxu0 %v1753
          %v1872 = vpop.f32.mrf.mxu0
          %v1873 = vadd.f32 %v1725, %v1872
          %1874 = vdwg.mxu0
          %1875 = vmatpush.msra.mxu0 0.0
          %1876 = vmatpush.msra.mxu0 0.0
          %1877 = vmatpush.msra.mxu0 0.0
          %1878 = vmatpush.msra.mxu0 0.0
          %1879 = vmatpush.msra.mxu0 0.0
          %1880 = vmatpush.msra.mxu0 0.0
          %1881 = vmatpush.msra.mxu0 0.0
          %1882 = vmatpush.msra.mxu0 0.0
          %1883 = vmatpush.msra.mxu0 0.0
          %1884 = vmatpush.msra.mxu0 0.0
          %1885 = vmatpush.msra.mxu0 0.0
          %1886 = vmatpush.msra.mxu0 0.0
          %1887 = vmatpush.msra.mxu0 %v1706
          %1888 = vmatpush.msra.mxu0 %v1690
          %1889 = vmatpush.msra.mxu0 %v1674
          %1890 = vmatpush.msra.mxu0 %v1658
          %1891 = vmatmul.f32.gmra.mxu0 %v1753
          %v1892 = vpop.f32.mrf.mxu0
          %v1893 = vadd.f32 %v1726, %v1892
          %1894 = vdwg.mxu0
          %1895 = vmatpush.msra.mxu0 0.0
          %1896 = vmatpush.msra.mxu0 0.0
          %1897 = vmatpush.msra.mxu0 0.0
          %1898 = vmatpush.msra.mxu0 0.0
          %1899 = vmatpush.msra.mxu0 0.0
          %1900 = vmatpush.msra.mxu0 0.0
          %1901 = vmatpush.msra.mxu0 0.0
          %1902 = vmatpush.msra.mxu0 0.0
          %1903 = vmatpush.msra.mxu0 0.0
          %1904 = vmatpush.msra.mxu0 0.0
          %1905 = vmatpush.msra.mxu0 0.0
          %1906 = vmatpush.msra.mxu0 0.0
          %1907 = vmatpush.msra.mxu0 %v1707
          %1908 = vmatpush.msra.mxu0 %v1691
          %1909 = vmatpush.msra.mxu0 %v1675
          %1910 = vmatpush.msra.mxu0 %v1659
          %1911 = vmatmul.f32.gmra.mxu0 %v1753
          %v1912 = vpop.f32.mrf.mxu0
          %v1913 = vadd.f32 %v1727, %v1912
          %1914 = vdwg.mxu0
          %1915 = vmatpush.msra.mxu0 0.0
          %1916 = vmatpush.msra.mxu0 0.0
          %1917 = vmatpush.msra.mxu0 0.0
          %1918 = vmatpush.msra.mxu0 0.0
          %1919 = vmatpush.msra.mxu0 0.0
          %1920 = vmatpush.msra.mxu0 0.0
          %1921 = vmatpush.msra.mxu0 0.0
          %1922 = vmatpush.msra.mxu0 0.0
          %1923 = vmatpush.msra.mxu0 0.0
          %1924 = vmatpush.msra.mxu0 0.0
          %1925 = vmatpush.msra.mxu0 0.0
          %1926 = vmatpush.msra.mxu0 0.0
          %1927 = vmatpush.msra.mxu0 %v1708
          %1928 = vmatpush.msra.mxu0 %v1692
          %1929 = vmatpush.msra.mxu0 %v1676
          %1930 = vmatpush.msra.mxu0 %v1660
          %1931 = vmatmul.f32.gmra.mxu0 %v1753
          %v1932 = vpop.f32.mrf.mxu0
          %v1933 = vadd.f32 %v1728, %v1932
          %1934 = vdwg.mxu0
          %1935 = vmatpush.msra.mxu0 0.0
          %1936 = vmatpush.msra.mxu0 0.0
          %1937 = vmatpush.msra.mxu0 0.0
          %1938 = vmatpush.msra.mxu0 0.0
          %1939 = vmatpush.msra.mxu0 0.0
          %1940 = vmatpush.msra.mxu0 0.0
          %1941 = vmatpush.msra.mxu0 0.0
          %1942 = vmatpush.msra.mxu0 0.0
          %1943 = vmatpush.msra.mxu0 0.0
          %1944 = vmatpush.msra.mxu0 0.0
          %1945 = vmatpush.msra.mxu0 0.0
          %1946 = vmatpush.msra.mxu0 0.0
          %1947 = vmatpush.msra.mxu0 %v1709
          %1948 = vmatpush.msra.mxu0 %v1693
          %1949 = vmatpush.msra.mxu0 %v1677
          %1950 = vmatpush.msra.mxu0 %v1661
          %1951 = vmatmul.f32.gmra.mxu0 %v1753
          %v1952 = vpop.f32.mrf.mxu0
          %v1953 = vadd.f32 %v1729, %v1952
          %1954 = vdwg.mxu0
          %1955 = vmatpush.msra.mxu0 0.0
          %1956 = vmatpush.msra.mxu0 0.0
          %1957 = vmatpush.msra.mxu0 0.0
          %1958 = vmatpush.msra.mxu0 0.0
          %1959 = vmatpush.msra.mxu0 0.0
          %1960 = vmatpush.msra.mxu0 0.0
          %1961 = vmatpush.msra.mxu0 0.0
          %1962 = vmatpush.msra.mxu0 0.0
          %1963 = vmatpush.msra.mxu0 0.0
          %1964 = vmatpush.msra.mxu0 0.0
          %1965 = vmatpush.msra.mxu0 0.0
          %1966 = vmatpush.msra.mxu0 0.0
          %1967 = vmatpush.msra.mxu0 %v1710
          %1968 = vmatpush.msra.mxu0 %v1694
          %1969 = vmatpush.msra.mxu0 %v1678
          %1970 = vmatpush.msra.mxu0 %v1662
          %1971 = vmatmul.f32.gmra.mxu0 %v1753
          %v1972 = vpop.f32.mrf.mxu0
          %v1973 = vadd.f32 %v1730, %v1972
          %1974 = vdwg.mxu0
          %1975 = vmatpush.msra.mxu0 0.0
          %1976 = vmatpush.msra.mxu0 0.0
          %1977 = vmatpush.msra.mxu0 0.0
          %1978 = vmatpush.msra.mxu0 0.0
          %1979 = vmatpush.msra.mxu0 0.0
          %1980 = vmatpush.msra.mxu0 0.0
          %1981 = vmatpush.msra.mxu0 0.0
          %1982 = vmatpush.msra.mxu0 0.0
          %1983 = vmatpush.msra.mxu0 0.0
          %1984 = vmatpush.msra.mxu0 0.0
          %1985 = vmatpush.msra.mxu0 0.0
          %1986 = vmatpush.msra.mxu0 0.0
          %1987 = vmatpush.msra.mxu0 %v1711
          %1988 = vmatpush.msra.mxu0 %v1695
          %1989 = vmatpush.msra.mxu0 %v1679
          %1990 = vmatpush.msra.mxu0 %v1663
          %1991 = vmatmul.f32.gmra.mxu0 %v1753
          %v1992 = vpop.f32.mrf.mxu0
          %v1993 = vadd.f32 %v1731, %v1992
          %1994 = vdwg.mxu0
          %1995 = vmatpush.msra.mxu0 0.0
          %1996 = vmatpush.msra.mxu0 0.0
          %1997 = vmatpush.msra.mxu0 0.0
          %1998 = vmatpush.msra.mxu0 0.0
          %1999 = vmatpush.msra.mxu0 0.0
          %2000 = vmatpush.msra.mxu0 0.0
          %2001 = vmatpush.msra.mxu0 0.0
          %2002 = vmatpush.msra.mxu0 0.0
          %2003 = vmatpush.msra.mxu0 0.0
          %2004 = vmatpush.msra.mxu0 0.0
          %2005 = vmatpush.msra.mxu0 0.0
          %2006 = vmatpush.msra.mxu0 0.0
          %2007 = vmatpush.msra.mxu0 %v1712
          %2008 = vmatpush.msra.mxu0 %v1696
          %2009 = vmatpush.msra.mxu0 %v1680
          %2010 = vmatpush.msra.mxu0 %v1664
          %2011 = vmatmul.f32.gmra.mxu0 %v1753
          %v2012 = vpop.f32.mrf.mxu0
          %v2013 = vadd.f32 %v1732, %v2012
          %2014 = vdwg.mxu0
          %2015 = vmatpush.msra.mxu0 0.0
          %2016 = vmatpush.msra.mxu0 0.0
          %2017 = vmatpush.msra.mxu0 0.0
          %2018 = vmatpush.msra.mxu0 0.0
          %2019 = vmatpush.msra.mxu0 0.0
          %2020 = vmatpush.msra.mxu0 0.0
          %2021 = vmatpush.msra.mxu0 0.0
          %2022 = vmatpush.msra.mxu0 0.0
          %2023 = vmatpush.msra.mxu0 0.0
          %2024 = vmatpush.msra.mxu0 0.0
          %2025 = vmatpush.msra.mxu0 0.0
          %2026 = vmatpush.msra.mxu0 0.0
          %2027 = vmatpush.msra.mxu0 %v1713
          %2028 = vmatpush.msra.mxu0 %v1697
          %2029 = vmatpush.msra.mxu0 %v1681
          %2030 = vmatpush.msra.mxu0 %v1665
          %2031 = vmatmul.f32.gmra.mxu0 %v1753
          %v2032 = vpop.f32.mrf.mxu0
          %v2033 = vadd.f32 %v1733, %v2032
          %2034 = vdwg.mxu0
          %2035 = vmatpush.msra.mxu0 0.0
          %2036 = vmatpush.msra.mxu0 0.0
          %2037 = vmatpush.msra.mxu0 0.0
          %2038 = vmatpush.msra.mxu0 0.0
          %2039 = vmatpush.msra.mxu0 0.0
          %2040 = vmatpush.msra.mxu0 0.0
          %2041 = vmatpush.msra.mxu0 0.0
          %2042 = vmatpush.msra.mxu0 0.0
          %2043 = vmatpush.msra.mxu0 0.0
          %2044 = vmatpush.msra.mxu0 0.0
          %2045 = vmatpush.msra.mxu0 0.0
          %2046 = vmatpush.msra.mxu0 0.0
          %2047 = vmatpush.msra.mxu0 %v1714
          %2048 = vmatpush.msra.mxu0 %v1698
          %2049 = vmatpush.msra.mxu0 %v1682
          %2050 = vmatpush.msra.mxu0 %v1666
          %2051 = vmatmul.f32.gmra.mxu0 %v1753
          %v2052 = vpop.f32.mrf.mxu0
          %v2053 = vadd.f32 %v1734, %v2052
          %2054 = vdwg.mxu0
          %2055 = vmatpush.msra.mxu0 0.0
          %2056 = vmatpush.msra.mxu0 0.0
          %2057 = vmatpush.msra.mxu0 0.0
          %2058 = vmatpush.msra.mxu0 0.0
          %2059 = vmatpush.msra.mxu0 0.0
          %2060 = vmatpush.msra.mxu0 0.0
          %2061 = vmatpush.msra.mxu0 0.0
          %2062 = vmatpush.msra.mxu0 0.0
          %2063 = vmatpush.msra.mxu0 0.0
          %2064 = vmatpush.msra.mxu0 0.0
          %2065 = vmatpush.msra.mxu0 0.0
          %2066 = vmatpush.msra.mxu0 0.0
          %2067 = vmatpush.msra.mxu0 %v1715
          %2068 = vmatpush.msra.mxu0 %v1699
          %2069 = vmatpush.msra.mxu0 %v1683
          %2070 = vmatpush.msra.mxu0 %v1667
          %2071 = vmatmul.f32.gmra.mxu0 %v1753
          %v2072 = vpop.f32.mrf.mxu0
          %v2073 = vadd.f32 %v1735, %v2072
          %2074 = vdwg.mxu0
          %v2075 = vmax.f32 %v1773, 0.0
          %v2076 = vmax.f32 %v1793, 0.0
          %v2077 = vmax.f32 %v1813, 0.0
          %v2078 = vmax.f32 %v1833, 0.0
          %v2079 = vmax.f32 %v1853, 0.0
          %v2080 = vmax.f32 %v1873, 0.0
          %v2081 = vmax.f32 %v1893, 0.0
          %v2082 = vmax.f32 %v1913, 0.0
          %v2083 = vmax.f32 %v1933, 0.0
          %v2084 = vmax.f32 %v1953, 0.0
          %v2085 = vmax.f32 %v1973, 0.0
          %v2086 = vmax.f32 %v1993, 0.0
          %v2087 = vmax.f32 %v2013, 0.0
          %v2088 = vmax.f32 %v2033, 0.0
          %v2089 = vmax.f32 %v2053, 0.0
          %v2090 = vmax.f32 %v2073, 0.0
          %v2091 = vld [vmem:[%s13] sm:$0xff]
          %v2092 = vld [vmem:[%s13 + $0x8] sm:$0xff]
          %v2093 = vld [vmem:[%s13 + $0x10] sm:$0xff]
          %v2094 = vld [vmem:[%s13 + $0x18] sm:$0xff]
          %v2095 = vld [vmem:[%s13 + $0x20] sm:$0xff]
          %v2096 = vld [vmem:[%s13 + $0x28] sm:$0xff]
          %v2097 = vld [vmem:[%s13 + $0x30] sm:$0xff]
          %v2098 = vld [vmem:[%s13 + $0x38] sm:$0xff]
          %v2099 = vld [vmem:[%s13 + $0x40] sm:$0xff]
          %v2100 = vld [vmem:[%s13 + $0x48] sm:$0xff]
          %v2101 = vld [vmem:[%s13 + $0x50] sm:$0xff]
          %v2102 = vld [vmem:[%s13 + $0x58] sm:$0xff]
          %v2103 = vld [vmem:[%s13 + $0x60] sm:$0xff]
          %v2104 = vld [vmem:[%s13 + $0x68] sm:$0xff]
          %v2105 = vld [vmem:[%s13 + $0x70] sm:$0xff]
          %v2106 = vld [vmem:[%s13 + $0x78] sm:$0xff]
          %v2107 = vld [vmem:[%s13 + $0x80] sm:$0xff]
          %v2108 = vld [vmem:[%s13 + $0x88] sm:$0xff]
          %v2109 = vld [vmem:[%s13 + $0x90] sm:$0xff]
          %v2110 = vld [vmem:[%s13 + $0x98] sm:$0xff]
          %v2111 = vld [vmem:[%s13 + $0xa0] sm:$0xff]
          %v2112 = vld [vmem:[%s13 + $0xa8] sm:$0xff]
          %v2113 = vld [vmem:[%s13 + $0xb0] sm:$0xff]
          %v2114 = vld [vmem:[%s13 + $0xb8] sm:$0xff]
          %v2115 = vld [vmem:[%s13 + $0xc0] sm:$0xff]
          %v2116 = vld [vmem:[%s13 + $0xc8] sm:$0xff]
          %v2117 = vld [vmem:[%s13 + $0xd0] sm:$0xff]
          %v2118 = vld [vmem:[%s13 + $0xd8] sm:$0xff]
          %v2119 = vld [vmem:[%s13 + $0xe0] sm:$0xff]
          %v2120 = vld [vmem:[%s13 + $0xe8] sm:$0xff]
          %v2121 = vld [vmem:[%s13 + $0xf0] sm:$0xff]
          %v2122 = vld [vmem:[%s13 + $0xf8] sm:$0xff]
          %v2123 = vld [vmem:[%s13 + $0x100] sm:$0xff]
          %v2124 = vld [vmem:[%s13 + $0x108] sm:$0xff]
          %v2125 = vld [vmem:[%s13 + $0x110] sm:$0xff]
          %v2126 = vld [vmem:[%s13 + $0x118] sm:$0xff]
          %v2127 = vld [vmem:[%s13 + $0x120] sm:$0xff]
          %v2128 = vld [vmem:[%s13 + $0x128] sm:$0xff]
          %v2129 = vld [vmem:[%s13 + $0x130] sm:$0xff]
          %v2130 = vld [vmem:[%s13 + $0x138] sm:$0xff]
          %v2131 = vld [vmem:[%s13 + $0x140] sm:$0xff]
          %v2132 = vld [vmem:[%s13 + $0x148] sm:$0xff]
          %v2133 = vld [vmem:[%s13 + $0x150] sm:$0xff]
          %v2134 = vld [vmem:[%s13 + $0x158] sm:$0xff]
          %v2135 = vld [vmem:[%s13 + $0x160] sm:$0xff]
          %v2136 = vld [vmem:[%s13 + $0x168] sm:$0xff]
          %v2137 = vld [vmem:[%s13 + $0x170] sm:$0xff]
          %v2138 = vld [vmem:[%s13 + $0x178] sm:$0xff]
          %v2139 = vld [vmem:[%s13 + $0x180] sm:$0xff]
          %v2140 = vld [vmem:[%s13 + $0x188] sm:$0xff]
          %v2141 = vld [vmem:[%s13 + $0x190] sm:$0xff]
          %v2142 = vld [vmem:[%s13 + $0x198] sm:$0xff]
          %v2143 = vld [vmem:[%s13 + $0x1a0] sm:$0xff]
          %v2144 = vld [vmem:[%s13 + $0x1a8] sm:$0xff]
          %v2145 = vld [vmem:[%s13 + $0x1b0] sm:$0xff]
          %v2146 = vld [vmem:[%s13 + $0x1b8] sm:$0xff]
          %v2147 = vld [vmem:[%s13 + $0x1c0] sm:$0xff]
          %v2148 = vld [vmem:[%s13 + $0x1c8] sm:$0xff]
          %v2149 = vld [vmem:[%s13 + $0x1d0] sm:$0xff]
          %v2150 = vld [vmem:[%s13 + $0x1d8] sm:$0xff]
          %v2151 = vld [vmem:[%s13 + $0x1e0] sm:$0xff]
          %v2152 = vld [vmem:[%s13 + $0x1e8] sm:$0xff]
          %v2153 = vld [vmem:[%s13 + $0x1f0] sm:$0xff]
          %v2154 = vld [vmem:[%s13 + $0x1f8] sm:$0xff]
          %v2155 = vld [vmem:[%s13 + $0x200] sm:$0xff]
          %v2156 = vld [vmem:[%s13 + $0x208] sm:$0xff]
          %v2157 = vld [vmem:[%s13 + $0x210] sm:$0xff]
          %v2158 = vld [vmem:[%s13 + $0x218] sm:$0xff]
          %v2159 = vld [vmem:[%s13 + $0x220] sm:$0xff]
          %v2160 = vld [vmem:[%s13 + $0x228] sm:$0xff]
          %v2161 = vld [vmem:[%s13 + $0x230] sm:$0xff]
          %v2162 = vld [vmem:[%s13 + $0x238] sm:$0xff]
          %v2163 = vld [vmem:[%s13 + $0x240] sm:$0xff]
          %v2164 = vld [vmem:[%s13 + $0x248] sm:$0xff]
          %v2165 = vld [vmem:[%s13 + $0x250] sm:$0xff]
          %v2166 = vld [vmem:[%s13 + $0x258] sm:$0xff]
          %v2167 = vld [vmem:[%s13 + $0x260] sm:$0xff]
          %v2168 = vld [vmem:[%s13 + $0x268] sm:$0xff]
          %v2169 = vld [vmem:[%s13 + $0x270] sm:$0xff]
          %v2170 = vld [vmem:[%s13 + $0x278] sm:$0xff]
          %v2171 = vld [vmem:[%s13 + $0x280] sm:$0xff]
          %v2172 = vld [vmem:[%s13 + $0x288] sm:$0xff]
          %v2173 = vld [vmem:[%s13 + $0x290] sm:$0xff]
          %v2174 = vld [vmem:[%s13 + $0x298] sm:$0xff]
          %v2175 = vld [vmem:[%s13 + $0x2a0] sm:$0xff]
          %v2176 = vld [vmem:[%s13 + $0x2a8] sm:$0xff]
          %v2177 = vld [vmem:[%s13 + $0x2b0] sm:$0xff]
          %v2178 = vld [vmem:[%s13 + $0x2b8] sm:$0xff]
          %v2179 = vld [vmem:[%s13 + $0x2c0] sm:$0xff]
          %v2180 = vld [vmem:[%s13 + $0x2c8] sm:$0xff]
          %v2181 = vld [vmem:[%s13 + $0x2d0] sm:$0xff]
          %v2182 = vld [vmem:[%s13 + $0x2d8] sm:$0xff]
          %v2183 = vld [vmem:[%s13 + $0x2e0] sm:$0xff]
          %v2184 = vld [vmem:[%s13 + $0x2e8] sm:$0xff]
          %v2185 = vld [vmem:[%s13 + $0x2f0] sm:$0xff]
          %v2186 = vld [vmem:[%s13 + $0x2f8] sm:$0xff]
          %v2187 = vld [vmem:[%s13 + $0x300] sm:$0xff]
          %v2188 = vld [vmem:[%s13 + $0x308] sm:$0xff]
          %v2189 = vld [vmem:[%s13 + $0x310] sm:$0xff]
          %v2190 = vld [vmem:[%s13 + $0x318] sm:$0xff]
          %v2191 = vld [vmem:[%s13 + $0x320] sm:$0xff]
          %v2192 = vld [vmem:[%s13 + $0x328] sm:$0xff]
          %v2193 = vld [vmem:[%s13 + $0x330] sm:$0xff]
          %v2194 = vld [vmem:[%s13 + $0x338] sm:$0xff]
          %v2195 = vld [vmem:[%s13 + $0x340] sm:$0xff]
          %v2196 = vld [vmem:[%s13 + $0x348] sm:$0xff]
          %v2197 = vld [vmem:[%s13 + $0x350] sm:$0xff]
          %v2198 = vld [vmem:[%s13 + $0x358] sm:$0xff]
          %v2199 = vld [vmem:[%s13 + $0x360] sm:$0xff]
          %v2200 = vld [vmem:[%s13 + $0x368] sm:$0xff]
          %v2201 = vld [vmem:[%s13 + $0x370] sm:$0xff]
          %v2202 = vld [vmem:[%s13 + $0x378] sm:$0xff]
          %v2203 = vld [vmem:[%s13 + $0x380] sm:$0xff]
          %v2204 = vld [vmem:[%s13 + $0x388] sm:$0xff]
          %v2205 = vld [vmem:[%s13 + $0x390] sm:$0xff]
          %v2206 = vld [vmem:[%s13 + $0x398] sm:$0xff]
          %v2207 = vld [vmem:[%s13 + $0x3a0] sm:$0xff]
          %v2208 = vld [vmem:[%s13 + $0x3a8] sm:$0xff]
          %v2209 = vld [vmem:[%s13 + $0x3b0] sm:$0xff]
          %v2210 = vld [vmem:[%s13 + $0x3b8] sm:$0xff]
          %v2211 = vld [vmem:[%s13 + $0x3c0] sm:$0xff]
          %v2212 = vld [vmem:[%s13 + $0x3c8] sm:$0xff]
          %v2213 = vld [vmem:[%s13 + $0x3d0] sm:$0xff]
          %v2214 = vld [vmem:[%s13 + $0x3d8] sm:$0xff]
          %v2215 = vld [vmem:[%s13 + $0x3e0] sm:$0xff]
          %v2216 = vld [vmem:[%s13 + $0x3e8] sm:$0xff]
          %v2217 = vld [vmem:[%s13 + $0x3f0] sm:$0xff]
          %v2218 = vld [vmem:[%s13 + $0x3f8] sm:$0xff]
          %v2219 = vld [vmem:[%s13 + $0x400] sm:$0xff]
          %v2220 = vld [vmem:[%s13 + $0x408] sm:$0xff]
          %v2221 = vld [vmem:[%s13 + $0x410] sm:$0xff]
          %v2222 = vld [vmem:[%s13 + $0x418] sm:$0xff]
          %v2223 = vld [vmem:[%s13 + $0x420] sm:$0xff]
          %v2224 = vld [vmem:[%s13 + $0x428] sm:$0xff]
          %v2225 = vld [vmem:[%s13 + $0x430] sm:$0xff]
          %v2226 = vld [vmem:[%s13 + $0x438] sm:$0xff]
          %v2227 = vld [vmem:[%s13 + $0x440] sm:$0xff]
          %v2228 = vld [vmem:[%s13 + $0x448] sm:$0xff]
          %v2229 = vld [vmem:[%s13 + $0x450] sm:$0xff]
          %v2230 = vld [vmem:[%s13 + $0x458] sm:$0xff]
          %v2231 = vld [vmem:[%s13 + $0x460] sm:$0xff]
          %v2232 = vld [vmem:[%s13 + $0x468] sm:$0xff]
          %v2233 = vld [vmem:[%s13 + $0x470] sm:$0xff]
          %v2234 = vld [vmem:[%s13 + $0x478] sm:$0xff]
          %v2235 = vld [vmem:[%s13 + $0x480] sm:$0xff]
          %v2236 = vld [vmem:[%s13 + $0x488] sm:$0xff]
          %v2237 = vld [vmem:[%s13 + $0x490] sm:$0xff]
          %v2238 = vld [vmem:[%s13 + $0x498] sm:$0xff]
          %v2239 = vld [vmem:[%s13 + $0x4a0] sm:$0xff]
          %v2240 = vld [vmem:[%s13 + $0x4a8] sm:$0xff]
          %v2241 = vld [vmem:[%s13 + $0x4b0] sm:$0xff]
          %v2242 = vld [vmem:[%s13 + $0x4b8] sm:$0xff]
          %v2243 = vld [vmem:[%s13 + $0x4c0] sm:$0xff]
          %v2244 = vld [vmem:[%s13 + $0x4c8] sm:$0xff]
          %v2245 = vld [vmem:[%s13 + $0x4d0] sm:$0xff]
          %v2246 = vld [vmem:[%s13 + $0x4d8] sm:$0xff]
          %v2247 = vld [vmem:[%s13 + $0x4e0] sm:$0xff]
          %v2248 = vld [vmem:[%s13 + $0x4e8] sm:$0xff]
          %v2249 = vld [vmem:[%s13 + $0x4f0] sm:$0xff]
          %v2250 = vld [vmem:[%s13 + $0x4f8] sm:$0xff]
          %v2251 = vld [vmem:[%s13 + $0x500] sm:$0xff]
          %v2252 = vld [vmem:[%s13 + $0x508] sm:$0xff]
          %v2253 = vld [vmem:[%s13 + $0x510] sm:$0xff]
          %v2254 = vld [vmem:[%s13 + $0x518] sm:$0xff]
          %v2255 = vld [vmem:[%s13 + $0x520] sm:$0xff]
          %v2256 = vld [vmem:[%s13 + $0x528] sm:$0xff]
          %v2257 = vld [vmem:[%s13 + $0x530] sm:$0xff]
          %v2258 = vld [vmem:[%s13 + $0x538] sm:$0xff]
          %v2259 = vld [vmem:[%s13 + $0x540] sm:$0xff]
          %v2260 = vld [vmem:[%s13 + $0x548] sm:$0xff]
          %v2261 = vld [vmem:[%s13 + $0x550] sm:$0xff]
          %v2262 = vld [vmem:[%s13 + $0x558] sm:$0xff]
          %v2263 = vld [vmem:[%s13 + $0x560] sm:$0xff]
          %v2264 = vld [vmem:[%s13 + $0x568] sm:$0xff]
          %v2265 = vld [vmem:[%s13 + $0x570] sm:$0xff]
          %v2266 = vld [vmem:[%s13 + $0x578] sm:$0xff]
          %v2267 = vld [vmem:[%s13 + $0x580] sm:$0xff]
          %v2268 = vld [vmem:[%s13 + $0x588] sm:$0xff]
          %v2269 = vld [vmem:[%s13 + $0x590] sm:$0xff]
          %v2270 = vld [vmem:[%s13 + $0x598] sm:$0xff]
          %v2271 = vld [vmem:[%s13 + $0x5a0] sm:$0xff]
          %v2272 = vld [vmem:[%s13 + $0x5a8] sm:$0xff]
          %v2273 = vld [vmem:[%s13 + $0x5b0] sm:$0xff]
          %v2274 = vld [vmem:[%s13 + $0x5b8] sm:$0xff]
          %v2275 = vld [vmem:[%s13 + $0x5c0] sm:$0xff]
          %v2276 = vld [vmem:[%s13 + $0x5c8] sm:$0xff]
          %v2277 = vld [vmem:[%s13 + $0x5d0] sm:$0xff]
          %v2278 = vld [vmem:[%s13 + $0x5d8] sm:$0xff]
          %v2279 = vld [vmem:[%s13 + $0x5e0] sm:$0xff]
          %v2280 = vld [vmem:[%s13 + $0x5e8] sm:$0xff]
          %v2281 = vld [vmem:[%s13 + $0x5f0] sm:$0xff]
          %v2282 = vld [vmem:[%s13 + $0x5f8] sm:$0xff]
          %v2283 = vld [vmem:[%s13 + $0x600] sm:$0xff]
          %v2284 = vld [vmem:[%s13 + $0x608] sm:$0xff]
          %v2285 = vld [vmem:[%s13 + $0x610] sm:$0xff]
          %v2286 = vld [vmem:[%s13 + $0x618] sm:$0xff]
          %v2287 = vld [vmem:[%s13 + $0x620] sm:$0xff]
          %v2288 = vld [vmem:[%s13 + $0x628] sm:$0xff]
          %v2289 = vld [vmem:[%s13 + $0x630] sm:$0xff]
          %v2290 = vld [vmem:[%s13 + $0x638] sm:$0xff]
          %v2291 = vld [vmem:[%s13 + $0x640] sm:$0xff]
          %v2292 = vld [vmem:[%s13 + $0x648] sm:$0xff]
          %v2293 = vld [vmem:[%s13 + $0x650] sm:$0xff]
          %v2294 = vld [vmem:[%s13 + $0x658] sm:$0xff]
          %v2295 = vld [vmem:[%s13 + $0x660] sm:$0xff]
          %v2296 = vld [vmem:[%s13 + $0x668] sm:$0xff]
          %v2297 = vld [vmem:[%s13 + $0x670] sm:$0xff]
          %v2298 = vld [vmem:[%s13 + $0x678] sm:$0xff]
          %v2299 = vld [vmem:[%s13 + $0x680] sm:$0xff]
          %v2300 = vld [vmem:[%s13 + $0x688] sm:$0xff]
          %v2301 = vld [vmem:[%s13 + $0x690] sm:$0xff]
          %v2302 = vld [vmem:[%s13 + $0x698] sm:$0xff]
          %v2303 = vld [vmem:[%s13 + $0x6a0] sm:$0xff]
          %v2304 = vld [vmem:[%s13 + $0x6a8] sm:$0xff]
          %v2305 = vld [vmem:[%s13 + $0x6b0] sm:$0xff]
          %v2306 = vld [vmem:[%s13 + $0x6b8] sm:$0xff]
          %v2307 = vld [vmem:[%s13 + $0x6c0] sm:$0xff]
          %v2308 = vld [vmem:[%s13 + $0x6c8] sm:$0xff]
          %v2309 = vld [vmem:[%s13 + $0x6d0] sm:$0xff]
          %v2310 = vld [vmem:[%s13 + $0x6d8] sm:$0xff]
          %v2311 = vld [vmem:[%s13 + $0x6e0] sm:$0xff]
          %v2312 = vld [vmem:[%s13 + $0x6e8] sm:$0xff]
          %v2313 = vld [vmem:[%s13 + $0x6f0] sm:$0xff]
          %v2314 = vld [vmem:[%s13 + $0x6f8] sm:$0xff]
          %v2315 = vld [vmem:[%s13 + $0x700] sm:$0xff]
          %v2316 = vld [vmem:[%s13 + $0x708] sm:$0xff]
          %v2317 = vld [vmem:[%s13 + $0x710] sm:$0xff]
          %v2318 = vld [vmem:[%s13 + $0x718] sm:$0xff]
          %v2319 = vld [vmem:[%s13 + $0x720] sm:$0xff]
          %v2320 = vld [vmem:[%s13 + $0x728] sm:$0xff]
          %v2321 = vld [vmem:[%s13 + $0x730] sm:$0xff]
          %v2322 = vld [vmem:[%s13 + $0x738] sm:$0xff]
          %v2323 = vld [vmem:[%s13 + $0x740] sm:$0xff]
          %v2324 = vld [vmem:[%s13 + $0x748] sm:$0xff]
          %v2325 = vld [vmem:[%s13 + $0x750] sm:$0xff]
          %v2326 = vld [vmem:[%s13 + $0x758] sm:$0xff]
          %v2327 = vld [vmem:[%s13 + $0x760] sm:$0xff]
          %v2328 = vld [vmem:[%s13 + $0x768] sm:$0xff]
          %v2329 = vld [vmem:[%s13 + $0x770] sm:$0xff]
          %v2330 = vld [vmem:[%s13 + $0x778] sm:$0xff]
          %v2331 = vld [vmem:[%s13 + $0x780] sm:$0xff]
          %v2332 = vld [vmem:[%s13 + $0x788] sm:$0xff]
          %v2333 = vld [vmem:[%s13 + $0x790] sm:$0xff]
          %v2334 = vld [vmem:[%s13 + $0x798] sm:$0xff]
          %v2335 = vld [vmem:[%s13 + $0x7a0] sm:$0xff]
          %v2336 = vld [vmem:[%s13 + $0x7a8] sm:$0xff]
          %v2337 = vld [vmem:[%s13 + $0x7b0] sm:$0xff]
          %v2338 = vld [vmem:[%s13 + $0x7b8] sm:$0xff]
          %v2339 = vld [vmem:[%s13 + $0x7c0] sm:$0xff]
          %v2340 = vld [vmem:[%s13 + $0x7c8] sm:$0xff]
          %v2341 = vld [vmem:[%s13 + $0x7d0] sm:$0xff]
          %v2342 = vld [vmem:[%s13 + $0x7d8] sm:$0xff]
          %v2343 = vld [vmem:[%s13 + $0x7e0] sm:$0xff]
          %v2344 = vld [vmem:[%s13 + $0x7e8] sm:$0xff]
          %v2345 = vld [vmem:[%s13 + $0x7f0] sm:$0xff]
          %v2346 = vld [vmem:[%s13 + $0x7f8] sm:$0xff]
          %v2347 = vld [vmem:[%s14] sm:$0x1]
          %v2349 = vperm.slane %v2347, 0
          %2351 = vmatpush.msra.mxu0 %v2106
          %2352 = vmatpush.msra.mxu0 %v2105
          %2353 = vmatpush.msra.mxu0 %v2104
          %2354 = vmatpush.msra.mxu0 %v2103
          %2355 = vmatpush.msra.mxu0 %v2102
          %2356 = vmatpush.msra.mxu0 %v2101
          %2357 = vmatpush.msra.mxu0 %v2100
          %2358 = vmatpush.msra.mxu0 %v2099
          %2359 = vmatpush.msra.mxu0 %v2098
          %2360 = vmatpush.msra.mxu0 %v2097
          %2361 = vmatpush.msra.mxu0 %v2096
          %2362 = vmatpush.msra.mxu0 %v2095
          %2363 = vmatpush.msra.mxu0 %v2094
          %2364 = vmatpush.msra.mxu0 %v2093
          %2365 = vmatpush.msra.mxu0 %v2092
          %2366 = vmatpush.msra.mxu0 %v2091
          %2367 = vmatmul.f32.gmra.mxu0 %v2075
          %v2368 = vpop.f32.mrf.mxu0
          %v2369 = vadd.f32 %v2349, %v2368
          %2370 = vdwg.mxu0
          %2371 = vmatpush.msra.mxu0 %v2122
          %2372 = vmatpush.msra.mxu0 %v2121
          %2373 = vmatpush.msra.mxu0 %v2120
          %2374 = vmatpush.msra.mxu0 %v2119
          %2375 = vmatpush.msra.mxu0 %v2118
          %2376 = vmatpush.msra.mxu0 %v2117
          %2377 = vmatpush.msra.mxu0 %v2116
          %2378 = vmatpush.msra.mxu0 %v2115
          %2379 = vmatpush.msra.mxu0 %v2114
          %2380 = vmatpush.msra.mxu0 %v2113
          %2381 = vmatpush.msra.mxu0 %v2112
          %2382 = vmatpush.msra.mxu0 %v2111
          %2383 = vmatpush.msra.mxu0 %v2110
          %2384 = vmatpush.msra.mxu0 %v2109
          %2385 = vmatpush.msra.mxu0 %v2108
          %2386 = vmatpush.msra.mxu0 %v2107
          %2387 = vmatmul.f32.gmra.mxu0 %v2076
          %v2388 = vpop.f32.mrf.mxu0
          %v2389 = vadd.f32 %v2369, %v2388
          %2390 = vdwg.mxu0
          %2391 = vmatpush.msra.mxu0 %v2138
          %2392 = vmatpush.msra.mxu0 %v2137
          %2393 = vmatpush.msra.mxu0 %v2136
          %2394 = vmatpush.msra.mxu0 %v2135
          %2395 = vmatpush.msra.mxu0 %v2134
          %2396 = vmatpush.msra.mxu0 %v2133
          %2397 = vmatpush.msra.mxu0 %v2132
          %2398 = vmatpush.msra.mxu0 %v2131
          %2399 = vmatpush.msra.mxu0 %v2130
          %2400 = vmatpush.msra.mxu0 %v2129
          %2401 = vmatpush.msra.mxu0 %v2128
          %2402 = vmatpush.msra.mxu0 %v2127
          %2403 = vmatpush.msra.mxu0 %v2126
          %2404 = vmatpush.msra.mxu0 %v2125
          %2405 = vmatpush.msra.mxu0 %v2124
          %2406 = vmatpush.msra.mxu0 %v2123
          %2407 = vmatmul.f32.gmra.mxu0 %v2077
          %v2408 = vpop.f32.mrf.mxu0
          %v2409 = vadd.f32 %v2389, %v2408
          %2410 = vdwg.mxu0
          %2411 = vmatpush.msra.mxu0 %v2154
          %2412 = vmatpush.msra.mxu0 %v2153
          %2413 = vmatpush.msra.mxu0 %v2152
          %2414 = vmatpush.msra.mxu0 %v2151
          %2415 = vmatpush.msra.mxu0 %v2150
          %2416 = vmatpush.msra.mxu0 %v2149
          %2417 = vmatpush.msra.mxu0 %v2148
          %2418 = vmatpush.msra.mxu0 %v2147
          %2419 = vmatpush.msra.mxu0 %v2146
          %2420 = vmatpush.msra.mxu0 %v2145
          %2421 = vmatpush.msra.mxu0 %v2144
          %2422 = vmatpush.msra.mxu0 %v2143
          %2423 = vmatpush.msra.mxu0 %v2142
          %2424 = vmatpush.msra.mxu0 %v2141
          %2425 = vmatpush.msra.mxu0 %v2140
          %2426 = vmatpush.msra.mxu0 %v2139
          %2427 = vmatmul.f32.gmra.mxu0 %v2078
          %v2428 = vpop.f32.mrf.mxu0
          %v2429 = vadd.f32 %v2409, %v2428
          %2430 = vdwg.mxu0
          %2431 = vmatpush.msra.mxu0 %v2170
          %2432 = vmatpush.msra.mxu0 %v2169
          %2433 = vmatpush.msra.mxu0 %v2168
          %2434 = vmatpush.msra.mxu0 %v2167
          %2435 = vmatpush.msra.mxu0 %v2166
          %2436 = vmatpush.msra.mxu0 %v2165
          %2437 = vmatpush.msra.mxu0 %v2164
          %2438 = vmatpush.msra.mxu0 %v2163
          %2439 = vmatpush.msra.mxu0 %v2162
          %2440 = vmatpush.msra.mxu0 %v2161
          %2441 = vmatpush.msra.mxu0 %v2160
          %2442 = vmatpush.msra.mxu0 %v2159
          %2443 = vmatpush.msra.mxu0 %v2158
          %2444 = vmatpush.msra.mxu0 %v2157
          %2445 = vmatpush.msra.mxu0 %v2156
          %2446 = vmatpush.msra.mxu0 %v2155
          %2447 = vmatmul.f32.gmra.mxu0 %v2079
          %v2448 = vpop.f32.mrf.mxu0
          %v2449 = vadd.f32 %v2429, %v2448
          %2450 = vdwg.mxu0
          %2451 = vmatpush.msra.mxu0 %v2186
          %2452 = vmatpush.msra.mxu0 %v2185
          %2453 = vmatpush.msra.mxu0 %v2184
          %2454 = vmatpush.msra.mxu0 %v2183
          %2455 = vmatpush.msra.mxu0 %v2182
          %2456 = vmatpush.msra.mxu0 %v2181
          %2457 = vmatpush.msra.mxu0 %v2180
          %2458 = vmatpush.msra.mxu0 %v2179
          %2459 = vmatpush.msra.mxu0 %v2178
          %2460 = vmatpush.msra.mxu0 %v2177
          %2461 = vmatpush.msra.mxu0 %v2176
          %2462 = vmatpush.msra.mxu0 %v2175
          %2463 = vmatpush.msra.mxu0 %v2174
          %2464 = vmatpush.msra.mxu0 %v2173
          %2465 = vmatpush.msra.mxu0 %v2172
          %2466 = vmatpush.msra.mxu0 %v2171
          %2467 = vmatmul.f32.gmra.mxu0 %v2080
          %v2468 = vpop.f32.mrf.mxu0
          %v2469 = vadd.f32 %v2449, %v2468
          %2470 = vdwg.mxu0
          %2471 = vmatpush.msra.mxu0 %v2202
          %2472 = vmatpush.msra.mxu0 %v2201
          %2473 = vmatpush.msra.mxu0 %v2200
          %2474 = vmatpush.msra.mxu0 %v2199
          %2475 = vmatpush.msra.mxu0 %v2198
          %2476 = vmatpush.msra.mxu0 %v2197
          %2477 = vmatpush.msra.mxu0 %v2196
          %2478 = vmatpush.msra.mxu0 %v2195
          %2479 = vmatpush.msra.mxu0 %v2194
          %2480 = vmatpush.msra.mxu0 %v2193
          %2481 = vmatpush.msra.mxu0 %v2192
          %2482 = vmatpush.msra.mxu0 %v2191
          %2483 = vmatpush.msra.mxu0 %v2190
          %2484 = vmatpush.msra.mxu0 %v2189
          %2485 = vmatpush.msra.mxu0 %v2188
          %2486 = vmatpush.msra.mxu0 %v2187
          %2487 = vmatmul.f32.gmra.mxu0 %v2081
          %v2488 = vpop.f32.mrf.mxu0
          %v2489 = vadd.f32 %v2469, %v2488
          %2490 = vdwg.mxu0
          %2491 = vmatpush.msra.mxu0 %v2218
          %2492 = vmatpush.msra.mxu0 %v2217
          %2493 = vmatpush.msra.mxu0 %v2216
          %2494 = vmatpush.msra.mxu0 %v2215
          %2495 = vmatpush.msra.mxu0 %v2214
          %2496 = vmatpush.msra.mxu0 %v2213
          %2497 = vmatpush.msra.mxu0 %v2212
          %2498 = vmatpush.msra.mxu0 %v2211
          %2499 = vmatpush.msra.mxu0 %v2210
          %2500 = vmatpush.msra.mxu0 %v2209
          %2501 = vmatpush.msra.mxu0 %v2208
          %2502 = vmatpush.msra.mxu0 %v2207
          %2503 = vmatpush.msra.mxu0 %v2206
          %2504 = vmatpush.msra.mxu0 %v2205
          %2505 = vmatpush.msra.mxu0 %v2204
          %2506 = vmatpush.msra.mxu0 %v2203
          %2507 = vmatmul.f32.gmra.mxu0 %v2082
          %v2508 = vpop.f32.mrf.mxu0
          %v2509 = vadd.f32 %v2489, %v2508
          %2510 = vdwg.mxu0
          %2511 = vmatpush.msra.mxu0 %v2234
          %2512 = vmatpush.msra.mxu0 %v2233
          %2513 = vmatpush.msra.mxu0 %v2232
          %2514 = vmatpush.msra.mxu0 %v2231
          %2515 = vmatpush.msra.mxu0 %v2230
          %2516 = vmatpush.msra.mxu0 %v2229
          %2517 = vmatpush.msra.mxu0 %v2228
          %2518 = vmatpush.msra.mxu0 %v2227
          %2519 = vmatpush.msra.mxu0 %v2226
          %2520 = vmatpush.msra.mxu0 %v2225
          %2521 = vmatpush.msra.mxu0 %v2224
          %2522 = vmatpush.msra.mxu0 %v2223
          %2523 = vmatpush.msra.mxu0 %v2222
          %2524 = vmatpush.msra.mxu0 %v2221
          %2525 = vmatpush.msra.mxu0 %v2220
          %2526 = vmatpush.msra.mxu0 %v2219
          %2527 = vmatmul.f32.gmra.mxu0 %v2083
          %v2528 = vpop.f32.mrf.mxu0
          %v2529 = vadd.f32 %v2509, %v2528
          %2530 = vdwg.mxu0
          %2531 = vmatpush.msra.mxu0 %v2250
          %2532 = vmatpush.msra.mxu0 %v2249
          %2533 = vmatpush.msra.mxu0 %v2248
          %2534 = vmatpush.msra.mxu0 %v2247
          %2535 = vmatpush.msra.mxu0 %v2246
          %2536 = vmatpush.msra.mxu0 %v2245
          %2537 = vmatpush.msra.mxu0 %v2244
          %2538 = vmatpush.msra.mxu0 %v2243
          %2539 = vmatpush.msra.mxu0 %v2242
          %2540 = vmatpush.msra.mxu0 %v2241
          %2541 = vmatpush.msra.mxu0 %v2240
          %2542 = vmatpush.msra.mxu0 %v2239
          %2543 = vmatpush.msra.mxu0 %v2238
          %2544 = vmatpush.msra.mxu0 %v2237
          %2545 = vmatpush.msra.mxu0 %v2236
          %2546 = vmatpush.msra.mxu0 %v2235
          %2547 = vmatmul.f32.gmra.mxu0 %v2084
          %v2548 = vpop.f32.mrf.mxu0
          %v2549 = vadd.f32 %v2529, %v2548
          %2550 = vdwg.mxu0
          %2551 = vmatpush.msra.mxu0 %v2266
          %2552 = vmatpush.msra.mxu0 %v2265
          %2553 = vmatpush.msra.mxu0 %v2264
          %2554 = vmatpush.msra.mxu0 %v2263
          %2555 = vmatpush.msra.mxu0 %v2262
          %2556 = vmatpush.msra.mxu0 %v2261
          %2557 = vmatpush.msra.mxu0 %v2260
          %2558 = vmatpush.msra.mxu0 %v2259
          %2559 = vmatpush.msra.mxu0 %v2258
          %2560 = vmatpush.msra.mxu0 %v2257
          %2561 = vmatpush.msra.mxu0 %v2256
          %2562 = vmatpush.msra.mxu0 %v2255
          %2563 = vmatpush.msra.mxu0 %v2254
          %2564 = vmatpush.msra.mxu0 %v2253
          %2565 = vmatpush.msra.mxu0 %v2252
          %2566 = vmatpush.msra.mxu0 %v2251
          %2567 = vmatmul.f32.gmra.mxu0 %v2085
          %v2568 = vpop.f32.mrf.mxu0
          %v2569 = vadd.f32 %v2549, %v2568
          %2570 = vdwg.mxu0
          %2571 = vmatpush.msra.mxu0 %v2282
          %2572 = vmatpush.msra.mxu0 %v2281
          %2573 = vmatpush.msra.mxu0 %v2280
          %2574 = vmatpush.msra.mxu0 %v2279
          %2575 = vmatpush.msra.mxu0 %v2278
          %2576 = vmatpush.msra.mxu0 %v2277
          %2577 = vmatpush.msra.mxu0 %v2276
          %2578 = vmatpush.msra.mxu0 %v2275
          %2579 = vmatpush.msra.mxu0 %v2274
          %2580 = vmatpush.msra.mxu0 %v2273
          %2581 = vmatpush.msra.mxu0 %v2272
          %2582 = vmatpush.msra.mxu0 %v2271
          %2583 = vmatpush.msra.mxu0 %v2270
          %2584 = vmatpush.msra.mxu0 %v2269
          %2585 = vmatpush.msra.mxu0 %v2268
          %2586 = vmatpush.msra.mxu0 %v2267
          %2587 = vmatmul.f32.gmra.mxu0 %v2086
          %v2588 = vpop.f32.mrf.mxu0
          %v2589 = vadd.f32 %v2569, %v2588
          %2590 = vdwg.mxu0
          %2591 = vmatpush.msra.mxu0 %v2298
          %2592 = vmatpush.msra.mxu0 %v2297
          %2593 = vmatpush.msra.mxu0 %v2296
          %2594 = vmatpush.msra.mxu0 %v2295
          %2595 = vmatpush.msra.mxu0 %v2294
          %2596 = vmatpush.msra.mxu0 %v2293
          %2597 = vmatpush.msra.mxu0 %v2292
          %2598 = vmatpush.msra.mxu0 %v2291
          %2599 = vmatpush.msra.mxu0 %v2290
          %2600 = vmatpush.msra.mxu0 %v2289
          %2601 = vmatpush.msra.mxu0 %v2288
          %2602 = vmatpush.msra.mxu0 %v2287
          %2603 = vmatpush.msra.mxu0 %v2286
          %2604 = vmatpush.msra.mxu0 %v2285
          %2605 = vmatpush.msra.mxu0 %v2284
          %2606 = vmatpush.msra.mxu0 %v2283
          %2607 = vmatmul.f32.gmra.mxu0 %v2087
          %v2608 = vpop.f32.mrf.mxu0
          %v2609 = vadd.f32 %v2589, %v2608
          %2610 = vdwg.mxu0
          %2611 = vmatpush.msra.mxu0 %v2314
          %2612 = vmatpush.msra.mxu0 %v2313
          %2613 = vmatpush.msra.mxu0 %v2312
          %2614 = vmatpush.msra.mxu0 %v2311
          %2615 = vmatpush.msra.mxu0 %v2310
          %2616 = vmatpush.msra.mxu0 %v2309
          %2617 = vmatpush.msra.mxu0 %v2308
          %2618 = vmatpush.msra.mxu0 %v2307
          %2619 = vmatpush.msra.mxu0 %v2306
          %2620 = vmatpush.msra.mxu0 %v2305
          %2621 = vmatpush.msra.mxu0 %v2304
          %2622 = vmatpush.msra.mxu0 %v2303
          %2623 = vmatpush.msra.mxu0 %v2302
          %2624 = vmatpush.msra.mxu0 %v2301
          %2625 = vmatpush.msra.mxu0 %v2300
          %2626 = vmatpush.msra.mxu0 %v2299
          %2627 = vmatmul.f32.gmra.mxu0 %v2088
          %v2628 = vpop.f32.mrf.mxu0
          %v2629 = vadd.f32 %v2609, %v2628
          %2630 = vdwg.mxu0
          %2631 = vmatpush.msra.mxu0 %v2330
          %2632 = vmatpush.msra.mxu0 %v2329
          %2633 = vmatpush.msra.mxu0 %v2328
          %2634 = vmatpush.msra.mxu0 %v2327
          %2635 = vmatpush.msra.mxu0 %v2326
          %2636 = vmatpush.msra.mxu0 %v2325
          %2637 = vmatpush.msra.mxu0 %v2324
          %2638 = vmatpush.msra.mxu0 %v2323
          %2639 = vmatpush.msra.mxu0 %v2322
          %2640 = vmatpush.msra.mxu0 %v2321
          %2641 = vmatpush.msra.mxu0 %v2320
          %2642 = vmatpush.msra.mxu0 %v2319
          %2643 = vmatpush.msra.mxu0 %v2318
          %2644 = vmatpush.msra.mxu0 %v2317
          %2645 = vmatpush.msra.mxu0 %v2316
          %2646 = vmatpush.msra.mxu0 %v2315
          %2647 = vmatmul.f32.gmra.mxu0 %v2089
          %v2648 = vpop.f32.mrf.mxu0
          %v2649 = vadd.f32 %v2629, %v2648
          %2650 = vdwg.mxu0
          %2651 = vmatpush.msra.mxu0 %v2346
          %2652 = vmatpush.msra.mxu0 %v2345
          %2653 = vmatpush.msra.mxu0 %v2344
          %2654 = vmatpush.msra.mxu0 %v2343
          %2655 = vmatpush.msra.mxu0 %v2342
          %2656 = vmatpush.msra.mxu0 %v2341
          %2657 = vmatpush.msra.mxu0 %v2340
          %2658 = vmatpush.msra.mxu0 %v2339
          %2659 = vmatpush.msra.mxu0 %v2338
          %2660 = vmatpush.msra.mxu0 %v2337
          %2661 = vmatpush.msra.mxu0 %v2336
          %2662 = vmatpush.msra.mxu0 %v2335
          %2663 = vmatpush.msra.mxu0 %v2334
          %2664 = vmatpush.msra.mxu0 %v2333
          %2665 = vmatpush.msra.mxu0 %v2332
          %2666 = vmatpush.msra.mxu0 %v2331
          %2667 = vmatmul.f32.gmra.mxu0 %v2090
          %v2668 = vpop.f32.mrf.mxu0
          %v2669 = vadd.f32 %v2649, %v2668
          %2670 = vdwg.mxu0
          %v2671 = vadd.f32 %v1651, %v2669
          %v2672 = vld [vmem:[%s17] sm:$0x1]
          %v2673 = vld [vmem:[%s18] sm:$0x1]
          %v2674 = vsel %vm869, %v2671, 0.0
          %2675 = vadd.xlane.f32.xlu0 %v2674
          %v2676 = vpop.xlane.xlu0 %2675
          %v2677 = vmul.f32 %v2676, %v1624
          %v2678 = vsub.f32 %v2671, %v2677
          %v2679 = vmul.f32 %v2678, %v2678
          %v2680 = vsel %vm869, %v2679, 0.0
          %2681 = vadd.xlane.f32.xlu0 %v2680
          %v2682 = vpop.xlane.xlu0 %2681
          %v2683 = vmul.f32 %v2682, %v1624
          %v2684 = vadd.f32 %v2683, 1e-05
          %v2685 = vrsqrt.pop %v2684
          %v2686 = vmul.f32 %v2685, %v2684
          %v2687 = vmul.f32 %v2686, %v2685
          %v2688 = vmul.f32 0.5, %v2687
          %v2689 = vsub.f32 1.5, %v2688
          %v2690 = vmul.f32 %v2685, %v2689
          %vm2691 = vweird.f32 %v2684
          %vm2692 = vweird.f32 %v2685
          %vm2693 = vmor %vm2691, %vm2692
          %v2694 = vsel %vm2693, %v2685, %v2690
          %v2695 = vmul.f32 %v2678, %v2694
          %v2697 = vperm.slane %v2672, 0
          %v2699 = vmul.f32 %v2695, %v2697
          %v2701 = vperm.slane %v2673, 0
          %v2703 = vadd.f32 %v2699, %v2701
          %2704 = vst.msk [vmem:[%s672] sm:$0xff] %vm869, %v2703
        $region104: #{tpu_custom_call.1} parent=95 // pred_fallthru
          _
        %s2705 = sand.u32 %s484, 1
        %s2706 = scalar_lea.sflag [#allocation7], %s2705
        %s2707 = sand.u32 %s484, 1
        %s2708 = smul.addr %s2707, 8
        %s2709 = scalar_lea.vmem [#allocation6], %s2708
        // Predicated region
        $region105: #{tpu_custom_call.1} parent=95 // pred_check
          %p2710 = pneg %p494
        $region106: #{tpu_custom_call.1} parent=95 // pred_check_branch
          %2712 = sbr.rel (%p2710) target = $region108
        $region107: #{tpu_custom_call.1} parent=95 // pred_region
          %2714 = vsyncadd %s2706, 0
          %s2715 = sadd.s32 %s39, %s38
          %s2716 = smul.addr %s2715, 8
          %s2717 = scalar_lea.hbm %s19, %s2716
          %s2719 = sshll.u32 %s2709, 4
          %s2720 = int_to_ptr.vmem [resolvable:$true] %s2719
          %s2721 = sshll.u32 %s2717, 4
          %s2722 = int_to_ptr.hbm [resolvable:$true] %s2721
          %2724 = dma.vmem_to_hbm [thread:$0]  %s2720, 128, %s2722, %s2706
        $region108: #{tpu_custom_call.1} parent=95 // pred_fallthru
          _
      $region96: #{tpu_custom_call.1} parent=5 // pred_fallthru
        _
      %p2725 = scmp.le.s32.totalorder 2, %s28
      // Predicated region
      $region109: #{tpu_custom_call.1} parent=5 // pred_check
        %p2726 = pneg %p2725
      $region110: #{tpu_custom_call.1} parent=5 // pred_check_branch
        %2728 = sbr.rel (%p2726) target = $region112
      $region111: #{tpu_custom_call.1} parent=5 // pred_region
        %s2729 = ssub.s32 %s28, 2
        // Predicated region
        $region113: #{tpu_custom_call.1} parent=111 // pred_check
          %p2730 = pneg %p500
        $region114: #{tpu_custom_call.1} parent=111 // pred_check_branch
          %2732 = sbr.rel (%p2730) target = $region116
        $region115: #{tpu_custom_call.1} parent=111 // pred_region
          %s2733 = sand.u32 %s485, 1
          %s2734 = scalar_lea.sflag [#allocation7], %s2733
          %s2735 = sand.u32 %s485, 1
          %s2736 = smul.addr %s2735, 8
          %s2737 = scalar_lea.vmem [#allocation6], %s2736
          %2739 = dma.done %s2734, 128
        $region116: #{tpu_custom_call.1} parent=111 // pred_fallthru
          _
      $region112: #{tpu_custom_call.1} parent=5 // pred_fallthru
        _
    $region6: #{tpu_custom_call.1} parent=1 // loop_footer
      %s32 = sadd.s32 1, %s28
    $region7: #{tpu_custom_call.1} parent=1 // loop_footer_branch
      %27 = sbr.rel target = $region3
    $region8: #{tpu_custom_call.1} parent=1 // loop_exit
      _
    %2740 = vsyncpa [#allocation7], 1
    %s2741 = scalar_lea.sflag [#allocation7], 1
    %2742 = vsyncpa %s2741, 1

</llo_original>
